<compile_context>
chip_gen: v7x
topology: tpu7x:2x2x1
jax: 0.10.0
libtpu: 0.0.40
codegen_flags: <defaults>
</compile_context>

<pallas_src>
import jax
import jax.numpy as jnp
from jax.experimental import pallas as pl
from jax.experimental.pallas import tpu as pltpu

EPS = 1e-5  # BatchNorm2d default eps


def _resblock_kernel(x_ref, w1_ref, b1_ref, gamma_ref, beta_ref,
                     w2_ref, b2_ref, out_ref, xp_sc, pt_sc):
    # x_ref    : (N, C, H, W)       input, NCHW exactly as PyTorch provides it
    # w*_ref   : (C, 9*C)           im2col weights, rows=c_out, cols=(kh,kw,c_in)
    # b*/gamma/beta : (C, 1)
    # out_ref  : (N, C, H*W)        NCHW with H,W flattened (lane-dense)
    # xp_sc    : (N, C, H+2, W+2)   zero-padded staging buffer
    # pt_sc    : (9*C, N*H*W)       channel-major im2col patch matrix
    N, C, H, W = x_ref.shape
    HW = H * W
    P = N * HW
    inv_P = 1.0 / P

    # Zero the padded staging buffer ONCE: only the 1-px halo needs to stay
    # zero; the interior is overwritten before each conv (v1 zeroed it twice).
    xp_sc[...] = jnp.zeros_like(xp_sc)

    def build_patches():
        # Materialize the im2col matrix once per conv; the conv itself is then
        # a single MXU matmul (no per-tap dot + accumulate chain).
        for n in range(N):
            for kh in range(3):
                for kw in range(3):
                    tap = kh * 3 + kw
                    blk = xp_sc[n, :, kh:kh + H, kw:kw + W].reshape(C, HW)
                    pt_sc[tap * C:(tap + 1) * C, n * HW:(n + 1) * HW] = blk

    def conv_bn(w_ref, b_ref):
        # Single (C, 9C) x (9C, P) matmul -> lane-dense (C, P) activation.
        z = jnp.dot(w_ref[...], pt_sc[...],
                    preferred_element_type=jnp.float32) + b_ref[...]
        # BatchNorm2d (training mode): one-pass sum / sum-of-squares stats over
        # all N*H*W positions, biased variance, shared affine params.
        s = jnp.sum(z, axis=1, keepdims=True)           # (C, 1)
        ss = jnp.sum(z * z, axis=1, keepdims=True)      # (C, 1)
        mean = s * inv_P
        var = ss * inv_P - mean * mean
        scale = jax.lax.rsqrt(var + EPS) * gamma_ref[...]
        return (z - mean) * scale + beta_ref[...]

    # Stage x into the padded interior (NCHW layout throughout; the channel
    # relayout happens implicitly via the im2col matmul, not a transpose).
    xp_sc[:, :, 1:H + 1, 1:W + 1] = x_ref[...]

    # conv1 -> bn -> relu
    build_patches()
    y = jnp.maximum(conv_bn(w1_ref, b1_ref), 0.0)       # (C, P)

    # Restage the activation for conv2 (halo still zero from the single fill).
    for n in range(N):
        xp_sc[n, :, 1:H + 1, 1:W + 1] = y[:, n * HW:(n + 1) * HW].reshape(C, H, W)

    # conv2 -> bn (shared gamma/beta, fresh batch statistics).
    build_patches()
    z = conv_bn(w2_ref, b2_ref)                         # (C, P)

    # Lane-dense stores: each row is 256 contiguous lanes (multiple of 128).
    for n in range(N):
        out_ref[n] = z[:, n * HW:(n + 1) * HW]


def resblock_forward(x_nchw, params):
    """x_nchw: (N, C, H, W) float32, exactly like the PyTorch module input."""
    w1, b1, gamma, beta, w2, b2 = params   # w*: HWIO (3, 3, C, C)
    N, C, H, W = x_nchw.shape
    KC = 9 * C

    # Tiny one-time parameter repacks (weights/bias only; no activation-sized
    # wrapper ops: no jnp.pad, no NCHW<->NHWC transposes of x).
    w1_mat = w1.reshape(KC, C).T.astype(jnp.float32)    # (C_out, 9*C_in)
    w2_mat = w2.reshape(KC, C).T.astype(jnp.float32)
    b1_c = b1.reshape(C, 1).astype(jnp.float32)
    b2_c = b2.reshape(C, 1).astype(jnp.float32)
    g_c = gamma.reshape(C, 1).astype(jnp.float32)
    be_c = beta.reshape(C, 1).astype(jnp.float32)

    vmem = pl.BlockSpec(memory_space=pltpu.MemorySpace.VMEM)

    out = pl.pallas_call(
        _resblock_kernel,
        out_shape=jax.ShapeDtypeStruct((N, C, H * W), jnp.float32),
        in_specs=[vmem] * 7,
        out_specs=vmem,
        scratch_shapes=[
            pltpu.VMEM((N, C, H + 2, W + 2), jnp.float32),   # padded staging
            pltpu.VMEM((KC, N * H * W), jnp.float32),        # im2col patches
        ],
    )(x_nchw.astype(jnp.float32), w1_mat, b1_c, g_c, be_c, w2_mat, b2_c)

    # Free reshape: kernel already emitted NCHW ordering with H,W flattened.
    return out.reshape(N, C, H, W)


def resblock_reference(x_nchw, params):
    """Pure-JAX reference mirroring the PyTorch forward (training-mode BN)."""
    w1, b1, gamma, beta, w2, b2 = params
    x = jnp.transpose(x_nchw, (0, 2, 3, 1)).astype(jnp.float32)

    def conv(x, w, b):
        y = jax.lax.conv_general_dilated(
            x, w, window_strides=(1, 1), padding="SAME",
            dimension_numbers=("NHWC", "HWIO", "NHWC"))
        return y + b

    def bn(y):
        mean = jnp.mean(y, axis=(0, 1, 2), keepdims=True)
        var = jnp.mean((y - mean) ** 2, axis=(0, 1, 2), keepdims=True)
        return (y - mean) * jax.lax.rsqrt(var + EPS) * gamma + beta

    y = jax.nn.relu(bn(conv(x, w1, b1)))
    z = bn(conv(y, w2, b2))
    return jnp.transpose(z, (0, 3, 1, 2))


if __name__ == "__main__":
    # Small shapes consistent with the module: N=2, C=4, H=W=16
    N, C, H, W = 2, 4, 16, 16
    key = jax.random.PRNGKey(0)
    kx, k1, kb1, k2, kb2 = jax.random.split(key, 5)

    x = jax.random.normal(kx, (N, C, H, W), jnp.float32)
    # Deterministic synthetic parameters (HWIO conv weights).
    w1 = jax.random.normal(k1, (3, 3, C, C), jnp.float32) * 0.2
    b1 = jax.random.normal(kb1, (C,), jnp.float32) * 0.1
    w2 = jax.random.normal(k2, (3, 3, C, C), jnp.float32) * 0.2
    b2 = jax.random.normal(kb2, (C,), jnp.float32) * 0.1
    gamma = jnp.ones((C,), jnp.float32)   # BatchNorm2d affine default init
    beta = jnp.zeros((C,), jnp.float32)
    params = (w1, b1, gamma, beta, w2, b2)

    out = resblock_forward(x, params)
    out = jax.block_until_ready(out)

    ref = resblock_reference(x, params)
    assert out.shape == (N, C, H, W)
    assert jnp.allclose(out, ref, atol=1e-4, rtol=1e-4), (
        f"max err {jnp.max(jnp.abs(out - ref))}")

    # TODO(synk): BatchNorm running-stats update is stateful bookkeeping and is
    # not modeled (it does not affect the training-mode forward output).
    print("KERNEL_OK")
</pallas_src>

<mosaic_0001>
module attributes {stable_mosaic.version = 11 : i64} {
  func.func @_resblock_kernel(%arg0: memref<2x4x16x16xf32, #tpu.memory_space<vmem>>, %arg1: memref<4x36xf32, #tpu.memory_space<vmem>>, %arg2: memref<4x1xf32, #tpu.memory_space<vmem>>, %arg3: memref<4x1xf32, #tpu.memory_space<vmem>>, %arg4: memref<4x1xf32, #tpu.memory_space<vmem>>, %arg5: memref<4x36xf32, #tpu.memory_space<vmem>>, %arg6: memref<4x1xf32, #tpu.memory_space<vmem>>, %arg7: memref<2x4x256xf32, #tpu.memory_space<vmem>>, %arg8: memref<2x4x18x18xf32, #tpu.memory_space<vmem>>, %arg9: memref<36x512xf32, #tpu.memory_space<vmem>>) attributes {dimension_semantics = [], scalar_prefetch = 0 : i64, scratch_operands = 2 : i64, tpu.core_type = #tpu.core_type<tc>} {
    %cst = arith.constant 0.000000e+00 : f32
    %0 = vector.broadcast %cst : f32 to vector<2x4x18x18xf32>
    %c0 = arith.constant 0 : index
    %c0_0 = arith.constant 0 : index
    %c0_1 = arith.constant 0 : index
    %c0_2 = arith.constant 0 : index
    %1 = vector.load %arg8[%c0, %c0_0, %c0_1, %c0_2] : memref<2x4x18x18xf32, #tpu.memory_space<vmem>>, vector<2x4x18x18xf32>
    tpu.vector_store %arg8[%c0, %c0_0, %c0_1, %c0_2], %0 {strides = array<i32>} : memref<2x4x18x18xf32, #tpu.memory_space<vmem>>, vector<2x4x18x18xf32>,
    %c0_3 = arith.constant 0 : index
    %c0_4 = arith.constant 0 : index
    %c0_5 = arith.constant 0 : index
    %c0_6 = arith.constant 0 : index
    %2 = vector.load %arg0[%c0_3, %c0_4, %c0_5, %c0_6] : memref<2x4x16x16xf32, #tpu.memory_space<vmem>>, vector<2x4x16x16xf32>
    %c0_7 = arith.constant 0 : index
    %c0_8 = arith.constant 0 : index
    %c1 = arith.constant 1 : index
    %c1_9 = arith.constant 1 : index
    %3 = vector.load %arg8[%c0_7, %c0_8, %c1, %c1_9] : memref<2x4x18x18xf32, #tpu.memory_space<vmem>>, vector<2x4x16x16xf32>
    tpu.vector_store %arg8[%c0_7, %c0_8, %c1, %c1_9], %2 {strides = array<i32>} : memref<2x4x18x18xf32, #tpu.memory_space<vmem>>, vector<2x4x16x16xf32>,
    %c0_10 = arith.constant 0 : index
    %c0_11 = arith.constant 0 : index
    %c0_12 = arith.constant 0 : index
    %c0_13 = arith.constant 0 : index
    %4 = vector.load %arg8[%c0_10, %c0_11, %c0_12, %c0_13] : memref<2x4x18x18xf32, #tpu.memory_space<vmem>>, vector<1x4x16x16xf32>
    %5 = vector.shape_cast %4 : vector<1x4x16x16xf32> to vector<4x16x16xf32>
    %6 = vector.shape_cast %5 : vector<4x16x16xf32> to vector<4x256xf32>
    %c0_14 = arith.constant 0 : index
    %c0_15 = arith.constant 0 : index
    %7 = vector.load %arg9[%c0_14, %c0_15] : memref<36x512xf32, #tpu.memory_space<vmem>>, vector<4x256xf32>
    tpu.vector_store %arg9[%c0_14, %c0_15], %6 {strides = array<i32>} : memref<36x512xf32, #tpu.memory_space<vmem>>, vector<4x256xf32>,
    %c0_16 = arith.constant 0 : index
    %c0_17 = arith.constant 0 : index
    %c0_18 = arith.constant 0 : index
    %c1_19 = arith.constant 1 : index
    %8 = vector.load %arg8[%c0_16, %c0_17, %c0_18, %c1_19] : memref<2x4x18x18xf32, #tpu.memory_space<vmem>>, vector<1x4x16x16xf32>
    %9 = vector.shape_cast %8 : vector<1x4x16x16xf32> to vector<4x16x16xf32>
    %10 = vector.shape_cast %9 : vector<4x16x16xf32> to vector<4x256xf32>
    %c4 = arith.constant 4 : index
    %c0_20 = arith.constant 0 : index
    %11 = vector.load %arg9[%c4, %c0_20] : memref<36x512xf32, #tpu.memory_space<vmem>>, vector<4x256xf32>
    tpu.vector_store %arg9[%c4, %c0_20], %10 {strides = array<i32>} : memref<36x512xf32, #tpu.memory_space<vmem>>, vector<4x256xf32>,
    %c0_21 = arith.constant 0 : index
    %c0_22 = arith.constant 0 : index
    %c0_23 = arith.constant 0 : index
    %c2 = arith.constant 2 : index
    %12 = vector.load %arg8[%c0_21, %c0_22, %c0_23, %c2] : memref<2x4x18x18xf32, #tpu.memory_space<vmem>>, vector<1x4x16x16xf32>
    %13 = vector.shape_cast %12 : vector<1x4x16x16xf32> to vector<4x16x16xf32>
    %14 = vector.shape_cast %13 : vector<4x16x16xf32> to vector<4x256xf32>
    %c8 = arith.constant 8 : index
    %c0_24 = arith.constant 0 : index
    %15 = vector.load %arg9[%c8, %c0_24] : memref<36x512xf32, #tpu.memory_space<vmem>>, vector<4x256xf32>
    tpu.vector_store %arg9[%c8, %c0_24], %14 {strides = array<i32>} : memref<36x512xf32, #tpu.memory_space<vmem>>, vector<4x256xf32>,
    %c0_25 = arith.constant 0 : index
    %c0_26 = arith.constant 0 : index
    %c1_27 = arith.constant 1 : index
    %c0_28 = arith.constant 0 : index
    %16 = vector.load %arg8[%c0_25, %c0_26, %c1_27, %c0_28] : memref<2x4x18x18xf32, #tpu.memory_space<vmem>>, vector<1x4x16x16xf32>
    %17 = vector.shape_cast %16 : vector<1x4x16x16xf32> to vector<4x16x16xf32>
    %18 = vector.shape_cast %17 : vector<4x16x16xf32> to vector<4x256xf32>
    %c12 = arith.constant 12 : index
    %c0_29 = arith.constant 0 : index
    %19 = vector.load %arg9[%c12, %c0_29] : memref<36x512xf32, #tpu.memory_space<vmem>>, vector<4x256xf32>
    tpu.vector_store %arg9[%c12, %c0_29], %18 {strides = array<i32>} : memref<36x512xf32, #tpu.memory_space<vmem>>, vector<4x256xf32>,
    %c0_30 = arith.constant 0 : index
    %c0_31 = arith.constant 0 : index
    %c1_32 = arith.constant 1 : index
    %c1_33 = arith.constant 1 : index
    %20 = vector.load %arg8[%c0_30, %c0_31, %c1_32, %c1_33] : memref<2x4x18x18xf32, #tpu.memory_space<vmem>>, vector<1x4x16x16xf32>
    %21 = vector.shape_cast %20 : vector<1x4x16x16xf32> to vector<4x16x16xf32>
    %22 = vector.shape_cast %21 : vector<4x16x16xf32> to vector<4x256xf32>
    %c16 = arith.constant 16 : index
    %c0_34 = arith.constant 0 : index
    %23 = vector.load %arg9[%c16, %c0_34] : memref<36x512xf32, #tpu.memory_space<vmem>>, vector<4x256xf32>
    tpu.vector_store %arg9[%c16, %c0_34], %22 {strides = array<i32>} : memref<36x512xf32, #tpu.memory_space<vmem>>, vector<4x256xf32>,
    %c0_35 = arith.constant 0 : index
    %c0_36 = arith.constant 0 : index
    %c1_37 = arith.constant 1 : index
    %c2_38 = arith.constant 2 : index
    %24 = vector.load %arg8[%c0_35, %c0_36, %c1_37, %c2_38] : memref<2x4x18x18xf32, #tpu.memory_space<vmem>>, vector<1x4x16x16xf32>
    %25 = vector.shape_cast %24 : vector<1x4x16x16xf32> to vector<4x16x16xf32>
    %26 = vector.shape_cast %25 : vector<4x16x16xf32> to vector<4x256xf32>
    %c20 = arith.constant 20 : index
    %c0_39 = arith.constant 0 : index
    %27 = vector.load %arg9[%c20, %c0_39] : memref<36x512xf32, #tpu.memory_space<vmem>>, vector<4x256xf32>
    tpu.vector_store %arg9[%c20, %c0_39], %26 {strides = array<i32>} : memref<36x512xf32, #tpu.memory_space<vmem>>, vector<4x256xf32>,
    %c0_40 = arith.constant 0 : index
    %c0_41 = arith.constant 0 : index
    %c2_42 = arith.constant 2 : index
    %c0_43 = arith.constant 0 : index
    %28 = vector.load %arg8[%c0_40, %c0_41, %c2_42, %c0_43] : memref<2x4x18x18xf32, #tpu.memory_space<vmem>>, vector<1x4x16x16xf32>
    %29 = vector.shape_cast %28 : vector<1x4x16x16xf32> to vector<4x16x16xf32>
    %30 = vector.shape_cast %29 : vector<4x16x16xf32> to vector<4x256xf32>
    %c24 = arith.constant 24 : index
    %c0_44 = arith.constant 0 : index
    %31 = vector.load %arg9[%c24, %c0_44] : memref<36x512xf32, #tpu.memory_space<vmem>>, vector<4x256xf32>
    tpu.vector_store %arg9[%c24, %c0_44], %30 {strides = array<i32>} : memref<36x512xf32, #tpu.memory_space<vmem>>, vector<4x256xf32>,
    %c0_45 = arith.constant 0 : index
    %c0_46 = arith.constant 0 : index
    %c2_47 = arith.constant 2 : index
    %c1_48 = arith.constant 1 : index
    %32 = vector.load %arg8[%c0_45, %c0_46, %c2_47, %c1_48] : memref<2x4x18x18xf32, #tpu.memory_space<vmem>>, vector<1x4x16x16xf32>
    %33 = vector.shape_cast %32 : vector<1x4x16x16xf32> to vector<4x16x16xf32>
    %34 = vector.shape_cast %33 : vector<4x16x16xf32> to vector<4x256xf32>
    %c28 = arith.constant 28 : index
    %c0_49 = arith.constant 0 : index
    %35 = vector.load %arg9[%c28, %c0_49] : memref<36x512xf32, #tpu.memory_space<vmem>>, vector<4x256xf32>
    tpu.vector_store %arg9[%c28, %c0_49], %34 {strides = array<i32>} : memref<36x512xf32, #tpu.memory_space<vmem>>, vector<4x256xf32>,
    %c0_50 = arith.constant 0 : index
    %c0_51 = arith.constant 0 : index
    %c2_52 = arith.constant 2 : index
    %c2_53 = arith.constant 2 : index
    %36 = vector.load %arg8[%c0_50, %c0_51, %c2_52, %c2_53] : memref<2x4x18x18xf32, #tpu.memory_space<vmem>>, vector<1x4x16x16xf32>
    %37 = vector.shape_cast %36 : vector<1x4x16x16xf32> to vector<4x16x16xf32>
    %38 = vector.shape_cast %37 : vector<4x16x16xf32> to vector<4x256xf32>
    %c32 = arith.constant 32 : index
    %c0_54 = arith.constant 0 : index
    %39 = vector.load %arg9[%c32, %c0_54] : memref<36x512xf32, #tpu.memory_space<vmem>>, vector<4x256xf32>
    tpu.vector_store %arg9[%c32, %c0_54], %38 {strides = array<i32>} : memref<36x512xf32, #tpu.memory_space<vmem>>, vector<4x256xf32>,
    %c1_55 = arith.constant 1 : index
    %c0_56 = arith.constant 0 : index
    %c0_57 = arith.constant 0 : index
    %c0_58 = arith.constant 0 : index
    %40 = vector.load %arg8[%c1_55, %c0_56, %c0_57, %c0_58] : memref<2x4x18x18xf32, #tpu.memory_space<vmem>>, vector<1x4x16x16xf32>
    %41 = vector.shape_cast %40 : vector<1x4x16x16xf32> to vector<4x16x16xf32>
    %42 = vector.shape_cast %41 : vector<4x16x16xf32> to vector<4x256xf32>
    %c0_59 = arith.constant 0 : index
    %c256 = arith.constant 256 : index
    %43 = vector.load %arg9[%c0_59, %c256] : memref<36x512xf32, #tpu.memory_space<vmem>>, vector<4x256xf32>
    tpu.vector_store %arg9[%c0_59, %c256], %42 {strides = array<i32>} : memref<36x512xf32, #tpu.memory_space<vmem>>, vector<4x256xf32>,
    %c1_60 = arith.constant 1 : index
    %c0_61 = arith.constant 0 : index
    %c0_62 = arith.constant 0 : index
    %c1_63 = arith.constant 1 : index
    %44 = vector.load %arg8[%c1_60, %c0_61, %c0_62, %c1_63] : memref<2x4x18x18xf32, #tpu.memory_space<vmem>>, vector<1x4x16x16xf32>
    %45 = vector.shape_cast %44 : vector<1x4x16x16xf32> to vector<4x16x16xf32>
    %46 = vector.shape_cast %45 : vector<4x16x16xf32> to vector<4x256xf32>
    %c4_64 = arith.constant 4 : index
    %c256_65 = arith.constant 256 : index
    %47 = vector.load %arg9[%c4_64, %c256_65] : memref<36x512xf32, #tpu.memory_space<vmem>>, vector<4x256xf32>
    tpu.vector_store %arg9[%c4_64, %c256_65], %46 {strides = array<i32>} : memref<36x512xf32, #tpu.memory_space<vmem>>, vector<4x256xf32>,
    %c1_66 = arith.constant 1 : index
    %c0_67 = arith.constant 0 : index
    %c0_68 = arith.constant 0 : index
    %c2_69 = arith.constant 2 : index
    %48 = vector.load %arg8[%c1_66, %c0_67, %c0_68, %c2_69] : memref<2x4x18x18xf32, #tpu.memory_space<vmem>>, vector<1x4x16x16xf32>
    %49 = vector.shape_cast %48 : vector<1x4x16x16xf32> to vector<4x16x16xf32>
    %50 = vector.shape_cast %49 : vector<4x16x16xf32> to vector<4x256xf32>
    %c8_70 = arith.constant 8 : index
    %c256_71 = arith.constant 256 : index
    %51 = vector.load %arg9[%c8_70, %c256_71] : memref<36x512xf32, #tpu.memory_space<vmem>>, vector<4x256xf32>
    tpu.vector_store %arg9[%c8_70, %c256_71], %50 {strides = array<i32>} : memref<36x512xf32, #tpu.memory_space<vmem>>, vector<4x256xf32>,
    %c1_72 = arith.constant 1 : index
    %c0_73 = arith.constant 0 : index
    %c1_74 = arith.constant 1 : index
    %c0_75 = arith.constant 0 : index
    %52 = vector.load %arg8[%c1_72, %c0_73, %c1_74, %c0_75] : memref<2x4x18x18xf32, #tpu.memory_space<vmem>>, vector<1x4x16x16xf32>
    %53 = vector.shape_cast %52 : vector<1x4x16x16xf32> to vector<4x16x16xf32>
    %54 = vector.shape_cast %53 : vector<4x16x16xf32> to vector<4x256xf32>
    %c12_76 = arith.constant 12 : index
    %c256_77 = arith.constant 256 : index
    %55 = vector.load %arg9[%c12_76, %c256_77] : memref<36x512xf32, #tpu.memory_space<vmem>>, vector<4x256xf32>
    tpu.vector_store %arg9[%c12_76, %c256_77], %54 {strides = array<i32>} : memref<36x512xf32, #tpu.memory_space<vmem>>, vector<4x256xf32>,
    %c1_78 = arith.constant 1 : index
    %c0_79 = arith.constant 0 : index
    %c1_80 = arith.constant 1 : index
    %c1_81 = arith.constant 1 : index
    %56 = vector.load %arg8[%c1_78, %c0_79, %c1_80, %c1_81] : memref<2x4x18x18xf32, #tpu.memory_space<vmem>>, vector<1x4x16x16xf32>
    %57 = vector.shape_cast %56 : vector<1x4x16x16xf32> to vector<4x16x16xf32>
    %58 = vector.shape_cast %57 : vector<4x16x16xf32> to vector<4x256xf32>
    %c16_82 = arith.constant 16 : index
    %c256_83 = arith.constant 256 : index
    %59 = vector.load %arg9[%c16_82, %c256_83] : memref<36x512xf32, #tpu.memory_space<vmem>>, vector<4x256xf32>
    tpu.vector_store %arg9[%c16_82, %c256_83], %58 {strides = array<i32>} : memref<36x512xf32, #tpu.memory_space<vmem>>, vector<4x256xf32>,
    %c1_84 = arith.constant 1 : index
    %c0_85 = arith.constant 0 : index
    %c1_86 = arith.constant 1 : index
    %c2_87 = arith.constant 2 : index
    %60 = vector.load %arg8[%c1_84, %c0_85, %c1_86, %c2_87] : memref<2x4x18x18xf32, #tpu.memory_space<vmem>>, vector<1x4x16x16xf32>
    %61 = vector.shape_cast %60 : vector<1x4x16x16xf32> to vector<4x16x16xf32>
    %62 = vector.shape_cast %61 : vector<4x16x16xf32> to vector<4x256xf32>
    %c20_88 = arith.constant 20 : index
    %c256_89 = arith.constant 256 : index
    %63 = vector.load %arg9[%c20_88, %c256_89] : memref<36x512xf32, #tpu.memory_space<vmem>>, vector<4x256xf32>
    tpu.vector_store %arg9[%c20_88, %c256_89], %62 {strides = array<i32>} : memref<36x512xf32, #tpu.memory_space<vmem>>, vector<4x256xf32>,
    %c1_90 = arith.constant 1 : index
    %c0_91 = arith.constant 0 : index
    %c2_92 = arith.constant 2 : index
    %c0_93 = arith.constant 0 : index
    %64 = vector.load %arg8[%c1_90, %c0_91, %c2_92, %c0_93] : memref<2x4x18x18xf32, #tpu.memory_space<vmem>>, vector<1x4x16x16xf32>
    %65 = vector.shape_cast %64 : vector<1x4x16x16xf32> to vector<4x16x16xf32>
    %66 = vector.shape_cast %65 : vector<4x16x16xf32> to vector<4x256xf32>
    %c24_94 = arith.constant 24 : index
    %c256_95 = arith.constant 256 : index
    %67 = vector.load %arg9[%c24_94, %c256_95] : memref<36x512xf32, #tpu.memory_space<vmem>>, vector<4x256xf32>
    tpu.vector_store %arg9[%c24_94, %c256_95], %66 {strides = array<i32>} : memref<36x512xf32, #tpu.memory_space<vmem>>, vector<4x256xf32>,
    %c1_96 = arith.constant 1 : index
    %c0_97 = arith.constant 0 : index
    %c2_98 = arith.constant 2 : index
    %c1_99 = arith.constant 1 : index
    %68 = vector.load %arg8[%c1_96, %c0_97, %c2_98, %c1_99] : memref<2x4x18x18xf32, #tpu.memory_space<vmem>>, vector<1x4x16x16xf32>
    %69 = vector.shape_cast %68 : vector<1x4x16x16xf32> to vector<4x16x16xf32>
    %70 = vector.shape_cast %69 : vector<4x16x16xf32> to vector<4x256xf32>
    %c28_100 = arith.constant 28 : index
    %c256_101 = arith.constant 256 : index
    %71 = vector.load %arg9[%c28_100, %c256_101] : memref<36x512xf32, #tpu.memory_space<vmem>>, vector<4x256xf32>
    tpu.vector_store %arg9[%c28_100, %c256_101], %70 {strides = array<i32>} : memref<36x512xf32, #tpu.memory_space<vmem>>, vector<4x256xf32>,
    %c1_102 = arith.constant 1 : index
    %c0_103 = arith.constant 0 : index
    %c2_104 = arith.constant 2 : index
    %c2_105 = arith.constant 2 : index
    %72 = vector.load %arg8[%c1_102, %c0_103, %c2_104, %c2_105] : memref<2x4x18x18xf32, #tpu.memory_space<vmem>>, vector<1x4x16x16xf32>
    %73 = vector.shape_cast %72 : vector<1x4x16x16xf32> to vector<4x16x16xf32>
    %74 = vector.shape_cast %73 : vector<4x16x16xf32> to vector<4x256xf32>
    %c32_106 = arith.constant 32 : index
    %c256_107 = arith.constant 256 : index
    %75 = vector.load %arg9[%c32_106, %c256_107] : memref<36x512xf32, #tpu.memory_space<vmem>>, vector<4x256xf32>
    tpu.vector_store %arg9[%c32_106, %c256_107], %74 {strides = array<i32>} : memref<36x512xf32, #tpu.memory_space<vmem>>, vector<4x256xf32>,
    %c0_108 = arith.constant 0 : index
    %c0_109 = arith.constant 0 : index
    %76 = vector.load %arg1[%c0_108, %c0_109] : memref<4x36xf32, #tpu.memory_space<vmem>>, vector<4x36xf32>
    %c0_110 = arith.constant 0 : index
    %c0_111 = arith.constant 0 : index
    %77 = vector.load %arg9[%c0_110, %c0_111] : memref<36x512xf32, #tpu.memory_space<vmem>>, vector<36x512xf32>
    %cst_112 = arith.constant dense<0.000000e+00> : vector<4x512xf32>
    %78 = tpu.matmul %76, %77, %cst_112 {dimension_numbers = #tpu.dot_dimension_numbers<[1], [0], [0], [1], [0, 0, 1, 1], [], []>} : vector<4x36xf32>, vector<36x512xf32>, vector<4x512xf32> -> vector<4x512xf32>
    %c0_113 = arith.constant 0 : index
    %c0_114 = arith.constant 0 : index
    %79 = vector.load %arg2[%c0_113, %c0_114] : memref<4x1xf32, #tpu.memory_space<vmem>>, vector<4x1xf32>
    %80 = vector.broadcast %79 : vector<4x1xf32> to vector<4x512xf32>
    %81 = arith.addf %78, %80 : vector<4x512xf32>
    %cst_115 = arith.constant dense<0.000000e+00> : vector<4xf32>
    %82 = vector.multi_reduction <add>, %81, %cst_115 [1] : vector<4x512xf32> to vector<4xf32>
    %83 = vector.shape_cast %82 : vector<4xf32> to vector<4x1xf32>
    %84 = arith.mulf %81, %81 : vector<4x512xf32>
    %cst_116 = arith.constant dense<0.000000e+00> : vector<4xf32>
    %85 = vector.multi_reduction <add>, %84, %cst_116 [1] : vector<4x512xf32> to vector<4xf32>
    %86 = vector.shape_cast %85 : vector<4xf32> to vector<4x1xf32>
    %cst_117 = arith.constant 0.001953125 : f32
    %87 = vector.broadcast %cst_117 : f32 to vector<4x1xf32>
    %88 = arith.mulf %83, %87 : vector<4x1xf32>
    %cst_118 = arith.constant 0.001953125 : f32
    %89 = vector.broadcast %cst_118 : f32 to vector<4x1xf32>
    %90 = arith.mulf %86, %89 : vector<4x1xf32>
    %91 = arith.mulf %88, %88 : vector<4x1xf32>
    %92 = arith.subf %90, %91 : vector<4x1xf32>
    %cst_119 = arith.constant 9.99999974E-6 : f32
    %93 = vector.broadcast %cst_119 : f32 to vector<4x1xf32>
    %94 = arith.addf %92, %93 : vector<4x1xf32>
    %95 = math.rsqrt %94 : vector<4x1xf32>
    %c0_120 = arith.constant 0 : index
    %c0_121 = arith.constant 0 : index
    %96 = vector.load %arg3[%c0_120, %c0_121] : memref<4x1xf32, #tpu.memory_space<vmem>>, vector<4x1xf32>
    %97 = arith.mulf %95, %96 : vector<4x1xf32>
    %98 = vector.broadcast %88 : vector<4x1xf32> to vector<4x512xf32>
    %99 = arith.subf %81, %98 : vector<4x512xf32>
    %100 = vector.broadcast %97 : vector<4x1xf32> to vector<4x512xf32>
    %101 = arith.mulf %99, %100 : vector<4x512xf32>
    %c0_122 = arith.constant 0 : index
    %c0_123 = arith.constant 0 : index
    %102 = vector.load %arg4[%c0_122, %c0_123] : memref<4x1xf32, #tpu.memory_space<vmem>>, vector<4x1xf32>
    %103 = vector.broadcast %102 : vector<4x1xf32> to vector<4x512xf32>
    %104 = arith.addf %101, %103 : vector<4x512xf32>
    %cst_124 = arith.constant 0.000000e+00 : f32
    %105 = vector.broadcast %cst_124 : f32 to vector<4x512xf32>
    %106 = arith.maximumf %104, %105 : vector<4x512xf32>
    %107 = vector.extract_strided_slice %106 {offsets = [0, 0], sizes = [4, 256], strides = [1, 1]} : vector<4x512xf32> to vector<4x256xf32>
    %108 = vector.shape_cast %107 : vector<4x256xf32> to vector<4x16x16xf32>
    %c0_125 = arith.constant 0 : index
    %c0_126 = arith.constant 0 : index
    %c1_127 = arith.constant 1 : index
    %c1_128 = arith.constant 1 : index
    %109 = vector.load %arg8[%c0_125, %c0_126, %c1_127, %c1_128] : memref<2x4x18x18xf32, #tpu.memory_space<vmem>>, vector<1x4x16x16xf32>
    %110 = vector.shape_cast %109 : vector<1x4x16x16xf32> to vector<4x16x16xf32>
    %111 = vector.shape_cast %108 : vector<4x16x16xf32> to vector<1x4x16x16xf32>
    tpu.vector_store %arg8[%c0_125, %c0_126, %c1_127, %c1_128], %111 {strides = array<i32>} : memref<2x4x18x18xf32, #tpu.memory_space<vmem>>, vector<1x4x16x16xf32>,
    %112 = vector.extract_strided_slice %106 {offsets = [0, 256], sizes = [4, 256], strides = [1, 1]} : vector<4x512xf32> to vector<4x256xf32>
    %113 = vector.shape_cast %112 : vector<4x256xf32> to vector<4x16x16xf32>
    %c1_129 = arith.constant 1 : index
    %c0_130 = arith.constant 0 : index
    %c1_131 = arith.constant 1 : index
    %c1_132 = arith.constant 1 : index
    %114 = vector.load %arg8[%c1_129, %c0_130, %c1_131, %c1_132] : memref<2x4x18x18xf32, #tpu.memory_space<vmem>>, vector<1x4x16x16xf32>
    %115 = vector.shape_cast %114 : vector<1x4x16x16xf32> to vector<4x16x16xf32>
    %116 = vector.shape_cast %113 : vector<4x16x16xf32> to vector<1x4x16x16xf32>
    tpu.vector_store %arg8[%c1_129, %c0_130, %c1_131, %c1_132], %116 {strides = array<i32>} : memref<2x4x18x18xf32, #tpu.memory_space<vmem>>, vector<1x4x16x16xf32>,
    %c0_133 = arith.constant 0 : index
    %c0_134 = arith.constant 0 : index
    %c0_135 = arith.constant 0 : index
    %c0_136 = arith.constant 0 : index
    %117 = vector.load %arg8[%c0_133, %c0_134, %c0_135, %c0_136] : memref<2x4x18x18xf32, #tpu.memory_space<vmem>>, vector<1x4x16x16xf32>
    %118 = vector.shape_cast %117 : vector<1x4x16x16xf32> to vector<4x16x16xf32>
    %119 = vector.shape_cast %118 : vector<4x16x16xf32> to vector<4x256xf32>
    %c0_137 = arith.constant 0 : index
    %c0_138 = arith.constant 0 : index
    %120 = vector.load %arg9[%c0_137, %c0_138] : memref<36x512xf32, #tpu.memory_space<vmem>>, vector<4x256xf32>
    tpu.vector_store %arg9[%c0_137, %c0_138], %119 {strides = array<i32>} : memref<36x512xf32, #tpu.memory_space<vmem>>, vector<4x256xf32>,
    %c0_139 = arith.constant 0 : index
    %c0_140 = arith.constant 0 : index
    %c0_141 = arith.constant 0 : index
    %c1_142 = arith.constant 1 : index
    %121 = vector.load %arg8[%c0_139, %c0_140, %c0_141, %c1_142] : memref<2x4x18x18xf32, #tpu.memory_space<vmem>>, vector<1x4x16x16xf32>
    %122 = vector.shape_cast %121 : vector<1x4x16x16xf32> to vector<4x16x16xf32>
    %123 = vector.shape_cast %122 : vector<4x16x16xf32> to vector<4x256xf32>
    %c4_143 = arith.constant 4 : index
    %c0_144 = arith.constant 0 : index
    %124 = vector.load %arg9[%c4_143, %c0_144] : memref<36x512xf32, #tpu.memory_space<vmem>>, vector<4x256xf32>
    tpu.vector_store %arg9[%c4_143, %c0_144], %123 {strides = array<i32>} : memref<36x512xf32, #tpu.memory_space<vmem>>, vector<4x256xf32>,
    %c0_145 = arith.constant 0 : index
    %c0_146 = arith.constant 0 : index
    %c0_147 = arith.constant 0 : index
    %c2_148 = arith.constant 2 : index
    %125 = vector.load %arg8[%c0_145, %c0_146, %c0_147, %c2_148] : memref<2x4x18x18xf32, #tpu.memory_space<vmem>>, vector<1x4x16x16xf32>
    %126 = vector.shape_cast %125 : vector<1x4x16x16xf32> to vector<4x16x16xf32>
    %127 = vector.shape_cast %126 : vector<4x16x16xf32> to vector<4x256xf32>
    %c8_149 = arith.constant 8 : index
    %c0_150 = arith.constant 0 : index
    %128 = vector.load %arg9[%c8_149, %c0_150] : memref<36x512xf32, #tpu.memory_space<vmem>>, vector<4x256xf32>
    tpu.vector_store %arg9[%c8_149, %c0_150], %127 {strides = array<i32>} : memref<36x512xf32, #tpu.memory_space<vmem>>, vector<4x256xf32>,
    %c0_151 = arith.constant 0 : index
    %c0_152 = arith.constant 0 : index
    %c1_153 = arith.constant 1 : index
    %c0_154 = arith.constant 0 : index
    %129 = vector.load %arg8[%c0_151, %c0_152, %c1_153, %c0_154] : memref<2x4x18x18xf32, #tpu.memory_space<vmem>>, vector<1x4x16x16xf32>
    %130 = vector.shape_cast %129 : vector<1x4x16x16xf32> to vector<4x16x16xf32>
    %131 = vector.shape_cast %130 : vector<4x16x16xf32> to vector<4x256xf32>
    %c12_155 = arith.constant 12 : index
    %c0_156 = arith.constant 0 : index
    %132 = vector.load %arg9[%c12_155, %c0_156] : memref<36x512xf32, #tpu.memory_space<vmem>>, vector<4x256xf32>
    tpu.vector_store %arg9[%c12_155, %c0_156], %131 {strides = array<i32>} : memref<36x512xf32, #tpu.memory_space<vmem>>, vector<4x256xf32>,
    %c0_157 = arith.constant 0 : index
    %c0_158 = arith.constant 0 : index
    %c1_159 = arith.constant 1 : index
    %c1_160 = arith.constant 1 : index
    %133 = vector.load %arg8[%c0_157, %c0_158, %c1_159, %c1_160] : memref<2x4x18x18xf32, #tpu.memory_space<vmem>>, vector<1x4x16x16xf32>
    %134 = vector.shape_cast %133 : vector<1x4x16x16xf32> to vector<4x16x16xf32>
    %135 = vector.shape_cast %134 : vector<4x16x16xf32> to vector<4x256xf32>
    %c16_161 = arith.constant 16 : index
    %c0_162 = arith.constant 0 : index
    %136 = vector.load %arg9[%c16_161, %c0_162] : memref<36x512xf32, #tpu.memory_space<vmem>>, vector<4x256xf32>
    tpu.vector_store %arg9[%c16_161, %c0_162], %135 {strides = array<i32>} : memref<36x512xf32, #tpu.memory_space<vmem>>, vector<4x256xf32>,
    %c0_163 = arith.constant 0 : index
    %c0_164 = arith.constant 0 : index
    %c1_165 = arith.constant 1 : index
    %c2_166 = arith.constant 2 : index
    %137 = vector.load %arg8[%c0_163, %c0_164, %c1_165, %c2_166] : memref<2x4x18x18xf32, #tpu.memory_space<vmem>>, vector<1x4x16x16xf32>
    %138 = vector.shape_cast %137 : vector<1x4x16x16xf32> to vector<4x16x16xf32>
    %139 = vector.shape_cast %138 : vector<4x16x16xf32> to vector<4x256xf32>
    %c20_167 = arith.constant 20 : index
    %c0_168 = arith.constant 0 : index
    %140 = vector.load %arg9[%c20_167, %c0_168] : memref<36x512xf32, #tpu.memory_space<vmem>>, vector<4x256xf32>
    tpu.vector_store %arg9[%c20_167, %c0_168], %139 {strides = array<i32>} : memref<36x512xf32, #tpu.memory_space<vmem>>, vector<4x256xf32>,
    %c0_169 = arith.constant 0 : index
    %c0_170 = arith.constant 0 : index
    %c2_171 = arith.constant 2 : index
    %c0_172 = arith.constant 0 : index
    %141 = vector.load %arg8[%c0_169, %c0_170, %c2_171, %c0_172] : memref<2x4x18x18xf32, #tpu.memory_space<vmem>>, vector<1x4x16x16xf32>
    %142 = vector.shape_cast %141 : vector<1x4x16x16xf32> to vector<4x16x16xf32>
    %143 = vector.shape_cast %142 : vector<4x16x16xf32> to vector<4x256xf32>
    %c24_173 = arith.constant 24 : index
    %c0_174 = arith.constant 0 : index
    %144 = vector.load %arg9[%c24_173, %c0_174] : memref<36x512xf32, #tpu.memory_space<vmem>>, vector<4x256xf32>
    tpu.vector_store %arg9[%c24_173, %c0_174], %143 {strides = array<i32>} : memref<36x512xf32, #tpu.memory_space<vmem>>, vector<4x256xf32>,
    %c0_175 = arith.constant 0 : index
    %c0_176 = arith.constant 0 : index
    %c2_177 = arith.constant 2 : index
    %c1_178 = arith.constant 1 : index
    %145 = vector.load %arg8[%c0_175, %c0_176, %c2_177, %c1_178] : memref<2x4x18x18xf32, #tpu.memory_space<vmem>>, vector<1x4x16x16xf32>
    %146 = vector.shape_cast %145 : vector<1x4x16x16xf32> to vector<4x16x16xf32>
    %147 = vector.shape_cast %146 : vector<4x16x16xf32> to vector<4x256xf32>
    %c28_179 = arith.constant 28 : index
    %c0_180 = arith.constant 0 : index
    %148 = vector.load %arg9[%c28_179, %c0_180] : memref<36x512xf32, #tpu.memory_space<vmem>>, vector<4x256xf32>
    tpu.vector_store %arg9[%c28_179, %c0_180], %147 {strides = array<i32>} : memref<36x512xf32, #tpu.memory_space<vmem>>, vector<4x256xf32>,
    %c0_181 = arith.constant 0 : index
    %c0_182 = arith.constant 0 : index
    %c2_183 = arith.constant 2 : index
    %c2_184 = arith.constant 2 : index
    %149 = vector.load %arg8[%c0_181, %c0_182, %c2_183, %c2_184] : memref<2x4x18x18xf32, #tpu.memory_space<vmem>>, vector<1x4x16x16xf32>
    %150 = vector.shape_cast %149 : vector<1x4x16x16xf32> to vector<4x16x16xf32>
    %151 = vector.shape_cast %150 : vector<4x16x16xf32> to vector<4x256xf32>
    %c32_185 = arith.constant 32 : index
    %c0_186 = arith.constant 0 : index
    %152 = vector.load %arg9[%c32_185, %c0_186] : memref<36x512xf32, #tpu.memory_space<vmem>>, vector<4x256xf32>
    tpu.vector_store %arg9[%c32_185, %c0_186], %151 {strides = array<i32>} : memref<36x512xf32, #tpu.memory_space<vmem>>, vector<4x256xf32>,
    %c1_187 = arith.constant 1 : index
    %c0_188 = arith.constant 0 : index
    %c0_189 = arith.constant 0 : index
    %c0_190 = arith.constant 0 : index
    %153 = vector.load %arg8[%c1_187, %c0_188, %c0_189, %c0_190] : memref<2x4x18x18xf32, #tpu.memory_space<vmem>>, vector<1x4x16x16xf32>
    %154 = vector.shape_cast %153 : vector<1x4x16x16xf32> to vector<4x16x16xf32>
    %155 = vector.shape_cast %154 : vector<4x16x16xf32> to vector<4x256xf32>
    %c0_191 = arith.constant 0 : index
    %c256_192 = arith.constant 256 : index
    %156 = vector.load %arg9[%c0_191, %c256_192] : memref<36x512xf32, #tpu.memory_space<vmem>>, vector<4x256xf32>
    tpu.vector_store %arg9[%c0_191, %c256_192], %155 {strides = array<i32>} : memref<36x512xf32, #tpu.memory_space<vmem>>, vector<4x256xf32>,
    %c1_193 = arith.constant 1 : index
    %c0_194 = arith.constant 0 : index
    %c0_195 = arith.constant 0 : index
    %c1_196 = arith.constant 1 : index
    %157 = vector.load %arg8[%c1_193, %c0_194, %c0_195, %c1_196] : memref<2x4x18x18xf32, #tpu.memory_space<vmem>>, vector<1x4x16x16xf32>
    %158 = vector.shape_cast %157 : vector<1x4x16x16xf32> to vector<4x16x16xf32>
    %159 = vector.shape_cast %158 : vector<4x16x16xf32> to vector<4x256xf32>
    %c4_197 = arith.constant 4 : index
    %c256_198 = arith.constant 256 : index
    %160 = vector.load %arg9[%c4_197, %c256_198] : memref<36x512xf32, #tpu.memory_space<vmem>>, vector<4x256xf32>
    tpu.vector_store %arg9[%c4_197, %c256_198], %159 {strides = array<i32>} : memref<36x512xf32, #tpu.memory_space<vmem>>, vector<4x256xf32>,
    %c1_199 = arith.constant 1 : index
    %c0_200 = arith.constant 0 : index
    %c0_201 = arith.constant 0 : index
    %c2_202 = arith.constant 2 : index
    %161 = vector.load %arg8[%c1_199, %c0_200, %c0_201, %c2_202] : memref<2x4x18x18xf32, #tpu.memory_space<vmem>>, vector<1x4x16x16xf32>
    %162 = vector.shape_cast %161 : vector<1x4x16x16xf32> to vector<4x16x16xf32>
    %163 = vector.shape_cast %162 : vector<4x16x16xf32> to vector<4x256xf32>
    %c8_203 = arith.constant 8 : index
    %c256_204 = arith.constant 256 : index
    %164 = vector.load %arg9[%c8_203, %c256_204] : memref<36x512xf32, #tpu.memory_space<vmem>>, vector<4x256xf32>
    tpu.vector_store %arg9[%c8_203, %c256_204], %163 {strides = array<i32>} : memref<36x512xf32, #tpu.memory_space<vmem>>, vector<4x256xf32>,
    %c1_205 = arith.constant 1 : index
    %c0_206 = arith.constant 0 : index
    %c1_207 = arith.constant 1 : index
    %c0_208 = arith.constant 0 : index
    %165 = vector.load %arg8[%c1_205, %c0_206, %c1_207, %c0_208] : memref<2x4x18x18xf32, #tpu.memory_space<vmem>>, vector<1x4x16x16xf32>
    %166 = vector.shape_cast %165 : vector<1x4x16x16xf32> to vector<4x16x16xf32>
    %167 = vector.shape_cast %166 : vector<4x16x16xf32> to vector<4x256xf32>
    %c12_209 = arith.constant 12 : index
    %c256_210 = arith.constant 256 : index
    %168 = vector.load %arg9[%c12_209, %c256_210] : memref<36x512xf32, #tpu.memory_space<vmem>>, vector<4x256xf32>
    tpu.vector_store %arg9[%c12_209, %c256_210], %167 {strides = array<i32>} : memref<36x512xf32, #tpu.memory_space<vmem>>, vector<4x256xf32>,
    %c1_211 = arith.constant 1 : index
    %c0_212 = arith.constant 0 : index
    %c1_213 = arith.constant 1 : index
    %c1_214 = arith.constant 1 : index
    %169 = vector.load %arg8[%c1_211, %c0_212, %c1_213, %c1_214] : memref<2x4x18x18xf32, #tpu.memory_space<vmem>>, vector<1x4x16x16xf32>
    %170 = vector.shape_cast %169 : vector<1x4x16x16xf32> to vector<4x16x16xf32>
    %171 = vector.shape_cast %170 : vector<4x16x16xf32> to vector<4x256xf32>
    %c16_215 = arith.constant 16 : index
    %c256_216 = arith.constant 256 : index
    %172 = vector.load %arg9[%c16_215, %c256_216] : memref<36x512xf32, #tpu.memory_space<vmem>>, vector<4x256xf32>
    tpu.vector_store %arg9[%c16_215, %c256_216], %171 {strides = array<i32>} : memref<36x512xf32, #tpu.memory_space<vmem>>, vector<4x256xf32>,
    %c1_217 = arith.constant 1 : index
    %c0_218 = arith.constant 0 : index
    %c1_219 = arith.constant 1 : index
    %c2_220 = arith.constant 2 : index
    %173 = vector.load %arg8[%c1_217, %c0_218, %c1_219, %c2_220] : memref<2x4x18x18xf32, #tpu.memory_space<vmem>>, vector<1x4x16x16xf32>
    %174 = vector.shape_cast %173 : vector<1x4x16x16xf32> to vector<4x16x16xf32>
    %175 = vector.shape_cast %174 : vector<4x16x16xf32> to vector<4x256xf32>
    %c20_221 = arith.constant 20 : index
    %c256_222 = arith.constant 256 : index
    %176 = vector.load %arg9[%c20_221, %c256_222] : memref<36x512xf32, #tpu.memory_space<vmem>>, vector<4x256xf32>
    tpu.vector_store %arg9[%c20_221, %c256_222], %175 {strides = array<i32>} : memref<36x512xf32, #tpu.memory_space<vmem>>, vector<4x256xf32>,
    %c1_223 = arith.constant 1 : index
    %c0_224 = arith.constant 0 : index
    %c2_225 = arith.constant 2 : index
    %c0_226 = arith.constant 0 : index
    %177 = vector.load %arg8[%c1_223, %c0_224, %c2_225, %c0_226] : memref<2x4x18x18xf32, #tpu.memory_space<vmem>>, vector<1x4x16x16xf32>
    %178 = vector.shape_cast %177 : vector<1x4x16x16xf32> to vector<4x16x16xf32>
    %179 = vector.shape_cast %178 : vector<4x16x16xf32> to vector<4x256xf32>
    %c24_227 = arith.constant 24 : index
    %c256_228 = arith.constant 256 : index
    %180 = vector.load %arg9[%c24_227, %c256_228] : memref<36x512xf32, #tpu.memory_space<vmem>>, vector<4x256xf32>
    tpu.vector_store %arg9[%c24_227, %c256_228], %179 {strides = array<i32>} : memref<36x512xf32, #tpu.memory_space<vmem>>, vector<4x256xf32>,
    %c1_229 = arith.constant 1 : index
    %c0_230 = arith.constant 0 : index
    %c2_231 = arith.constant 2 : index
    %c1_232 = arith.constant 1 : index
    %181 = vector.load %arg8[%c1_229, %c0_230, %c2_231, %c1_232] : memref<2x4x18x18xf32, #tpu.memory_space<vmem>>, vector<1x4x16x16xf32>
    %182 = vector.shape_cast %181 : vector<1x4x16x16xf32> to vector<4x16x16xf32>
    %183 = vector.shape_cast %182 : vector<4x16x16xf32> to vector<4x256xf32>
    %c28_233 = arith.constant 28 : index
    %c256_234 = arith.constant 256 : index
    %184 = vector.load %arg9[%c28_233, %c256_234] : memref<36x512xf32, #tpu.memory_space<vmem>>, vector<4x256xf32>
    tpu.vector_store %arg9[%c28_233, %c256_234], %183 {strides = array<i32>} : memref<36x512xf32, #tpu.memory_space<vmem>>, vector<4x256xf32>,
    %c1_235 = arith.constant 1 : index
    %c0_236 = arith.constant 0 : index
    %c2_237 = arith.constant 2 : index
    %c2_238 = arith.constant 2 : index
    %185 = vector.load %arg8[%c1_235, %c0_236, %c2_237, %c2_238] : memref<2x4x18x18xf32, #tpu.memory_space<vmem>>, vector<1x4x16x16xf32>
    %186 = vector.shape_cast %185 : vector<1x4x16x16xf32> to vector<4x16x16xf32>
    %187 = vector.shape_cast %186 : vector<4x16x16xf32> to vector<4x256xf32>
    %c32_239 = arith.constant 32 : index
    %c256_240 = arith.constant 256 : index
    %188 = vector.load %arg9[%c32_239, %c256_240] : memref<36x512xf32, #tpu.memory_space<vmem>>, vector<4x256xf32>
    tpu.vector_store %arg9[%c32_239, %c256_240], %187 {strides = array<i32>} : memref<36x512xf32, #tpu.memory_space<vmem>>, vector<4x256xf32>,
    %c0_241 = arith.constant 0 : index
    %c0_242 = arith.constant 0 : index
    %189 = vector.load %arg5[%c0_241, %c0_242] : memref<4x36xf32, #tpu.memory_space<vmem>>, vector<4x36xf32>
    %c0_243 = arith.constant 0 : index
    %c0_244 = arith.constant 0 : index
    %190 = vector.load %arg9[%c0_243, %c0_244] : memref<36x512xf32, #tpu.memory_space<vmem>>, vector<36x512xf32>
    %cst_245 = arith.constant dense<0.000000e+00> : vector<4x512xf32>
    %191 = tpu.matmul %189, %190, %cst_245 {dimension_numbers = #tpu.dot_dimension_numbers<[1], [0], [0], [1], [0, 0, 1, 1], [], []>} : vector<4x36xf32>, vector<36x512xf32>, vector<4x512xf32> -> vector<4x512xf32>
    %c0_246 = arith.constant 0 : index
    %c0_247 = arith.constant 0 : index
    %192 = vector.load %arg6[%c0_246, %c0_247] : memref<4x1xf32, #tpu.memory_space<vmem>>, vector<4x1xf32>
    %193 = vector.broadcast %192 : vector<4x1xf32> to vector<4x512xf32>
    %194 = arith.addf %191, %193 : vector<4x512xf32>
    %cst_248 = arith.constant dense<0.000000e+00> : vector<4xf32>
    %195 = vector.multi_reduction <add>, %194, %cst_248 [1] : vector<4x512xf32> to vector<4xf32>
    %196 = vector.shape_cast %195 : vector<4xf32> to vector<4x1xf32>
    %197 = arith.mulf %194, %194 : vector<4x512xf32>
    %cst_249 = arith.constant dense<0.000000e+00> : vector<4xf32>
    %198 = vector.multi_reduction <add>, %197, %cst_249 [1] : vector<4x512xf32> to vector<4xf32>
    %199 = vector.shape_cast %198 : vector<4xf32> to vector<4x1xf32>
    %cst_250 = arith.constant 0.001953125 : f32
    %200 = vector.broadcast %cst_250 : f32 to vector<4x1xf32>
    %201 = arith.mulf %196, %200 : vector<4x1xf32>
    %cst_251 = arith.constant 0.001953125 : f32
    %202 = vector.broadcast %cst_251 : f32 to vector<4x1xf32>
    %203 = arith.mulf %199, %202 : vector<4x1xf32>
    %204 = arith.mulf %201, %201 : vector<4x1xf32>
    %205 = arith.subf %203, %204 : vector<4x1xf32>
    %cst_252 = arith.constant 9.99999974E-6 : f32
    %206 = vector.broadcast %cst_252 : f32 to vector<4x1xf32>
    %207 = arith.addf %205, %206 : vector<4x1xf32>
    %208 = math.rsqrt %207 : vector<4x1xf32>
    %c0_253 = arith.constant 0 : index
    %c0_254 = arith.constant 0 : index
    %209 = vector.load %arg3[%c0_253, %c0_254] : memref<4x1xf32, #tpu.memory_space<vmem>>, vector<4x1xf32>
    %210 = arith.mulf %208, %209 : vector<4x1xf32>
    %211 = vector.broadcast %201 : vector<4x1xf32> to vector<4x512xf32>
    %212 = arith.subf %194, %211 : vector<4x512xf32>
    %213 = vector.broadcast %210 : vector<4x1xf32> to vector<4x512xf32>
    %214 = arith.mulf %212, %213 : vector<4x512xf32>
    %c0_255 = arith.constant 0 : index
    %c0_256 = arith.constant 0 : index
    %215 = vector.load %arg4[%c0_255, %c0_256] : memref<4x1xf32, #tpu.memory_space<vmem>>, vector<4x1xf32>
    %216 = vector.broadcast %215 : vector<4x1xf32> to vector<4x512xf32>
    %217 = arith.addf %214, %216 : vector<4x512xf32>
    %218 = vector.extract_strided_slice %217 {offsets = [0, 0], sizes = [4, 256], strides = [1, 1]} : vector<4x512xf32> to vector<4x256xf32>
    %c0_257 = arith.constant 0 : index
    %c0_258 = arith.constant 0 : index
    %c0_259 = arith.constant 0 : index
    %219 = vector.load %arg7[%c0_257, %c0_258, %c0_259] : memref<2x4x256xf32, #tpu.memory_space<vmem>>, vector<1x4x256xf32>
    %220 = vector.shape_cast %219 : vector<1x4x256xf32> to vector<4x256xf32>
    %221 = vector.shape_cast %218 : vector<4x256xf32> to vector<1x4x256xf32>
    tpu.vector_store %arg7[%c0_257, %c0_258, %c0_259], %221 {strides = array<i32>} : memref<2x4x256xf32, #tpu.memory_space<vmem>>, vector<1x4x256xf32>,
    %222 = vector.extract_strided_slice %217 {offsets = [0, 256], sizes = [4, 256], strides = [1, 1]} : vector<4x512xf32> to vector<4x256xf32>
    %c1_260 = arith.constant 1 : index
    %c0_261 = arith.constant 0 : index
    %c0_262 = arith.constant 0 : index
    %223 = vector.load %arg7[%c1_260, %c0_261, %c0_262] : memref<2x4x256xf32, #tpu.memory_space<vmem>>, vector<1x4x256xf32>
    %224 = vector.shape_cast %223 : vector<1x4x256xf32> to vector<4x256xf32>
    %225 = vector.shape_cast %222 : vector<4x256xf32> to vector<1x4x256xf32>
    tpu.vector_store %arg7[%c1_260, %c0_261, %c0_262], %225 {strides = array<i32>} : memref<2x4x256xf32, #tpu.memory_space<vmem>>, vector<1x4x256xf32>,
    return
  }
}

</mosaic_0001>

<llo_original>
// kernel: tpu_custom_call.1
$region0: #{tpu_custom_call.1}
  #allocation0 [shape = 'u32[]', space=smem, size = 0x4, offset = 0x4, fixed_abs, tag = 'smem constant byte address 0x4 - core index']
  #allocation1 [shape = 'u32[144,128]{1,0:T(1,128)}', space=vmem, size = 0x12000, scoped, tag = 'internal scratch']
  #allocation2 [shape = 'f32[2,4,18,18]{3,2,1,0:T(8,128)}', space=vmem, size = 0x18000, scoped, tag = 'scratch operand']
  #allocation3 [shape = 'f32[36,512]{1,0:T(8,128)}', space=vmem, size = 0x14000, scoped, tag = 'scratch operand']
  %s0 = inlined_call_operand.hbm [shape: f32[2,4,16,16], index: 0, kind: input, shape index: {}]
  %s1 = inlined_call_operand.vmem [shape: f32[4,36], index: 1, kind: input, shape index: {}]
  %s2 = inlined_call_operand.vmem [shape: f32[4,1], index: 2, kind: input, shape index: {}]
  %s3 = inlined_call_operand.vmem [shape: f32[4,1], index: 3, kind: input, shape index: {}]
  %s4 = inlined_call_operand.vmem [shape: f32[4,1], index: 4, kind: input, shape index: {}]
  %s5 = inlined_call_operand.vmem [shape: f32[4,36], index: 5, kind: input, shape index: {}]
  %s6 = inlined_call_operand.vmem [shape: f32[4,1], index: 6, kind: input, shape index: {}]
  %s7 = inlined_call_operand.hbm [shape: f32[2,4,256], index: 7, kind: output, shape index: {}]
  %s8 = sld [smem:[#allocation0]]
  $region42: #{tpu_custom_call.1} parent=0
    _
  %s10 = ssub.s32 1, %s8
  %s11 = scalar_select 0, %s10, %s8
  $region1: #{tpu_custom_call.1} parent=0
    #allocation4 [shape = 'u8[65536]{0}', space=vmem, size = 0x10000, scoped, tag = 'input window, operand 0, single buffered']
    #allocation5 [shape = 's32[1]{0}', space=sflag, size = 0x4, scoped, tag = 'scoped memory for tpu_custom_call.1']
    #allocation6 [shape = 's32[1]{0}', space=sflag, size = 0x4, scoped, tag = 'scoped memory for tpu_custom_call.1']
    #allocation7 [shape = 'u8[8192]{0}', space=vmem, size = 0x2000, scoped, tag = 'output window, operand 0, single buffered']
    %12 = vsyncpa [#allocation5], 0
    %13 = vsyncpa [#allocation6], 0
    // Predicated region
    $region2: #{tpu_custom_call.1} parent=1 // pred_check
      _
    $region3: #{tpu_custom_call.1} parent=1 // pred_check_branch
      %15 = sbr.rel (0) target = $region5
    $region4: #{tpu_custom_call.1} parent=1 // pred_region
      %s17 = ssub.s32 2048, 2048
      %18 = vsyncadd [#allocation5], %s17
      %s19 = sshll.u32 [#allocation4], 4
      %s20 = int_to_ptr.vmem [resolvable:$true] %s19
      %25 = dma.hbm_to_vmem [thread:$0]  %s0, 2048, %s20, [#allocation5], 128, 128, 8
    $region5: #{tpu_custom_call.1} parent=1 // pred_fallthru
      _
    // Predicated region
    $region6: #{tpu_custom_call.1} parent=1 // pred_check
      _
    $region7: #{tpu_custom_call.1} parent=1 // pred_check_branch
      %27 = sbr.rel (0) target = $region9
    $region8: #{tpu_custom_call.1} parent=1 // pred_region
      _
    $region9: #{tpu_custom_call.1} parent=1 // pred_fallthru
      _
    // Predicated region
    $region10: #{tpu_custom_call.1} parent=1 // pred_check
      _
    $region11: #{tpu_custom_call.1} parent=1 // pred_check_branch
      %29 = sbr.rel (0) target = $region13
    $region12: #{tpu_custom_call.1} parent=1 // pred_region
      _
    $region13: #{tpu_custom_call.1} parent=1 // pred_fallthru
      _
    // Predicated region
    $region14: #{tpu_custom_call.1} parent=1 // pred_check
      _
    $region15: #{tpu_custom_call.1} parent=1 // pred_check_branch
      %31 = sbr.rel (0) target = $region17
    $region16: #{tpu_custom_call.1} parent=1 // pred_region
      _
    $region17: #{tpu_custom_call.1} parent=1 // pred_fallthru
      _
    // Predicated region
    $region18: #{tpu_custom_call.1} parent=1 // pred_check
      _
    $region19: #{tpu_custom_call.1} parent=1 // pred_check_branch
      %33 = sbr.rel (0) target = $region21
    $region20: #{tpu_custom_call.1} parent=1 // pred_region
      _
    $region21: #{tpu_custom_call.1} parent=1 // pred_fallthru
      _
    // Predicated region
    $region22: #{tpu_custom_call.1} parent=1 // pred_check
      _
    $region23: #{tpu_custom_call.1} parent=1 // pred_check_branch
      %35 = sbr.rel (0) target = $region25
    $region24: #{tpu_custom_call.1} parent=1 // pred_region
      _
    $region25: #{tpu_custom_call.1} parent=1 // pred_fallthru
      _
    // Predicated region
    $region26: #{tpu_custom_call.1} parent=1 // pred_check
      _
    $region27: #{tpu_custom_call.1} parent=1 // pred_check_branch
      %37 = sbr.rel (0) target = $region29
    $region28: #{tpu_custom_call.1} parent=1 // pred_region
      _
    $region29: #{tpu_custom_call.1} parent=1 // pred_fallthru
      _
    // Predicated region
    $region30: #{tpu_custom_call.1} parent=1 // pred_check
      _
    $region31: #{tpu_custom_call.1} parent=1 // pred_check_branch
      %39 = sbr.rel (0) target = $region33
    $region32: #{tpu_custom_call.1} parent=1 // pred_region
      %40 = dma.done [#allocation5], 2048
    $region33: #{tpu_custom_call.1} parent=1 // pred_fallthru
      _
    %vm41 = vcmask 146432
    %42 = vst.msk [vmem:[#allocation2] sm:$0xff] %vm41, 0.0
    %43 = vst.msk [vmem:[#allocation2 + $0x8] sm:$0xff] %vm41, 0.0
    %vm44 = vcmask 140288
    %45 = vst.msk [vmem:[#allocation2 + $0x10] sm:$0x3] %vm44, 0.0
    %46 = vst.msk [vmem:[#allocation2 + $0x18] sm:$0xff] %vm41, 0.0
    %47 = vst.msk [vmem:[#allocation2 + $0x20] sm:$0xff] %vm41, 0.0
    %48 = vst.msk [vmem:[#allocation2 + $0x28] sm:$0x3] %vm44, 0.0
    %49 = vst.msk [vmem:[#allocation2 + $0x30] sm:$0xff] %vm41, 0.0
    %50 = vst.msk [vmem:[#allocation2 + $0x38] sm:$0xff] %vm41, 0.0
    %51 = vst.msk [vmem:[#allocation2 + $0x40] sm:$0x3] %vm44, 0.0
    %52 = vst.msk [vmem:[#allocation2 + $0x48] sm:$0xff] %vm41, 0.0
    %53 = vst.msk [vmem:[#allocation2 + $0x50] sm:$0xff] %vm41, 0.0
    %54 = vst.msk [vmem:[#allocation2 + $0x58] sm:$0x3] %vm44, 0.0
    %55 = vst.msk [vmem:[#allocation2 + $0x60] sm:$0xff] %vm41, 0.0
    %56 = vst.msk [vmem:[#allocation2 + $0x68] sm:$0xff] %vm41, 0.0
    %57 = vst.msk [vmem:[#allocation2 + $0x70] sm:$0x3] %vm44, 0.0
    %58 = vst.msk [vmem:[#allocation2 + $0x78] sm:$0xff] %vm41, 0.0
    %59 = vst.msk [vmem:[#allocation2 + $0x80] sm:$0xff] %vm41, 0.0
    %60 = vst.msk [vmem:[#allocation2 + $0x88] sm:$0x3] %vm44, 0.0
    %61 = vst.msk [vmem:[#allocation2 + $0x90] sm:$0xff] %vm41, 0.0
    %62 = vst.msk [vmem:[#allocation2 + $0x98] sm:$0xff] %vm41, 0.0
    %63 = vst.msk [vmem:[#allocation2 + $0xa0] sm:$0x3] %vm44, 0.0
    %64 = vst.msk [vmem:[#allocation2 + $0xa8] sm:$0xff] %vm41, 0.0
    %65 = vst.msk [vmem:[#allocation2 + $0xb0] sm:$0xff] %vm41, 0.0
    %66 = vst.msk [vmem:[#allocation2 + $0xb8] sm:$0x3] %vm44, 0.0
    %v67 = vld [vmem:[#allocation4] sm:$0xff]
    %v68 = vld [vmem:[#allocation4 + $0x8] sm:$0xff]
    %v69 = vld [vmem:[#allocation4 + $0x10] sm:$0xff]
    %v70 = vld [vmem:[#allocation4 + $0x18] sm:$0xff]
    %v71 = vld [vmem:[#allocation4 + $0x20] sm:$0xff]
    %v72 = vld [vmem:[#allocation4 + $0x28] sm:$0xff]
    %v73 = vld [vmem:[#allocation4 + $0x30] sm:$0xff]
    %v74 = vld [vmem:[#allocation4 + $0x38] sm:$0xff]
    %v75 = vld [vmem:[#allocation4 + $0x40] sm:$0xff]
    %v76 = vld [vmem:[#allocation4 + $0x48] sm:$0xff]
    %v77 = vld [vmem:[#allocation4 + $0x50] sm:$0xff]
    %v78 = vld [vmem:[#allocation4 + $0x58] sm:$0xff]
    %v79 = vld [vmem:[#allocation4 + $0x60] sm:$0xff]
    %v80 = vld [vmem:[#allocation4 + $0x68] sm:$0xff]
    %v81 = vld [vmem:[#allocation4 + $0x70] sm:$0xff]
    %v82 = vld [vmem:[#allocation4 + $0x78] sm:$0xff]
    %99 = vrot.lane.b32.xlu0 %v67, 1
    %v100 = vpop.permute.xlu0 %99
    %101 = vrot.lane.b32.xlu0 %v68, 1
    %v102 = vpop.permute.xlu0 %101
    %103 = vrot.lane.b32.xlu0 %v69, 1
    %v104 = vpop.permute.xlu0 %103
    %105 = vrot.lane.b32.xlu0 %v70, 1
    %v106 = vpop.permute.xlu0 %105
    %107 = vrot.lane.b32.xlu0 %v71, 1
    %v108 = vpop.permute.xlu0 %107
    %109 = vrot.lane.b32.xlu0 %v72, 1
    %v110 = vpop.permute.xlu0 %109
    %111 = vrot.lane.b32.xlu0 %v73, 1
    %v112 = vpop.permute.xlu0 %111
    %113 = vrot.lane.b32.xlu0 %v74, 1
    %v114 = vpop.permute.xlu0 %113
    %115 = vrot.lane.b32.xlu0 %v75, 1
    %v116 = vpop.permute.xlu0 %115
    %117 = vrot.lane.b32.xlu0 %v76, 1
    %v118 = vpop.permute.xlu0 %117
    %119 = vrot.lane.b32.xlu0 %v77, 1
    %v120 = vpop.permute.xlu0 %119
    %121 = vrot.lane.b32.xlu0 %v78, 1
    %v122 = vpop.permute.xlu0 %121
    %123 = vrot.lane.b32.xlu0 %v79, 1
    %v124 = vpop.permute.xlu0 %123
    %125 = vrot.lane.b32.xlu0 %v80, 1
    %v126 = vpop.permute.xlu0 %125
    %127 = vrot.lane.b32.xlu0 %v81, 1
    %v128 = vpop.permute.xlu0 %127
    %129 = vrot.lane.b32.xlu0 %v82, 1
    %v130 = vpop.permute.xlu0 %129
    %vm147 = vcmask 138248
    %148 = vst.msk [vmem:[#allocation2 + $0x1] sm:$0xff] %vm147, %v100
    %149 = vst.msk [vmem:[#allocation2 + $0x9] sm:$0xff] %vm147, %v102
    %150 = vst.msk [vmem:[#allocation2 + $0x19] sm:$0xff] %vm147, %v104
    %151 = vst.msk [vmem:[#allocation2 + $0x21] sm:$0xff] %vm147, %v106
    %152 = vst.msk [vmem:[#allocation2 + $0x31] sm:$0xff] %vm147, %v108
    %153 = vst.msk [vmem:[#allocation2 + $0x39] sm:$0xff] %vm147, %v110
    %154 = vst.msk [vmem:[#allocation2 + $0x49] sm:$0xff] %vm147, %v112
    %155 = vst.msk [vmem:[#allocation2 + $0x51] sm:$0xff] %vm147, %v114
    %156 = vst.msk [vmem:[#allocation2 + $0x61] sm:$0xff] %vm147, %v116
    %157 = vst.msk [vmem:[#allocation2 + $0x69] sm:$0xff] %vm147, %v118
    %158 = vst.msk [vmem:[#allocation2 + $0x79] sm:$0xff] %vm147, %v120
    %159 = vst.msk [vmem:[#allocation2 + $0x81] sm:$0xff] %vm147, %v122
    %160 = vst.msk [vmem:[#allocation2 + $0x91] sm:$0xff] %vm147, %v124
    %161 = vst.msk [vmem:[#allocation2 + $0x99] sm:$0xff] %vm147, %v126
    %162 = vst.msk [vmem:[#allocation2 + $0xa9] sm:$0xff] %vm147, %v128
    %163 = vst.msk [vmem:[#allocation2 + $0xb1] sm:$0xff] %vm147, %v130
    %v164 = vld [vmem:[#allocation2] sm:$0xff]
    %v165 = vld [vmem:[#allocation2 + $0x8] sm:$0xff]
    %v166 = vld [vmem:[#allocation2 + $0x18] sm:$0xff]
    %v167 = vld [vmem:[#allocation2 + $0x20] sm:$0xff]
    %v168 = vld [vmem:[#allocation2 + $0x30] sm:$0xff]
    %v169 = vld [vmem:[#allocation2 + $0x38] sm:$0xff]
    %v170 = vld [vmem:[#allocation2 + $0x48] sm:$0xff]
    %v171 = vld [vmem:[#allocation2 + $0x50] sm:$0xff]
    %v172 = vcombine.low %v164, %v168
    %v173 = vcombine.high %v164, %v168
    %v175 = vunpack.c.l.s4 1983009808
    %v176 = vunpack.c.0.s8 %v175
    %v177 = vlaneseq
    %v178 = vshrl.u32 %v177, 7
    %v179 = vsub.s32 %v176, %v178
    %v180 = vrot.slane %v172, %v179
    %v182 = vunpack.c.l.s4 1983009808
    %v183 = vunpack.c.0.s8 %v182
    %v184 = vlaneseq
    %v185 = vshrl.u32 %v184, 7
    %v186 = vsub.s32 %v183, %v185
    %v187 = vrot.slane %v173, %v186
    %v188 = vcombine.low %v166, %v170
    %v189 = vcombine.high %v166, %v170
    %v191 = vunpack.c.l.s4 1983009808
    %v192 = vunpack.c.0.s8 %v191
    %v193 = vlaneseq
    %v194 = vshrl.u32 %v193, 7
    %v195 = vsub.s32 %v192, %v194
    %v196 = vrot.slane %v188, %v195
    %v198 = vunpack.c.l.s4 1983009808
    %v199 = vunpack.c.0.s8 %v198
    %v200 = vlaneseq
    %v201 = vshrl.u32 %v200, 7
    %v202 = vsub.s32 %v199, %v201
    %v203 = vrot.slane %v189, %v202
    %v204 = vcombine.low %v180, %v196
    %v205 = vcombine.high %v180, %v196
    %v207 = vunpack.c.l.s4 1934713408
    %v208 = vunpack.c.0.s8 %v207
    %v209 = vlaneseq
    %v210 = vshrl.u32 %v209, 7
    %v211 = vsub.s32 %v208, %v210
    %v212 = vrot.slane %v204, %v211
    %v214 = vunpack.c.l.s4 1934713408
    %v215 = vunpack.c.0.s8 %v214
    %v216 = vlaneseq
    %v217 = vshrl.u32 %v216, 7
    %v218 = vsub.s32 %v215, %v217
    %v219 = vrot.slane %v205, %v218
    %v220 = vcombine.low %v187, %v203
    %v221 = vcombine.high %v187, %v203
    %v223 = vunpack.c.l.s4 1934713408
    %v224 = vunpack.c.0.s8 %v223
    %v225 = vlaneseq
    %v226 = vshrl.u32 %v225, 7
    %v227 = vsub.s32 %v224, %v226
    %v228 = vrot.slane %v220, %v227
    %v230 = vunpack.c.l.s4 1934713408
    %v231 = vunpack.c.0.s8 %v230
    %v232 = vlaneseq
    %v233 = vshrl.u32 %v232, 7
    %v234 = vsub.s32 %v231, %v233
    %v235 = vrot.slane %v221, %v234
    %v236 = vcombine.high %v212, 0.0
    %v237 = vcombine.high %v219, 0.0
    %v238 = vcombine.high %v228, 0.0
    %v239 = vcombine.high %v235, 0.0
    %v240 = vcombine.low %v165, %v169
    %v241 = vcombine.high %v165, %v169
    %v243 = vunpack.c.l.s4 1983009808
    %v244 = vunpack.c.0.s8 %v243
    %v245 = vlaneseq
    %v246 = vshrl.u32 %v245, 7
    %v247 = vsub.s32 %v244, %v246
    %v248 = vrot.slane %v240, %v247
    %v250 = vunpack.c.l.s4 1983009808
    %v251 = vunpack.c.0.s8 %v250
    %v252 = vlaneseq
    %v253 = vshrl.u32 %v252, 7
    %v254 = vsub.s32 %v251, %v253
    %v255 = vrot.slane %v241, %v254
    %v256 = vcombine.low %v167, %v171
    %v257 = vcombine.high %v167, %v171
    %v259 = vunpack.c.l.s4 1983009808
    %v260 = vunpack.c.0.s8 %v259
    %v261 = vlaneseq
    %v262 = vshrl.u32 %v261, 7
    %v263 = vsub.s32 %v260, %v262
    %v264 = vrot.slane %v256, %v263
    %v266 = vunpack.c.l.s4 1983009808
    %v267 = vunpack.c.0.s8 %v266
    %v268 = vlaneseq
    %v269 = vshrl.u32 %v268, 7
    %v270 = vsub.s32 %v267, %v269
    %v271 = vrot.slane %v257, %v270
    %v272 = vcombine.low %v248, %v264
    %v273 = vcombine.high %v248, %v264
    %v275 = vunpack.c.l.s4 1934713408
    %v276 = vunpack.c.0.s8 %v275
    %v277 = vlaneseq
    %v278 = vshrl.u32 %v277, 7
    %v279 = vsub.s32 %v276, %v278
    %v280 = vrot.slane %v272, %v279
    %v282 = vunpack.c.l.s4 1934713408
    %v283 = vunpack.c.0.s8 %v282
    %v284 = vlaneseq
    %v285 = vshrl.u32 %v284, 7
    %v286 = vsub.s32 %v283, %v285
    %v287 = vrot.slane %v273, %v286
    %v288 = vcombine.low %v255, %v271
    %v289 = vcombine.high %v255, %v271
    %v291 = vunpack.c.l.s4 1934713408
    %v292 = vunpack.c.0.s8 %v291
    %v293 = vlaneseq
    %v294 = vshrl.u32 %v293, 7
    %v295 = vsub.s32 %v292, %v294
    %v296 = vrot.slane %v288, %v295
    %v298 = vunpack.c.l.s4 1934713408
    %v299 = vunpack.c.0.s8 %v298
    %v300 = vlaneseq
    %v301 = vshrl.u32 %v300, 7
    %v302 = vsub.s32 %v299, %v301
    %v303 = vrot.slane %v289, %v302
    %v304 = vcombine.high %v280, 0.0
    %v305 = vcombine.high %v287, 0.0
    %v306 = vcombine.high %v296, 0.0
    %v307 = vcombine.high %v303, 0.0
    %309 = vrot.lane.b32.xlu0 %v236, 16
    %v310 = vpop.permute.xlu0 %309
    %313 = vrot.lane.b32.xlu0 %v219, 32
    %v314 = vpop.permute.xlu0 %313
    %317 = vrot.lane.b32.xlu0 %v237, 48
    %v318 = vpop.permute.xlu0 %317
    %321 = vrot.lane.b32.xlu0 %v228, 64
    %v322 = vpop.permute.xlu0 %321
    %325 = vrot.lane.b32.xlu0 %v238, 80
    %v326 = vpop.permute.xlu0 %325
    %329 = vrot.lane.b32.xlu0 %v235, 96
    %v330 = vpop.permute.xlu0 %329
    %333 = vrot.lane.b32.xlu0 %v239, 112
    %v334 = vpop.permute.xlu0 %333
    %337 = vrot.lane.b32.xlu0 %v304, 16
    %v338 = vpop.permute.xlu0 %337
    %341 = vrot.lane.b32.xlu0 %v287, 32
    %v342 = vpop.permute.xlu0 %341
    %345 = vrot.lane.b32.xlu0 %v305, 48
    %v346 = vpop.permute.xlu0 %345
    %349 = vrot.lane.b32.xlu0 %v296, 64
    %v350 = vpop.permute.xlu0 %349
    %353 = vrot.lane.b32.xlu0 %v306, 80
    %v354 = vpop.permute.xlu0 %353
    %357 = vrot.lane.b32.xlu0 %v303, 96
    %v358 = vpop.permute.xlu0 %357
    %361 = vrot.lane.b32.xlu0 %v307, 112
    %v362 = vpop.permute.xlu0 %361
    %vm364 = vcmask 130048
    %v365 = vsel %vm364, %v212, %v310
    %vm366 = vcmask 261120
    %v367 = vsel %vm366, %v365, %v314
    %vm368 = vcmask 392192
    %v369 = vsel %vm368, %v367, %v318
    %vm370 = vcmask 523264
    %v371 = vsel %vm370, %v369, %v322
    %vm372 = vcmask 654336
    %v373 = vsel %vm372, %v371, %v326
    %vm374 = vcmask 785408
    %v375 = vsel %vm374, %v373, %v330
    %vm376 = vcmask 916480
    %v377 = vsel %vm376, %v375, %v334
    %v378 = vsel %vm364, %v280, %v338
    %v379 = vsel %vm366, %v378, %v342
    %v380 = vsel %vm368, %v379, %v346
    %v381 = vsel %vm370, %v380, %v350
    %v382 = vsel %vm372, %v381, %v354
    %v383 = vsel %vm374, %v382, %v358
    %v384 = vsel %vm376, %v383, %v362
    %385 = vst [vmem:[#allocation3] sm:$0xf] %v377
    %386 = vst [vmem:[#allocation3 + $0x8] sm:$0xf] %v384
    %v387 = vld [vmem:[#allocation2] sm:$0xff]
    %v388 = vld [vmem:[#allocation2 + $0x8] sm:$0xff]
    %v389 = vld [vmem:[#allocation2 + $0x18] sm:$0xff]
    %v390 = vld [vmem:[#allocation2 + $0x20] sm:$0xff]
    %v391 = vld [vmem:[#allocation2 + $0x30] sm:$0xff]
    %v392 = vld [vmem:[#allocation2 + $0x38] sm:$0xff]
    %v393 = vld [vmem:[#allocation2 + $0x48] sm:$0xff]
    %v394 = vld [vmem:[#allocation2 + $0x50] sm:$0xff]
    %403 = vrot.lane.b32.xlu0 %v387, 127
    %v404 = vpop.permute.xlu0 %403
    %405 = vrot.lane.b32.xlu0 %v388, 127
    %v406 = vpop.permute.xlu0 %405
    %407 = vrot.lane.b32.xlu0 %v389, 127
    %v408 = vpop.permute.xlu0 %407
    %409 = vrot.lane.b32.xlu0 %v390, 127
    %v410 = vpop.permute.xlu0 %409
    %411 = vrot.lane.b32.xlu0 %v391, 127
    %v412 = vpop.permute.xlu0 %411
    %413 = vrot.lane.b32.xlu0 %v392, 127
    %v414 = vpop.permute.xlu0 %413
    %415 = vrot.lane.b32.xlu0 %v393, 127
    %v416 = vpop.permute.xlu0 %415
    %417 = vrot.lane.b32.xlu0 %v394, 127
    %v418 = vpop.permute.xlu0 %417
    %v427 = vcombine.low %v404, %v412
    %v428 = vcombine.high %v404, %v412
    %v430 = vunpack.c.l.s4 1983009808
    %v431 = vunpack.c.0.s8 %v430
    %v432 = vlaneseq
    %v433 = vshrl.u32 %v432, 7
    %v434 = vsub.s32 %v431, %v433
    %v435 = vrot.slane %v427, %v434
    %v437 = vunpack.c.l.s4 1983009808
    %v438 = vunpack.c.0.s8 %v437
    %v439 = vlaneseq
    %v440 = vshrl.u32 %v439, 7
    %v441 = vsub.s32 %v438, %v440
    %v442 = vrot.slane %v428, %v441
    %v443 = vcombine.low %v408, %v416
    %v444 = vcombine.high %v408, %v416
    %v446 = vunpack.c.l.s4 1983009808
    %v447 = vunpack.c.0.s8 %v446
    %v448 = vlaneseq
    %v449 = vshrl.u32 %v448, 7
    %v450 = vsub.s32 %v447, %v449
    %v451 = vrot.slane %v443, %v450
    %v453 = vunpack.c.l.s4 1983009808
    %v454 = vunpack.c.0.s8 %v453
    %v455 = vlaneseq
    %v456 = vshrl.u32 %v455, 7
    %v457 = vsub.s32 %v454, %v456
    %v458 = vrot.slane %v444, %v457
    %v459 = vcombine.low %v435, %v451
    %v460 = vcombine.high %v435, %v451
    %v462 = vunpack.c.l.s4 1934713408
    %v463 = vunpack.c.0.s8 %v462
    %v464 = vlaneseq
    %v465 = vshrl.u32 %v464, 7
    %v466 = vsub.s32 %v463, %v465
    %v467 = vrot.slane %v459, %v466
    %v469 = vunpack.c.l.s4 1934713408
    %v470 = vunpack.c.0.s8 %v469
    %v471 = vlaneseq
    %v472 = vshrl.u32 %v471, 7
    %v473 = vsub.s32 %v470, %v472
    %v474 = vrot.slane %v460, %v473
    %v475 = vcombine.low %v442, %v458
    %v476 = vcombine.high %v442, %v458
    %v478 = vunpack.c.l.s4 1934713408
    %v479 = vunpack.c.0.s8 %v478
    %v480 = vlaneseq
    %v481 = vshrl.u32 %v480, 7
    %v482 = vsub.s32 %v479, %v481
    %v483 = vrot.slane %v475, %v482
    %v485 = vunpack.c.l.s4 1934713408
    %v486 = vunpack.c.0.s8 %v485
    %v487 = vlaneseq
    %v488 = vshrl.u32 %v487, 7
    %v489 = vsub.s32 %v486, %v488
    %v490 = vrot.slane %v476, %v489
    %v491 = vcombine.high %v467, 0.0
    %v492 = vcombine.high %v474, 0.0
    %v493 = vcombine.high %v483, 0.0
    %v494 = vcombine.high %v490, 0.0
    %v495 = vcombine.low %v406, %v414
    %v496 = vcombine.high %v406, %v414
    %v498 = vunpack.c.l.s4 1983009808
    %v499 = vunpack.c.0.s8 %v498
    %v500 = vlaneseq
    %v501 = vshrl.u32 %v500, 7
    %v502 = vsub.s32 %v499, %v501
    %v503 = vrot.slane %v495, %v502
    %v505 = vunpack.c.l.s4 1983009808
    %v506 = vunpack.c.0.s8 %v505
    %v507 = vlaneseq
    %v508 = vshrl.u32 %v507, 7
    %v509 = vsub.s32 %v506, %v508
    %v510 = vrot.slane %v496, %v509
    %v511 = vcombine.low %v410, %v418
    %v512 = vcombine.high %v410, %v418
    %v514 = vunpack.c.l.s4 1983009808
    %v515 = vunpack.c.0.s8 %v514
    %v516 = vlaneseq
    %v517 = vshrl.u32 %v516, 7
    %v518 = vsub.s32 %v515, %v517
    %v519 = vrot.slane %v511, %v518
    %v521 = vunpack.c.l.s4 1983009808
    %v522 = vunpack.c.0.s8 %v521
    %v523 = vlaneseq
    %v524 = vshrl.u32 %v523, 7
    %v525 = vsub.s32 %v522, %v524
    %v526 = vrot.slane %v512, %v525
    %v527 = vcombine.low %v503, %v519
    %v528 = vcombine.high %v503, %v519
    %v530 = vunpack.c.l.s4 1934713408
    %v531 = vunpack.c.0.s8 %v530
    %v532 = vlaneseq
    %v533 = vshrl.u32 %v532, 7
    %v534 = vsub.s32 %v531, %v533
    %v535 = vrot.slane %v527, %v534
    %v537 = vunpack.c.l.s4 1934713408
    %v538 = vunpack.c.0.s8 %v537
    %v539 = vlaneseq
    %v540 = vshrl.u32 %v539, 7
    %v541 = vsub.s32 %v538, %v540
    %v542 = vrot.slane %v528, %v541
    %v543 = vcombine.low %v510, %v526
    %v544 = vcombine.high %v510, %v526
    %v546 = vunpack.c.l.s4 1934713408
    %v547 = vunpack.c.0.s8 %v546
    %v548 = vlaneseq
    %v549 = vshrl.u32 %v548, 7
    %v550 = vsub.s32 %v547, %v549
    %v551 = vrot.slane %v543, %v550
    %v553 = vunpack.c.l.s4 1934713408
    %v554 = vunpack.c.0.s8 %v553
    %v555 = vlaneseq
    %v556 = vshrl.u32 %v555, 7
    %v557 = vsub.s32 %v554, %v556
    %v558 = vrot.slane %v544, %v557
    %v559 = vcombine.high %v535, 0.0
    %v560 = vcombine.high %v542, 0.0
    %v561 = vcombine.high %v551, 0.0
    %v562 = vcombine.high %v558, 0.0
    %564 = vrot.lane.b32.xlu0 %v491, 16
    %v565 = vpop.permute.xlu0 %564
    %568 = vrot.lane.b32.xlu0 %v474, 32
    %v569 = vpop.permute.xlu0 %568
    %572 = vrot.lane.b32.xlu0 %v492, 48
    %v573 = vpop.permute.xlu0 %572
    %576 = vrot.lane.b32.xlu0 %v483, 64
    %v577 = vpop.permute.xlu0 %576
    %580 = vrot.lane.b32.xlu0 %v493, 80
    %v581 = vpop.permute.xlu0 %580
    %584 = vrot.lane.b32.xlu0 %v490, 96
    %v585 = vpop.permute.xlu0 %584
    %588 = vrot.lane.b32.xlu0 %v494, 112
    %v589 = vpop.permute.xlu0 %588
    %592 = vrot.lane.b32.xlu0 %v559, 16
    %v593 = vpop.permute.xlu0 %592
    %596 = vrot.lane.b32.xlu0 %v542, 32
    %v597 = vpop.permute.xlu0 %596
    %600 = vrot.lane.b32.xlu0 %v560, 48
    %v601 = vpop.permute.xlu0 %600
    %604 = vrot.lane.b32.xlu0 %v551, 64
    %v605 = vpop.permute.xlu0 %604
    %608 = vrot.lane.b32.xlu0 %v561, 80
    %v609 = vpop.permute.xlu0 %608
    %612 = vrot.lane.b32.xlu0 %v558, 96
    %v613 = vpop.permute.xlu0 %612
    %616 = vrot.lane.b32.xlu0 %v562, 112
    %v617 = vpop.permute.xlu0 %616
    %v619 = vsel %vm364, %v467, %v565
    %v620 = vsel %vm366, %v619, %v569
    %v621 = vsel %vm368, %v620, %v573
    %v622 = vsel %vm370, %v621, %v577
    %v623 = vsel %vm372, %v622, %v581
    %v624 = vsel %vm374, %v623, %v585
    %v625 = vsel %vm376, %v624, %v589
    %v626 = vsel %vm364, %v535, %v593
    %v627 = vsel %vm366, %v626, %v597
    %v628 = vsel %vm368, %v627, %v601
    %v629 = vsel %vm370, %v628, %v605
    %v630 = vsel %vm372, %v629, %v609
    %v631 = vsel %vm374, %v630, %v613
    %v632 = vsel %vm376, %v631, %v617
    %v635 = vrot.slane %v625, 4
    %v636 = vrot.slane %v632, 4
    %639 = vst [vmem:[#allocation3] sm:$0xf0] %v635
    %640 = vst [vmem:[#allocation3 + $0x8] sm:$0xf0] %v636
    %v641 = vld [vmem:[#allocation2] sm:$0xff]
    %v642 = vld [vmem:[#allocation2 + $0x8] sm:$0xff]
    %v643 = vld [vmem:[#allocation2 + $0x18] sm:$0xff]
    %v644 = vld [vmem:[#allocation2 + $0x20] sm:$0xff]
    %v645 = vld [vmem:[#allocation2 + $0x30] sm:$0xff]
    %v646 = vld [vmem:[#allocation2 + $0x38] sm:$0xff]
    %v647 = vld [vmem:[#allocation2 + $0x48] sm:$0xff]
    %v648 = vld [vmem:[#allocation2 + $0x50] sm:$0xff]
    %657 = vrot.lane.b32.xlu0 %v641, 126
    %v658 = vpop.permute.xlu0 %657
    %659 = vrot.lane.b32.xlu0 %v642, 126
    %v660 = vpop.permute.xlu0 %659
    %661 = vrot.lane.b32.xlu0 %v643, 126
    %v662 = vpop.permute.xlu0 %661
    %663 = vrot.lane.b32.xlu0 %v644, 126
    %v664 = vpop.permute.xlu0 %663
    %665 = vrot.lane.b32.xlu0 %v645, 126
    %v666 = vpop.permute.xlu0 %665
    %667 = vrot.lane.b32.xlu0 %v646, 126
    %v668 = vpop.permute.xlu0 %667
    %669 = vrot.lane.b32.xlu0 %v647, 126
    %v670 = vpop.permute.xlu0 %669
    %671 = vrot.lane.b32.xlu0 %v648, 126
    %v672 = vpop.permute.xlu0 %671
    %v681 = vcombine.low %v658, %v666
    %v682 = vcombine.high %v658, %v666
    %v684 = vunpack.c.l.s4 1983009808
    %v685 = vunpack.c.0.s8 %v684
    %v686 = vlaneseq
    %v687 = vshrl.u32 %v686, 7
    %v688 = vsub.s32 %v685, %v687
    %v689 = vrot.slane %v681, %v688
    %v691 = vunpack.c.l.s4 1983009808
    %v692 = vunpack.c.0.s8 %v691
    %v693 = vlaneseq
    %v694 = vshrl.u32 %v693, 7
    %v695 = vsub.s32 %v692, %v694
    %v696 = vrot.slane %v682, %v695
    %v697 = vcombine.low %v662, %v670
    %v698 = vcombine.high %v662, %v670
    %v700 = vunpack.c.l.s4 1983009808
    %v701 = vunpack.c.0.s8 %v700
    %v702 = vlaneseq
    %v703 = vshrl.u32 %v702, 7
    %v704 = vsub.s32 %v701, %v703
    %v705 = vrot.slane %v697, %v704
    %v707 = vunpack.c.l.s4 1983009808
    %v708 = vunpack.c.0.s8 %v707
    %v709 = vlaneseq
    %v710 = vshrl.u32 %v709, 7
    %v711 = vsub.s32 %v708, %v710
    %v712 = vrot.slane %v698, %v711
    %v713 = vcombine.low %v689, %v705
    %v714 = vcombine.high %v689, %v705
    %v716 = vunpack.c.l.s4 1934713408
    %v717 = vunpack.c.0.s8 %v716
    %v718 = vlaneseq
    %v719 = vshrl.u32 %v718, 7
    %v720 = vsub.s32 %v717, %v719
    %v721 = vrot.slane %v713, %v720
    %v723 = vunpack.c.l.s4 1934713408
    %v724 = vunpack.c.0.s8 %v723
    %v725 = vlaneseq
    %v726 = vshrl.u32 %v725, 7
    %v727 = vsub.s32 %v724, %v726
    %v728 = vrot.slane %v714, %v727
    %v729 = vcombine.low %v696, %v712
    %v730 = vcombine.high %v696, %v712
    %v732 = vunpack.c.l.s4 1934713408
    %v733 = vunpack.c.0.s8 %v732
    %v734 = vlaneseq
    %v735 = vshrl.u32 %v734, 7
    %v736 = vsub.s32 %v733, %v735
    %v737 = vrot.slane %v729, %v736
    %v739 = vunpack.c.l.s4 1934713408
    %v740 = vunpack.c.0.s8 %v739
    %v741 = vlaneseq
    %v742 = vshrl.u32 %v741, 7
    %v743 = vsub.s32 %v740, %v742
    %v744 = vrot.slane %v730, %v743
    %v745 = vcombine.high %v721, 0.0
    %v746 = vcombine.high %v728, 0.0
    %v747 = vcombine.high %v737, 0.0
    %v748 = vcombine.high %v744, 0.0
    %v749 = vcombine.low %v660, %v668
    %v750 = vcombine.high %v660, %v668
    %v752 = vunpack.c.l.s4 1983009808
    %v753 = vunpack.c.0.s8 %v752
    %v754 = vlaneseq
    %v755 = vshrl.u32 %v754, 7
    %v756 = vsub.s32 %v753, %v755
    %v757 = vrot.slane %v749, %v756
    %v759 = vunpack.c.l.s4 1983009808
    %v760 = vunpack.c.0.s8 %v759
    %v761 = vlaneseq
    %v762 = vshrl.u32 %v761, 7
    %v763 = vsub.s32 %v760, %v762
    %v764 = vrot.slane %v750, %v763
    %v765 = vcombine.low %v664, %v672
    %v766 = vcombine.high %v664, %v672
    %v768 = vunpack.c.l.s4 1983009808
    %v769 = vunpack.c.0.s8 %v768
    %v770 = vlaneseq
    %v771 = vshrl.u32 %v770, 7
    %v772 = vsub.s32 %v769, %v771
    %v773 = vrot.slane %v765, %v772
    %v775 = vunpack.c.l.s4 1983009808
    %v776 = vunpack.c.0.s8 %v775
    %v777 = vlaneseq
    %v778 = vshrl.u32 %v777, 7
    %v779 = vsub.s32 %v776, %v778
    %v780 = vrot.slane %v766, %v779
    %v781 = vcombine.low %v757, %v773
    %v782 = vcombine.high %v757, %v773
    %v784 = vunpack.c.l.s4 1934713408
    %v785 = vunpack.c.0.s8 %v784
    %v786 = vlaneseq
    %v787 = vshrl.u32 %v786, 7
    %v788 = vsub.s32 %v785, %v787
    %v789 = vrot.slane %v781, %v788
    %v791 = vunpack.c.l.s4 1934713408
    %v792 = vunpack.c.0.s8 %v791
    %v793 = vlaneseq
    %v794 = vshrl.u32 %v793, 7
    %v795 = vsub.s32 %v792, %v794
    %v796 = vrot.slane %v782, %v795
    %v797 = vcombine.low %v764, %v780
    %v798 = vcombine.high %v764, %v780
    %v800 = vunpack.c.l.s4 1934713408
    %v801 = vunpack.c.0.s8 %v800
    %v802 = vlaneseq
    %v803 = vshrl.u32 %v802, 7
    %v804 = vsub.s32 %v801, %v803
    %v805 = vrot.slane %v797, %v804
    %v807 = vunpack.c.l.s4 1934713408
    %v808 = vunpack.c.0.s8 %v807
    %v809 = vlaneseq
    %v810 = vshrl.u32 %v809, 7
    %v811 = vsub.s32 %v808, %v810
    %v812 = vrot.slane %v798, %v811
    %v813 = vcombine.high %v789, 0.0
    %v814 = vcombine.high %v796, 0.0
    %v815 = vcombine.high %v805, 0.0
    %v816 = vcombine.high %v812, 0.0
    %818 = vrot.lane.b32.xlu0 %v745, 16
    %v819 = vpop.permute.xlu0 %818
    %822 = vrot.lane.b32.xlu0 %v728, 32
    %v823 = vpop.permute.xlu0 %822
    %826 = vrot.lane.b32.xlu0 %v746, 48
    %v827 = vpop.permute.xlu0 %826
    %830 = vrot.lane.b32.xlu0 %v737, 64
    %v831 = vpop.permute.xlu0 %830
    %834 = vrot.lane.b32.xlu0 %v747, 80
    %v835 = vpop.permute.xlu0 %834
    %838 = vrot.lane.b32.xlu0 %v744, 96
    %v839 = vpop.permute.xlu0 %838
    %842 = vrot.lane.b32.xlu0 %v748, 112
    %v843 = vpop.permute.xlu0 %842
    %846 = vrot.lane.b32.xlu0 %v813, 16
    %v847 = vpop.permute.xlu0 %846
    %850 = vrot.lane.b32.xlu0 %v796, 32
    %v851 = vpop.permute.xlu0 %850
    %854 = vrot.lane.b32.xlu0 %v814, 48
    %v855 = vpop.permute.xlu0 %854
    %858 = vrot.lane.b32.xlu0 %v805, 64
    %v859 = vpop.permute.xlu0 %858
    %862 = vrot.lane.b32.xlu0 %v815, 80
    %v863 = vpop.permute.xlu0 %862
    %866 = vrot.lane.b32.xlu0 %v812, 96
    %v867 = vpop.permute.xlu0 %866
    %870 = vrot.lane.b32.xlu0 %v816, 112
    %v871 = vpop.permute.xlu0 %870
    %v873 = vsel %vm364, %v721, %v819
    %v874 = vsel %vm366, %v873, %v823
    %v875 = vsel %vm368, %v874, %v827
    %v876 = vsel %vm370, %v875, %v831
    %v877 = vsel %vm372, %v876, %v835
    %v878 = vsel %vm374, %v877, %v839
    %v879 = vsel %vm376, %v878, %v843
    %v880 = vsel %vm364, %v789, %v847
    %v881 = vsel %vm366, %v880, %v851
    %v882 = vsel %vm368, %v881, %v855
    %v883 = vsel %vm370, %v882, %v859
    %v884 = vsel %vm372, %v883, %v863
    %v885 = vsel %vm374, %v884, %v867
    %v886 = vsel %vm376, %v885, %v871
    %887 = vst [vmem:[#allocation3 + $0x20] sm:$0xf] %v879
    %888 = vst [vmem:[#allocation3 + $0x28] sm:$0xf] %v886
    %v889 = vld [vmem:[#allocation2 + $0x1] sm:$0xff]
    %v890 = vld [vmem:[#allocation2 + $0x9] sm:$0xff]
    %v891 = vld [vmem:[#allocation2 + $0x19] sm:$0xff]
    %v892 = vld [vmem:[#allocation2 + $0x21] sm:$0xff]
    %v893 = vld [vmem:[#allocation2 + $0x31] sm:$0xff]
    %v894 = vld [vmem:[#allocation2 + $0x39] sm:$0xff]
    %v895 = vld [vmem:[#allocation2 + $0x49] sm:$0xff]
    %v896 = vld [vmem:[#allocation2 + $0x51] sm:$0xff]
    %v897 = vcombine.low %v889, %v893
    %v898 = vcombine.high %v889, %v893
    %v900 = vunpack.c.l.s4 1983009808
    %v901 = vunpack.c.0.s8 %v900
    %v902 = vlaneseq
    %v903 = vshrl.u32 %v902, 7
    %v904 = vsub.s32 %v901, %v903
    %v905 = vrot.slane %v897, %v904
    %v907 = vunpack.c.l.s4 1983009808
    %v908 = vunpack.c.0.s8 %v907
    %v909 = vlaneseq
    %v910 = vshrl.u32 %v909, 7
    %v911 = vsub.s32 %v908, %v910
    %v912 = vrot.slane %v898, %v911
    %v913 = vcombine.low %v891, %v895
    %v914 = vcombine.high %v891, %v895
    %v916 = vunpack.c.l.s4 1983009808
    %v917 = vunpack.c.0.s8 %v916
    %v918 = vlaneseq
    %v919 = vshrl.u32 %v918, 7
    %v920 = vsub.s32 %v917, %v919
    %v921 = vrot.slane %v913, %v920
    %v923 = vunpack.c.l.s4 1983009808
    %v924 = vunpack.c.0.s8 %v923
    %v925 = vlaneseq
    %v926 = vshrl.u32 %v925, 7
    %v927 = vsub.s32 %v924, %v926
    %v928 = vrot.slane %v914, %v927
    %v929 = vcombine.low %v905, %v921
    %v930 = vcombine.high %v905, %v921
    %v932 = vunpack.c.l.s4 1934713408
    %v933 = vunpack.c.0.s8 %v932
    %v934 = vlaneseq
    %v935 = vshrl.u32 %v934, 7
    %v936 = vsub.s32 %v933, %v935
    %v937 = vrot.slane %v929, %v936
    %v939 = vunpack.c.l.s4 1934713408
    %v940 = vunpack.c.0.s8 %v939
    %v941 = vlaneseq
    %v942 = vshrl.u32 %v941, 7
    %v943 = vsub.s32 %v940, %v942
    %v944 = vrot.slane %v930, %v943
    %v945 = vcombine.low %v912, %v928
    %v946 = vcombine.high %v912, %v928
    %v948 = vunpack.c.l.s4 1934713408
    %v949 = vunpack.c.0.s8 %v948
    %v950 = vlaneseq
    %v951 = vshrl.u32 %v950, 7
    %v952 = vsub.s32 %v949, %v951
    %v953 = vrot.slane %v945, %v952
    %v955 = vunpack.c.l.s4 1934713408
    %v956 = vunpack.c.0.s8 %v955
    %v957 = vlaneseq
    %v958 = vshrl.u32 %v957, 7
    %v959 = vsub.s32 %v956, %v958
    %v960 = vrot.slane %v946, %v959
    %v961 = vcombine.high %v937, 0.0
    %v962 = vcombine.high %v944, 0.0
    %v963 = vcombine.high %v953, 0.0
    %v964 = vcombine.high %v960, 0.0
    %v965 = vcombine.low %v890, %v894
    %v966 = vcombine.high %v890, %v894
    %v968 = vunpack.c.l.s4 1983009808
    %v969 = vunpack.c.0.s8 %v968
    %v970 = vlaneseq
    %v971 = vshrl.u32 %v970, 7
    %v972 = vsub.s32 %v969, %v971
    %v973 = vrot.slane %v965, %v972
    %v975 = vunpack.c.l.s4 1983009808
    %v976 = vunpack.c.0.s8 %v975
    %v977 = vlaneseq
    %v978 = vshrl.u32 %v977, 7
    %v979 = vsub.s32 %v976, %v978
    %v980 = vrot.slane %v966, %v979
    %v981 = vcombine.low %v892, %v896
    %v982 = vcombine.high %v892, %v896
    %v984 = vunpack.c.l.s4 1983009808
    %v985 = vunpack.c.0.s8 %v984
    %v986 = vlaneseq
    %v987 = vshrl.u32 %v986, 7
    %v988 = vsub.s32 %v985, %v987
    %v989 = vrot.slane %v981, %v988
    %v991 = vunpack.c.l.s4 1983009808
    %v992 = vunpack.c.0.s8 %v991
    %v993 = vlaneseq
    %v994 = vshrl.u32 %v993, 7
    %v995 = vsub.s32 %v992, %v994
    %v996 = vrot.slane %v982, %v995
    %v997 = vcombine.low %v973, %v989
    %v998 = vcombine.high %v973, %v989
    %v1000 = vunpack.c.l.s4 1934713408
    %v1001 = vunpack.c.0.s8 %v1000
    %v1002 = vlaneseq
    %v1003 = vshrl.u32 %v1002, 7
    %v1004 = vsub.s32 %v1001, %v1003
    %v1005 = vrot.slane %v997, %v1004
    %v1007 = vunpack.c.l.s4 1934713408
    %v1008 = vunpack.c.0.s8 %v1007
    %v1009 = vlaneseq
    %v1010 = vshrl.u32 %v1009, 7
    %v1011 = vsub.s32 %v1008, %v1010
    %v1012 = vrot.slane %v998, %v1011
    %v1013 = vcombine.low %v980, %v996
    %v1014 = vcombine.high %v980, %v996
    %v1016 = vunpack.c.l.s4 1934713408
    %v1017 = vunpack.c.0.s8 %v1016
    %v1018 = vlaneseq
    %v1019 = vshrl.u32 %v1018, 7
    %v1020 = vsub.s32 %v1017, %v1019
    %v1021 = vrot.slane %v1013, %v1020
    %v1023 = vunpack.c.l.s4 1934713408
    %v1024 = vunpack.c.0.s8 %v1023
    %v1025 = vlaneseq
    %v1026 = vshrl.u32 %v1025, 7
    %v1027 = vsub.s32 %v1024, %v1026
    %v1028 = vrot.slane %v1014, %v1027
    %v1029 = vcombine.high %v1005, 0.0
    %v1030 = vcombine.high %v1012, 0.0
    %v1031 = vcombine.high %v1021, 0.0
    %v1032 = vcombine.high %v1028, 0.0
    %1034 = vrot.lane.b32.xlu0 %v961, 16
    %v1035 = vpop.permute.xlu0 %1034
    %1038 = vrot.lane.b32.xlu0 %v944, 32
    %v1039 = vpop.permute.xlu0 %1038
    %1042 = vrot.lane.b32.xlu0 %v962, 48
    %v1043 = vpop.permute.xlu0 %1042
    %1046 = vrot.lane.b32.xlu0 %v953, 64
    %v1047 = vpop.permute.xlu0 %1046
    %1050 = vrot.lane.b32.xlu0 %v963, 80
    %v1051 = vpop.permute.xlu0 %1050
    %1054 = vrot.lane.b32.xlu0 %v960, 96
    %v1055 = vpop.permute.xlu0 %1054
    %1058 = vrot.lane.b32.xlu0 %v964, 112
    %v1059 = vpop.permute.xlu0 %1058
    %1062 = vrot.lane.b32.xlu0 %v1029, 16
    %v1063 = vpop.permute.xlu0 %1062
    %1066 = vrot.lane.b32.xlu0 %v1012, 32
    %v1067 = vpop.permute.xlu0 %1066
    %1070 = vrot.lane.b32.xlu0 %v1030, 48
    %v1071 = vpop.permute.xlu0 %1070
    %1074 = vrot.lane.b32.xlu0 %v1021, 64
    %v1075 = vpop.permute.xlu0 %1074
    %1078 = vrot.lane.b32.xlu0 %v1031, 80
    %v1079 = vpop.permute.xlu0 %1078
    %1082 = vrot.lane.b32.xlu0 %v1028, 96
    %v1083 = vpop.permute.xlu0 %1082
    %1086 = vrot.lane.b32.xlu0 %v1032, 112
    %v1087 = vpop.permute.xlu0 %1086
    %v1089 = vsel %vm364, %v937, %v1035
    %v1090 = vsel %vm366, %v1089, %v1039
    %v1091 = vsel %vm368, %v1090, %v1043
    %v1092 = vsel %vm370, %v1091, %v1047
    %v1093 = vsel %vm372, %v1092, %v1051
    %v1094 = vsel %vm374, %v1093, %v1055
    %v1095 = vsel %vm376, %v1094, %v1059
    %v1096 = vsel %vm364, %v1005, %v1063
    %v1097 = vsel %vm366, %v1096, %v1067
    %v1098 = vsel %vm368, %v1097, %v1071
    %v1099 = vsel %vm370, %v1098, %v1075
    %v1100 = vsel %vm372, %v1099, %v1079
    %v1101 = vsel %vm374, %v1100, %v1083
    %v1102 = vsel %vm376, %v1101, %v1087
    %v1105 = vrot.slane %v1095, 4
    %v1106 = vrot.slane %v1102, 4
    %1109 = vst [vmem:[#allocation3 + $0x20] sm:$0xf0] %v1105
    %1110 = vst [vmem:[#allocation3 + $0x28] sm:$0xf0] %v1106
    %v1111 = vld [vmem:[#allocation2 + $0x1] sm:$0xff]
    %v1112 = vld [vmem:[#allocation2 + $0x9] sm:$0xff]
    %v1113 = vld [vmem:[#allocation2 + $0x19] sm:$0xff]
    %v1114 = vld [vmem:[#allocation2 + $0x21] sm:$0xff]
    %v1115 = vld [vmem:[#allocation2 + $0x31] sm:$0xff]
    %v1116 = vld [vmem:[#allocation2 + $0x39] sm:$0xff]
    %v1117 = vld [vmem:[#allocation2 + $0x49] sm:$0xff]
    %v1118 = vld [vmem:[#allocation2 + $0x51] sm:$0xff]
    %1127 = vrot.lane.b32.xlu0 %v1111, 127
    %v1128 = vpop.permute.xlu0 %1127
    %1129 = vrot.lane.b32.xlu0 %v1112, 127
    %v1130 = vpop.permute.xlu0 %1129
    %1131 = vrot.lane.b32.xlu0 %v1113, 127
    %v1132 = vpop.permute.xlu0 %1131
    %1133 = vrot.lane.b32.xlu0 %v1114, 127
    %v1134 = vpop.permute.xlu0 %1133
    %1135 = vrot.lane.b32.xlu0 %v1115, 127
    %v1136 = vpop.permute.xlu0 %1135
    %1137 = vrot.lane.b32.xlu0 %v1116, 127
    %v1138 = vpop.permute.xlu0 %1137
    %1139 = vrot.lane.b32.xlu0 %v1117, 127
    %v1140 = vpop.permute.xlu0 %1139
    %1141 = vrot.lane.b32.xlu0 %v1118, 127
    %v1142 = vpop.permute.xlu0 %1141
    %v1151 = vcombine.low %v1128, %v1136
    %v1152 = vcombine.high %v1128, %v1136
    %v1154 = vunpack.c.l.s4 1983009808
    %v1155 = vunpack.c.0.s8 %v1154
    %v1156 = vlaneseq
    %v1157 = vshrl.u32 %v1156, 7
    %v1158 = vsub.s32 %v1155, %v1157
    %v1159 = vrot.slane %v1151, %v1158
    %v1161 = vunpack.c.l.s4 1983009808
    %v1162 = vunpack.c.0.s8 %v1161
    %v1163 = vlaneseq
    %v1164 = vshrl.u32 %v1163, 7
    %v1165 = vsub.s32 %v1162, %v1164
    %v1166 = vrot.slane %v1152, %v1165
    %v1167 = vcombine.low %v1132, %v1140
    %v1168 = vcombine.high %v1132, %v1140
    %v1170 = vunpack.c.l.s4 1983009808
    %v1171 = vunpack.c.0.s8 %v1170
    %v1172 = vlaneseq
    %v1173 = vshrl.u32 %v1172, 7
    %v1174 = vsub.s32 %v1171, %v1173
    %v1175 = vrot.slane %v1167, %v1174
    %v1177 = vunpack.c.l.s4 1983009808
    %v1178 = vunpack.c.0.s8 %v1177
    %v1179 = vlaneseq
    %v1180 = vshrl.u32 %v1179, 7
    %v1181 = vsub.s32 %v1178, %v1180
    %v1182 = vrot.slane %v1168, %v1181
    %v1183 = vcombine.low %v1159, %v1175
    %v1184 = vcombine.high %v1159, %v1175
    %v1186 = vunpack.c.l.s4 1934713408
    %v1187 = vunpack.c.0.s8 %v1186
    %v1188 = vlaneseq
    %v1189 = vshrl.u32 %v1188, 7
    %v1190 = vsub.s32 %v1187, %v1189
    %v1191 = vrot.slane %v1183, %v1190
    %v1193 = vunpack.c.l.s4 1934713408
    %v1194 = vunpack.c.0.s8 %v1193
    %v1195 = vlaneseq
    %v1196 = vshrl.u32 %v1195, 7
    %v1197 = vsub.s32 %v1194, %v1196
    %v1198 = vrot.slane %v1184, %v1197
    %v1199 = vcombine.low %v1166, %v1182
    %v1200 = vcombine.high %v1166, %v1182
    %v1202 = vunpack.c.l.s4 1934713408
    %v1203 = vunpack.c.0.s8 %v1202
    %v1204 = vlaneseq
    %v1205 = vshrl.u32 %v1204, 7
    %v1206 = vsub.s32 %v1203, %v1205
    %v1207 = vrot.slane %v1199, %v1206
    %v1209 = vunpack.c.l.s4 1934713408
    %v1210 = vunpack.c.0.s8 %v1209
    %v1211 = vlaneseq
    %v1212 = vshrl.u32 %v1211, 7
    %v1213 = vsub.s32 %v1210, %v1212
    %v1214 = vrot.slane %v1200, %v1213
    %v1215 = vcombine.high %v1191, 0.0
    %v1216 = vcombine.high %v1198, 0.0
    %v1217 = vcombine.high %v1207, 0.0
    %v1218 = vcombine.high %v1214, 0.0
    %v1219 = vcombine.low %v1130, %v1138
    %v1220 = vcombine.high %v1130, %v1138
    %v1222 = vunpack.c.l.s4 1983009808
    %v1223 = vunpack.c.0.s8 %v1222
    %v1224 = vlaneseq
    %v1225 = vshrl.u32 %v1224, 7
    %v1226 = vsub.s32 %v1223, %v1225
    %v1227 = vrot.slane %v1219, %v1226
    %v1229 = vunpack.c.l.s4 1983009808
    %v1230 = vunpack.c.0.s8 %v1229
    %v1231 = vlaneseq
    %v1232 = vshrl.u32 %v1231, 7
    %v1233 = vsub.s32 %v1230, %v1232
    %v1234 = vrot.slane %v1220, %v1233
    %v1235 = vcombine.low %v1134, %v1142
    %v1236 = vcombine.high %v1134, %v1142
    %v1238 = vunpack.c.l.s4 1983009808
    %v1239 = vunpack.c.0.s8 %v1238
    %v1240 = vlaneseq
    %v1241 = vshrl.u32 %v1240, 7
    %v1242 = vsub.s32 %v1239, %v1241
    %v1243 = vrot.slane %v1235, %v1242
    %v1245 = vunpack.c.l.s4 1983009808
    %v1246 = vunpack.c.0.s8 %v1245
    %v1247 = vlaneseq
    %v1248 = vshrl.u32 %v1247, 7
    %v1249 = vsub.s32 %v1246, %v1248
    %v1250 = vrot.slane %v1236, %v1249
    %v1251 = vcombine.low %v1227, %v1243
    %v1252 = vcombine.high %v1227, %v1243
    %v1254 = vunpack.c.l.s4 1934713408
    %v1255 = vunpack.c.0.s8 %v1254
    %v1256 = vlaneseq
    %v1257 = vshrl.u32 %v1256, 7
    %v1258 = vsub.s32 %v1255, %v1257
    %v1259 = vrot.slane %v1251, %v1258
    %v1261 = vunpack.c.l.s4 1934713408
    %v1262 = vunpack.c.0.s8 %v1261
    %v1263 = vlaneseq
    %v1264 = vshrl.u32 %v1263, 7
    %v1265 = vsub.s32 %v1262, %v1264
    %v1266 = vrot.slane %v1252, %v1265
    %v1267 = vcombine.low %v1234, %v1250
    %v1268 = vcombine.high %v1234, %v1250
    %v1270 = vunpack.c.l.s4 1934713408
    %v1271 = vunpack.c.0.s8 %v1270
    %v1272 = vlaneseq
    %v1273 = vshrl.u32 %v1272, 7
    %v1274 = vsub.s32 %v1271, %v1273
    %v1275 = vrot.slane %v1267, %v1274
    %v1277 = vunpack.c.l.s4 1934713408
    %v1278 = vunpack.c.0.s8 %v1277
    %v1279 = vlaneseq
    %v1280 = vshrl.u32 %v1279, 7
    %v1281 = vsub.s32 %v1278, %v1280
    %v1282 = vrot.slane %v1268, %v1281
    %v1283 = vcombine.high %v1259, 0.0
    %v1284 = vcombine.high %v1266, 0.0
    %v1285 = vcombine.high %v1275, 0.0
    %v1286 = vcombine.high %v1282, 0.0
    %1288 = vrot.lane.b32.xlu0 %v1215, 16
    %v1289 = vpop.permute.xlu0 %1288
    %1292 = vrot.lane.b32.xlu0 %v1198, 32
    %v1293 = vpop.permute.xlu0 %1292
    %1296 = vrot.lane.b32.xlu0 %v1216, 48
    %v1297 = vpop.permute.xlu0 %1296
    %1300 = vrot.lane.b32.xlu0 %v1207, 64
    %v1301 = vpop.permute.xlu0 %1300
    %1304 = vrot.lane.b32.xlu0 %v1217, 80
    %v1305 = vpop.permute.xlu0 %1304
    %1308 = vrot.lane.b32.xlu0 %v1214, 96
    %v1309 = vpop.permute.xlu0 %1308
    %1312 = vrot.lane.b32.xlu0 %v1218, 112
    %v1313 = vpop.permute.xlu0 %1312
    %1316 = vrot.lane.b32.xlu0 %v1283, 16
    %v1317 = vpop.permute.xlu0 %1316
    %1320 = vrot.lane.b32.xlu0 %v1266, 32
    %v1321 = vpop.permute.xlu0 %1320
    %1324 = vrot.lane.b32.xlu0 %v1284, 48
    %v1325 = vpop.permute.xlu0 %1324
    %1328 = vrot.lane.b32.xlu0 %v1275, 64
    %v1329 = vpop.permute.xlu0 %1328
    %1332 = vrot.lane.b32.xlu0 %v1285, 80
    %v1333 = vpop.permute.xlu0 %1332
    %1336 = vrot.lane.b32.xlu0 %v1282, 96
    %v1337 = vpop.permute.xlu0 %1336
    %1340 = vrot.lane.b32.xlu0 %v1286, 112
    %v1341 = vpop.permute.xlu0 %1340
    %v1343 = vsel %vm364, %v1191, %v1289
    %v1344 = vsel %vm366, %v1343, %v1293
    %v1345 = vsel %vm368, %v1344, %v1297
    %v1346 = vsel %vm370, %v1345, %v1301
    %v1347 = vsel %vm372, %v1346, %v1305
    %v1348 = vsel %vm374, %v1347, %v1309
    %v1349 = vsel %vm376, %v1348, %v1313
    %v1350 = vsel %vm364, %v1259, %v1317
    %v1351 = vsel %vm366, %v1350, %v1321
    %v1352 = vsel %vm368, %v1351, %v1325
    %v1353 = vsel %vm370, %v1352, %v1329
    %v1354 = vsel %vm372, %v1353, %v1333
    %v1355 = vsel %vm374, %v1354, %v1337
    %v1356 = vsel %vm376, %v1355, %v1341
    %1357 = vst [vmem:[#allocation3 + $0x40] sm:$0xf] %v1349
    %1358 = vst [vmem:[#allocation3 + $0x48] sm:$0xf] %v1356
    %v1359 = vld [vmem:[#allocation2 + $0x1] sm:$0xff]
    %v1360 = vld [vmem:[#allocation2 + $0x9] sm:$0xff]
    %v1361 = vld [vmem:[#allocation2 + $0x19] sm:$0xff]
    %v1362 = vld [vmem:[#allocation2 + $0x21] sm:$0xff]
    %v1363 = vld [vmem:[#allocation2 + $0x31] sm:$0xff]
    %v1364 = vld [vmem:[#allocation2 + $0x39] sm:$0xff]
    %v1365 = vld [vmem:[#allocation2 + $0x49] sm:$0xff]
    %v1366 = vld [vmem:[#allocation2 + $0x51] sm:$0xff]
    %1375 = vrot.lane.b32.xlu0 %v1359, 126
    %v1376 = vpop.permute.xlu0 %1375
    %1377 = vrot.lane.b32.xlu0 %v1360, 126
    %v1378 = vpop.permute.xlu0 %1377
    %1379 = vrot.lane.b32.xlu0 %v1361, 126
    %v1380 = vpop.permute.xlu0 %1379
    %1381 = vrot.lane.b32.xlu0 %v1362, 126
    %v1382 = vpop.permute.xlu0 %1381
    %1383 = vrot.lane.b32.xlu0 %v1363, 126
    %v1384 = vpop.permute.xlu0 %1383
    %1385 = vrot.lane.b32.xlu0 %v1364, 126
    %v1386 = vpop.permute.xlu0 %1385
    %1387 = vrot.lane.b32.xlu0 %v1365, 126
    %v1388 = vpop.permute.xlu0 %1387
    %1389 = vrot.lane.b32.xlu0 %v1366, 126
    %v1390 = vpop.permute.xlu0 %1389
    %v1399 = vcombine.low %v1376, %v1384
    %v1400 = vcombine.high %v1376, %v1384
    %v1402 = vunpack.c.l.s4 1983009808
    %v1403 = vunpack.c.0.s8 %v1402
    %v1404 = vlaneseq
    %v1405 = vshrl.u32 %v1404, 7
    %v1406 = vsub.s32 %v1403, %v1405
    %v1407 = vrot.slane %v1399, %v1406
    %v1409 = vunpack.c.l.s4 1983009808
    %v1410 = vunpack.c.0.s8 %v1409
    %v1411 = vlaneseq
    %v1412 = vshrl.u32 %v1411, 7
    %v1413 = vsub.s32 %v1410, %v1412
    %v1414 = vrot.slane %v1400, %v1413
    %v1415 = vcombine.low %v1380, %v1388
    %v1416 = vcombine.high %v1380, %v1388
    %v1418 = vunpack.c.l.s4 1983009808
    %v1419 = vunpack.c.0.s8 %v1418
    %v1420 = vlaneseq
    %v1421 = vshrl.u32 %v1420, 7
    %v1422 = vsub.s32 %v1419, %v1421
    %v1423 = vrot.slane %v1415, %v1422
    %v1425 = vunpack.c.l.s4 1983009808
    %v1426 = vunpack.c.0.s8 %v1425
    %v1427 = vlaneseq
    %v1428 = vshrl.u32 %v1427, 7
    %v1429 = vsub.s32 %v1426, %v1428
    %v1430 = vrot.slane %v1416, %v1429
    %v1431 = vcombine.low %v1407, %v1423
    %v1432 = vcombine.high %v1407, %v1423
    %v1434 = vunpack.c.l.s4 1934713408
    %v1435 = vunpack.c.0.s8 %v1434
    %v1436 = vlaneseq
    %v1437 = vshrl.u32 %v1436, 7
    %v1438 = vsub.s32 %v1435, %v1437
    %v1439 = vrot.slane %v1431, %v1438
    %v1441 = vunpack.c.l.s4 1934713408
    %v1442 = vunpack.c.0.s8 %v1441
    %v1443 = vlaneseq
    %v1444 = vshrl.u32 %v1443, 7
    %v1445 = vsub.s32 %v1442, %v1444
    %v1446 = vrot.slane %v1432, %v1445
    %v1447 = vcombine.low %v1414, %v1430
    %v1448 = vcombine.high %v1414, %v1430
    %v1450 = vunpack.c.l.s4 1934713408
    %v1451 = vunpack.c.0.s8 %v1450
    %v1452 = vlaneseq
    %v1453 = vshrl.u32 %v1452, 7
    %v1454 = vsub.s32 %v1451, %v1453
    %v1455 = vrot.slane %v1447, %v1454
    %v1457 = vunpack.c.l.s4 1934713408
    %v1458 = vunpack.c.0.s8 %v1457
    %v1459 = vlaneseq
    %v1460 = vshrl.u32 %v1459, 7
    %v1461 = vsub.s32 %v1458, %v1460
    %v1462 = vrot.slane %v1448, %v1461
    %v1463 = vcombine.high %v1439, 0.0
    %v1464 = vcombine.high %v1446, 0.0
    %v1465 = vcombine.high %v1455, 0.0
    %v1466 = vcombine.high %v1462, 0.0
    %v1467 = vcombine.low %v1378, %v1386
    %v1468 = vcombine.high %v1378, %v1386
    %v1470 = vunpack.c.l.s4 1983009808
    %v1471 = vunpack.c.0.s8 %v1470
    %v1472 = vlaneseq
    %v1473 = vshrl.u32 %v1472, 7
    %v1474 = vsub.s32 %v1471, %v1473
    %v1475 = vrot.slane %v1467, %v1474
    %v1477 = vunpack.c.l.s4 1983009808
    %v1478 = vunpack.c.0.s8 %v1477
    %v1479 = vlaneseq
    %v1480 = vshrl.u32 %v1479, 7
    %v1481 = vsub.s32 %v1478, %v1480
    %v1482 = vrot.slane %v1468, %v1481
    %v1483 = vcombine.low %v1382, %v1390
    %v1484 = vcombine.high %v1382, %v1390
    %v1486 = vunpack.c.l.s4 1983009808
    %v1487 = vunpack.c.0.s8 %v1486
    %v1488 = vlaneseq
    %v1489 = vshrl.u32 %v1488, 7
    %v1490 = vsub.s32 %v1487, %v1489
    %v1491 = vrot.slane %v1483, %v1490
    %v1493 = vunpack.c.l.s4 1983009808
    %v1494 = vunpack.c.0.s8 %v1493
    %v1495 = vlaneseq
    %v1496 = vshrl.u32 %v1495, 7
    %v1497 = vsub.s32 %v1494, %v1496
    %v1498 = vrot.slane %v1484, %v1497
    %v1499 = vcombine.low %v1475, %v1491
    %v1500 = vcombine.high %v1475, %v1491
    %v1502 = vunpack.c.l.s4 1934713408
    %v1503 = vunpack.c.0.s8 %v1502
    %v1504 = vlaneseq
    %v1505 = vshrl.u32 %v1504, 7
    %v1506 = vsub.s32 %v1503, %v1505
    %v1507 = vrot.slane %v1499, %v1506
    %v1509 = vunpack.c.l.s4 1934713408
    %v1510 = vunpack.c.0.s8 %v1509
    %v1511 = vlaneseq
    %v1512 = vshrl.u32 %v1511, 7
    %v1513 = vsub.s32 %v1510, %v1512
    %v1514 = vrot.slane %v1500, %v1513
    %v1515 = vcombine.low %v1482, %v1498
    %v1516 = vcombine.high %v1482, %v1498
    %v1518 = vunpack.c.l.s4 1934713408
    %v1519 = vunpack.c.0.s8 %v1518
    %v1520 = vlaneseq
    %v1521 = vshrl.u32 %v1520, 7
    %v1522 = vsub.s32 %v1519, %v1521
    %v1523 = vrot.slane %v1515, %v1522
    %v1525 = vunpack.c.l.s4 1934713408
    %v1526 = vunpack.c.0.s8 %v1525
    %v1527 = vlaneseq
    %v1528 = vshrl.u32 %v1527, 7
    %v1529 = vsub.s32 %v1526, %v1528
    %v1530 = vrot.slane %v1516, %v1529
    %v1531 = vcombine.high %v1507, 0.0
    %v1532 = vcombine.high %v1514, 0.0
    %v1533 = vcombine.high %v1523, 0.0
    %v1534 = vcombine.high %v1530, 0.0
    %1536 = vrot.lane.b32.xlu0 %v1463, 16
    %v1537 = vpop.permute.xlu0 %1536
    %1540 = vrot.lane.b32.xlu0 %v1446, 32
    %v1541 = vpop.permute.xlu0 %1540
    %1544 = vrot.lane.b32.xlu0 %v1464, 48
    %v1545 = vpop.permute.xlu0 %1544
    %1548 = vrot.lane.b32.xlu0 %v1455, 64
    %v1549 = vpop.permute.xlu0 %1548
    %1552 = vrot.lane.b32.xlu0 %v1465, 80
    %v1553 = vpop.permute.xlu0 %1552
    %1556 = vrot.lane.b32.xlu0 %v1462, 96
    %v1557 = vpop.permute.xlu0 %1556
    %1560 = vrot.lane.b32.xlu0 %v1466, 112
    %v1561 = vpop.permute.xlu0 %1560
    %1564 = vrot.lane.b32.xlu0 %v1531, 16
    %v1565 = vpop.permute.xlu0 %1564
    %1568 = vrot.lane.b32.xlu0 %v1514, 32
    %v1569 = vpop.permute.xlu0 %1568
    %1572 = vrot.lane.b32.xlu0 %v1532, 48
    %v1573 = vpop.permute.xlu0 %1572
    %1576 = vrot.lane.b32.xlu0 %v1523, 64
    %v1577 = vpop.permute.xlu0 %1576
    %1580 = vrot.lane.b32.xlu0 %v1533, 80
    %v1581 = vpop.permute.xlu0 %1580
    %1584 = vrot.lane.b32.xlu0 %v1530, 96
    %v1585 = vpop.permute.xlu0 %1584
    %1588 = vrot.lane.b32.xlu0 %v1534, 112
    %v1589 = vpop.permute.xlu0 %1588
    %v1591 = vsel %vm364, %v1439, %v1537
    %v1592 = vsel %vm366, %v1591, %v1541
    %v1593 = vsel %vm368, %v1592, %v1545
    %v1594 = vsel %vm370, %v1593, %v1549
    %v1595 = vsel %vm372, %v1594, %v1553
    %v1596 = vsel %vm374, %v1595, %v1557
    %v1597 = vsel %vm376, %v1596, %v1561
    %v1598 = vsel %vm364, %v1507, %v1565
    %v1599 = vsel %vm366, %v1598, %v1569
    %v1600 = vsel %vm368, %v1599, %v1573
    %v1601 = vsel %vm370, %v1600, %v1577
    %v1602 = vsel %vm372, %v1601, %v1581
    %v1603 = vsel %vm374, %v1602, %v1585
    %v1604 = vsel %vm376, %v1603, %v1589
    %v1607 = vrot.slane %v1597, 4
    %v1608 = vrot.slane %v1604, 4
    %1611 = vst [vmem:[#allocation3 + $0x40] sm:$0xf0] %v1607
    %1612 = vst [vmem:[#allocation3 + $0x48] sm:$0xf0] %v1608
    %v1613 = vld [vmem:[#allocation2 + $0x2] sm:$0xff]
    %v1614 = vld [vmem:[#allocation2 + $0xa] sm:$0xff]
    %v1615 = vld [vmem:[#allocation2 + $0x1a] sm:$0xff]
    %v1616 = vld [vmem:[#allocation2 + $0x22] sm:$0xff]
    %v1617 = vld [vmem:[#allocation2 + $0x32] sm:$0xff]
    %v1618 = vld [vmem:[#allocation2 + $0x3a] sm:$0xff]
    %v1619 = vld [vmem:[#allocation2 + $0x4a] sm:$0xff]
    %v1620 = vld [vmem:[#allocation2 + $0x52] sm:$0xff]
    %v1621 = vcombine.low %v1613, %v1617
    %v1622 = vcombine.high %v1613, %v1617
    %v1624 = vunpack.c.l.s4 1983009808
    %v1625 = vunpack.c.0.s8 %v1624
    %v1626 = vlaneseq
    %v1627 = vshrl.u32 %v1626, 7
    %v1628 = vsub.s32 %v1625, %v1627
    %v1629 = vrot.slane %v1621, %v1628
    %v1631 = vunpack.c.l.s4 1983009808
    %v1632 = vunpack.c.0.s8 %v1631
    %v1633 = vlaneseq
    %v1634 = vshrl.u32 %v1633, 7
    %v1635 = vsub.s32 %v1632, %v1634
    %v1636 = vrot.slane %v1622, %v1635
    %v1637 = vcombine.low %v1615, %v1619
    %v1638 = vcombine.high %v1615, %v1619
    %v1640 = vunpack.c.l.s4 1983009808
    %v1641 = vunpack.c.0.s8 %v1640
    %v1642 = vlaneseq
    %v1643 = vshrl.u32 %v1642, 7
    %v1644 = vsub.s32 %v1641, %v1643
    %v1645 = vrot.slane %v1637, %v1644
    %v1647 = vunpack.c.l.s4 1983009808
    %v1648 = vunpack.c.0.s8 %v1647
    %v1649 = vlaneseq
    %v1650 = vshrl.u32 %v1649, 7
    %v1651 = vsub.s32 %v1648, %v1650
    %v1652 = vrot.slane %v1638, %v1651
    %v1653 = vcombine.low %v1629, %v1645
    %v1654 = vcombine.high %v1629, %v1645
    %v1656 = vunpack.c.l.s4 1934713408
    %v1657 = vunpack.c.0.s8 %v1656
    %v1658 = vlaneseq
    %v1659 = vshrl.u32 %v1658, 7
    %v1660 = vsub.s32 %v1657, %v1659
    %v1661 = vrot.slane %v1653, %v1660
    %v1663 = vunpack.c.l.s4 1934713408
    %v1664 = vunpack.c.0.s8 %v1663
    %v1665 = vlaneseq
    %v1666 = vshrl.u32 %v1665, 7
    %v1667 = vsub.s32 %v1664, %v1666
    %v1668 = vrot.slane %v1654, %v1667
    %v1669 = vcombine.low %v1636, %v1652
    %v1670 = vcombine.high %v1636, %v1652
    %v1672 = vunpack.c.l.s4 1934713408
    %v1673 = vunpack.c.0.s8 %v1672
    %v1674 = vlaneseq
    %v1675 = vshrl.u32 %v1674, 7
    %v1676 = vsub.s32 %v1673, %v1675
    %v1677 = vrot.slane %v1669, %v1676
    %v1679 = vunpack.c.l.s4 1934713408
    %v1680 = vunpack.c.0.s8 %v1679
    %v1681 = vlaneseq
    %v1682 = vshrl.u32 %v1681, 7
    %v1683 = vsub.s32 %v1680, %v1682
    %v1684 = vrot.slane %v1670, %v1683
    %v1685 = vcombine.high %v1661, 0.0
    %v1686 = vcombine.high %v1668, 0.0
    %v1687 = vcombine.high %v1677, 0.0
    %v1688 = vcombine.high %v1684, 0.0
    %v1689 = vcombine.low %v1614, %v1618
    %v1690 = vcombine.high %v1614, %v1618
    %v1692 = vunpack.c.l.s4 1983009808
    %v1693 = vunpack.c.0.s8 %v1692
    %v1694 = vlaneseq
    %v1695 = vshrl.u32 %v1694, 7
    %v1696 = vsub.s32 %v1693, %v1695
    %v1697 = vrot.slane %v1689, %v1696
    %v1699 = vunpack.c.l.s4 1983009808
    %v1700 = vunpack.c.0.s8 %v1699
    %v1701 = vlaneseq
    %v1702 = vshrl.u32 %v1701, 7
    %v1703 = vsub.s32 %v1700, %v1702
    %v1704 = vrot.slane %v1690, %v1703
    %v1705 = vcombine.low %v1616, %v1620
    %v1706 = vcombine.high %v1616, %v1620
    %v1708 = vunpack.c.l.s4 1983009808
    %v1709 = vunpack.c.0.s8 %v1708
    %v1710 = vlaneseq
    %v1711 = vshrl.u32 %v1710, 7
    %v1712 = vsub.s32 %v1709, %v1711
    %v1713 = vrot.slane %v1705, %v1712
    %v1715 = vunpack.c.l.s4 1983009808
    %v1716 = vunpack.c.0.s8 %v1715
    %v1717 = vlaneseq
    %v1718 = vshrl.u32 %v1717, 7
    %v1719 = vsub.s32 %v1716, %v1718
    %v1720 = vrot.slane %v1706, %v1719
    %v1721 = vcombine.low %v1697, %v1713
    %v1722 = vcombine.high %v1697, %v1713
    %v1724 = vunpack.c.l.s4 1934713408
    %v1725 = vunpack.c.0.s8 %v1724
    %v1726 = vlaneseq
    %v1727 = vshrl.u32 %v1726, 7
    %v1728 = vsub.s32 %v1725, %v1727
    %v1729 = vrot.slane %v1721, %v1728
    %v1731 = vunpack.c.l.s4 1934713408
    %v1732 = vunpack.c.0.s8 %v1731
    %v1733 = vlaneseq
    %v1734 = vshrl.u32 %v1733, 7
    %v1735 = vsub.s32 %v1732, %v1734
    %v1736 = vrot.slane %v1722, %v1735
    %v1737 = vcombine.low %v1704, %v1720
    %v1738 = vcombine.high %v1704, %v1720
    %v1740 = vunpack.c.l.s4 1934713408
    %v1741 = vunpack.c.0.s8 %v1740
    %v1742 = vlaneseq
    %v1743 = vshrl.u32 %v1742, 7
    %v1744 = vsub.s32 %v1741, %v1743
    %v1745 = vrot.slane %v1737, %v1744
    %v1747 = vunpack.c.l.s4 1934713408
    %v1748 = vunpack.c.0.s8 %v1747
    %v1749 = vlaneseq
    %v1750 = vshrl.u32 %v1749, 7
    %v1751 = vsub.s32 %v1748, %v1750
    %v1752 = vrot.slane %v1738, %v1751
    %v1753 = vcombine.high %v1729, 0.0
    %v1754 = vcombine.high %v1736, 0.0
    %v1755 = vcombine.high %v1745, 0.0
    %v1756 = vcombine.high %v1752, 0.0
    %1758 = vrot.lane.b32.xlu0 %v1685, 16
    %v1759 = vpop.permute.xlu0 %1758
    %1762 = vrot.lane.b32.xlu0 %v1668, 32
    %v1763 = vpop.permute.xlu0 %1762
    %1766 = vrot.lane.b32.xlu0 %v1686, 48
    %v1767 = vpop.permute.xlu0 %1766
    %1770 = vrot.lane.b32.xlu0 %v1677, 64
    %v1771 = vpop.permute.xlu0 %1770
    %1774 = vrot.lane.b32.xlu0 %v1687, 80
    %v1775 = vpop.permute.xlu0 %1774
    %1778 = vrot.lane.b32.xlu0 %v1684, 96
    %v1779 = vpop.permute.xlu0 %1778
    %1782 = vrot.lane.b32.xlu0 %v1688, 112
    %v1783 = vpop.permute.xlu0 %1782
    %1786 = vrot.lane.b32.xlu0 %v1753, 16
    %v1787 = vpop.permute.xlu0 %1786
    %1790 = vrot.lane.b32.xlu0 %v1736, 32
    %v1791 = vpop.permute.xlu0 %1790
    %1794 = vrot.lane.b32.xlu0 %v1754, 48
    %v1795 = vpop.permute.xlu0 %1794
    %1798 = vrot.lane.b32.xlu0 %v1745, 64
    %v1799 = vpop.permute.xlu0 %1798
    %1802 = vrot.lane.b32.xlu0 %v1755, 80
    %v1803 = vpop.permute.xlu0 %1802
    %1806 = vrot.lane.b32.xlu0 %v1752, 96
    %v1807 = vpop.permute.xlu0 %1806
    %1810 = vrot.lane.b32.xlu0 %v1756, 112
    %v1811 = vpop.permute.xlu0 %1810
    %v1813 = vsel %vm364, %v1661, %v1759
    %v1814 = vsel %vm366, %v1813, %v1763
    %v1815 = vsel %vm368, %v1814, %v1767
    %v1816 = vsel %vm370, %v1815, %v1771
    %v1817 = vsel %vm372, %v1816, %v1775
    %v1818 = vsel %vm374, %v1817, %v1779
    %v1819 = vsel %vm376, %v1818, %v1783
    %v1820 = vsel %vm364, %v1729, %v1787
    %v1821 = vsel %vm366, %v1820, %v1791
    %v1822 = vsel %vm368, %v1821, %v1795
    %v1823 = vsel %vm370, %v1822, %v1799
    %v1824 = vsel %vm372, %v1823, %v1803
    %v1825 = vsel %vm374, %v1824, %v1807
    %v1826 = vsel %vm376, %v1825, %v1811
    %1827 = vst [vmem:[#allocation3 + $0x60] sm:$0xf] %v1819
    %1828 = vst [vmem:[#allocation3 + $0x68] sm:$0xf] %v1826
    %v1829 = vld [vmem:[#allocation2 + $0x2] sm:$0xff]
    %v1830 = vld [vmem:[#allocation2 + $0xa] sm:$0xff]
    %v1831 = vld [vmem:[#allocation2 + $0x1a] sm:$0xff]
    %v1832 = vld [vmem:[#allocation2 + $0x22] sm:$0xff]
    %v1833 = vld [vmem:[#allocation2 + $0x32] sm:$0xff]
    %v1834 = vld [vmem:[#allocation2 + $0x3a] sm:$0xff]
    %v1835 = vld [vmem:[#allocation2 + $0x4a] sm:$0xff]
    %v1836 = vld [vmem:[#allocation2 + $0x52] sm:$0xff]
    %1845 = vrot.lane.b32.xlu0 %v1829, 127
    %v1846 = vpop.permute.xlu0 %1845
    %1847 = vrot.lane.b32.xlu0 %v1830, 127
    %v1848 = vpop.permute.xlu0 %1847
    %1849 = vrot.lane.b32.xlu0 %v1831, 127
    %v1850 = vpop.permute.xlu0 %1849
    %1851 = vrot.lane.b32.xlu0 %v1832, 127
    %v1852 = vpop.permute.xlu0 %1851
    %1853 = vrot.lane.b32.xlu0 %v1833, 127
    %v1854 = vpop.permute.xlu0 %1853
    %1855 = vrot.lane.b32.xlu0 %v1834, 127
    %v1856 = vpop.permute.xlu0 %1855
    %1857 = vrot.lane.b32.xlu0 %v1835, 127
    %v1858 = vpop.permute.xlu0 %1857
    %1859 = vrot.lane.b32.xlu0 %v1836, 127
    %v1860 = vpop.permute.xlu0 %1859
    %v1869 = vcombine.low %v1846, %v1854
    %v1870 = vcombine.high %v1846, %v1854
    %v1872 = vunpack.c.l.s4 1983009808
    %v1873 = vunpack.c.0.s8 %v1872
    %v1874 = vlaneseq
    %v1875 = vshrl.u32 %v1874, 7
    %v1876 = vsub.s32 %v1873, %v1875
    %v1877 = vrot.slane %v1869, %v1876
    %v1879 = vunpack.c.l.s4 1983009808
    %v1880 = vunpack.c.0.s8 %v1879
    %v1881 = vlaneseq
    %v1882 = vshrl.u32 %v1881, 7
    %v1883 = vsub.s32 %v1880, %v1882
    %v1884 = vrot.slane %v1870, %v1883
    %v1885 = vcombine.low %v1850, %v1858
    %v1886 = vcombine.high %v1850, %v1858
    %v1888 = vunpack.c.l.s4 1983009808
    %v1889 = vunpack.c.0.s8 %v1888
    %v1890 = vlaneseq
    %v1891 = vshrl.u32 %v1890, 7
    %v1892 = vsub.s32 %v1889, %v1891
    %v1893 = vrot.slane %v1885, %v1892
    %v1895 = vunpack.c.l.s4 1983009808
    %v1896 = vunpack.c.0.s8 %v1895
    %v1897 = vlaneseq
    %v1898 = vshrl.u32 %v1897, 7
    %v1899 = vsub.s32 %v1896, %v1898
    %v1900 = vrot.slane %v1886, %v1899
    %v1901 = vcombine.low %v1877, %v1893
    %v1902 = vcombine.high %v1877, %v1893
    %v1904 = vunpack.c.l.s4 1934713408
    %v1905 = vunpack.c.0.s8 %v1904
    %v1906 = vlaneseq
    %v1907 = vshrl.u32 %v1906, 7
    %v1908 = vsub.s32 %v1905, %v1907
    %v1909 = vrot.slane %v1901, %v1908
    %v1911 = vunpack.c.l.s4 1934713408
    %v1912 = vunpack.c.0.s8 %v1911
    %v1913 = vlaneseq
    %v1914 = vshrl.u32 %v1913, 7
    %v1915 = vsub.s32 %v1912, %v1914
    %v1916 = vrot.slane %v1902, %v1915
    %v1917 = vcombine.low %v1884, %v1900
    %v1918 = vcombine.high %v1884, %v1900
    %v1920 = vunpack.c.l.s4 1934713408
    %v1921 = vunpack.c.0.s8 %v1920
    %v1922 = vlaneseq
    %v1923 = vshrl.u32 %v1922, 7
    %v1924 = vsub.s32 %v1921, %v1923
    %v1925 = vrot.slane %v1917, %v1924
    %v1927 = vunpack.c.l.s4 1934713408
    %v1928 = vunpack.c.0.s8 %v1927
    %v1929 = vlaneseq
    %v1930 = vshrl.u32 %v1929, 7
    %v1931 = vsub.s32 %v1928, %v1930
    %v1932 = vrot.slane %v1918, %v1931
    %v1933 = vcombine.high %v1909, 0.0
    %v1934 = vcombine.high %v1916, 0.0
    %v1935 = vcombine.high %v1925, 0.0
    %v1936 = vcombine.high %v1932, 0.0
    %v1937 = vcombine.low %v1848, %v1856
    %v1938 = vcombine.high %v1848, %v1856
    %v1940 = vunpack.c.l.s4 1983009808
    %v1941 = vunpack.c.0.s8 %v1940
    %v1942 = vlaneseq
    %v1943 = vshrl.u32 %v1942, 7
    %v1944 = vsub.s32 %v1941, %v1943
    %v1945 = vrot.slane %v1937, %v1944
    %v1947 = vunpack.c.l.s4 1983009808
    %v1948 = vunpack.c.0.s8 %v1947
    %v1949 = vlaneseq
    %v1950 = vshrl.u32 %v1949, 7
    %v1951 = vsub.s32 %v1948, %v1950
    %v1952 = vrot.slane %v1938, %v1951
    %v1953 = vcombine.low %v1852, %v1860
    %v1954 = vcombine.high %v1852, %v1860
    %v1956 = vunpack.c.l.s4 1983009808
    %v1957 = vunpack.c.0.s8 %v1956
    %v1958 = vlaneseq
    %v1959 = vshrl.u32 %v1958, 7
    %v1960 = vsub.s32 %v1957, %v1959
    %v1961 = vrot.slane %v1953, %v1960
    %v1963 = vunpack.c.l.s4 1983009808
    %v1964 = vunpack.c.0.s8 %v1963
    %v1965 = vlaneseq
    %v1966 = vshrl.u32 %v1965, 7
    %v1967 = vsub.s32 %v1964, %v1966
    %v1968 = vrot.slane %v1954, %v1967
    %v1969 = vcombine.low %v1945, %v1961
    %v1970 = vcombine.high %v1945, %v1961
    %v1972 = vunpack.c.l.s4 1934713408
    %v1973 = vunpack.c.0.s8 %v1972
    %v1974 = vlaneseq
    %v1975 = vshrl.u32 %v1974, 7
    %v1976 = vsub.s32 %v1973, %v1975
    %v1977 = vrot.slane %v1969, %v1976
    %v1979 = vunpack.c.l.s4 1934713408
    %v1980 = vunpack.c.0.s8 %v1979
    %v1981 = vlaneseq
    %v1982 = vshrl.u32 %v1981, 7
    %v1983 = vsub.s32 %v1980, %v1982
    %v1984 = vrot.slane %v1970, %v1983
    %v1985 = vcombine.low %v1952, %v1968
    %v1986 = vcombine.high %v1952, %v1968
    %v1988 = vunpack.c.l.s4 1934713408
    %v1989 = vunpack.c.0.s8 %v1988
    %v1990 = vlaneseq
    %v1991 = vshrl.u32 %v1990, 7
    %v1992 = vsub.s32 %v1989, %v1991
    %v1993 = vrot.slane %v1985, %v1992
    %v1995 = vunpack.c.l.s4 1934713408
    %v1996 = vunpack.c.0.s8 %v1995
    %v1997 = vlaneseq
    %v1998 = vshrl.u32 %v1997, 7
    %v1999 = vsub.s32 %v1996, %v1998
    %v2000 = vrot.slane %v1986, %v1999
    %v2001 = vcombine.high %v1977, 0.0
    %v2002 = vcombine.high %v1984, 0.0
    %v2003 = vcombine.high %v1993, 0.0
    %v2004 = vcombine.high %v2000, 0.0
    %2006 = vrot.lane.b32.xlu0 %v1933, 16
    %v2007 = vpop.permute.xlu0 %2006
    %2010 = vrot.lane.b32.xlu0 %v1916, 32
    %v2011 = vpop.permute.xlu0 %2010
    %2014 = vrot.lane.b32.xlu0 %v1934, 48
    %v2015 = vpop.permute.xlu0 %2014
    %2018 = vrot.lane.b32.xlu0 %v1925, 64
    %v2019 = vpop.permute.xlu0 %2018
    %2022 = vrot.lane.b32.xlu0 %v1935, 80
    %v2023 = vpop.permute.xlu0 %2022
    %2026 = vrot.lane.b32.xlu0 %v1932, 96
    %v2027 = vpop.permute.xlu0 %2026
    %2030 = vrot.lane.b32.xlu0 %v1936, 112
    %v2031 = vpop.permute.xlu0 %2030
    %2034 = vrot.lane.b32.xlu0 %v2001, 16
    %v2035 = vpop.permute.xlu0 %2034
    %2038 = vrot.lane.b32.xlu0 %v1984, 32
    %v2039 = vpop.permute.xlu0 %2038
    %2042 = vrot.lane.b32.xlu0 %v2002, 48
    %v2043 = vpop.permute.xlu0 %2042
    %2046 = vrot.lane.b32.xlu0 %v1993, 64
    %v2047 = vpop.permute.xlu0 %2046
    %2050 = vrot.lane.b32.xlu0 %v2003, 80
    %v2051 = vpop.permute.xlu0 %2050
    %2054 = vrot.lane.b32.xlu0 %v2000, 96
    %v2055 = vpop.permute.xlu0 %2054
    %2058 = vrot.lane.b32.xlu0 %v2004, 112
    %v2059 = vpop.permute.xlu0 %2058
    %v2061 = vsel %vm364, %v1909, %v2007
    %v2062 = vsel %vm366, %v2061, %v2011
    %v2063 = vsel %vm368, %v2062, %v2015
    %v2064 = vsel %vm370, %v2063, %v2019
    %v2065 = vsel %vm372, %v2064, %v2023
    %v2066 = vsel %vm374, %v2065, %v2027
    %v2067 = vsel %vm376, %v2066, %v2031
    %v2068 = vsel %vm364, %v1977, %v2035
    %v2069 = vsel %vm366, %v2068, %v2039
    %v2070 = vsel %vm368, %v2069, %v2043
    %v2071 = vsel %vm370, %v2070, %v2047
    %v2072 = vsel %vm372, %v2071, %v2051
    %v2073 = vsel %vm374, %v2072, %v2055
    %v2074 = vsel %vm376, %v2073, %v2059
    %v2077 = vrot.slane %v2067, 4
    %v2078 = vrot.slane %v2074, 4
    %2081 = vst [vmem:[#allocation3 + $0x60] sm:$0xf0] %v2077
    %2082 = vst [vmem:[#allocation3 + $0x68] sm:$0xf0] %v2078
    %v2083 = vld [vmem:[#allocation2 + $0x2] sm:$0xff]
    %v2084 = vld [vmem:[#allocation2 + $0xa] sm:$0xff]
    %v2085 = vld [vmem:[#allocation2 + $0x1a] sm:$0xff]
    %v2086 = vld [vmem:[#allocation2 + $0x22] sm:$0xff]
    %v2087 = vld [vmem:[#allocation2 + $0x32] sm:$0xff]
    %v2088 = vld [vmem:[#allocation2 + $0x3a] sm:$0xff]
    %v2089 = vld [vmem:[#allocation2 + $0x4a] sm:$0xff]
    %v2090 = vld [vmem:[#allocation2 + $0x52] sm:$0xff]
    %2099 = vrot.lane.b32.xlu0 %v2083, 126
    %v2100 = vpop.permute.xlu0 %2099
    %2101 = vrot.lane.b32.xlu0 %v2084, 126
    %v2102 = vpop.permute.xlu0 %2101
    %2103 = vrot.lane.b32.xlu0 %v2085, 126
    %v2104 = vpop.permute.xlu0 %2103
    %2105 = vrot.lane.b32.xlu0 %v2086, 126
    %v2106 = vpop.permute.xlu0 %2105
    %2107 = vrot.lane.b32.xlu0 %v2087, 126
    %v2108 = vpop.permute.xlu0 %2107
    %2109 = vrot.lane.b32.xlu0 %v2088, 126
    %v2110 = vpop.permute.xlu0 %2109
    %2111 = vrot.lane.b32.xlu0 %v2089, 126
    %v2112 = vpop.permute.xlu0 %2111
    %2113 = vrot.lane.b32.xlu0 %v2090, 126
    %v2114 = vpop.permute.xlu0 %2113
    %v2123 = vcombine.low %v2100, %v2108
    %v2124 = vcombine.high %v2100, %v2108
    %v2126 = vunpack.c.l.s4 1983009808
    %v2127 = vunpack.c.0.s8 %v2126
    %v2128 = vlaneseq
    %v2129 = vshrl.u32 %v2128, 7
    %v2130 = vsub.s32 %v2127, %v2129
    %v2131 = vrot.slane %v2123, %v2130
    %v2133 = vunpack.c.l.s4 1983009808
    %v2134 = vunpack.c.0.s8 %v2133
    %v2135 = vlaneseq
    %v2136 = vshrl.u32 %v2135, 7
    %v2137 = vsub.s32 %v2134, %v2136
    %v2138 = vrot.slane %v2124, %v2137
    %v2139 = vcombine.low %v2104, %v2112
    %v2140 = vcombine.high %v2104, %v2112
    %v2142 = vunpack.c.l.s4 1983009808
    %v2143 = vunpack.c.0.s8 %v2142
    %v2144 = vlaneseq
    %v2145 = vshrl.u32 %v2144, 7
    %v2146 = vsub.s32 %v2143, %v2145
    %v2147 = vrot.slane %v2139, %v2146
    %v2149 = vunpack.c.l.s4 1983009808
    %v2150 = vunpack.c.0.s8 %v2149
    %v2151 = vlaneseq
    %v2152 = vshrl.u32 %v2151, 7
    %v2153 = vsub.s32 %v2150, %v2152
    %v2154 = vrot.slane %v2140, %v2153
    %v2155 = vcombine.low %v2131, %v2147
    %v2156 = vcombine.high %v2131, %v2147
    %v2158 = vunpack.c.l.s4 1934713408
    %v2159 = vunpack.c.0.s8 %v2158
    %v2160 = vlaneseq
    %v2161 = vshrl.u32 %v2160, 7
    %v2162 = vsub.s32 %v2159, %v2161
    %v2163 = vrot.slane %v2155, %v2162
    %v2165 = vunpack.c.l.s4 1934713408
    %v2166 = vunpack.c.0.s8 %v2165
    %v2167 = vlaneseq
    %v2168 = vshrl.u32 %v2167, 7
    %v2169 = vsub.s32 %v2166, %v2168
    %v2170 = vrot.slane %v2156, %v2169
    %v2171 = vcombine.low %v2138, %v2154
    %v2172 = vcombine.high %v2138, %v2154
    %v2174 = vunpack.c.l.s4 1934713408
    %v2175 = vunpack.c.0.s8 %v2174
    %v2176 = vlaneseq
    %v2177 = vshrl.u32 %v2176, 7
    %v2178 = vsub.s32 %v2175, %v2177
    %v2179 = vrot.slane %v2171, %v2178
    %v2181 = vunpack.c.l.s4 1934713408
    %v2182 = vunpack.c.0.s8 %v2181
    %v2183 = vlaneseq
    %v2184 = vshrl.u32 %v2183, 7
    %v2185 = vsub.s32 %v2182, %v2184
    %v2186 = vrot.slane %v2172, %v2185
    %v2187 = vcombine.high %v2163, 0.0
    %v2188 = vcombine.high %v2170, 0.0
    %v2189 = vcombine.high %v2179, 0.0
    %v2190 = vcombine.high %v2186, 0.0
    %v2191 = vcombine.low %v2102, %v2110
    %v2192 = vcombine.high %v2102, %v2110
    %v2194 = vunpack.c.l.s4 1983009808
    %v2195 = vunpack.c.0.s8 %v2194
    %v2196 = vlaneseq
    %v2197 = vshrl.u32 %v2196, 7
    %v2198 = vsub.s32 %v2195, %v2197
    %v2199 = vrot.slane %v2191, %v2198
    %v2201 = vunpack.c.l.s4 1983009808
    %v2202 = vunpack.c.0.s8 %v2201
    %v2203 = vlaneseq
    %v2204 = vshrl.u32 %v2203, 7
    %v2205 = vsub.s32 %v2202, %v2204
    %v2206 = vrot.slane %v2192, %v2205
    %v2207 = vcombine.low %v2106, %v2114
    %v2208 = vcombine.high %v2106, %v2114
    %v2210 = vunpack.c.l.s4 1983009808
    %v2211 = vunpack.c.0.s8 %v2210
    %v2212 = vlaneseq
    %v2213 = vshrl.u32 %v2212, 7
    %v2214 = vsub.s32 %v2211, %v2213
    %v2215 = vrot.slane %v2207, %v2214
    %v2217 = vunpack.c.l.s4 1983009808
    %v2218 = vunpack.c.0.s8 %v2217
    %v2219 = vlaneseq
    %v2220 = vshrl.u32 %v2219, 7
    %v2221 = vsub.s32 %v2218, %v2220
    %v2222 = vrot.slane %v2208, %v2221
    %v2223 = vcombine.low %v2199, %v2215
    %v2224 = vcombine.high %v2199, %v2215
    %v2226 = vunpack.c.l.s4 1934713408
    %v2227 = vunpack.c.0.s8 %v2226
    %v2228 = vlaneseq
    %v2229 = vshrl.u32 %v2228, 7
    %v2230 = vsub.s32 %v2227, %v2229
    %v2231 = vrot.slane %v2223, %v2230
    %v2233 = vunpack.c.l.s4 1934713408
    %v2234 = vunpack.c.0.s8 %v2233
    %v2235 = vlaneseq
    %v2236 = vshrl.u32 %v2235, 7
    %v2237 = vsub.s32 %v2234, %v2236
    %v2238 = vrot.slane %v2224, %v2237
    %v2239 = vcombine.low %v2206, %v2222
    %v2240 = vcombine.high %v2206, %v2222
    %v2242 = vunpack.c.l.s4 1934713408
    %v2243 = vunpack.c.0.s8 %v2242
    %v2244 = vlaneseq
    %v2245 = vshrl.u32 %v2244, 7
    %v2246 = vsub.s32 %v2243, %v2245
    %v2247 = vrot.slane %v2239, %v2246
    %v2249 = vunpack.c.l.s4 1934713408
    %v2250 = vunpack.c.0.s8 %v2249
    %v2251 = vlaneseq
    %v2252 = vshrl.u32 %v2251, 7
    %v2253 = vsub.s32 %v2250, %v2252
    %v2254 = vrot.slane %v2240, %v2253
    %v2255 = vcombine.high %v2231, 0.0
    %v2256 = vcombine.high %v2238, 0.0
    %v2257 = vcombine.high %v2247, 0.0
    %v2258 = vcombine.high %v2254, 0.0
    %2260 = vrot.lane.b32.xlu0 %v2187, 16
    %v2261 = vpop.permute.xlu0 %2260
    %2264 = vrot.lane.b32.xlu0 %v2170, 32
    %v2265 = vpop.permute.xlu0 %2264
    %2268 = vrot.lane.b32.xlu0 %v2188, 48
    %v2269 = vpop.permute.xlu0 %2268
    %2272 = vrot.lane.b32.xlu0 %v2179, 64
    %v2273 = vpop.permute.xlu0 %2272
    %2276 = vrot.lane.b32.xlu0 %v2189, 80
    %v2277 = vpop.permute.xlu0 %2276
    %2280 = vrot.lane.b32.xlu0 %v2186, 96
    %v2281 = vpop.permute.xlu0 %2280
    %2284 = vrot.lane.b32.xlu0 %v2190, 112
    %v2285 = vpop.permute.xlu0 %2284
    %2288 = vrot.lane.b32.xlu0 %v2255, 16
    %v2289 = vpop.permute.xlu0 %2288
    %2292 = vrot.lane.b32.xlu0 %v2238, 32
    %v2293 = vpop.permute.xlu0 %2292
    %2296 = vrot.lane.b32.xlu0 %v2256, 48
    %v2297 = vpop.permute.xlu0 %2296
    %2300 = vrot.lane.b32.xlu0 %v2247, 64
    %v2301 = vpop.permute.xlu0 %2300
    %2304 = vrot.lane.b32.xlu0 %v2257, 80
    %v2305 = vpop.permute.xlu0 %2304
    %2308 = vrot.lane.b32.xlu0 %v2254, 96
    %v2309 = vpop.permute.xlu0 %2308
    %2312 = vrot.lane.b32.xlu0 %v2258, 112
    %v2313 = vpop.permute.xlu0 %2312
    %v2315 = vsel %vm364, %v2163, %v2261
    %v2316 = vsel %vm366, %v2315, %v2265
    %v2317 = vsel %vm368, %v2316, %v2269
    %v2318 = vsel %vm370, %v2317, %v2273
    %v2319 = vsel %vm372, %v2318, %v2277
    %v2320 = vsel %vm374, %v2319, %v2281
    %v2321 = vsel %vm376, %v2320, %v2285
    %v2322 = vsel %vm364, %v2231, %v2289
    %v2323 = vsel %vm366, %v2322, %v2293
    %v2324 = vsel %vm368, %v2323, %v2297
    %v2325 = vsel %vm370, %v2324, %v2301
    %v2326 = vsel %vm372, %v2325, %v2305
    %v2327 = vsel %vm374, %v2326, %v2309
    %v2328 = vsel %vm376, %v2327, %v2313
    %2329 = vst [vmem:[#allocation3 + $0x80] sm:$0xf] %v2321
    %2330 = vst [vmem:[#allocation3 + $0x88] sm:$0xf] %v2328
    %s2331 = scalar_lea.vmem [#allocation2], 96
    %v2332 = vld [vmem:[%s2331] sm:$0xff]
    %v2333 = vld [vmem:[%s2331 + $0x8] sm:$0xff]
    %v2334 = vld [vmem:[%s2331 + $0x18] sm:$0xff]
    %v2335 = vld [vmem:[%s2331 + $0x20] sm:$0xff]
    %v2336 = vld [vmem:[%s2331 + $0x30] sm:$0xff]
    %v2337 = vld [vmem:[%s2331 + $0x38] sm:$0xff]
    %v2338 = vld [vmem:[%s2331 + $0x48] sm:$0xff]
    %v2339 = vld [vmem:[%s2331 + $0x50] sm:$0xff]
    %v2340 = vcombine.low %v2332, %v2336
    %v2341 = vcombine.high %v2332, %v2336
    %v2343 = vunpack.c.l.s4 1983009808
    %v2344 = vunpack.c.0.s8 %v2343
    %v2345 = vlaneseq
    %v2346 = vshrl.u32 %v2345, 7
    %v2347 = vsub.s32 %v2344, %v2346
    %v2348 = vrot.slane %v2340, %v2347
    %v2350 = vunpack.c.l.s4 1983009808
    %v2351 = vunpack.c.0.s8 %v2350
    %v2352 = vlaneseq
    %v2353 = vshrl.u32 %v2352, 7
    %v2354 = vsub.s32 %v2351, %v2353
    %v2355 = vrot.slane %v2341, %v2354
    %v2356 = vcombine.low %v2334, %v2338
    %v2357 = vcombine.high %v2334, %v2338
    %v2359 = vunpack.c.l.s4 1983009808
    %v2360 = vunpack.c.0.s8 %v2359
    %v2361 = vlaneseq
    %v2362 = vshrl.u32 %v2361, 7
    %v2363 = vsub.s32 %v2360, %v2362
    %v2364 = vrot.slane %v2356, %v2363
    %v2366 = vunpack.c.l.s4 1983009808
    %v2367 = vunpack.c.0.s8 %v2366
    %v2368 = vlaneseq
    %v2369 = vshrl.u32 %v2368, 7
    %v2370 = vsub.s32 %v2367, %v2369
    %v2371 = vrot.slane %v2357, %v2370
    %v2372 = vcombine.low %v2348, %v2364
    %v2373 = vcombine.high %v2348, %v2364
    %v2375 = vunpack.c.l.s4 1934713408
    %v2376 = vunpack.c.0.s8 %v2375
    %v2377 = vlaneseq
    %v2378 = vshrl.u32 %v2377, 7
    %v2379 = vsub.s32 %v2376, %v2378
    %v2380 = vrot.slane %v2372, %v2379
    %v2382 = vunpack.c.l.s4 1934713408
    %v2383 = vunpack.c.0.s8 %v2382
    %v2384 = vlaneseq
    %v2385 = vshrl.u32 %v2384, 7
    %v2386 = vsub.s32 %v2383, %v2385
    %v2387 = vrot.slane %v2373, %v2386
    %v2388 = vcombine.low %v2355, %v2371
    %v2389 = vcombine.high %v2355, %v2371
    %v2391 = vunpack.c.l.s4 1934713408
    %v2392 = vunpack.c.0.s8 %v2391
    %v2393 = vlaneseq
    %v2394 = vshrl.u32 %v2393, 7
    %v2395 = vsub.s32 %v2392, %v2394
    %v2396 = vrot.slane %v2388, %v2395
    %v2398 = vunpack.c.l.s4 1934713408
    %v2399 = vunpack.c.0.s8 %v2398
    %v2400 = vlaneseq
    %v2401 = vshrl.u32 %v2400, 7
    %v2402 = vsub.s32 %v2399, %v2401
    %v2403 = vrot.slane %v2389, %v2402
    %v2404 = vcombine.high %v2380, 0.0
    %v2405 = vcombine.high %v2387, 0.0
    %v2406 = vcombine.high %v2396, 0.0
    %v2407 = vcombine.high %v2403, 0.0
    %v2408 = vcombine.low %v2333, %v2337
    %v2409 = vcombine.high %v2333, %v2337
    %v2411 = vunpack.c.l.s4 1983009808
    %v2412 = vunpack.c.0.s8 %v2411
    %v2413 = vlaneseq
    %v2414 = vshrl.u32 %v2413, 7
    %v2415 = vsub.s32 %v2412, %v2414
    %v2416 = vrot.slane %v2408, %v2415
    %v2418 = vunpack.c.l.s4 1983009808
    %v2419 = vunpack.c.0.s8 %v2418
    %v2420 = vlaneseq
    %v2421 = vshrl.u32 %v2420, 7
    %v2422 = vsub.s32 %v2419, %v2421
    %v2423 = vrot.slane %v2409, %v2422
    %v2424 = vcombine.low %v2335, %v2339
    %v2425 = vcombine.high %v2335, %v2339
    %v2427 = vunpack.c.l.s4 1983009808
    %v2428 = vunpack.c.0.s8 %v2427
    %v2429 = vlaneseq
    %v2430 = vshrl.u32 %v2429, 7
    %v2431 = vsub.s32 %v2428, %v2430
    %v2432 = vrot.slane %v2424, %v2431
    %v2434 = vunpack.c.l.s4 1983009808
    %v2435 = vunpack.c.0.s8 %v2434
    %v2436 = vlaneseq
    %v2437 = vshrl.u32 %v2436, 7
    %v2438 = vsub.s32 %v2435, %v2437
    %v2439 = vrot.slane %v2425, %v2438
    %v2440 = vcombine.low %v2416, %v2432
    %v2441 = vcombine.high %v2416, %v2432
    %v2443 = vunpack.c.l.s4 1934713408
    %v2444 = vunpack.c.0.s8 %v2443
    %v2445 = vlaneseq
    %v2446 = vshrl.u32 %v2445, 7
    %v2447 = vsub.s32 %v2444, %v2446
    %v2448 = vrot.slane %v2440, %v2447
    %v2450 = vunpack.c.l.s4 1934713408
    %v2451 = vunpack.c.0.s8 %v2450
    %v2452 = vlaneseq
    %v2453 = vshrl.u32 %v2452, 7
    %v2454 = vsub.s32 %v2451, %v2453
    %v2455 = vrot.slane %v2441, %v2454
    %v2456 = vcombine.low %v2423, %v2439
    %v2457 = vcombine.high %v2423, %v2439
    %v2459 = vunpack.c.l.s4 1934713408
    %v2460 = vunpack.c.0.s8 %v2459
    %v2461 = vlaneseq
    %v2462 = vshrl.u32 %v2461, 7
    %v2463 = vsub.s32 %v2460, %v2462
    %v2464 = vrot.slane %v2456, %v2463
    %v2466 = vunpack.c.l.s4 1934713408
    %v2467 = vunpack.c.0.s8 %v2466
    %v2468 = vlaneseq
    %v2469 = vshrl.u32 %v2468, 7
    %v2470 = vsub.s32 %v2467, %v2469
    %v2471 = vrot.slane %v2457, %v2470
    %v2472 = vcombine.high %v2448, 0.0
    %v2473 = vcombine.high %v2455, 0.0
    %v2474 = vcombine.high %v2464, 0.0
    %v2475 = vcombine.high %v2471, 0.0
    %2477 = vrot.lane.b32.xlu0 %v2404, 16
    %v2478 = vpop.permute.xlu0 %2477
    %2481 = vrot.lane.b32.xlu0 %v2387, 32
    %v2482 = vpop.permute.xlu0 %2481
    %2485 = vrot.lane.b32.xlu0 %v2405, 48
    %v2486 = vpop.permute.xlu0 %2485
    %2489 = vrot.lane.b32.xlu0 %v2396, 64
    %v2490 = vpop.permute.xlu0 %2489
    %2493 = vrot.lane.b32.xlu0 %v2406, 80
    %v2494 = vpop.permute.xlu0 %2493
    %2497 = vrot.lane.b32.xlu0 %v2403, 96
    %v2498 = vpop.permute.xlu0 %2497
    %2501 = vrot.lane.b32.xlu0 %v2407, 112
    %v2502 = vpop.permute.xlu0 %2501
    %2505 = vrot.lane.b32.xlu0 %v2472, 16
    %v2506 = vpop.permute.xlu0 %2505
    %2509 = vrot.lane.b32.xlu0 %v2455, 32
    %v2510 = vpop.permute.xlu0 %2509
    %2513 = vrot.lane.b32.xlu0 %v2473, 48
    %v2514 = vpop.permute.xlu0 %2513
    %2517 = vrot.lane.b32.xlu0 %v2464, 64
    %v2518 = vpop.permute.xlu0 %2517
    %2521 = vrot.lane.b32.xlu0 %v2474, 80
    %v2522 = vpop.permute.xlu0 %2521
    %2525 = vrot.lane.b32.xlu0 %v2471, 96
    %v2526 = vpop.permute.xlu0 %2525
    %2529 = vrot.lane.b32.xlu0 %v2475, 112
    %v2530 = vpop.permute.xlu0 %2529
    %v2532 = vsel %vm364, %v2380, %v2478
    %v2533 = vsel %vm366, %v2532, %v2482
    %v2534 = vsel %vm368, %v2533, %v2486
    %v2535 = vsel %vm370, %v2534, %v2490
    %v2536 = vsel %vm372, %v2535, %v2494
    %v2537 = vsel %vm374, %v2536, %v2498
    %v2538 = vsel %vm376, %v2537, %v2502
    %v2539 = vsel %vm364, %v2448, %v2506
    %v2540 = vsel %vm366, %v2539, %v2510
    %v2541 = vsel %vm368, %v2540, %v2514
    %v2542 = vsel %vm370, %v2541, %v2518
    %v2543 = vsel %vm372, %v2542, %v2522
    %v2544 = vsel %vm374, %v2543, %v2526
    %v2545 = vsel %vm376, %v2544, %v2530
    %2546 = vst [vmem:[#allocation3 + $0x10] sm:$0xf] %v2538
    %2547 = vst [vmem:[#allocation3 + $0x18] sm:$0xf] %v2545
    %v2548 = vld [vmem:[%s2331] sm:$0xff]
    %v2549 = vld [vmem:[%s2331 + $0x8] sm:$0xff]
    %v2550 = vld [vmem:[%s2331 + $0x18] sm:$0xff]
    %v2551 = vld [vmem:[%s2331 + $0x20] sm:$0xff]
    %v2552 = vld [vmem:[%s2331 + $0x30] sm:$0xff]
    %v2553 = vld [vmem:[%s2331 + $0x38] sm:$0xff]
    %v2554 = vld [vmem:[%s2331 + $0x48] sm:$0xff]
    %v2555 = vld [vmem:[%s2331 + $0x50] sm:$0xff]
    %2564 = vrot.lane.b32.xlu0 %v2548, 127
    %v2565 = vpop.permute.xlu0 %2564
    %2566 = vrot.lane.b32.xlu0 %v2549, 127
    %v2567 = vpop.permute.xlu0 %2566
    %2568 = vrot.lane.b32.xlu0 %v2550, 127
    %v2569 = vpop.permute.xlu0 %2568
    %2570 = vrot.lane.b32.xlu0 %v2551, 127
    %v2571 = vpop.permute.xlu0 %2570
    %2572 = vrot.lane.b32.xlu0 %v2552, 127
    %v2573 = vpop.permute.xlu0 %2572
    %2574 = vrot.lane.b32.xlu0 %v2553, 127
    %v2575 = vpop.permute.xlu0 %2574
    %2576 = vrot.lane.b32.xlu0 %v2554, 127
    %v2577 = vpop.permute.xlu0 %2576
    %2578 = vrot.lane.b32.xlu0 %v2555, 127
    %v2579 = vpop.permute.xlu0 %2578
    %v2588 = vcombine.low %v2565, %v2573
    %v2589 = vcombine.high %v2565, %v2573
    %v2591 = vunpack.c.l.s4 1983009808
    %v2592 = vunpack.c.0.s8 %v2591
    %v2593 = vlaneseq
    %v2594 = vshrl.u32 %v2593, 7
    %v2595 = vsub.s32 %v2592, %v2594
    %v2596 = vrot.slane %v2588, %v2595
    %v2598 = vunpack.c.l.s4 1983009808
    %v2599 = vunpack.c.0.s8 %v2598
    %v2600 = vlaneseq
    %v2601 = vshrl.u32 %v2600, 7
    %v2602 = vsub.s32 %v2599, %v2601
    %v2603 = vrot.slane %v2589, %v2602
    %v2604 = vcombine.low %v2569, %v2577
    %v2605 = vcombine.high %v2569, %v2577
    %v2607 = vunpack.c.l.s4 1983009808
    %v2608 = vunpack.c.0.s8 %v2607
    %v2609 = vlaneseq
    %v2610 = vshrl.u32 %v2609, 7
    %v2611 = vsub.s32 %v2608, %v2610
    %v2612 = vrot.slane %v2604, %v2611
    %v2614 = vunpack.c.l.s4 1983009808
    %v2615 = vunpack.c.0.s8 %v2614
    %v2616 = vlaneseq
    %v2617 = vshrl.u32 %v2616, 7
    %v2618 = vsub.s32 %v2615, %v2617
    %v2619 = vrot.slane %v2605, %v2618
    %v2620 = vcombine.low %v2596, %v2612
    %v2621 = vcombine.high %v2596, %v2612
    %v2623 = vunpack.c.l.s4 1934713408
    %v2624 = vunpack.c.0.s8 %v2623
    %v2625 = vlaneseq
    %v2626 = vshrl.u32 %v2625, 7
    %v2627 = vsub.s32 %v2624, %v2626
    %v2628 = vrot.slane %v2620, %v2627
    %v2630 = vunpack.c.l.s4 1934713408
    %v2631 = vunpack.c.0.s8 %v2630
    %v2632 = vlaneseq
    %v2633 = vshrl.u32 %v2632, 7
    %v2634 = vsub.s32 %v2631, %v2633
    %v2635 = vrot.slane %v2621, %v2634
    %v2636 = vcombine.low %v2603, %v2619
    %v2637 = vcombine.high %v2603, %v2619
    %v2639 = vunpack.c.l.s4 1934713408
    %v2640 = vunpack.c.0.s8 %v2639
    %v2641 = vlaneseq
    %v2642 = vshrl.u32 %v2641, 7
    %v2643 = vsub.s32 %v2640, %v2642
    %v2644 = vrot.slane %v2636, %v2643
    %v2646 = vunpack.c.l.s4 1934713408
    %v2647 = vunpack.c.0.s8 %v2646
    %v2648 = vlaneseq
    %v2649 = vshrl.u32 %v2648, 7
    %v2650 = vsub.s32 %v2647, %v2649
    %v2651 = vrot.slane %v2637, %v2650
    %v2652 = vcombine.high %v2628, 0.0
    %v2653 = vcombine.high %v2635, 0.0
    %v2654 = vcombine.high %v2644, 0.0
    %v2655 = vcombine.high %v2651, 0.0
    %v2656 = vcombine.low %v2567, %v2575
    %v2657 = vcombine.high %v2567, %v2575
    %v2659 = vunpack.c.l.s4 1983009808
    %v2660 = vunpack.c.0.s8 %v2659
    %v2661 = vlaneseq
    %v2662 = vshrl.u32 %v2661, 7
    %v2663 = vsub.s32 %v2660, %v2662
    %v2664 = vrot.slane %v2656, %v2663
    %v2666 = vunpack.c.l.s4 1983009808
    %v2667 = vunpack.c.0.s8 %v2666
    %v2668 = vlaneseq
    %v2669 = vshrl.u32 %v2668, 7
    %v2670 = vsub.s32 %v2667, %v2669
    %v2671 = vrot.slane %v2657, %v2670
    %v2672 = vcombine.low %v2571, %v2579
    %v2673 = vcombine.high %v2571, %v2579
    %v2675 = vunpack.c.l.s4 1983009808
    %v2676 = vunpack.c.0.s8 %v2675
    %v2677 = vlaneseq
    %v2678 = vshrl.u32 %v2677, 7
    %v2679 = vsub.s32 %v2676, %v2678
    %v2680 = vrot.slane %v2672, %v2679
    %v2682 = vunpack.c.l.s4 1983009808
    %v2683 = vunpack.c.0.s8 %v2682
    %v2684 = vlaneseq
    %v2685 = vshrl.u32 %v2684, 7
    %v2686 = vsub.s32 %v2683, %v2685
    %v2687 = vrot.slane %v2673, %v2686
    %v2688 = vcombine.low %v2664, %v2680
    %v2689 = vcombine.high %v2664, %v2680
    %v2691 = vunpack.c.l.s4 1934713408
    %v2692 = vunpack.c.0.s8 %v2691
    %v2693 = vlaneseq
    %v2694 = vshrl.u32 %v2693, 7
    %v2695 = vsub.s32 %v2692, %v2694
    %v2696 = vrot.slane %v2688, %v2695
    %v2698 = vunpack.c.l.s4 1934713408
    %v2699 = vunpack.c.0.s8 %v2698
    %v2700 = vlaneseq
    %v2701 = vshrl.u32 %v2700, 7
    %v2702 = vsub.s32 %v2699, %v2701
    %v2703 = vrot.slane %v2689, %v2702
    %v2704 = vcombine.low %v2671, %v2687
    %v2705 = vcombine.high %v2671, %v2687
    %v2707 = vunpack.c.l.s4 1934713408
    %v2708 = vunpack.c.0.s8 %v2707
    %v2709 = vlaneseq
    %v2710 = vshrl.u32 %v2709, 7
    %v2711 = vsub.s32 %v2708, %v2710
    %v2712 = vrot.slane %v2704, %v2711
    %v2714 = vunpack.c.l.s4 1934713408
    %v2715 = vunpack.c.0.s8 %v2714
    %v2716 = vlaneseq
    %v2717 = vshrl.u32 %v2716, 7
    %v2718 = vsub.s32 %v2715, %v2717
    %v2719 = vrot.slane %v2705, %v2718
    %v2720 = vcombine.high %v2696, 0.0
    %v2721 = vcombine.high %v2703, 0.0
    %v2722 = vcombine.high %v2712, 0.0
    %v2723 = vcombine.high %v2719, 0.0
    %2725 = vrot.lane.b32.xlu0 %v2652, 16
    %v2726 = vpop.permute.xlu0 %2725
    %2729 = vrot.lane.b32.xlu0 %v2635, 32
    %v2730 = vpop.permute.xlu0 %2729
    %2733 = vrot.lane.b32.xlu0 %v2653, 48
    %v2734 = vpop.permute.xlu0 %2733
    %2737 = vrot.lane.b32.xlu0 %v2644, 64
    %v2738 = vpop.permute.xlu0 %2737
    %2741 = vrot.lane.b32.xlu0 %v2654, 80
    %v2742 = vpop.permute.xlu0 %2741
    %2745 = vrot.lane.b32.xlu0 %v2651, 96
    %v2746 = vpop.permute.xlu0 %2745
    %2749 = vrot.lane.b32.xlu0 %v2655, 112
    %v2750 = vpop.permute.xlu0 %2749
    %2753 = vrot.lane.b32.xlu0 %v2720, 16
    %v2754 = vpop.permute.xlu0 %2753
    %2757 = vrot.lane.b32.xlu0 %v2703, 32
    %v2758 = vpop.permute.xlu0 %2757
    %2761 = vrot.lane.b32.xlu0 %v2721, 48
    %v2762 = vpop.permute.xlu0 %2761
    %2765 = vrot.lane.b32.xlu0 %v2712, 64
    %v2766 = vpop.permute.xlu0 %2765
    %2769 = vrot.lane.b32.xlu0 %v2722, 80
    %v2770 = vpop.permute.xlu0 %2769
    %2773 = vrot.lane.b32.xlu0 %v2719, 96
    %v2774 = vpop.permute.xlu0 %2773
    %2777 = vrot.lane.b32.xlu0 %v2723, 112
    %v2778 = vpop.permute.xlu0 %2777
    %v2780 = vsel %vm364, %v2628, %v2726
    %v2781 = vsel %vm366, %v2780, %v2730
    %v2782 = vsel %vm368, %v2781, %v2734
    %v2783 = vsel %vm370, %v2782, %v2738
    %v2784 = vsel %vm372, %v2783, %v2742
    %v2785 = vsel %vm374, %v2784, %v2746
    %v2786 = vsel %vm376, %v2785, %v2750
    %v2787 = vsel %vm364, %v2696, %v2754
    %v2788 = vsel %vm366, %v2787, %v2758
    %v2789 = vsel %vm368, %v2788, %v2762
    %v2790 = vsel %vm370, %v2789, %v2766
    %v2791 = vsel %vm372, %v2790, %v2770
    %v2792 = vsel %vm374, %v2791, %v2774
    %v2793 = vsel %vm376, %v2792, %v2778
    %v2796 = vrot.slane %v2786, 4
    %v2797 = vrot.slane %v2793, 4
    %2800 = vst [vmem:[#allocation3 + $0x10] sm:$0xf0] %v2796
    %2801 = vst [vmem:[#allocation3 + $0x18] sm:$0xf0] %v2797
    %v2802 = vld [vmem:[%s2331] sm:$0xff]
    %v2803 = vld [vmem:[%s2331 + $0x8] sm:$0xff]
    %v2804 = vld [vmem:[%s2331 + $0x18] sm:$0xff]
    %v2805 = vld [vmem:[%s2331 + $0x20] sm:$0xff]
    %v2806 = vld [vmem:[%s2331 + $0x30] sm:$0xff]
    %v2807 = vld [vmem:[%s2331 + $0x38] sm:$0xff]
    %v2808 = vld [vmem:[%s2331 + $0x48] sm:$0xff]
    %v2809 = vld [vmem:[%s2331 + $0x50] sm:$0xff]
    %2818 = vrot.lane.b32.xlu0 %v2802, 126
    %v2819 = vpop.permute.xlu0 %2818
    %2820 = vrot.lane.b32.xlu0 %v2803, 126
    %v2821 = vpop.permute.xlu0 %2820
    %2822 = vrot.lane.b32.xlu0 %v2804, 126
    %v2823 = vpop.permute.xlu0 %2822
    %2824 = vrot.lane.b32.xlu0 %v2805, 126
    %v2825 = vpop.permute.xlu0 %2824
    %2826 = vrot.lane.b32.xlu0 %v2806, 126
    %v2827 = vpop.permute.xlu0 %2826
    %2828 = vrot.lane.b32.xlu0 %v2807, 126
    %v2829 = vpop.permute.xlu0 %2828
    %2830 = vrot.lane.b32.xlu0 %v2808, 126
    %v2831 = vpop.permute.xlu0 %2830
    %2832 = vrot.lane.b32.xlu0 %v2809, 126
    %v2833 = vpop.permute.xlu0 %2832
    %v2842 = vcombine.low %v2819, %v2827
    %v2843 = vcombine.high %v2819, %v2827
    %v2845 = vunpack.c.l.s4 1983009808
    %v2846 = vunpack.c.0.s8 %v2845
    %v2847 = vlaneseq
    %v2848 = vshrl.u32 %v2847, 7
    %v2849 = vsub.s32 %v2846, %v2848
    %v2850 = vrot.slane %v2842, %v2849
    %v2852 = vunpack.c.l.s4 1983009808
    %v2853 = vunpack.c.0.s8 %v2852
    %v2854 = vlaneseq
    %v2855 = vshrl.u32 %v2854, 7
    %v2856 = vsub.s32 %v2853, %v2855
    %v2857 = vrot.slane %v2843, %v2856
    %v2858 = vcombine.low %v2823, %v2831
    %v2859 = vcombine.high %v2823, %v2831
    %v2861 = vunpack.c.l.s4 1983009808
    %v2862 = vunpack.c.0.s8 %v2861
    %v2863 = vlaneseq
    %v2864 = vshrl.u32 %v2863, 7
    %v2865 = vsub.s32 %v2862, %v2864
    %v2866 = vrot.slane %v2858, %v2865
    %v2868 = vunpack.c.l.s4 1983009808
    %v2869 = vunpack.c.0.s8 %v2868
    %v2870 = vlaneseq
    %v2871 = vshrl.u32 %v2870, 7
    %v2872 = vsub.s32 %v2869, %v2871
    %v2873 = vrot.slane %v2859, %v2872
    %v2874 = vcombine.low %v2850, %v2866
    %v2875 = vcombine.high %v2850, %v2866
    %v2877 = vunpack.c.l.s4 1934713408
    %v2878 = vunpack.c.0.s8 %v2877
    %v2879 = vlaneseq
    %v2880 = vshrl.u32 %v2879, 7
    %v2881 = vsub.s32 %v2878, %v2880
    %v2882 = vrot.slane %v2874, %v2881
    %v2884 = vunpack.c.l.s4 1934713408
    %v2885 = vunpack.c.0.s8 %v2884
    %v2886 = vlaneseq
    %v2887 = vshrl.u32 %v2886, 7
    %v2888 = vsub.s32 %v2885, %v2887
    %v2889 = vrot.slane %v2875, %v2888
    %v2890 = vcombine.low %v2857, %v2873
    %v2891 = vcombine.high %v2857, %v2873
    %v2893 = vunpack.c.l.s4 1934713408
    %v2894 = vunpack.c.0.s8 %v2893
    %v2895 = vlaneseq
    %v2896 = vshrl.u32 %v2895, 7
    %v2897 = vsub.s32 %v2894, %v2896
    %v2898 = vrot.slane %v2890, %v2897
    %v2900 = vunpack.c.l.s4 1934713408
    %v2901 = vunpack.c.0.s8 %v2900
    %v2902 = vlaneseq
    %v2903 = vshrl.u32 %v2902, 7
    %v2904 = vsub.s32 %v2901, %v2903
    %v2905 = vrot.slane %v2891, %v2904
    %v2906 = vcombine.high %v2882, 0.0
    %v2907 = vcombine.high %v2889, 0.0
    %v2908 = vcombine.high %v2898, 0.0
    %v2909 = vcombine.high %v2905, 0.0
    %v2910 = vcombine.low %v2821, %v2829
    %v2911 = vcombine.high %v2821, %v2829
    %v2913 = vunpack.c.l.s4 1983009808
    %v2914 = vunpack.c.0.s8 %v2913
    %v2915 = vlaneseq
    %v2916 = vshrl.u32 %v2915, 7
    %v2917 = vsub.s32 %v2914, %v2916
    %v2918 = vrot.slane %v2910, %v2917
    %v2920 = vunpack.c.l.s4 1983009808
    %v2921 = vunpack.c.0.s8 %v2920
    %v2922 = vlaneseq
    %v2923 = vshrl.u32 %v2922, 7
    %v2924 = vsub.s32 %v2921, %v2923
    %v2925 = vrot.slane %v2911, %v2924
    %v2926 = vcombine.low %v2825, %v2833
    %v2927 = vcombine.high %v2825, %v2833
    %v2929 = vunpack.c.l.s4 1983009808
    %v2930 = vunpack.c.0.s8 %v2929
    %v2931 = vlaneseq
    %v2932 = vshrl.u32 %v2931, 7
    %v2933 = vsub.s32 %v2930, %v2932
    %v2934 = vrot.slane %v2926, %v2933
    %v2936 = vunpack.c.l.s4 1983009808
    %v2937 = vunpack.c.0.s8 %v2936
    %v2938 = vlaneseq
    %v2939 = vshrl.u32 %v2938, 7
    %v2940 = vsub.s32 %v2937, %v2939
    %v2941 = vrot.slane %v2927, %v2940
    %v2942 = vcombine.low %v2918, %v2934
    %v2943 = vcombine.high %v2918, %v2934
    %v2945 = vunpack.c.l.s4 1934713408
    %v2946 = vunpack.c.0.s8 %v2945
    %v2947 = vlaneseq
    %v2948 = vshrl.u32 %v2947, 7
    %v2949 = vsub.s32 %v2946, %v2948
    %v2950 = vrot.slane %v2942, %v2949
    %v2952 = vunpack.c.l.s4 1934713408
    %v2953 = vunpack.c.0.s8 %v2952
    %v2954 = vlaneseq
    %v2955 = vshrl.u32 %v2954, 7
    %v2956 = vsub.s32 %v2953, %v2955
    %v2957 = vrot.slane %v2943, %v2956
    %v2958 = vcombine.low %v2925, %v2941
    %v2959 = vcombine.high %v2925, %v2941
    %v2961 = vunpack.c.l.s4 1934713408
    %v2962 = vunpack.c.0.s8 %v2961
    %v2963 = vlaneseq
    %v2964 = vshrl.u32 %v2963, 7
    %v2965 = vsub.s32 %v2962, %v2964
    %v2966 = vrot.slane %v2958, %v2965
    %v2968 = vunpack.c.l.s4 1934713408
    %v2969 = vunpack.c.0.s8 %v2968
    %v2970 = vlaneseq
    %v2971 = vshrl.u32 %v2970, 7
    %v2972 = vsub.s32 %v2969, %v2971
    %v2973 = vrot.slane %v2959, %v2972
    %v2974 = vcombine.high %v2950, 0.0
    %v2975 = vcombine.high %v2957, 0.0
    %v2976 = vcombine.high %v2966, 0.0
    %v2977 = vcombine.high %v2973, 0.0
    %2979 = vrot.lane.b32.xlu0 %v2906, 16
    %v2980 = vpop.permute.xlu0 %2979
    %2983 = vrot.lane.b32.xlu0 %v2889, 32
    %v2984 = vpop.permute.xlu0 %2983
    %2987 = vrot.lane.b32.xlu0 %v2907, 48
    %v2988 = vpop.permute.xlu0 %2987
    %2991 = vrot.lane.b32.xlu0 %v2898, 64
    %v2992 = vpop.permute.xlu0 %2991
    %2995 = vrot.lane.b32.xlu0 %v2908, 80
    %v2996 = vpop.permute.xlu0 %2995
    %2999 = vrot.lane.b32.xlu0 %v2905, 96
    %v3000 = vpop.permute.xlu0 %2999
    %3003 = vrot.lane.b32.xlu0 %v2909, 112
    %v3004 = vpop.permute.xlu0 %3003
    %3007 = vrot.lane.b32.xlu0 %v2974, 16
    %v3008 = vpop.permute.xlu0 %3007
    %3011 = vrot.lane.b32.xlu0 %v2957, 32
    %v3012 = vpop.permute.xlu0 %3011
    %3015 = vrot.lane.b32.xlu0 %v2975, 48
    %v3016 = vpop.permute.xlu0 %3015
    %3019 = vrot.lane.b32.xlu0 %v2966, 64
    %v3020 = vpop.permute.xlu0 %3019
    %3023 = vrot.lane.b32.xlu0 %v2976, 80
    %v3024 = vpop.permute.xlu0 %3023
    %3027 = vrot.lane.b32.xlu0 %v2973, 96
    %v3028 = vpop.permute.xlu0 %3027
    %3031 = vrot.lane.b32.xlu0 %v2977, 112
    %v3032 = vpop.permute.xlu0 %3031
    %v3034 = vsel %vm364, %v2882, %v2980
    %v3035 = vsel %vm366, %v3034, %v2984
    %v3036 = vsel %vm368, %v3035, %v2988
    %v3037 = vsel %vm370, %v3036, %v2992
    %v3038 = vsel %vm372, %v3037, %v2996
    %v3039 = vsel %vm374, %v3038, %v3000
    %v3040 = vsel %vm376, %v3039, %v3004
    %v3041 = vsel %vm364, %v2950, %v3008
    %v3042 = vsel %vm366, %v3041, %v3012
    %v3043 = vsel %vm368, %v3042, %v3016
    %v3044 = vsel %vm370, %v3043, %v3020
    %v3045 = vsel %vm372, %v3044, %v3024
    %v3046 = vsel %vm374, %v3045, %v3028
    %v3047 = vsel %vm376, %v3046, %v3032
    %3048 = vst [vmem:[#allocation3 + $0x30] sm:$0xf] %v3040
    %3049 = vst [vmem:[#allocation3 + $0x38] sm:$0xf] %v3047
    %v3050 = vld [vmem:[%s2331 + $0x1] sm:$0xff]
    %v3051 = vld [vmem:[%s2331 + $0x9] sm:$0xff]
    %v3052 = vld [vmem:[%s2331 + $0x19] sm:$0xff]
    %v3053 = vld [vmem:[%s2331 + $0x21] sm:$0xff]
    %v3054 = vld [vmem:[%s2331 + $0x31] sm:$0xff]
    %v3055 = vld [vmem:[%s2331 + $0x39] sm:$0xff]
    %v3056 = vld [vmem:[%s2331 + $0x49] sm:$0xff]
    %v3057 = vld [vmem:[%s2331 + $0x51] sm:$0xff]
    %v3058 = vcombine.low %v3050, %v3054
    %v3059 = vcombine.high %v3050, %v3054
    %v3061 = vunpack.c.l.s4 1983009808
    %v3062 = vunpack.c.0.s8 %v3061
    %v3063 = vlaneseq
    %v3064 = vshrl.u32 %v3063, 7
    %v3065 = vsub.s32 %v3062, %v3064
    %v3066 = vrot.slane %v3058, %v3065
    %v3068 = vunpack.c.l.s4 1983009808
    %v3069 = vunpack.c.0.s8 %v3068
    %v3070 = vlaneseq
    %v3071 = vshrl.u32 %v3070, 7
    %v3072 = vsub.s32 %v3069, %v3071
    %v3073 = vrot.slane %v3059, %v3072
    %v3074 = vcombine.low %v3052, %v3056
    %v3075 = vcombine.high %v3052, %v3056
    %v3077 = vunpack.c.l.s4 1983009808
    %v3078 = vunpack.c.0.s8 %v3077
    %v3079 = vlaneseq
    %v3080 = vshrl.u32 %v3079, 7
    %v3081 = vsub.s32 %v3078, %v3080
    %v3082 = vrot.slane %v3074, %v3081
    %v3084 = vunpack.c.l.s4 1983009808
    %v3085 = vunpack.c.0.s8 %v3084
    %v3086 = vlaneseq
    %v3087 = vshrl.u32 %v3086, 7
    %v3088 = vsub.s32 %v3085, %v3087
    %v3089 = vrot.slane %v3075, %v3088
    %v3090 = vcombine.low %v3066, %v3082
    %v3091 = vcombine.high %v3066, %v3082
    %v3093 = vunpack.c.l.s4 1934713408
    %v3094 = vunpack.c.0.s8 %v3093
    %v3095 = vlaneseq
    %v3096 = vshrl.u32 %v3095, 7
    %v3097 = vsub.s32 %v3094, %v3096
    %v3098 = vrot.slane %v3090, %v3097
    %v3100 = vunpack.c.l.s4 1934713408
    %v3101 = vunpack.c.0.s8 %v3100
    %v3102 = vlaneseq
    %v3103 = vshrl.u32 %v3102, 7
    %v3104 = vsub.s32 %v3101, %v3103
    %v3105 = vrot.slane %v3091, %v3104
    %v3106 = vcombine.low %v3073, %v3089
    %v3107 = vcombine.high %v3073, %v3089
    %v3109 = vunpack.c.l.s4 1934713408
    %v3110 = vunpack.c.0.s8 %v3109
    %v3111 = vlaneseq
    %v3112 = vshrl.u32 %v3111, 7
    %v3113 = vsub.s32 %v3110, %v3112
    %v3114 = vrot.slane %v3106, %v3113
    %v3116 = vunpack.c.l.s4 1934713408
    %v3117 = vunpack.c.0.s8 %v3116
    %v3118 = vlaneseq
    %v3119 = vshrl.u32 %v3118, 7
    %v3120 = vsub.s32 %v3117, %v3119
    %v3121 = vrot.slane %v3107, %v3120
    %v3122 = vcombine.high %v3098, 0.0
    %v3123 = vcombine.high %v3105, 0.0
    %v3124 = vcombine.high %v3114, 0.0
    %v3125 = vcombine.high %v3121, 0.0
    %v3126 = vcombine.low %v3051, %v3055
    %v3127 = vcombine.high %v3051, %v3055
    %v3129 = vunpack.c.l.s4 1983009808
    %v3130 = vunpack.c.0.s8 %v3129
    %v3131 = vlaneseq
    %v3132 = vshrl.u32 %v3131, 7
    %v3133 = vsub.s32 %v3130, %v3132
    %v3134 = vrot.slane %v3126, %v3133
    %v3136 = vunpack.c.l.s4 1983009808
    %v3137 = vunpack.c.0.s8 %v3136
    %v3138 = vlaneseq
    %v3139 = vshrl.u32 %v3138, 7
    %v3140 = vsub.s32 %v3137, %v3139
    %v3141 = vrot.slane %v3127, %v3140
    %v3142 = vcombine.low %v3053, %v3057
    %v3143 = vcombine.high %v3053, %v3057
    %v3145 = vunpack.c.l.s4 1983009808
    %v3146 = vunpack.c.0.s8 %v3145
    %v3147 = vlaneseq
    %v3148 = vshrl.u32 %v3147, 7
    %v3149 = vsub.s32 %v3146, %v3148
    %v3150 = vrot.slane %v3142, %v3149
    %v3152 = vunpack.c.l.s4 1983009808
    %v3153 = vunpack.c.0.s8 %v3152
    %v3154 = vlaneseq
    %v3155 = vshrl.u32 %v3154, 7
    %v3156 = vsub.s32 %v3153, %v3155
    %v3157 = vrot.slane %v3143, %v3156
    %v3158 = vcombine.low %v3134, %v3150
    %v3159 = vcombine.high %v3134, %v3150
    %v3161 = vunpack.c.l.s4 1934713408
    %v3162 = vunpack.c.0.s8 %v3161
    %v3163 = vlaneseq
    %v3164 = vshrl.u32 %v3163, 7
    %v3165 = vsub.s32 %v3162, %v3164
    %v3166 = vrot.slane %v3158, %v3165
    %v3168 = vunpack.c.l.s4 1934713408
    %v3169 = vunpack.c.0.s8 %v3168
    %v3170 = vlaneseq
    %v3171 = vshrl.u32 %v3170, 7
    %v3172 = vsub.s32 %v3169, %v3171
    %v3173 = vrot.slane %v3159, %v3172
    %v3174 = vcombine.low %v3141, %v3157
    %v3175 = vcombine.high %v3141, %v3157
    %v3177 = vunpack.c.l.s4 1934713408
    %v3178 = vunpack.c.0.s8 %v3177
    %v3179 = vlaneseq
    %v3180 = vshrl.u32 %v3179, 7
    %v3181 = vsub.s32 %v3178, %v3180
    %v3182 = vrot.slane %v3174, %v3181
    %v3184 = vunpack.c.l.s4 1934713408
    %v3185 = vunpack.c.0.s8 %v3184
    %v3186 = vlaneseq
    %v3187 = vshrl.u32 %v3186, 7
    %v3188 = vsub.s32 %v3185, %v3187
    %v3189 = vrot.slane %v3175, %v3188
    %v3190 = vcombine.high %v3166, 0.0
    %v3191 = vcombine.high %v3173, 0.0
    %v3192 = vcombine.high %v3182, 0.0
    %v3193 = vcombine.high %v3189, 0.0
    %3195 = vrot.lane.b32.xlu0 %v3122, 16
    %v3196 = vpop.permute.xlu0 %3195
    %3199 = vrot.lane.b32.xlu0 %v3105, 32
    %v3200 = vpop.permute.xlu0 %3199
    %3203 = vrot.lane.b32.xlu0 %v3123, 48
    %v3204 = vpop.permute.xlu0 %3203
    %3207 = vrot.lane.b32.xlu0 %v3114, 64
    %v3208 = vpop.permute.xlu0 %3207
    %3211 = vrot.lane.b32.xlu0 %v3124, 80
    %v3212 = vpop.permute.xlu0 %3211
    %3215 = vrot.lane.b32.xlu0 %v3121, 96
    %v3216 = vpop.permute.xlu0 %3215
    %3219 = vrot.lane.b32.xlu0 %v3125, 112
    %v3220 = vpop.permute.xlu0 %3219
    %3223 = vrot.lane.b32.xlu0 %v3190, 16
    %v3224 = vpop.permute.xlu0 %3223
    %3227 = vrot.lane.b32.xlu0 %v3173, 32
    %v3228 = vpop.permute.xlu0 %3227
    %3231 = vrot.lane.b32.xlu0 %v3191, 48
    %v3232 = vpop.permute.xlu0 %3231
    %3235 = vrot.lane.b32.xlu0 %v3182, 64
    %v3236 = vpop.permute.xlu0 %3235
    %3239 = vrot.lane.b32.xlu0 %v3192, 80
    %v3240 = vpop.permute.xlu0 %3239
    %3243 = vrot.lane.b32.xlu0 %v3189, 96
    %v3244 = vpop.permute.xlu0 %3243
    %3247 = vrot.lane.b32.xlu0 %v3193, 112
    %v3248 = vpop.permute.xlu0 %3247
    %v3250 = vsel %vm364, %v3098, %v3196
    %v3251 = vsel %vm366, %v3250, %v3200
    %v3252 = vsel %vm368, %v3251, %v3204
    %v3253 = vsel %vm370, %v3252, %v3208
    %v3254 = vsel %vm372, %v3253, %v3212
    %v3255 = vsel %vm374, %v3254, %v3216
    %v3256 = vsel %vm376, %v3255, %v3220
    %v3257 = vsel %vm364, %v3166, %v3224
    %v3258 = vsel %vm366, %v3257, %v3228
    %v3259 = vsel %vm368, %v3258, %v3232
    %v3260 = vsel %vm370, %v3259, %v3236
    %v3261 = vsel %vm372, %v3260, %v3240
    %v3262 = vsel %vm374, %v3261, %v3244
    %v3263 = vsel %vm376, %v3262, %v3248
    %v3266 = vrot.slane %v3256, 4
    %v3267 = vrot.slane %v3263, 4
    %3270 = vst [vmem:[#allocation3 + $0x30] sm:$0xf0] %v3266
    %3271 = vst [vmem:[#allocation3 + $0x38] sm:$0xf0] %v3267
    %v3272 = vld [vmem:[%s2331 + $0x1] sm:$0xff]
    %v3273 = vld [vmem:[%s2331 + $0x9] sm:$0xff]
    %v3274 = vld [vmem:[%s2331 + $0x19] sm:$0xff]
    %v3275 = vld [vmem:[%s2331 + $0x21] sm:$0xff]
    %v3276 = vld [vmem:[%s2331 + $0x31] sm:$0xff]
    %v3277 = vld [vmem:[%s2331 + $0x39] sm:$0xff]
    %v3278 = vld [vmem:[%s2331 + $0x49] sm:$0xff]
    %v3279 = vld [vmem:[%s2331 + $0x51] sm:$0xff]
    %3288 = vrot.lane.b32.xlu0 %v3272, 127
    %v3289 = vpop.permute.xlu0 %3288
    %3290 = vrot.lane.b32.xlu0 %v3273, 127
    %v3291 = vpop.permute.xlu0 %3290
    %3292 = vrot.lane.b32.xlu0 %v3274, 127
    %v3293 = vpop.permute.xlu0 %3292
    %3294 = vrot.lane.b32.xlu0 %v3275, 127
    %v3295 = vpop.permute.xlu0 %3294
    %3296 = vrot.lane.b32.xlu0 %v3276, 127
    %v3297 = vpop.permute.xlu0 %3296
    %3298 = vrot.lane.b32.xlu0 %v3277, 127
    %v3299 = vpop.permute.xlu0 %3298
    %3300 = vrot.lane.b32.xlu0 %v3278, 127
    %v3301 = vpop.permute.xlu0 %3300
    %3302 = vrot.lane.b32.xlu0 %v3279, 127
    %v3303 = vpop.permute.xlu0 %3302
    %v3312 = vcombine.low %v3289, %v3297
    %v3313 = vcombine.high %v3289, %v3297
    %v3315 = vunpack.c.l.s4 1983009808
    %v3316 = vunpack.c.0.s8 %v3315
    %v3317 = vlaneseq
    %v3318 = vshrl.u32 %v3317, 7
    %v3319 = vsub.s32 %v3316, %v3318
    %v3320 = vrot.slane %v3312, %v3319
    %v3322 = vunpack.c.l.s4 1983009808
    %v3323 = vunpack.c.0.s8 %v3322
    %v3324 = vlaneseq
    %v3325 = vshrl.u32 %v3324, 7
    %v3326 = vsub.s32 %v3323, %v3325
    %v3327 = vrot.slane %v3313, %v3326
    %v3328 = vcombine.low %v3293, %v3301
    %v3329 = vcombine.high %v3293, %v3301
    %v3331 = vunpack.c.l.s4 1983009808
    %v3332 = vunpack.c.0.s8 %v3331
    %v3333 = vlaneseq
    %v3334 = vshrl.u32 %v3333, 7
    %v3335 = vsub.s32 %v3332, %v3334
    %v3336 = vrot.slane %v3328, %v3335
    %v3338 = vunpack.c.l.s4 1983009808
    %v3339 = vunpack.c.0.s8 %v3338
    %v3340 = vlaneseq
    %v3341 = vshrl.u32 %v3340, 7
    %v3342 = vsub.s32 %v3339, %v3341
    %v3343 = vrot.slane %v3329, %v3342
    %v3344 = vcombine.low %v3320, %v3336
    %v3345 = vcombine.high %v3320, %v3336
    %v3347 = vunpack.c.l.s4 1934713408
    %v3348 = vunpack.c.0.s8 %v3347
    %v3349 = vlaneseq
    %v3350 = vshrl.u32 %v3349, 7
    %v3351 = vsub.s32 %v3348, %v3350
    %v3352 = vrot.slane %v3344, %v3351
    %v3354 = vunpack.c.l.s4 1934713408
    %v3355 = vunpack.c.0.s8 %v3354
    %v3356 = vlaneseq
    %v3357 = vshrl.u32 %v3356, 7
    %v3358 = vsub.s32 %v3355, %v3357
    %v3359 = vrot.slane %v3345, %v3358
    %v3360 = vcombine.low %v3327, %v3343
    %v3361 = vcombine.high %v3327, %v3343
    %v3363 = vunpack.c.l.s4 1934713408
    %v3364 = vunpack.c.0.s8 %v3363
    %v3365 = vlaneseq
    %v3366 = vshrl.u32 %v3365, 7
    %v3367 = vsub.s32 %v3364, %v3366
    %v3368 = vrot.slane %v3360, %v3367
    %v3370 = vunpack.c.l.s4 1934713408
    %v3371 = vunpack.c.0.s8 %v3370
    %v3372 = vlaneseq
    %v3373 = vshrl.u32 %v3372, 7
    %v3374 = vsub.s32 %v3371, %v3373
    %v3375 = vrot.slane %v3361, %v3374
    %v3376 = vcombine.high %v3352, 0.0
    %v3377 = vcombine.high %v3359, 0.0
    %v3378 = vcombine.high %v3368, 0.0
    %v3379 = vcombine.high %v3375, 0.0
    %v3380 = vcombine.low %v3291, %v3299
    %v3381 = vcombine.high %v3291, %v3299
    %v3383 = vunpack.c.l.s4 1983009808
    %v3384 = vunpack.c.0.s8 %v3383
    %v3385 = vlaneseq
    %v3386 = vshrl.u32 %v3385, 7
    %v3387 = vsub.s32 %v3384, %v3386
    %v3388 = vrot.slane %v3380, %v3387
    %v3390 = vunpack.c.l.s4 1983009808
    %v3391 = vunpack.c.0.s8 %v3390
    %v3392 = vlaneseq
    %v3393 = vshrl.u32 %v3392, 7
    %v3394 = vsub.s32 %v3391, %v3393
    %v3395 = vrot.slane %v3381, %v3394
    %v3396 = vcombine.low %v3295, %v3303
    %v3397 = vcombine.high %v3295, %v3303
    %v3399 = vunpack.c.l.s4 1983009808
    %v3400 = vunpack.c.0.s8 %v3399
    %v3401 = vlaneseq
    %v3402 = vshrl.u32 %v3401, 7
    %v3403 = vsub.s32 %v3400, %v3402
    %v3404 = vrot.slane %v3396, %v3403
    %v3406 = vunpack.c.l.s4 1983009808
    %v3407 = vunpack.c.0.s8 %v3406
    %v3408 = vlaneseq
    %v3409 = vshrl.u32 %v3408, 7
    %v3410 = vsub.s32 %v3407, %v3409
    %v3411 = vrot.slane %v3397, %v3410
    %v3412 = vcombine.low %v3388, %v3404
    %v3413 = vcombine.high %v3388, %v3404
    %v3415 = vunpack.c.l.s4 1934713408
    %v3416 = vunpack.c.0.s8 %v3415
    %v3417 = vlaneseq
    %v3418 = vshrl.u32 %v3417, 7
    %v3419 = vsub.s32 %v3416, %v3418
    %v3420 = vrot.slane %v3412, %v3419
    %v3422 = vunpack.c.l.s4 1934713408
    %v3423 = vunpack.c.0.s8 %v3422
    %v3424 = vlaneseq
    %v3425 = vshrl.u32 %v3424, 7
    %v3426 = vsub.s32 %v3423, %v3425
    %v3427 = vrot.slane %v3413, %v3426
    %v3428 = vcombine.low %v3395, %v3411
    %v3429 = vcombine.high %v3395, %v3411
    %v3431 = vunpack.c.l.s4 1934713408
    %v3432 = vunpack.c.0.s8 %v3431
    %v3433 = vlaneseq
    %v3434 = vshrl.u32 %v3433, 7
    %v3435 = vsub.s32 %v3432, %v3434
    %v3436 = vrot.slane %v3428, %v3435
    %v3438 = vunpack.c.l.s4 1934713408
    %v3439 = vunpack.c.0.s8 %v3438
    %v3440 = vlaneseq
    %v3441 = vshrl.u32 %v3440, 7
    %v3442 = vsub.s32 %v3439, %v3441
    %v3443 = vrot.slane %v3429, %v3442
    %v3444 = vcombine.high %v3420, 0.0
    %v3445 = vcombine.high %v3427, 0.0
    %v3446 = vcombine.high %v3436, 0.0
    %v3447 = vcombine.high %v3443, 0.0
    %3449 = vrot.lane.b32.xlu0 %v3376, 16
    %v3450 = vpop.permute.xlu0 %3449
    %3453 = vrot.lane.b32.xlu0 %v3359, 32
    %v3454 = vpop.permute.xlu0 %3453
    %3457 = vrot.lane.b32.xlu0 %v3377, 48
    %v3458 = vpop.permute.xlu0 %3457
    %3461 = vrot.lane.b32.xlu0 %v3368, 64
    %v3462 = vpop.permute.xlu0 %3461
    %3465 = vrot.lane.b32.xlu0 %v3378, 80
    %v3466 = vpop.permute.xlu0 %3465
    %3469 = vrot.lane.b32.xlu0 %v3375, 96
    %v3470 = vpop.permute.xlu0 %3469
    %3473 = vrot.lane.b32.xlu0 %v3379, 112
    %v3474 = vpop.permute.xlu0 %3473
    %3477 = vrot.lane.b32.xlu0 %v3444, 16
    %v3478 = vpop.permute.xlu0 %3477
    %3481 = vrot.lane.b32.xlu0 %v3427, 32
    %v3482 = vpop.permute.xlu0 %3481
    %3485 = vrot.lane.b32.xlu0 %v3445, 48
    %v3486 = vpop.permute.xlu0 %3485
    %3489 = vrot.lane.b32.xlu0 %v3436, 64
    %v3490 = vpop.permute.xlu0 %3489
    %3493 = vrot.lane.b32.xlu0 %v3446, 80
    %v3494 = vpop.permute.xlu0 %3493
    %3497 = vrot.lane.b32.xlu0 %v3443, 96
    %v3498 = vpop.permute.xlu0 %3497
    %3501 = vrot.lane.b32.xlu0 %v3447, 112
    %v3502 = vpop.permute.xlu0 %3501
    %v3504 = vsel %vm364, %v3352, %v3450
    %v3505 = vsel %vm366, %v3504, %v3454
    %v3506 = vsel %vm368, %v3505, %v3458
    %v3507 = vsel %vm370, %v3506, %v3462
    %v3508 = vsel %vm372, %v3507, %v3466
    %v3509 = vsel %vm374, %v3508, %v3470
    %v3510 = vsel %vm376, %v3509, %v3474
    %v3511 = vsel %vm364, %v3420, %v3478
    %v3512 = vsel %vm366, %v3511, %v3482
    %v3513 = vsel %vm368, %v3512, %v3486
    %v3514 = vsel %vm370, %v3513, %v3490
    %v3515 = vsel %vm372, %v3514, %v3494
    %v3516 = vsel %vm374, %v3515, %v3498
    %v3517 = vsel %vm376, %v3516, %v3502
    %3518 = vst [vmem:[#allocation3 + $0x50] sm:$0xf] %v3510
    %3519 = vst [vmem:[#allocation3 + $0x58] sm:$0xf] %v3517
    %v3520 = vld [vmem:[%s2331 + $0x1] sm:$0xff]
    %v3521 = vld [vmem:[%s2331 + $0x9] sm:$0xff]
    %v3522 = vld [vmem:[%s2331 + $0x19] sm:$0xff]
    %v3523 = vld [vmem:[%s2331 + $0x21] sm:$0xff]
    %v3524 = vld [vmem:[%s2331 + $0x31] sm:$0xff]
    %v3525 = vld [vmem:[%s2331 + $0x39] sm:$0xff]
    %v3526 = vld [vmem:[%s2331 + $0x49] sm:$0xff]
    %v3527 = vld [vmem:[%s2331 + $0x51] sm:$0xff]
    %3536 = vrot.lane.b32.xlu0 %v3520, 126
    %v3537 = vpop.permute.xlu0 %3536
    %3538 = vrot.lane.b32.xlu0 %v3521, 126
    %v3539 = vpop.permute.xlu0 %3538
    %3540 = vrot.lane.b32.xlu0 %v3522, 126
    %v3541 = vpop.permute.xlu0 %3540
    %3542 = vrot.lane.b32.xlu0 %v3523, 126
    %v3543 = vpop.permute.xlu0 %3542
    %3544 = vrot.lane.b32.xlu0 %v3524, 126
    %v3545 = vpop.permute.xlu0 %3544
    %3546 = vrot.lane.b32.xlu0 %v3525, 126
    %v3547 = vpop.permute.xlu0 %3546
    %3548 = vrot.lane.b32.xlu0 %v3526, 126
    %v3549 = vpop.permute.xlu0 %3548
    %3550 = vrot.lane.b32.xlu0 %v3527, 126
    %v3551 = vpop.permute.xlu0 %3550
    %v3560 = vcombine.low %v3537, %v3545
    %v3561 = vcombine.high %v3537, %v3545
    %v3563 = vunpack.c.l.s4 1983009808
    %v3564 = vunpack.c.0.s8 %v3563
    %v3565 = vlaneseq
    %v3566 = vshrl.u32 %v3565, 7
    %v3567 = vsub.s32 %v3564, %v3566
    %v3568 = vrot.slane %v3560, %v3567
    %v3570 = vunpack.c.l.s4 1983009808
    %v3571 = vunpack.c.0.s8 %v3570
    %v3572 = vlaneseq
    %v3573 = vshrl.u32 %v3572, 7
    %v3574 = vsub.s32 %v3571, %v3573
    %v3575 = vrot.slane %v3561, %v3574
    %v3576 = vcombine.low %v3541, %v3549
    %v3577 = vcombine.high %v3541, %v3549
    %v3579 = vunpack.c.l.s4 1983009808
    %v3580 = vunpack.c.0.s8 %v3579
    %v3581 = vlaneseq
    %v3582 = vshrl.u32 %v3581, 7
    %v3583 = vsub.s32 %v3580, %v3582
    %v3584 = vrot.slane %v3576, %v3583
    %v3586 = vunpack.c.l.s4 1983009808
    %v3587 = vunpack.c.0.s8 %v3586
    %v3588 = vlaneseq
    %v3589 = vshrl.u32 %v3588, 7
    %v3590 = vsub.s32 %v3587, %v3589
    %v3591 = vrot.slane %v3577, %v3590
    %v3592 = vcombine.low %v3568, %v3584
    %v3593 = vcombine.high %v3568, %v3584
    %v3595 = vunpack.c.l.s4 1934713408
    %v3596 = vunpack.c.0.s8 %v3595
    %v3597 = vlaneseq
    %v3598 = vshrl.u32 %v3597, 7
    %v3599 = vsub.s32 %v3596, %v3598
    %v3600 = vrot.slane %v3592, %v3599
    %v3602 = vunpack.c.l.s4 1934713408
    %v3603 = vunpack.c.0.s8 %v3602
    %v3604 = vlaneseq
    %v3605 = vshrl.u32 %v3604, 7
    %v3606 = vsub.s32 %v3603, %v3605
    %v3607 = vrot.slane %v3593, %v3606
    %v3608 = vcombine.low %v3575, %v3591
    %v3609 = vcombine.high %v3575, %v3591
    %v3611 = vunpack.c.l.s4 1934713408
    %v3612 = vunpack.c.0.s8 %v3611
    %v3613 = vlaneseq
    %v3614 = vshrl.u32 %v3613, 7
    %v3615 = vsub.s32 %v3612, %v3614
    %v3616 = vrot.slane %v3608, %v3615
    %v3618 = vunpack.c.l.s4 1934713408
    %v3619 = vunpack.c.0.s8 %v3618
    %v3620 = vlaneseq
    %v3621 = vshrl.u32 %v3620, 7
    %v3622 = vsub.s32 %v3619, %v3621
    %v3623 = vrot.slane %v3609, %v3622
    %v3624 = vcombine.high %v3600, 0.0
    %v3625 = vcombine.high %v3607, 0.0
    %v3626 = vcombine.high %v3616, 0.0
    %v3627 = vcombine.high %v3623, 0.0
    %v3628 = vcombine.low %v3539, %v3547
    %v3629 = vcombine.high %v3539, %v3547
    %v3631 = vunpack.c.l.s4 1983009808
    %v3632 = vunpack.c.0.s8 %v3631
    %v3633 = vlaneseq
    %v3634 = vshrl.u32 %v3633, 7
    %v3635 = vsub.s32 %v3632, %v3634
    %v3636 = vrot.slane %v3628, %v3635
    %v3638 = vunpack.c.l.s4 1983009808
    %v3639 = vunpack.c.0.s8 %v3638
    %v3640 = vlaneseq
    %v3641 = vshrl.u32 %v3640, 7
    %v3642 = vsub.s32 %v3639, %v3641
    %v3643 = vrot.slane %v3629, %v3642
    %v3644 = vcombine.low %v3543, %v3551
    %v3645 = vcombine.high %v3543, %v3551
    %v3647 = vunpack.c.l.s4 1983009808
    %v3648 = vunpack.c.0.s8 %v3647
    %v3649 = vlaneseq
    %v3650 = vshrl.u32 %v3649, 7
    %v3651 = vsub.s32 %v3648, %v3650
    %v3652 = vrot.slane %v3644, %v3651
    %v3654 = vunpack.c.l.s4 1983009808
    %v3655 = vunpack.c.0.s8 %v3654
    %v3656 = vlaneseq
    %v3657 = vshrl.u32 %v3656, 7
    %v3658 = vsub.s32 %v3655, %v3657
    %v3659 = vrot.slane %v3645, %v3658
    %v3660 = vcombine.low %v3636, %v3652
    %v3661 = vcombine.high %v3636, %v3652
    %v3663 = vunpack.c.l.s4 1934713408
    %v3664 = vunpack.c.0.s8 %v3663
    %v3665 = vlaneseq
    %v3666 = vshrl.u32 %v3665, 7
    %v3667 = vsub.s32 %v3664, %v3666
    %v3668 = vrot.slane %v3660, %v3667
    %v3670 = vunpack.c.l.s4 1934713408
    %v3671 = vunpack.c.0.s8 %v3670
    %v3672 = vlaneseq
    %v3673 = vshrl.u32 %v3672, 7
    %v3674 = vsub.s32 %v3671, %v3673
    %v3675 = vrot.slane %v3661, %v3674
    %v3676 = vcombine.low %v3643, %v3659
    %v3677 = vcombine.high %v3643, %v3659
    %v3679 = vunpack.c.l.s4 1934713408
    %v3680 = vunpack.c.0.s8 %v3679
    %v3681 = vlaneseq
    %v3682 = vshrl.u32 %v3681, 7
    %v3683 = vsub.s32 %v3680, %v3682
    %v3684 = vrot.slane %v3676, %v3683
    %v3686 = vunpack.c.l.s4 1934713408
    %v3687 = vunpack.c.0.s8 %v3686
    %v3688 = vlaneseq
    %v3689 = vshrl.u32 %v3688, 7
    %v3690 = vsub.s32 %v3687, %v3689
    %v3691 = vrot.slane %v3677, %v3690
    %v3692 = vcombine.high %v3668, 0.0
    %v3693 = vcombine.high %v3675, 0.0
    %v3694 = vcombine.high %v3684, 0.0
    %v3695 = vcombine.high %v3691, 0.0
    %3697 = vrot.lane.b32.xlu0 %v3624, 16
    %v3698 = vpop.permute.xlu0 %3697
    %3701 = vrot.lane.b32.xlu0 %v3607, 32
    %v3702 = vpop.permute.xlu0 %3701
    %3705 = vrot.lane.b32.xlu0 %v3625, 48
    %v3706 = vpop.permute.xlu0 %3705
    %3709 = vrot.lane.b32.xlu0 %v3616, 64
    %v3710 = vpop.permute.xlu0 %3709
    %3713 = vrot.lane.b32.xlu0 %v3626, 80
    %v3714 = vpop.permute.xlu0 %3713
    %3717 = vrot.lane.b32.xlu0 %v3623, 96
    %v3718 = vpop.permute.xlu0 %3717
    %3721 = vrot.lane.b32.xlu0 %v3627, 112
    %v3722 = vpop.permute.xlu0 %3721
    %3725 = vrot.lane.b32.xlu0 %v3692, 16
    %v3726 = vpop.permute.xlu0 %3725
    %3729 = vrot.lane.b32.xlu0 %v3675, 32
    %v3730 = vpop.permute.xlu0 %3729
    %3733 = vrot.lane.b32.xlu0 %v3693, 48
    %v3734 = vpop.permute.xlu0 %3733
    %3737 = vrot.lane.b32.xlu0 %v3684, 64
    %v3738 = vpop.permute.xlu0 %3737
    %3741 = vrot.lane.b32.xlu0 %v3694, 80
    %v3742 = vpop.permute.xlu0 %3741
    %3745 = vrot.lane.b32.xlu0 %v3691, 96
    %v3746 = vpop.permute.xlu0 %3745
    %3749 = vrot.lane.b32.xlu0 %v3695, 112
    %v3750 = vpop.permute.xlu0 %3749
    %v3752 = vsel %vm364, %v3600, %v3698
    %v3753 = vsel %vm366, %v3752, %v3702
    %v3754 = vsel %vm368, %v3753, %v3706
    %v3755 = vsel %vm370, %v3754, %v3710
    %v3756 = vsel %vm372, %v3755, %v3714
    %v3757 = vsel %vm374, %v3756, %v3718
    %v3758 = vsel %vm376, %v3757, %v3722
    %v3759 = vsel %vm364, %v3668, %v3726
    %v3760 = vsel %vm366, %v3759, %v3730
    %v3761 = vsel %vm368, %v3760, %v3734
    %v3762 = vsel %vm370, %v3761, %v3738
    %v3763 = vsel %vm372, %v3762, %v3742
    %v3764 = vsel %vm374, %v3763, %v3746
    %v3765 = vsel %vm376, %v3764, %v3750
    %v3768 = vrot.slane %v3758, 4
    %v3769 = vrot.slane %v3765, 4
    %3772 = vst [vmem:[#allocation3 + $0x50] sm:$0xf0] %v3768
    %3773 = vst [vmem:[#allocation3 + $0x58] sm:$0xf0] %v3769
    %v3774 = vld [vmem:[%s2331 + $0x2] sm:$0xff]
    %v3775 = vld [vmem:[%s2331 + $0xa] sm:$0xff]
    %v3776 = vld [vmem:[%s2331 + $0x1a] sm:$0xff]
    %v3777 = vld [vmem:[%s2331 + $0x22] sm:$0xff]
    %v3778 = vld [vmem:[%s2331 + $0x32] sm:$0xff]
    %v3779 = vld [vmem:[%s2331 + $0x3a] sm:$0xff]
    %v3780 = vld [vmem:[%s2331 + $0x4a] sm:$0xff]
    %v3781 = vld [vmem:[%s2331 + $0x52] sm:$0xff]
    %v3782 = vcombine.low %v3774, %v3778
    %v3783 = vcombine.high %v3774, %v3778
    %v3785 = vunpack.c.l.s4 1983009808
    %v3786 = vunpack.c.0.s8 %v3785
    %v3787 = vlaneseq
    %v3788 = vshrl.u32 %v3787, 7
    %v3789 = vsub.s32 %v3786, %v3788
    %v3790 = vrot.slane %v3782, %v3789
    %v3792 = vunpack.c.l.s4 1983009808
    %v3793 = vunpack.c.0.s8 %v3792
    %v3794 = vlaneseq
    %v3795 = vshrl.u32 %v3794, 7
    %v3796 = vsub.s32 %v3793, %v3795
    %v3797 = vrot.slane %v3783, %v3796
    %v3798 = vcombine.low %v3776, %v3780
    %v3799 = vcombine.high %v3776, %v3780
    %v3801 = vunpack.c.l.s4 1983009808
    %v3802 = vunpack.c.0.s8 %v3801
    %v3803 = vlaneseq
    %v3804 = vshrl.u32 %v3803, 7
    %v3805 = vsub.s32 %v3802, %v3804
    %v3806 = vrot.slane %v3798, %v3805
    %v3808 = vunpack.c.l.s4 1983009808
    %v3809 = vunpack.c.0.s8 %v3808
    %v3810 = vlaneseq
    %v3811 = vshrl.u32 %v3810, 7
    %v3812 = vsub.s32 %v3809, %v3811
    %v3813 = vrot.slane %v3799, %v3812
    %v3814 = vcombine.low %v3790, %v3806
    %v3815 = vcombine.high %v3790, %v3806
    %v3817 = vunpack.c.l.s4 1934713408
    %v3818 = vunpack.c.0.s8 %v3817
    %v3819 = vlaneseq
    %v3820 = vshrl.u32 %v3819, 7
    %v3821 = vsub.s32 %v3818, %v3820
    %v3822 = vrot.slane %v3814, %v3821
    %v3824 = vunpack.c.l.s4 1934713408
    %v3825 = vunpack.c.0.s8 %v3824
    %v3826 = vlaneseq
    %v3827 = vshrl.u32 %v3826, 7
    %v3828 = vsub.s32 %v3825, %v3827
    %v3829 = vrot.slane %v3815, %v3828
    %v3830 = vcombine.low %v3797, %v3813
    %v3831 = vcombine.high %v3797, %v3813
    %v3833 = vunpack.c.l.s4 1934713408
    %v3834 = vunpack.c.0.s8 %v3833
    %v3835 = vlaneseq
    %v3836 = vshrl.u32 %v3835, 7
    %v3837 = vsub.s32 %v3834, %v3836
    %v3838 = vrot.slane %v3830, %v3837
    %v3840 = vunpack.c.l.s4 1934713408
    %v3841 = vunpack.c.0.s8 %v3840
    %v3842 = vlaneseq
    %v3843 = vshrl.u32 %v3842, 7
    %v3844 = vsub.s32 %v3841, %v3843
    %v3845 = vrot.slane %v3831, %v3844
    %v3846 = vcombine.high %v3822, 0.0
    %v3847 = vcombine.high %v3829, 0.0
    %v3848 = vcombine.high %v3838, 0.0
    %v3849 = vcombine.high %v3845, 0.0
    %v3850 = vcombine.low %v3775, %v3779
    %v3851 = vcombine.high %v3775, %v3779
    %v3853 = vunpack.c.l.s4 1983009808
    %v3854 = vunpack.c.0.s8 %v3853
    %v3855 = vlaneseq
    %v3856 = vshrl.u32 %v3855, 7
    %v3857 = vsub.s32 %v3854, %v3856
    %v3858 = vrot.slane %v3850, %v3857
    %v3860 = vunpack.c.l.s4 1983009808
    %v3861 = vunpack.c.0.s8 %v3860
    %v3862 = vlaneseq
    %v3863 = vshrl.u32 %v3862, 7
    %v3864 = vsub.s32 %v3861, %v3863
    %v3865 = vrot.slane %v3851, %v3864
    %v3866 = vcombine.low %v3777, %v3781
    %v3867 = vcombine.high %v3777, %v3781
    %v3869 = vunpack.c.l.s4 1983009808
    %v3870 = vunpack.c.0.s8 %v3869
    %v3871 = vlaneseq
    %v3872 = vshrl.u32 %v3871, 7
    %v3873 = vsub.s32 %v3870, %v3872
    %v3874 = vrot.slane %v3866, %v3873
    %v3876 = vunpack.c.l.s4 1983009808
    %v3877 = vunpack.c.0.s8 %v3876
    %v3878 = vlaneseq
    %v3879 = vshrl.u32 %v3878, 7
    %v3880 = vsub.s32 %v3877, %v3879
    %v3881 = vrot.slane %v3867, %v3880
    %v3882 = vcombine.low %v3858, %v3874
    %v3883 = vcombine.high %v3858, %v3874
    %v3885 = vunpack.c.l.s4 1934713408
    %v3886 = vunpack.c.0.s8 %v3885
    %v3887 = vlaneseq
    %v3888 = vshrl.u32 %v3887, 7
    %v3889 = vsub.s32 %v3886, %v3888
    %v3890 = vrot.slane %v3882, %v3889
    %v3892 = vunpack.c.l.s4 1934713408
    %v3893 = vunpack.c.0.s8 %v3892
    %v3894 = vlaneseq
    %v3895 = vshrl.u32 %v3894, 7
    %v3896 = vsub.s32 %v3893, %v3895
    %v3897 = vrot.slane %v3883, %v3896
    %v3898 = vcombine.low %v3865, %v3881
    %v3899 = vcombine.high %v3865, %v3881
    %v3901 = vunpack.c.l.s4 1934713408
    %v3902 = vunpack.c.0.s8 %v3901
    %v3903 = vlaneseq
    %v3904 = vshrl.u32 %v3903, 7
    %v3905 = vsub.s32 %v3902, %v3904
    %v3906 = vrot.slane %v3898, %v3905
    %v3908 = vunpack.c.l.s4 1934713408
    %v3909 = vunpack.c.0.s8 %v3908
    %v3910 = vlaneseq
    %v3911 = vshrl.u32 %v3910, 7
    %v3912 = vsub.s32 %v3909, %v3911
    %v3913 = vrot.slane %v3899, %v3912
    %v3914 = vcombine.high %v3890, 0.0
    %v3915 = vcombine.high %v3897, 0.0
    %v3916 = vcombine.high %v3906, 0.0
    %v3917 = vcombine.high %v3913, 0.0
    %3919 = vrot.lane.b32.xlu0 %v3846, 16
    %v3920 = vpop.permute.xlu0 %3919
    %3923 = vrot.lane.b32.xlu0 %v3829, 32
    %v3924 = vpop.permute.xlu0 %3923
    %3927 = vrot.lane.b32.xlu0 %v3847, 48
    %v3928 = vpop.permute.xlu0 %3927
    %3931 = vrot.lane.b32.xlu0 %v3838, 64
    %v3932 = vpop.permute.xlu0 %3931
    %3935 = vrot.lane.b32.xlu0 %v3848, 80
    %v3936 = vpop.permute.xlu0 %3935
    %3939 = vrot.lane.b32.xlu0 %v3845, 96
    %v3940 = vpop.permute.xlu0 %3939
    %3943 = vrot.lane.b32.xlu0 %v3849, 112
    %v3944 = vpop.permute.xlu0 %3943
    %3947 = vrot.lane.b32.xlu0 %v3914, 16
    %v3948 = vpop.permute.xlu0 %3947
    %3951 = vrot.lane.b32.xlu0 %v3897, 32
    %v3952 = vpop.permute.xlu0 %3951
    %3955 = vrot.lane.b32.xlu0 %v3915, 48
    %v3956 = vpop.permute.xlu0 %3955
    %3959 = vrot.lane.b32.xlu0 %v3906, 64
    %v3960 = vpop.permute.xlu0 %3959
    %3963 = vrot.lane.b32.xlu0 %v3916, 80
    %v3964 = vpop.permute.xlu0 %3963
    %3967 = vrot.lane.b32.xlu0 %v3913, 96
    %v3968 = vpop.permute.xlu0 %3967
    %3971 = vrot.lane.b32.xlu0 %v3917, 112
    %v3972 = vpop.permute.xlu0 %3971
    %v3974 = vsel %vm364, %v3822, %v3920
    %v3975 = vsel %vm366, %v3974, %v3924
    %v3976 = vsel %vm368, %v3975, %v3928
    %v3977 = vsel %vm370, %v3976, %v3932
    %v3978 = vsel %vm372, %v3977, %v3936
    %v3979 = vsel %vm374, %v3978, %v3940
    %v3980 = vsel %vm376, %v3979, %v3944
    %v3981 = vsel %vm364, %v3890, %v3948
    %v3982 = vsel %vm366, %v3981, %v3952
    %v3983 = vsel %vm368, %v3982, %v3956
    %v3984 = vsel %vm370, %v3983, %v3960
    %v3985 = vsel %vm372, %v3984, %v3964
    %v3986 = vsel %vm374, %v3985, %v3968
    %v3987 = vsel %vm376, %v3986, %v3972
    %3988 = vst [vmem:[#allocation3 + $0x70] sm:$0xf] %v3980
    %3989 = vst [vmem:[#allocation3 + $0x78] sm:$0xf] %v3987
    %v3990 = vld [vmem:[%s2331 + $0x2] sm:$0xff]
    %v3991 = vld [vmem:[%s2331 + $0xa] sm:$0xff]
    %v3992 = vld [vmem:[%s2331 + $0x1a] sm:$0xff]
    %v3993 = vld [vmem:[%s2331 + $0x22] sm:$0xff]
    %v3994 = vld [vmem:[%s2331 + $0x32] sm:$0xff]
    %v3995 = vld [vmem:[%s2331 + $0x3a] sm:$0xff]
    %v3996 = vld [vmem:[%s2331 + $0x4a] sm:$0xff]
    %v3997 = vld [vmem:[%s2331 + $0x52] sm:$0xff]
    %4006 = vrot.lane.b32.xlu0 %v3990, 127
    %v4007 = vpop.permute.xlu0 %4006
    %4008 = vrot.lane.b32.xlu0 %v3991, 127
    %v4009 = vpop.permute.xlu0 %4008
    %4010 = vrot.lane.b32.xlu0 %v3992, 127
    %v4011 = vpop.permute.xlu0 %4010
    %4012 = vrot.lane.b32.xlu0 %v3993, 127
    %v4013 = vpop.permute.xlu0 %4012
    %4014 = vrot.lane.b32.xlu0 %v3994, 127
    %v4015 = vpop.permute.xlu0 %4014
    %4016 = vrot.lane.b32.xlu0 %v3995, 127
    %v4017 = vpop.permute.xlu0 %4016
    %4018 = vrot.lane.b32.xlu0 %v3996, 127
    %v4019 = vpop.permute.xlu0 %4018
    %4020 = vrot.lane.b32.xlu0 %v3997, 127
    %v4021 = vpop.permute.xlu0 %4020
    %v4030 = vcombine.low %v4007, %v4015
    %v4031 = vcombine.high %v4007, %v4015
    %v4033 = vunpack.c.l.s4 1983009808
    %v4034 = vunpack.c.0.s8 %v4033
    %v4035 = vlaneseq
    %v4036 = vshrl.u32 %v4035, 7
    %v4037 = vsub.s32 %v4034, %v4036
    %v4038 = vrot.slane %v4030, %v4037
    %v4040 = vunpack.c.l.s4 1983009808
    %v4041 = vunpack.c.0.s8 %v4040
    %v4042 = vlaneseq
    %v4043 = vshrl.u32 %v4042, 7
    %v4044 = vsub.s32 %v4041, %v4043
    %v4045 = vrot.slane %v4031, %v4044
    %v4046 = vcombine.low %v4011, %v4019
    %v4047 = vcombine.high %v4011, %v4019
    %v4049 = vunpack.c.l.s4 1983009808
    %v4050 = vunpack.c.0.s8 %v4049
    %v4051 = vlaneseq
    %v4052 = vshrl.u32 %v4051, 7
    %v4053 = vsub.s32 %v4050, %v4052
    %v4054 = vrot.slane %v4046, %v4053
    %v4056 = vunpack.c.l.s4 1983009808
    %v4057 = vunpack.c.0.s8 %v4056
    %v4058 = vlaneseq
    %v4059 = vshrl.u32 %v4058, 7
    %v4060 = vsub.s32 %v4057, %v4059
    %v4061 = vrot.slane %v4047, %v4060
    %v4062 = vcombine.low %v4038, %v4054
    %v4063 = vcombine.high %v4038, %v4054
    %v4065 = vunpack.c.l.s4 1934713408
    %v4066 = vunpack.c.0.s8 %v4065
    %v4067 = vlaneseq
    %v4068 = vshrl.u32 %v4067, 7
    %v4069 = vsub.s32 %v4066, %v4068
    %v4070 = vrot.slane %v4062, %v4069
    %v4072 = vunpack.c.l.s4 1934713408
    %v4073 = vunpack.c.0.s8 %v4072
    %v4074 = vlaneseq
    %v4075 = vshrl.u32 %v4074, 7
    %v4076 = vsub.s32 %v4073, %v4075
    %v4077 = vrot.slane %v4063, %v4076
    %v4078 = vcombine.low %v4045, %v4061
    %v4079 = vcombine.high %v4045, %v4061
    %v4081 = vunpack.c.l.s4 1934713408
    %v4082 = vunpack.c.0.s8 %v4081
    %v4083 = vlaneseq
    %v4084 = vshrl.u32 %v4083, 7
    %v4085 = vsub.s32 %v4082, %v4084
    %v4086 = vrot.slane %v4078, %v4085
    %v4088 = vunpack.c.l.s4 1934713408
    %v4089 = vunpack.c.0.s8 %v4088
    %v4090 = vlaneseq
    %v4091 = vshrl.u32 %v4090, 7
    %v4092 = vsub.s32 %v4089, %v4091
    %v4093 = vrot.slane %v4079, %v4092
    %v4094 = vcombine.high %v4070, 0.0
    %v4095 = vcombine.high %v4077, 0.0
    %v4096 = vcombine.high %v4086, 0.0
    %v4097 = vcombine.high %v4093, 0.0
    %v4098 = vcombine.low %v4009, %v4017
    %v4099 = vcombine.high %v4009, %v4017
    %v4101 = vunpack.c.l.s4 1983009808
    %v4102 = vunpack.c.0.s8 %v4101
    %v4103 = vlaneseq
    %v4104 = vshrl.u32 %v4103, 7
    %v4105 = vsub.s32 %v4102, %v4104
    %v4106 = vrot.slane %v4098, %v4105
    %v4108 = vunpack.c.l.s4 1983009808
    %v4109 = vunpack.c.0.s8 %v4108
    %v4110 = vlaneseq
    %v4111 = vshrl.u32 %v4110, 7
    %v4112 = vsub.s32 %v4109, %v4111
    %v4113 = vrot.slane %v4099, %v4112
    %v4114 = vcombine.low %v4013, %v4021
    %v4115 = vcombine.high %v4013, %v4021
    %v4117 = vunpack.c.l.s4 1983009808
    %v4118 = vunpack.c.0.s8 %v4117
    %v4119 = vlaneseq
    %v4120 = vshrl.u32 %v4119, 7
    %v4121 = vsub.s32 %v4118, %v4120
    %v4122 = vrot.slane %v4114, %v4121
    %v4124 = vunpack.c.l.s4 1983009808
    %v4125 = vunpack.c.0.s8 %v4124
    %v4126 = vlaneseq
    %v4127 = vshrl.u32 %v4126, 7
    %v4128 = vsub.s32 %v4125, %v4127
    %v4129 = vrot.slane %v4115, %v4128
    %v4130 = vcombine.low %v4106, %v4122
    %v4131 = vcombine.high %v4106, %v4122
    %v4133 = vunpack.c.l.s4 1934713408
    %v4134 = vunpack.c.0.s8 %v4133
    %v4135 = vlaneseq
    %v4136 = vshrl.u32 %v4135, 7
    %v4137 = vsub.s32 %v4134, %v4136
    %v4138 = vrot.slane %v4130, %v4137
    %v4140 = vunpack.c.l.s4 1934713408
    %v4141 = vunpack.c.0.s8 %v4140
    %v4142 = vlaneseq
    %v4143 = vshrl.u32 %v4142, 7
    %v4144 = vsub.s32 %v4141, %v4143
    %v4145 = vrot.slane %v4131, %v4144
    %v4146 = vcombine.low %v4113, %v4129
    %v4147 = vcombine.high %v4113, %v4129
    %v4149 = vunpack.c.l.s4 1934713408
    %v4150 = vunpack.c.0.s8 %v4149
    %v4151 = vlaneseq
    %v4152 = vshrl.u32 %v4151, 7
    %v4153 = vsub.s32 %v4150, %v4152
    %v4154 = vrot.slane %v4146, %v4153
    %v4156 = vunpack.c.l.s4 1934713408
    %v4157 = vunpack.c.0.s8 %v4156
    %v4158 = vlaneseq
    %v4159 = vshrl.u32 %v4158, 7
    %v4160 = vsub.s32 %v4157, %v4159
    %v4161 = vrot.slane %v4147, %v4160
    %v4162 = vcombine.high %v4138, 0.0
    %v4163 = vcombine.high %v4145, 0.0
    %v4164 = vcombine.high %v4154, 0.0
    %v4165 = vcombine.high %v4161, 0.0
    %4167 = vrot.lane.b32.xlu0 %v4094, 16
    %v4168 = vpop.permute.xlu0 %4167
    %4171 = vrot.lane.b32.xlu0 %v4077, 32
    %v4172 = vpop.permute.xlu0 %4171
    %4175 = vrot.lane.b32.xlu0 %v4095, 48
    %v4176 = vpop.permute.xlu0 %4175
    %4179 = vrot.lane.b32.xlu0 %v4086, 64
    %v4180 = vpop.permute.xlu0 %4179
    %4183 = vrot.lane.b32.xlu0 %v4096, 80
    %v4184 = vpop.permute.xlu0 %4183
    %4187 = vrot.lane.b32.xlu0 %v4093, 96
    %v4188 = vpop.permute.xlu0 %4187
    %4191 = vrot.lane.b32.xlu0 %v4097, 112
    %v4192 = vpop.permute.xlu0 %4191
    %4195 = vrot.lane.b32.xlu0 %v4162, 16
    %v4196 = vpop.permute.xlu0 %4195
    %4199 = vrot.lane.b32.xlu0 %v4145, 32
    %v4200 = vpop.permute.xlu0 %4199
    %4203 = vrot.lane.b32.xlu0 %v4163, 48
    %v4204 = vpop.permute.xlu0 %4203
    %4207 = vrot.lane.b32.xlu0 %v4154, 64
    %v4208 = vpop.permute.xlu0 %4207
    %4211 = vrot.lane.b32.xlu0 %v4164, 80
    %v4212 = vpop.permute.xlu0 %4211
    %4215 = vrot.lane.b32.xlu0 %v4161, 96
    %v4216 = vpop.permute.xlu0 %4215
    %4219 = vrot.lane.b32.xlu0 %v4165, 112
    %v4220 = vpop.permute.xlu0 %4219
    %v4222 = vsel %vm364, %v4070, %v4168
    %v4223 = vsel %vm366, %v4222, %v4172
    %v4224 = vsel %vm368, %v4223, %v4176
    %v4225 = vsel %vm370, %v4224, %v4180
    %v4226 = vsel %vm372, %v4225, %v4184
    %v4227 = vsel %vm374, %v4226, %v4188
    %v4228 = vsel %vm376, %v4227, %v4192
    %v4229 = vsel %vm364, %v4138, %v4196
    %v4230 = vsel %vm366, %v4229, %v4200
    %v4231 = vsel %vm368, %v4230, %v4204
    %v4232 = vsel %vm370, %v4231, %v4208
    %v4233 = vsel %vm372, %v4232, %v4212
    %v4234 = vsel %vm374, %v4233, %v4216
    %v4235 = vsel %vm376, %v4234, %v4220
    %v4238 = vrot.slane %v4228, 4
    %v4239 = vrot.slane %v4235, 4
    %4242 = vst [vmem:[#allocation3 + $0x70] sm:$0xf0] %v4238
    %4243 = vst [vmem:[#allocation3 + $0x78] sm:$0xf0] %v4239
    %v4244 = vld [vmem:[%s2331 + $0x2] sm:$0xff]
    %v4245 = vld [vmem:[%s2331 + $0xa] sm:$0xff]
    %v4246 = vld [vmem:[%s2331 + $0x1a] sm:$0xff]
    %v4247 = vld [vmem:[%s2331 + $0x22] sm:$0xff]
    %v4248 = vld [vmem:[%s2331 + $0x32] sm:$0xff]
    %v4249 = vld [vmem:[%s2331 + $0x3a] sm:$0xff]
    %v4250 = vld [vmem:[%s2331 + $0x4a] sm:$0xff]
    %v4251 = vld [vmem:[%s2331 + $0x52] sm:$0xff]
    %4260 = vrot.lane.b32.xlu0 %v4244, 126
    %v4261 = vpop.permute.xlu0 %4260
    %4262 = vrot.lane.b32.xlu0 %v4245, 126
    %v4263 = vpop.permute.xlu0 %4262
    %4264 = vrot.lane.b32.xlu0 %v4246, 126
    %v4265 = vpop.permute.xlu0 %4264
    %4266 = vrot.lane.b32.xlu0 %v4247, 126
    %v4267 = vpop.permute.xlu0 %4266
    %4268 = vrot.lane.b32.xlu0 %v4248, 126
    %v4269 = vpop.permute.xlu0 %4268
    %4270 = vrot.lane.b32.xlu0 %v4249, 126
    %v4271 = vpop.permute.xlu0 %4270
    %4272 = vrot.lane.b32.xlu0 %v4250, 126
    %v4273 = vpop.permute.xlu0 %4272
    %4274 = vrot.lane.b32.xlu0 %v4251, 126
    %v4275 = vpop.permute.xlu0 %4274
    %v4284 = vcombine.low %v4261, %v4269
    %v4285 = vcombine.high %v4261, %v4269
    %v4287 = vunpack.c.l.s4 1983009808
    %v4288 = vunpack.c.0.s8 %v4287
    %v4289 = vlaneseq
    %v4290 = vshrl.u32 %v4289, 7
    %v4291 = vsub.s32 %v4288, %v4290
    %v4292 = vrot.slane %v4284, %v4291
    %v4294 = vunpack.c.l.s4 1983009808
    %v4295 = vunpack.c.0.s8 %v4294
    %v4296 = vlaneseq
    %v4297 = vshrl.u32 %v4296, 7
    %v4298 = vsub.s32 %v4295, %v4297
    %v4299 = vrot.slane %v4285, %v4298
    %v4300 = vcombine.low %v4265, %v4273
    %v4301 = vcombine.high %v4265, %v4273
    %v4303 = vunpack.c.l.s4 1983009808
    %v4304 = vunpack.c.0.s8 %v4303
    %v4305 = vlaneseq
    %v4306 = vshrl.u32 %v4305, 7
    %v4307 = vsub.s32 %v4304, %v4306
    %v4308 = vrot.slane %v4300, %v4307
    %v4310 = vunpack.c.l.s4 1983009808
    %v4311 = vunpack.c.0.s8 %v4310
    %v4312 = vlaneseq
    %v4313 = vshrl.u32 %v4312, 7
    %v4314 = vsub.s32 %v4311, %v4313
    %v4315 = vrot.slane %v4301, %v4314
    %v4316 = vcombine.low %v4292, %v4308
    %v4317 = vcombine.high %v4292, %v4308
    %v4319 = vunpack.c.l.s4 1934713408
    %v4320 = vunpack.c.0.s8 %v4319
    %v4321 = vlaneseq
    %v4322 = vshrl.u32 %v4321, 7
    %v4323 = vsub.s32 %v4320, %v4322
    %v4324 = vrot.slane %v4316, %v4323
    %v4326 = vunpack.c.l.s4 1934713408
    %v4327 = vunpack.c.0.s8 %v4326
    %v4328 = vlaneseq
    %v4329 = vshrl.u32 %v4328, 7
    %v4330 = vsub.s32 %v4327, %v4329
    %v4331 = vrot.slane %v4317, %v4330
    %v4332 = vcombine.low %v4299, %v4315
    %v4333 = vcombine.high %v4299, %v4315
    %v4335 = vunpack.c.l.s4 1934713408
    %v4336 = vunpack.c.0.s8 %v4335
    %v4337 = vlaneseq
    %v4338 = vshrl.u32 %v4337, 7
    %v4339 = vsub.s32 %v4336, %v4338
    %v4340 = vrot.slane %v4332, %v4339
    %v4342 = vunpack.c.l.s4 1934713408
    %v4343 = vunpack.c.0.s8 %v4342
    %v4344 = vlaneseq
    %v4345 = vshrl.u32 %v4344, 7
    %v4346 = vsub.s32 %v4343, %v4345
    %v4347 = vrot.slane %v4333, %v4346
    %v4348 = vcombine.high %v4324, 0.0
    %v4349 = vcombine.high %v4331, 0.0
    %v4350 = vcombine.high %v4340, 0.0
    %v4351 = vcombine.high %v4347, 0.0
    %v4352 = vcombine.low %v4263, %v4271
    %v4353 = vcombine.high %v4263, %v4271
    %v4355 = vunpack.c.l.s4 1983009808
    %v4356 = vunpack.c.0.s8 %v4355
    %v4357 = vlaneseq
    %v4358 = vshrl.u32 %v4357, 7
    %v4359 = vsub.s32 %v4356, %v4358
    %v4360 = vrot.slane %v4352, %v4359
    %v4362 = vunpack.c.l.s4 1983009808
    %v4363 = vunpack.c.0.s8 %v4362
    %v4364 = vlaneseq
    %v4365 = vshrl.u32 %v4364, 7
    %v4366 = vsub.s32 %v4363, %v4365
    %v4367 = vrot.slane %v4353, %v4366
    %v4368 = vcombine.low %v4267, %v4275
    %v4369 = vcombine.high %v4267, %v4275
    %v4371 = vunpack.c.l.s4 1983009808
    %v4372 = vunpack.c.0.s8 %v4371
    %v4373 = vlaneseq
    %v4374 = vshrl.u32 %v4373, 7
    %v4375 = vsub.s32 %v4372, %v4374
    %v4376 = vrot.slane %v4368, %v4375
    %v4378 = vunpack.c.l.s4 1983009808
    %v4379 = vunpack.c.0.s8 %v4378
    %v4380 = vlaneseq
    %v4381 = vshrl.u32 %v4380, 7
    %v4382 = vsub.s32 %v4379, %v4381
    %v4383 = vrot.slane %v4369, %v4382
    %v4384 = vcombine.low %v4360, %v4376
    %v4385 = vcombine.high %v4360, %v4376
    %v4387 = vunpack.c.l.s4 1934713408
    %v4388 = vunpack.c.0.s8 %v4387
    %v4389 = vlaneseq
    %v4390 = vshrl.u32 %v4389, 7
    %v4391 = vsub.s32 %v4388, %v4390
    %v4392 = vrot.slane %v4384, %v4391
    %v4394 = vunpack.c.l.s4 1934713408
    %v4395 = vunpack.c.0.s8 %v4394
    %v4396 = vlaneseq
    %v4397 = vshrl.u32 %v4396, 7
    %v4398 = vsub.s32 %v4395, %v4397
    %v4399 = vrot.slane %v4385, %v4398
    %v4400 = vcombine.low %v4367, %v4383
    %v4401 = vcombine.high %v4367, %v4383
    %v4403 = vunpack.c.l.s4 1934713408
    %v4404 = vunpack.c.0.s8 %v4403
    %v4405 = vlaneseq
    %v4406 = vshrl.u32 %v4405, 7
    %v4407 = vsub.s32 %v4404, %v4406
    %v4408 = vrot.slane %v4400, %v4407
    %v4410 = vunpack.c.l.s4 1934713408
    %v4411 = vunpack.c.0.s8 %v4410
    %v4412 = vlaneseq
    %v4413 = vshrl.u32 %v4412, 7
    %v4414 = vsub.s32 %v4411, %v4413
    %v4415 = vrot.slane %v4401, %v4414
    %v4416 = vcombine.high %v4392, 0.0
    %v4417 = vcombine.high %v4399, 0.0
    %v4418 = vcombine.high %v4408, 0.0
    %v4419 = vcombine.high %v4415, 0.0
    %4421 = vrot.lane.b32.xlu0 %v4348, 16
    %v4422 = vpop.permute.xlu0 %4421
    %4425 = vrot.lane.b32.xlu0 %v4331, 32
    %v4426 = vpop.permute.xlu0 %4425
    %4429 = vrot.lane.b32.xlu0 %v4349, 48
    %v4430 = vpop.permute.xlu0 %4429
    %4433 = vrot.lane.b32.xlu0 %v4340, 64
    %v4434 = vpop.permute.xlu0 %4433
    %4437 = vrot.lane.b32.xlu0 %v4350, 80
    %v4438 = vpop.permute.xlu0 %4437
    %4441 = vrot.lane.b32.xlu0 %v4347, 96
    %v4442 = vpop.permute.xlu0 %4441
    %4445 = vrot.lane.b32.xlu0 %v4351, 112
    %v4446 = vpop.permute.xlu0 %4445
    %4449 = vrot.lane.b32.xlu0 %v4416, 16
    %v4450 = vpop.permute.xlu0 %4449
    %4453 = vrot.lane.b32.xlu0 %v4399, 32
    %v4454 = vpop.permute.xlu0 %4453
    %4457 = vrot.lane.b32.xlu0 %v4417, 48
    %v4458 = vpop.permute.xlu0 %4457
    %4461 = vrot.lane.b32.xlu0 %v4408, 64
    %v4462 = vpop.permute.xlu0 %4461
    %4465 = vrot.lane.b32.xlu0 %v4418, 80
    %v4466 = vpop.permute.xlu0 %4465
    %4469 = vrot.lane.b32.xlu0 %v4415, 96
    %v4470 = vpop.permute.xlu0 %4469
    %4473 = vrot.lane.b32.xlu0 %v4419, 112
    %v4474 = vpop.permute.xlu0 %4473
    %v4476 = vsel %vm364, %v4324, %v4422
    %v4477 = vsel %vm366, %v4476, %v4426
    %v4478 = vsel %vm368, %v4477, %v4430
    %v4479 = vsel %vm370, %v4478, %v4434
    %v4480 = vsel %vm372, %v4479, %v4438
    %v4481 = vsel %vm374, %v4480, %v4442
    %v4482 = vsel %vm376, %v4481, %v4446
    %v4483 = vsel %vm364, %v4392, %v4450
    %v4484 = vsel %vm366, %v4483, %v4454
    %v4485 = vsel %vm368, %v4484, %v4458
    %v4486 = vsel %vm370, %v4485, %v4462
    %v4487 = vsel %vm372, %v4486, %v4466
    %v4488 = vsel %vm374, %v4487, %v4470
    %v4489 = vsel %vm376, %v4488, %v4474
    %4490 = vst [vmem:[#allocation3 + $0x90] sm:$0xf] %v4482
    %4491 = vst [vmem:[#allocation3 + $0x98] sm:$0xf] %v4489
    %v4492 = vld [vmem:[%s1] sm:$0xf]
    %v4493 = vld [vmem:[#allocation3] sm:$0xff]
    %v4494 = vld [vmem:[#allocation3 + $0x8] sm:$0xff]
    %v4495 = vld [vmem:[#allocation3 + $0x10] sm:$0xff]
    %v4496 = vld [vmem:[#allocation3 + $0x18] sm:$0xff]
    %v4497 = vld [vmem:[#allocation3 + $0x20] sm:$0xff]
    %v4498 = vld [vmem:[#allocation3 + $0x28] sm:$0xff]
    %v4499 = vld [vmem:[#allocation3 + $0x30] sm:$0xff]
    %v4500 = vld [vmem:[#allocation3 + $0x38] sm:$0xff]
    %v4501 = vld [vmem:[#allocation3 + $0x40] sm:$0xff]
    %v4502 = vld [vmem:[#allocation3 + $0x48] sm:$0xff]
    %v4503 = vld [vmem:[#allocation3 + $0x50] sm:$0xff]
    %v4504 = vld [vmem:[#allocation3 + $0x58] sm:$0xff]
    %v4505 = vld [vmem:[#allocation3 + $0x60] sm:$0xff]
    %v4506 = vld [vmem:[#allocation3 + $0x68] sm:$0xff]
    %v4507 = vld [vmem:[#allocation3 + $0x70] sm:$0xff]
    %v4508 = vld [vmem:[#allocation3 + $0x78] sm:$0xff]
    %v4509 = vld [vmem:[#allocation3 + $0x80] sm:$0xf]
    %v4510 = vld [vmem:[#allocation3 + $0x88] sm:$0xf]
    %v4511 = vld [vmem:[#allocation3 + $0x90] sm:$0xf]
    %v4512 = vld [vmem:[#allocation3 + $0x98] sm:$0xf]
    %v4513 = vld [vmem:[%s2] sm:$0xf]
    %4515 = vset.pattern.permute.xlu0 0
    %4516 = vperm.xlu0 %4515, %v4513
    %v4517 = vpop.permute.xlu0 %4516
    %vm4519 = vcmask 293888
    %v4521 = vsel %vm4519, %v4492, 0
    %vm4523 = vcmask 1043456
    %v4525 = vsel %vm4523, %v4509, 0
    %v4528 = vsel %vm4523, %v4510, 0
    %v4531 = vsel %vm4523, %v4511, 0
    %v4534 = vsel %vm4523, %v4512, 0
    %4536 = vmatprep.subr.mxu0 %v4494
    %4537 = vmatpush1.msra.mxu0 %v4493
    %4538 = vmatprep.subr.mxu0 %v4498
    %4539 = vmatpush1.msra.mxu0 %v4497
    %4540 = vmatprep.subr.mxu0 %v4502
    %4541 = vmatpush1.msra.mxu0 %v4501
    %4542 = vmatprep.subr.mxu0 %v4506
    %4543 = vmatpush1.msra.mxu0 %v4505
    %4544 = vmatprep.subr.mxu0 %v4528
    %4545 = vmatpush1.msra.mxu0 %v4525
    %4546 = vmatprep.subr.mxu0 0.0
    %4547 = vmatpush1.msra.mxu0 0.0
    %4548 = vmatprep.subr.mxu0 0.0
    %4549 = vmatpush1.msra.mxu0 0.0
    %4550 = vmatprep.subr.mxu0 0.0
    %4551 = vmatpush1.msra.mxu0 0.0
    %4552 = vmatprep.subr.mxu0 0.0
    %4553 = vmatpush1.msra.mxu0 0.0
    %4554 = vmatprep.subr.mxu0 0.0
    %4555 = vmatpush1.msra.mxu0 0.0
    %4556 = vmatprep.subr.mxu0 0.0
    %4557 = vmatpush1.msra.mxu0 0.0
    %4558 = vmatprep.subr.mxu0 0.0
    %4559 = vmatpush1.msra.mxu0 0.0
    %4560 = vmatprep.subr.mxu0 0.0
    %4561 = vmatpush1.msra.mxu0 0.0
    %4562 = vmatprep.subr.mxu0 0.0
    %4563 = vmatpush1.msra.mxu0 0.0
    %4564 = vmatprep.subr.mxu0 0.0
    %4565 = vmatpush1.msra.mxu0 0.0
    %4566 = vmatprep.subr.mxu0 0.0
    %4567 = vmatpush1.msra.mxu0 0.0
    %4568 = vmatprep.subr.mxu0 0.0
    %4569 = vmatpush1.msra.mxu0 0.0
    %4570 = vmatprep.subr.mxu0 0.0
    %4571 = vmatpush1.msra.mxu0 0.0
    %4572 = vmatprep.subr.mxu0 0.0
    %4573 = vmatpush1.msra.mxu0 0.0
    %4574 = vmatprep.subr.mxu0 0.0
    %4575 = vmatpush1.msra.mxu0 0.0
    %4576 = vmatprep.subr.mxu0 0.0
    %4577 = vmatpush1.msra.mxu0 0.0
    %4578 = vmatprep.subr.mxu0 0.0
    %4579 = vmatpush1.msra.mxu0 0.0
    %4580 = vmatprep.subr.mxu0 0.0
    %4581 = vmatpush1.msra.mxu0 0.0
    %4582 = vmatprep.subr.mxu0 0.0
    %4583 = vmatpush1.msra.mxu0 0.0
    %4584 = vmatprep.subr.mxu0 0.0
    %4585 = vmatpush1.msra.mxu0 0.0
    %4586 = vmatprep.subr.mxu0 0.0
    %4587 = vmatpush1.msra.mxu0 0.0
    %4588 = vmatprep.subr.mxu0 0.0
    %4589 = vmatpush1.msra.mxu0 0.0
    %4590 = vmatprep.subr.mxu0 0.0
    %4591 = vmatpush1.msra.mxu0 0.0
    %4592 = vmatprep.subr.mxu0 0.0
    %4593 = vmatpush1.msra.mxu0 0.0
    %4594 = vmatprep.subr.mxu0 0.0
    %4595 = vmatpush1.msra.mxu0 0.0
    %4596 = vmatprep.subr.mxu0 0.0
    %4597 = vmatpush1.msra.mxu0 0.0
    %4598 = vmatprep.subr.mxu0 0.0
    %4599 = vmatpush1.msra.mxu0 0.0
    %4600 = vmatprep.mubr.f32.mxu0 0.0
    %4601 = vmatmul.mubr.f32.gmra.mrb[0].mxu0 %v4521
    %v4602 = vpop.f32.mrb[0].mxu0
    %v4603 = vadd.f32 %v4517, %v4602
    %v4604 = vpop.f32.mrb[0].mxu0
    %v4605 = vadd.f32 %v4517, %v4604
    %4606 = vdwg.mxu0
    %4607 = vmatprep.subr.mxu0 %v4496
    %4608 = vmatpush1.msra.mxu0 %v4495
    %4609 = vmatprep.subr.mxu0 %v4500
    %4610 = vmatpush1.msra.mxu0 %v4499
    %4611 = vmatprep.subr.mxu0 %v4504
    %4612 = vmatpush1.msra.mxu0 %v4503
    %4613 = vmatprep.subr.mxu0 %v4508
    %4614 = vmatpush1.msra.mxu0 %v4507
    %4615 = vmatprep.subr.mxu0 %v4534
    %4616 = vmatpush1.msra.mxu0 %v4531
    %4617 = vmatprep.subr.mxu0 0.0
    %4618 = vmatpush1.msra.mxu0 0.0
    %4619 = vmatprep.subr.mxu0 0.0
    %4620 = vmatpush1.msra.mxu0 0.0
    %4621 = vmatprep.subr.mxu0 0.0
    %4622 = vmatpush1.msra.mxu0 0.0
    %4623 = vmatprep.subr.mxu0 0.0
    %4624 = vmatpush1.msra.mxu0 0.0
    %4625 = vmatprep.subr.mxu0 0.0
    %4626 = vmatpush1.msra.mxu0 0.0
    %4627 = vmatprep.subr.mxu0 0.0
    %4628 = vmatpush1.msra.mxu0 0.0
    %4629 = vmatprep.subr.mxu0 0.0
    %4630 = vmatpush1.msra.mxu0 0.0
    %4631 = vmatprep.subr.mxu0 0.0
    %4632 = vmatpush1.msra.mxu0 0.0
    %4633 = vmatprep.subr.mxu0 0.0
    %4634 = vmatpush1.msra.mxu0 0.0
    %4635 = vmatprep.subr.mxu0 0.0
    %4636 = vmatpush1.msra.mxu0 0.0
    %4637 = vmatprep.subr.mxu0 0.0
    %4638 = vmatpush1.msra.mxu0 0.0
    %4639 = vmatprep.subr.mxu0 0.0
    %4640 = vmatpush1.msra.mxu0 0.0
    %4641 = vmatprep.subr.mxu0 0.0
    %4642 = vmatpush1.msra.mxu0 0.0
    %4643 = vmatprep.subr.mxu0 0.0
    %4644 = vmatpush1.msra.mxu0 0.0
    %4645 = vmatprep.subr.mxu0 0.0
    %4646 = vmatpush1.msra.mxu0 0.0
    %4647 = vmatprep.subr.mxu0 0.0
    %4648 = vmatpush1.msra.mxu0 0.0
    %4649 = vmatprep.subr.mxu0 0.0
    %4650 = vmatpush1.msra.mxu0 0.0
    %4651 = vmatprep.subr.mxu0 0.0
    %4652 = vmatpush1.msra.mxu0 0.0
    %4653 = vmatprep.subr.mxu0 0.0
    %4654 = vmatpush1.msra.mxu0 0.0
    %4655 = vmatprep.subr.mxu0 0.0
    %4656 = vmatpush1.msra.mxu0 0.0
    %4657 = vmatprep.subr.mxu0 0.0
    %4658 = vmatpush1.msra.mxu0 0.0
    %4659 = vmatprep.subr.mxu0 0.0
    %4660 = vmatpush1.msra.mxu0 0.0
    %4661 = vmatprep.subr.mxu0 0.0
    %4662 = vmatpush1.msra.mxu0 0.0
    %4663 = vmatprep.subr.mxu0 0.0
    %4664 = vmatpush1.msra.mxu0 0.0
    %4665 = vmatprep.subr.mxu0 0.0
    %4666 = vmatpush1.msra.mxu0 0.0
    %4667 = vmatprep.subr.mxu0 0.0
    %4668 = vmatpush1.msra.mxu0 0.0
    %4669 = vmatprep.subr.mxu0 0.0
    %4670 = vmatpush1.msra.mxu0 0.0
    %4671 = vmatprep.mubr.f32.mxu0 0.0
    %4672 = vmatmul.mubr.f32.gmra.mrb[0].mxu0 %v4521
    %v4673 = vpop.f32.mrb[0].mxu0
    %v4674 = vadd.f32 %v4517, %v4673
    %v4675 = vpop.f32.mrb[0].mxu0
    %v4676 = vadd.f32 %v4517, %v4675
    %4677 = vdwg.mxu0
    %v4678 = vsel %vm4523, %v4603, 0.0
    %v4679 = vsel %vm4523, %v4605, 0.0
    %v4680 = vadd.f32 %v4678, %v4679
    %v4681 = vsel %vm4523, %v4674, 0.0
    %v4682 = vadd.f32 %v4680, %v4681
    %v4683 = vsel %vm4523, %v4676, 0.0
    %v4684 = vadd.f32 %v4682, %v4683
    %4685 = vadd.xlane.f32.xlu0 %v4684
    %v4686 = vpop.xlane.xlu0 %4685
    %v4687 = vmul.f32 %v4603, %v4603
    %v4688 = vmul.f32 %v4605, %v4605
    %v4689 = vmul.f32 %v4674, %v4674
    %v4690 = vmul.f32 %v4676, %v4676
    %v4691 = vsel %vm4523, %v4687, 0.0
    %v4692 = vsel %vm4523, %v4688, 0.0
    %v4693 = vadd.f32 %v4691, %v4692
    %v4694 = vsel %vm4523, %v4689, 0.0
    %v4695 = vadd.f32 %v4693, %v4694
    %v4696 = vsel %vm4523, %v4690, 0.0
    %v4697 = vadd.f32 %v4695, %v4696
    %4698 = vadd.xlane.f32.xlu0 %v4697
    %v4699 = vpop.xlane.xlu0 %4698
    %v4700 = vmul.f32 %v4686, 0.001953125
    %v4701 = vmul.f32 %v4699, 0.001953125
    %v4702 = vmul.f32 %v4700, %v4700
    %v4703 = vsub.f32 %v4701, %v4702
    %v4704 = vadd.f32 %v4703, 1e-05
    %v4705 = vrsqrt.pop %v4704
    %v4706 = vld [vmem:[%s3] sm:$0xf]
    %v4707 = vmul.f32 %v4705, %v4706
    %v4708 = vsub.f32 %v4603, %v4700
    %v4709 = vsub.f32 %v4605, %v4700
    %v4710 = vsub.f32 %v4674, %v4700
    %v4711 = vsub.f32 %v4676, %v4700
    %4713 = vset.pattern.permute.xlu0 0
    %4714 = vperm.xlu0 %4713, %v4707
    %v4715 = vpop.permute.xlu0 %4714
    %v4717 = vmul.f32 %v4708, %v4715
    %v4718 = vmul.f32 %v4709, %v4715
    %v4719 = vmul.f32 %v4710, %v4715
    %v4720 = vmul.f32 %v4711, %v4715
    %v4721 = vld [vmem:[%s4] sm:$0xf]
    %4723 = vset.pattern.permute.xlu0 0
    %4724 = vperm.xlu0 %4723, %v4721
    %v4725 = vpop.permute.xlu0 %4724
    %v4727 = vadd.f32 %v4717, %v4725
    %v4728 = vadd.f32 %v4718, %v4725
    %v4729 = vadd.f32 %v4719, %v4725
    %v4730 = vadd.f32 %v4720, %v4725
    %v4731 = vmax.f32 %v4727, 0.0
    %v4732 = vmax.f32 %v4728, 0.0
    %v4733 = vmax.f32 %v4729, 0.0
    %v4734 = vmax.f32 %v4730, 0.0
    %4736 = vrot.lane.b32.xlu0 %v4731, 112
    %v4737 = vpop.permute.xlu0 %4736
    %4739 = vrot.lane.b32.xlu0 %v4731, 96
    %v4740 = vpop.permute.xlu0 %4739
    %4742 = vrot.lane.b32.xlu0 %v4731, 80
    %v4743 = vpop.permute.xlu0 %4742
    %4745 = vrot.lane.b32.xlu0 %v4731, 64
    %v4746 = vpop.permute.xlu0 %4745
    %4748 = vrot.lane.b32.xlu0 %v4731, 48
    %v4749 = vpop.permute.xlu0 %4748
    %4751 = vrot.lane.b32.xlu0 %v4731, 32
    %v4752 = vpop.permute.xlu0 %4751
    %4754 = vrot.lane.b32.xlu0 %v4731, 16
    %v4755 = vpop.permute.xlu0 %4754
    %4758 = vrot.lane.b32.xlu0 %v4732, 112
    %v4759 = vpop.permute.xlu0 %4758
    %4761 = vrot.lane.b32.xlu0 %v4732, 96
    %v4762 = vpop.permute.xlu0 %4761
    %4764 = vrot.lane.b32.xlu0 %v4732, 80
    %v4765 = vpop.permute.xlu0 %4764
    %4767 = vrot.lane.b32.xlu0 %v4732, 64
    %v4768 = vpop.permute.xlu0 %4767
    %4770 = vrot.lane.b32.xlu0 %v4732, 48
    %v4771 = vpop.permute.xlu0 %4770
    %4773 = vrot.lane.b32.xlu0 %v4732, 32
    %v4774 = vpop.permute.xlu0 %4773
    %4776 = vrot.lane.b32.xlu0 %v4732, 16
    %v4777 = vpop.permute.xlu0 %4776
    %v4779 = vcombine.low %v4731, %v4740
    %v4781 = vunpack.c.l.s4 1983009808
    %v4782 = vunpack.c.0.s8 %v4781
    %v4783 = vlaneseq
    %v4784 = vshrl.u32 %v4783, 7
    %v4785 = vsub.s32 %v4782, %v4784
    %v4786 = vrot.slane %v4779, %v4785
    %v4787 = vcombine.low %v4737, %v4743
    %v4789 = vunpack.c.l.s4 1983009808
    %v4790 = vunpack.c.0.s8 %v4789
    %v4791 = vlaneseq
    %v4792 = vshrl.u32 %v4791, 7
    %v4793 = vsub.s32 %v4790, %v4792
    %v4794 = vrot.slane %v4787, %v4793
    %v4795 = vcombine.low %v4746, %v4752
    %v4797 = vunpack.c.l.s4 1983009808
    %v4798 = vunpack.c.0.s8 %v4797
    %v4799 = vlaneseq
    %v4800 = vshrl.u32 %v4799, 7
    %v4801 = vsub.s32 %v4798, %v4800
    %v4802 = vrot.slane %v4795, %v4801
    %v4803 = vcombine.low %v4749, %v4755
    %v4805 = vunpack.c.l.s4 1983009808
    %v4806 = vunpack.c.0.s8 %v4805
    %v4807 = vlaneseq
    %v4808 = vshrl.u32 %v4807, 7
    %v4809 = vsub.s32 %v4806, %v4808
    %v4810 = vrot.slane %v4803, %v4809
    %v4811 = vcombine.low %v4786, %v4794
    %v4812 = vcombine.high %v4786, %v4794
    %v4814 = vunpack.c.l.s4 1934713408
    %v4815 = vunpack.c.0.s8 %v4814
    %v4816 = vlaneseq
    %v4817 = vshrl.u32 %v4816, 7
    %v4818 = vsub.s32 %v4815, %v4817
    %v4819 = vrot.slane %v4811, %v4818
    %v4821 = vunpack.c.l.s4 1934713408
    %v4822 = vunpack.c.0.s8 %v4821
    %v4823 = vlaneseq
    %v4824 = vshrl.u32 %v4823, 7
    %v4825 = vsub.s32 %v4822, %v4824
    %v4826 = vrot.slane %v4812, %v4825
    %v4827 = vcombine.low %v4802, %v4810
    %v4828 = vcombine.high %v4802, %v4810
    %v4830 = vunpack.c.l.s4 1934713408
    %v4831 = vunpack.c.0.s8 %v4830
    %v4832 = vlaneseq
    %v4833 = vshrl.u32 %v4832, 7
    %v4834 = vsub.s32 %v4831, %v4833
    %v4835 = vrot.slane %v4827, %v4834
    %v4837 = vunpack.c.l.s4 1934713408
    %v4838 = vunpack.c.0.s8 %v4837
    %v4839 = vlaneseq
    %v4840 = vshrl.u32 %v4839, 7
    %v4841 = vsub.s32 %v4838, %v4840
    %v4842 = vrot.slane %v4828, %v4841
    %v4843 = vcombine.low %v4819, %v4835
    %v4844 = vcombine.high %v4819, %v4835
    %v4845 = vcombine.low %v4826, %v4842
    %v4846 = vcombine.high %v4826, %v4842
    %v4847 = vcombine.low %v4732, %v4762
    %v4849 = vunpack.c.l.s4 1983009808
    %v4850 = vunpack.c.0.s8 %v4849
    %v4851 = vlaneseq
    %v4852 = vshrl.u32 %v4851, 7
    %v4853 = vsub.s32 %v4850, %v4852
    %v4854 = vrot.slane %v4847, %v4853
    %v4855 = vcombine.low %v4759, %v4765
    %v4857 = vunpack.c.l.s4 1983009808
    %v4858 = vunpack.c.0.s8 %v4857
    %v4859 = vlaneseq
    %v4860 = vshrl.u32 %v4859, 7
    %v4861 = vsub.s32 %v4858, %v4860
    %v4862 = vrot.slane %v4855, %v4861
    %v4863 = vcombine.low %v4768, %v4774
    %v4865 = vunpack.c.l.s4 1983009808
    %v4866 = vunpack.c.0.s8 %v4865
    %v4867 = vlaneseq
    %v4868 = vshrl.u32 %v4867, 7
    %v4869 = vsub.s32 %v4866, %v4868
    %v4870 = vrot.slane %v4863, %v4869
    %v4871 = vcombine.low %v4771, %v4777
    %v4873 = vunpack.c.l.s4 1983009808
    %v4874 = vunpack.c.0.s8 %v4873
    %v4875 = vlaneseq
    %v4876 = vshrl.u32 %v4875, 7
    %v4877 = vsub.s32 %v4874, %v4876
    %v4878 = vrot.slane %v4871, %v4877
    %v4879 = vcombine.low %v4854, %v4862
    %v4880 = vcombine.high %v4854, %v4862
    %v4882 = vunpack.c.l.s4 1934713408
    %v4883 = vunpack.c.0.s8 %v4882
    %v4884 = vlaneseq
    %v4885 = vshrl.u32 %v4884, 7
    %v4886 = vsub.s32 %v4883, %v4885
    %v4887 = vrot.slane %v4879, %v4886
    %v4889 = vunpack.c.l.s4 1934713408
    %v4890 = vunpack.c.0.s8 %v4889
    %v4891 = vlaneseq
    %v4892 = vshrl.u32 %v4891, 7
    %v4893 = vsub.s32 %v4890, %v4892
    %v4894 = vrot.slane %v4880, %v4893
    %v4895 = vcombine.low %v4870, %v4878
    %v4896 = vcombine.high %v4870, %v4878
    %v4898 = vunpack.c.l.s4 1934713408
    %v4899 = vunpack.c.0.s8 %v4898
    %v4900 = vlaneseq
    %v4901 = vshrl.u32 %v4900, 7
    %v4902 = vsub.s32 %v4899, %v4901
    %v4903 = vrot.slane %v4895, %v4902
    %v4905 = vunpack.c.l.s4 1934713408
    %v4906 = vunpack.c.0.s8 %v4905
    %v4907 = vlaneseq
    %v4908 = vshrl.u32 %v4907, 7
    %v4909 = vsub.s32 %v4906, %v4908
    %v4910 = vrot.slane %v4896, %v4909
    %v4911 = vcombine.low %v4887, %v4903
    %v4912 = vcombine.high %v4887, %v4903
    %v4913 = vcombine.low %v4894, %v4910
    %v4914 = vcombine.high %v4894, %v4910
    %4923 = vrot.lane.b32.xlu0 %v4843, 1
    %v4924 = vpop.permute.xlu0 %4923
    %4925 = vrot.lane.b32.xlu0 %v4911, 1
    %v4926 = vpop.permute.xlu0 %4925
    %4927 = vrot.lane.b32.xlu0 %v4844, 1
    %v4928 = vpop.permute.xlu0 %4927
    %4929 = vrot.lane.b32.xlu0 %v4912, 1
    %v4930 = vpop.permute.xlu0 %4929
    %4931 = vrot.lane.b32.xlu0 %v4845, 1
    %v4932 = vpop.permute.xlu0 %4931
    %4933 = vrot.lane.b32.xlu0 %v4913, 1
    %v4934 = vpop.permute.xlu0 %4933
    %4935 = vrot.lane.b32.xlu0 %v4846, 1
    %v4936 = vpop.permute.xlu0 %4935
    %4937 = vrot.lane.b32.xlu0 %v4914, 1
    %v4938 = vpop.permute.xlu0 %4937
    %4947 = vst.msk [vmem:[#allocation2 + $0x1] sm:$0xff] %vm147, %v4924
    %4948 = vst.msk [vmem:[#allocation2 + $0x9] sm:$0xff] %vm147, %v4926
    %4949 = vst.msk [vmem:[#allocation2 + $0x19] sm:$0xff] %vm147, %v4928
    %4950 = vst.msk [vmem:[#allocation2 + $0x21] sm:$0xff] %vm147, %v4930
    %4951 = vst.msk [vmem:[#allocation2 + $0x31] sm:$0xff] %vm147, %v4932
    %4952 = vst.msk [vmem:[#allocation2 + $0x39] sm:$0xff] %vm147, %v4934
    %4953 = vst.msk [vmem:[#allocation2 + $0x49] sm:$0xff] %vm147, %v4936
    %4954 = vst.msk [vmem:[#allocation2 + $0x51] sm:$0xff] %vm147, %v4938
    %4956 = vrot.lane.b32.xlu0 %v4733, 112
    %v4957 = vpop.permute.xlu0 %4956
    %4959 = vrot.lane.b32.xlu0 %v4733, 96
    %v4960 = vpop.permute.xlu0 %4959
    %4962 = vrot.lane.b32.xlu0 %v4733, 80
    %v4963 = vpop.permute.xlu0 %4962
    %4965 = vrot.lane.b32.xlu0 %v4733, 64
    %v4966 = vpop.permute.xlu0 %4965
    %4968 = vrot.lane.b32.xlu0 %v4733, 48
    %v4969 = vpop.permute.xlu0 %4968
    %4971 = vrot.lane.b32.xlu0 %v4733, 32
    %v4972 = vpop.permute.xlu0 %4971
    %4974 = vrot.lane.b32.xlu0 %v4733, 16
    %v4975 = vpop.permute.xlu0 %4974
    %4978 = vrot.lane.b32.xlu0 %v4734, 112
    %v4979 = vpop.permute.xlu0 %4978
    %4981 = vrot.lane.b32.xlu0 %v4734, 96
    %v4982 = vpop.permute.xlu0 %4981
    %4984 = vrot.lane.b32.xlu0 %v4734, 80
    %v4985 = vpop.permute.xlu0 %4984
    %4987 = vrot.lane.b32.xlu0 %v4734, 64
    %v4988 = vpop.permute.xlu0 %4987
    %4990 = vrot.lane.b32.xlu0 %v4734, 48
    %v4991 = vpop.permute.xlu0 %4990
    %4993 = vrot.lane.b32.xlu0 %v4734, 32
    %v4994 = vpop.permute.xlu0 %4993
    %4996 = vrot.lane.b32.xlu0 %v4734, 16
    %v4997 = vpop.permute.xlu0 %4996
    %v4999 = vcombine.low %v4733, %v4960
    %v5001 = vunpack.c.l.s4 1983009808
    %v5002 = vunpack.c.0.s8 %v5001
    %v5003 = vlaneseq
    %v5004 = vshrl.u32 %v5003, 7
    %v5005 = vsub.s32 %v5002, %v5004
    %v5006 = vrot.slane %v4999, %v5005
    %v5007 = vcombine.low %v4957, %v4963
    %v5009 = vunpack.c.l.s4 1983009808
    %v5010 = vunpack.c.0.s8 %v5009
    %v5011 = vlaneseq
    %v5012 = vshrl.u32 %v5011, 7
    %v5013 = vsub.s32 %v5010, %v5012
    %v5014 = vrot.slane %v5007, %v5013
    %v5015 = vcombine.low %v4966, %v4972
    %v5017 = vunpack.c.l.s4 1983009808
    %v5018 = vunpack.c.0.s8 %v5017
    %v5019 = vlaneseq
    %v5020 = vshrl.u32 %v5019, 7
    %v5021 = vsub.s32 %v5018, %v5020
    %v5022 = vrot.slane %v5015, %v5021
    %v5023 = vcombine.low %v4969, %v4975
    %v5025 = vunpack.c.l.s4 1983009808
    %v5026 = vunpack.c.0.s8 %v5025
    %v5027 = vlaneseq
    %v5028 = vshrl.u32 %v5027, 7
    %v5029 = vsub.s32 %v5026, %v5028
    %v5030 = vrot.slane %v5023, %v5029
    %v5031 = vcombine.low %v5006, %v5014
    %v5032 = vcombine.high %v5006, %v5014
    %v5034 = vunpack.c.l.s4 1934713408
    %v5035 = vunpack.c.0.s8 %v5034
    %v5036 = vlaneseq
    %v5037 = vshrl.u32 %v5036, 7
    %v5038 = vsub.s32 %v5035, %v5037
    %v5039 = vrot.slane %v5031, %v5038
    %v5041 = vunpack.c.l.s4 1934713408
    %v5042 = vunpack.c.0.s8 %v5041
    %v5043 = vlaneseq
    %v5044 = vshrl.u32 %v5043, 7
    %v5045 = vsub.s32 %v5042, %v5044
    %v5046 = vrot.slane %v5032, %v5045
    %v5047 = vcombine.low %v5022, %v5030
    %v5048 = vcombine.high %v5022, %v5030
    %v5050 = vunpack.c.l.s4 1934713408
    %v5051 = vunpack.c.0.s8 %v5050
    %v5052 = vlaneseq
    %v5053 = vshrl.u32 %v5052, 7
    %v5054 = vsub.s32 %v5051, %v5053
    %v5055 = vrot.slane %v5047, %v5054
    %v5057 = vunpack.c.l.s4 1934713408
    %v5058 = vunpack.c.0.s8 %v5057
    %v5059 = vlaneseq
    %v5060 = vshrl.u32 %v5059, 7
    %v5061 = vsub.s32 %v5058, %v5060
    %v5062 = vrot.slane %v5048, %v5061
    %v5063 = vcombine.low %v5039, %v5055
    %v5064 = vcombine.high %v5039, %v5055
    %v5065 = vcombine.low %v5046, %v5062
    %v5066 = vcombine.high %v5046, %v5062
    %v5067 = vcombine.low %v4734, %v4982
    %v5069 = vunpack.c.l.s4 1983009808
    %v5070 = vunpack.c.0.s8 %v5069
    %v5071 = vlaneseq
    %v5072 = vshrl.u32 %v5071, 7
    %v5073 = vsub.s32 %v5070, %v5072
    %v5074 = vrot.slane %v5067, %v5073
    %v5075 = vcombine.low %v4979, %v4985
    %v5077 = vunpack.c.l.s4 1983009808
    %v5078 = vunpack.c.0.s8 %v5077
    %v5079 = vlaneseq
    %v5080 = vshrl.u32 %v5079, 7
    %v5081 = vsub.s32 %v5078, %v5080
    %v5082 = vrot.slane %v5075, %v5081
    %v5083 = vcombine.low %v4988, %v4994
    %v5085 = vunpack.c.l.s4 1983009808
    %v5086 = vunpack.c.0.s8 %v5085
    %v5087 = vlaneseq
    %v5088 = vshrl.u32 %v5087, 7
    %v5089 = vsub.s32 %v5086, %v5088
    %v5090 = vrot.slane %v5083, %v5089
    %v5091 = vcombine.low %v4991, %v4997
    %v5093 = vunpack.c.l.s4 1983009808
    %v5094 = vunpack.c.0.s8 %v5093
    %v5095 = vlaneseq
    %v5096 = vshrl.u32 %v5095, 7
    %v5097 = vsub.s32 %v5094, %v5096
    %v5098 = vrot.slane %v5091, %v5097
    %v5099 = vcombine.low %v5074, %v5082
    %v5100 = vcombine.high %v5074, %v5082
    %v5102 = vunpack.c.l.s4 1934713408
    %v5103 = vunpack.c.0.s8 %v5102
    %v5104 = vlaneseq
    %v5105 = vshrl.u32 %v5104, 7
    %v5106 = vsub.s32 %v5103, %v5105
    %v5107 = vrot.slane %v5099, %v5106
    %v5109 = vunpack.c.l.s4 1934713408
    %v5110 = vunpack.c.0.s8 %v5109
    %v5111 = vlaneseq
    %v5112 = vshrl.u32 %v5111, 7
    %v5113 = vsub.s32 %v5110, %v5112
    %v5114 = vrot.slane %v5100, %v5113
    %v5115 = vcombine.low %v5090, %v5098
    %v5116 = vcombine.high %v5090, %v5098
    %v5118 = vunpack.c.l.s4 1934713408
    %v5119 = vunpack.c.0.s8 %v5118
    %v5120 = vlaneseq
    %v5121 = vshrl.u32 %v5120, 7
    %v5122 = vsub.s32 %v5119, %v5121
    %v5123 = vrot.slane %v5115, %v5122
    %v5125 = vunpack.c.l.s4 1934713408
    %v5126 = vunpack.c.0.s8 %v5125
    %v5127 = vlaneseq
    %v5128 = vshrl.u32 %v5127, 7
    %v5129 = vsub.s32 %v5126, %v5128
    %v5130 = vrot.slane %v5116, %v5129
    %v5131 = vcombine.low %v5107, %v5123
    %v5132 = vcombine.high %v5107, %v5123
    %v5133 = vcombine.low %v5114, %v5130
    %v5134 = vcombine.high %v5114, %v5130
    %5143 = vrot.lane.b32.xlu0 %v5063, 1
    %v5144 = vpop.permute.xlu0 %5143
    %5145 = vrot.lane.b32.xlu0 %v5131, 1
    %v5146 = vpop.permute.xlu0 %5145
    %5147 = vrot.lane.b32.xlu0 %v5064, 1
    %v5148 = vpop.permute.xlu0 %5147
    %5149 = vrot.lane.b32.xlu0 %v5132, 1
    %v5150 = vpop.permute.xlu0 %5149
    %5151 = vrot.lane.b32.xlu0 %v5065, 1
    %v5152 = vpop.permute.xlu0 %5151
    %5153 = vrot.lane.b32.xlu0 %v5133, 1
    %v5154 = vpop.permute.xlu0 %5153
    %5155 = vrot.lane.b32.xlu0 %v5066, 1
    %v5156 = vpop.permute.xlu0 %5155
    %5157 = vrot.lane.b32.xlu0 %v5134, 1
    %v5158 = vpop.permute.xlu0 %5157
    %5167 = vst.msk [vmem:[%s2331 + $0x1] sm:$0xff] %vm147, %v5144
    %5168 = vst.msk [vmem:[%s2331 + $0x9] sm:$0xff] %vm147, %v5146
    %5169 = vst.msk [vmem:[%s2331 + $0x19] sm:$0xff] %vm147, %v5148
    %5170 = vst.msk [vmem:[%s2331 + $0x21] sm:$0xff] %vm147, %v5150
    %5171 = vst.msk [vmem:[%s2331 + $0x31] sm:$0xff] %vm147, %v5152
    %5172 = vst.msk [vmem:[%s2331 + $0x39] sm:$0xff] %vm147, %v5154
    %5173 = vst.msk [vmem:[%s2331 + $0x49] sm:$0xff] %vm147, %v5156
    %5174 = vst.msk [vmem:[%s2331 + $0x51] sm:$0xff] %vm147, %v5158
    %v5175 = vld [vmem:[#allocation2] sm:$0xff]
    %v5176 = vld [vmem:[#allocation2 + $0x8] sm:$0xff]
    %v5177 = vld [vmem:[#allocation2 + $0x18] sm:$0xff]
    %v5178 = vld [vmem:[#allocation2 + $0x20] sm:$0xff]
    %v5179 = vld [vmem:[#allocation2 + $0x30] sm:$0xff]
    %v5180 = vld [vmem:[#allocation2 + $0x38] sm:$0xff]
    %v5181 = vld [vmem:[#allocation2 + $0x48] sm:$0xff]
    %v5182 = vld [vmem:[#allocation2 + $0x50] sm:$0xff]
    %v5183 = vcombine.low %v5175, %v5179
    %v5184 = vcombine.high %v5175, %v5179
    %v5186 = vunpack.c.l.s4 1983009808
    %v5187 = vunpack.c.0.s8 %v5186
    %v5188 = vlaneseq
    %v5189 = vshrl.u32 %v5188, 7
    %v5190 = vsub.s32 %v5187, %v5189
    %v5191 = vrot.slane %v5183, %v5190
    %v5193 = vunpack.c.l.s4 1983009808
    %v5194 = vunpack.c.0.s8 %v5193
    %v5195 = vlaneseq
    %v5196 = vshrl.u32 %v5195, 7
    %v5197 = vsub.s32 %v5194, %v5196
    %v5198 = vrot.slane %v5184, %v5197
    %v5199 = vcombine.low %v5177, %v5181
    %v5200 = vcombine.high %v5177, %v5181
    %v5202 = vunpack.c.l.s4 1983009808
    %v5203 = vunpack.c.0.s8 %v5202
    %v5204 = vlaneseq
    %v5205 = vshrl.u32 %v5204, 7
    %v5206 = vsub.s32 %v5203, %v5205
    %v5207 = vrot.slane %v5199, %v5206
    %v5209 = vunpack.c.l.s4 1983009808
    %v5210 = vunpack.c.0.s8 %v5209
    %v5211 = vlaneseq
    %v5212 = vshrl.u32 %v5211, 7
    %v5213 = vsub.s32 %v5210, %v5212
    %v5214 = vrot.slane %v5200, %v5213
    %v5215 = vcombine.low %v5191, %v5207
    %v5216 = vcombine.high %v5191, %v5207
    %v5218 = vunpack.c.l.s4 1934713408
    %v5219 = vunpack.c.0.s8 %v5218
    %v5220 = vlaneseq
    %v5221 = vshrl.u32 %v5220, 7
    %v5222 = vsub.s32 %v5219, %v5221
    %v5223 = vrot.slane %v5215, %v5222
    %v5225 = vunpack.c.l.s4 1934713408
    %v5226 = vunpack.c.0.s8 %v5225
    %v5227 = vlaneseq
    %v5228 = vshrl.u32 %v5227, 7
    %v5229 = vsub.s32 %v5226, %v5228
    %v5230 = vrot.slane %v5216, %v5229
    %v5231 = vcombine.low %v5198, %v5214
    %v5232 = vcombine.high %v5198, %v5214
    %v5234 = vunpack.c.l.s4 1934713408
    %v5235 = vunpack.c.0.s8 %v5234
    %v5236 = vlaneseq
    %v5237 = vshrl.u32 %v5236, 7
    %v5238 = vsub.s32 %v5235, %v5237
    %v5239 = vrot.slane %v5231, %v5238
    %v5241 = vunpack.c.l.s4 1934713408
    %v5242 = vunpack.c.0.s8 %v5241
    %v5243 = vlaneseq
    %v5244 = vshrl.u32 %v5243, 7
    %v5245 = vsub.s32 %v5242, %v5244
    %v5246 = vrot.slane %v5232, %v5245
    %v5247 = vcombine.high %v5223, 0.0
    %v5248 = vcombine.high %v5230, 0.0
    %v5249 = vcombine.high %v5239, 0.0
    %v5250 = vcombine.high %v5246, 0.0
    %v5251 = vcombine.low %v5176, %v5180
    %v5252 = vcombine.high %v5176, %v5180
    %v5254 = vunpack.c.l.s4 1983009808
    %v5255 = vunpack.c.0.s8 %v5254
    %v5256 = vlaneseq
    %v5257 = vshrl.u32 %v5256, 7
    %v5258 = vsub.s32 %v5255, %v5257
    %v5259 = vrot.slane %v5251, %v5258
    %v5261 = vunpack.c.l.s4 1983009808
    %v5262 = vunpack.c.0.s8 %v5261
    %v5263 = vlaneseq
    %v5264 = vshrl.u32 %v5263, 7
    %v5265 = vsub.s32 %v5262, %v5264
    %v5266 = vrot.slane %v5252, %v5265
    %v5267 = vcombine.low %v5178, %v5182
    %v5268 = vcombine.high %v5178, %v5182
    %v5270 = vunpack.c.l.s4 1983009808
    %v5271 = vunpack.c.0.s8 %v5270
    %v5272 = vlaneseq
    %v5273 = vshrl.u32 %v5272, 7
    %v5274 = vsub.s32 %v5271, %v5273
    %v5275 = vrot.slane %v5267, %v5274
    %v5277 = vunpack.c.l.s4 1983009808
    %v5278 = vunpack.c.0.s8 %v5277
    %v5279 = vlaneseq
    %v5280 = vshrl.u32 %v5279, 7
    %v5281 = vsub.s32 %v5278, %v5280
    %v5282 = vrot.slane %v5268, %v5281
    %v5283 = vcombine.low %v5259, %v5275
    %v5284 = vcombine.high %v5259, %v5275
    %v5286 = vunpack.c.l.s4 1934713408
    %v5287 = vunpack.c.0.s8 %v5286
    %v5288 = vlaneseq
    %v5289 = vshrl.u32 %v5288, 7
    %v5290 = vsub.s32 %v5287, %v5289
    %v5291 = vrot.slane %v5283, %v5290
    %v5293 = vunpack.c.l.s4 1934713408
    %v5294 = vunpack.c.0.s8 %v5293
    %v5295 = vlaneseq
    %v5296 = vshrl.u32 %v5295, 7
    %v5297 = vsub.s32 %v5294, %v5296
    %v5298 = vrot.slane %v5284, %v5297
    %v5299 = vcombine.low %v5266, %v5282
    %v5300 = vcombine.high %v5266, %v5282
    %v5302 = vunpack.c.l.s4 1934713408
    %v5303 = vunpack.c.0.s8 %v5302
    %v5304 = vlaneseq
    %v5305 = vshrl.u32 %v5304, 7
    %v5306 = vsub.s32 %v5303, %v5305
    %v5307 = vrot.slane %v5299, %v5306
    %v5309 = vunpack.c.l.s4 1934713408
    %v5310 = vunpack.c.0.s8 %v5309
    %v5311 = vlaneseq
    %v5312 = vshrl.u32 %v5311, 7
    %v5313 = vsub.s32 %v5310, %v5312
    %v5314 = vrot.slane %v5300, %v5313
    %v5315 = vcombine.high %v5291, 0.0
    %v5316 = vcombine.high %v5298, 0.0
    %v5317 = vcombine.high %v5307, 0.0
    %v5318 = vcombine.high %v5314, 0.0
    %5320 = vrot.lane.b32.xlu0 %v5247, 16
    %v5321 = vpop.permute.xlu0 %5320
    %5324 = vrot.lane.b32.xlu0 %v5230, 32
    %v5325 = vpop.permute.xlu0 %5324
    %5328 = vrot.lane.b32.xlu0 %v5248, 48
    %v5329 = vpop.permute.xlu0 %5328
    %5332 = vrot.lane.b32.xlu0 %v5239, 64
    %v5333 = vpop.permute.xlu0 %5332
    %5336 = vrot.lane.b32.xlu0 %v5249, 80
    %v5337 = vpop.permute.xlu0 %5336
    %5340 = vrot.lane.b32.xlu0 %v5246, 96
    %v5341 = vpop.permute.xlu0 %5340
    %5344 = vrot.lane.b32.xlu0 %v5250, 112
    %v5345 = vpop.permute.xlu0 %5344
    %5348 = vrot.lane.b32.xlu0 %v5315, 16
    %v5349 = vpop.permute.xlu0 %5348
    %5352 = vrot.lane.b32.xlu0 %v5298, 32
    %v5353 = vpop.permute.xlu0 %5352
    %5356 = vrot.lane.b32.xlu0 %v5316, 48
    %v5357 = vpop.permute.xlu0 %5356
    %5360 = vrot.lane.b32.xlu0 %v5307, 64
    %v5361 = vpop.permute.xlu0 %5360
    %5364 = vrot.lane.b32.xlu0 %v5317, 80
    %v5365 = vpop.permute.xlu0 %5364
    %5368 = vrot.lane.b32.xlu0 %v5314, 96
    %v5369 = vpop.permute.xlu0 %5368
    %5372 = vrot.lane.b32.xlu0 %v5318, 112
    %v5373 = vpop.permute.xlu0 %5372
    %v5375 = vsel %vm364, %v5223, %v5321
    %v5376 = vsel %vm366, %v5375, %v5325
    %v5377 = vsel %vm368, %v5376, %v5329
    %v5378 = vsel %vm370, %v5377, %v5333
    %v5379 = vsel %vm372, %v5378, %v5337
    %v5380 = vsel %vm374, %v5379, %v5341
    %v5381 = vsel %vm376, %v5380, %v5345
    %v5382 = vsel %vm364, %v5291, %v5349
    %v5383 = vsel %vm366, %v5382, %v5353
    %v5384 = vsel %vm368, %v5383, %v5357
    %v5385 = vsel %vm370, %v5384, %v5361
    %v5386 = vsel %vm372, %v5385, %v5365
    %v5387 = vsel %vm374, %v5386, %v5369
    %v5388 = vsel %vm376, %v5387, %v5373
    %5389 = vst [vmem:[#allocation3] sm:$0xf] %v5381
    %5390 = vst [vmem:[#allocation3 + $0x8] sm:$0xf] %v5388
    %v5391 = vld [vmem:[#allocation2] sm:$0xff]
    %v5392 = vld [vmem:[#allocation2 + $0x8] sm:$0xff]
    %v5393 = vld [vmem:[#allocation2 + $0x18] sm:$0xff]
    %v5394 = vld [vmem:[#allocation2 + $0x20] sm:$0xff]
    %v5395 = vld [vmem:[#allocation2 + $0x30] sm:$0xff]
    %v5396 = vld [vmem:[#allocation2 + $0x38] sm:$0xff]
    %v5397 = vld [vmem:[#allocation2 + $0x48] sm:$0xff]
    %v5398 = vld [vmem:[#allocation2 + $0x50] sm:$0xff]
    %5407 = vrot.lane.b32.xlu0 %v5391, 127
    %v5408 = vpop.permute.xlu0 %5407
    %5409 = vrot.lane.b32.xlu0 %v5392, 127
    %v5410 = vpop.permute.xlu0 %5409
    %5411 = vrot.lane.b32.xlu0 %v5393, 127
    %v5412 = vpop.permute.xlu0 %5411
    %5413 = vrot.lane.b32.xlu0 %v5394, 127
    %v5414 = vpop.permute.xlu0 %5413
    %5415 = vrot.lane.b32.xlu0 %v5395, 127
    %v5416 = vpop.permute.xlu0 %5415
    %5417 = vrot.lane.b32.xlu0 %v5396, 127
    %v5418 = vpop.permute.xlu0 %5417
    %5419 = vrot.lane.b32.xlu0 %v5397, 127
    %v5420 = vpop.permute.xlu0 %5419
    %5421 = vrot.lane.b32.xlu0 %v5398, 127
    %v5422 = vpop.permute.xlu0 %5421
    %v5431 = vcombine.low %v5408, %v5416
    %v5432 = vcombine.high %v5408, %v5416
    %v5434 = vunpack.c.l.s4 1983009808
    %v5435 = vunpack.c.0.s8 %v5434
    %v5436 = vlaneseq
    %v5437 = vshrl.u32 %v5436, 7
    %v5438 = vsub.s32 %v5435, %v5437
    %v5439 = vrot.slane %v5431, %v5438
    %v5441 = vunpack.c.l.s4 1983009808
    %v5442 = vunpack.c.0.s8 %v5441
    %v5443 = vlaneseq
    %v5444 = vshrl.u32 %v5443, 7
    %v5445 = vsub.s32 %v5442, %v5444
    %v5446 = vrot.slane %v5432, %v5445
    %v5447 = vcombine.low %v5412, %v5420
    %v5448 = vcombine.high %v5412, %v5420
    %v5450 = vunpack.c.l.s4 1983009808
    %v5451 = vunpack.c.0.s8 %v5450
    %v5452 = vlaneseq
    %v5453 = vshrl.u32 %v5452, 7
    %v5454 = vsub.s32 %v5451, %v5453
    %v5455 = vrot.slane %v5447, %v5454
    %v5457 = vunpack.c.l.s4 1983009808
    %v5458 = vunpack.c.0.s8 %v5457
    %v5459 = vlaneseq
    %v5460 = vshrl.u32 %v5459, 7
    %v5461 = vsub.s32 %v5458, %v5460
    %v5462 = vrot.slane %v5448, %v5461
    %v5463 = vcombine.low %v5439, %v5455
    %v5464 = vcombine.high %v5439, %v5455
    %v5466 = vunpack.c.l.s4 1934713408
    %v5467 = vunpack.c.0.s8 %v5466
    %v5468 = vlaneseq
    %v5469 = vshrl.u32 %v5468, 7
    %v5470 = vsub.s32 %v5467, %v5469
    %v5471 = vrot.slane %v5463, %v5470
    %v5473 = vunpack.c.l.s4 1934713408
    %v5474 = vunpack.c.0.s8 %v5473
    %v5475 = vlaneseq
    %v5476 = vshrl.u32 %v5475, 7
    %v5477 = vsub.s32 %v5474, %v5476
    %v5478 = vrot.slane %v5464, %v5477
    %v5479 = vcombine.low %v5446, %v5462
    %v5480 = vcombine.high %v5446, %v5462
    %v5482 = vunpack.c.l.s4 1934713408
    %v5483 = vunpack.c.0.s8 %v5482
    %v5484 = vlaneseq
    %v5485 = vshrl.u32 %v5484, 7
    %v5486 = vsub.s32 %v5483, %v5485
    %v5487 = vrot.slane %v5479, %v5486
    %v5489 = vunpack.c.l.s4 1934713408
    %v5490 = vunpack.c.0.s8 %v5489
    %v5491 = vlaneseq
    %v5492 = vshrl.u32 %v5491, 7
    %v5493 = vsub.s32 %v5490, %v5492
    %v5494 = vrot.slane %v5480, %v5493
    %v5495 = vcombine.high %v5471, 0.0
    %v5496 = vcombine.high %v5478, 0.0
    %v5497 = vcombine.high %v5487, 0.0
    %v5498 = vcombine.high %v5494, 0.0
    %v5499 = vcombine.low %v5410, %v5418
    %v5500 = vcombine.high %v5410, %v5418
    %v5502 = vunpack.c.l.s4 1983009808
    %v5503 = vunpack.c.0.s8 %v5502
    %v5504 = vlaneseq
    %v5505 = vshrl.u32 %v5504, 7
    %v5506 = vsub.s32 %v5503, %v5505
    %v5507 = vrot.slane %v5499, %v5506
    %v5509 = vunpack.c.l.s4 1983009808
    %v5510 = vunpack.c.0.s8 %v5509
    %v5511 = vlaneseq
    %v5512 = vshrl.u32 %v5511, 7
    %v5513 = vsub.s32 %v5510, %v5512
    %v5514 = vrot.slane %v5500, %v5513
    %v5515 = vcombine.low %v5414, %v5422
    %v5516 = vcombine.high %v5414, %v5422
    %v5518 = vunpack.c.l.s4 1983009808
    %v5519 = vunpack.c.0.s8 %v5518
    %v5520 = vlaneseq
    %v5521 = vshrl.u32 %v5520, 7
    %v5522 = vsub.s32 %v5519, %v5521
    %v5523 = vrot.slane %v5515, %v5522
    %v5525 = vunpack.c.l.s4 1983009808
    %v5526 = vunpack.c.0.s8 %v5525
    %v5527 = vlaneseq
    %v5528 = vshrl.u32 %v5527, 7
    %v5529 = vsub.s32 %v5526, %v5528
    %v5530 = vrot.slane %v5516, %v5529
    %v5531 = vcombine.low %v5507, %v5523
    %v5532 = vcombine.high %v5507, %v5523
    %v5534 = vunpack.c.l.s4 1934713408
    %v5535 = vunpack.c.0.s8 %v5534
    %v5536 = vlaneseq
    %v5537 = vshrl.u32 %v5536, 7
    %v5538 = vsub.s32 %v5535, %v5537
    %v5539 = vrot.slane %v5531, %v5538
    %v5541 = vunpack.c.l.s4 1934713408
    %v5542 = vunpack.c.0.s8 %v5541
    %v5543 = vlaneseq
    %v5544 = vshrl.u32 %v5543, 7
    %v5545 = vsub.s32 %v5542, %v5544
    %v5546 = vrot.slane %v5532, %v5545
    %v5547 = vcombine.low %v5514, %v5530
    %v5548 = vcombine.high %v5514, %v5530
    %v5550 = vunpack.c.l.s4 1934713408
    %v5551 = vunpack.c.0.s8 %v5550
    %v5552 = vlaneseq
    %v5553 = vshrl.u32 %v5552, 7
    %v5554 = vsub.s32 %v5551, %v5553
    %v5555 = vrot.slane %v5547, %v5554
    %v5557 = vunpack.c.l.s4 1934713408
    %v5558 = vunpack.c.0.s8 %v5557
    %v5559 = vlaneseq
    %v5560 = vshrl.u32 %v5559, 7
    %v5561 = vsub.s32 %v5558, %v5560
    %v5562 = vrot.slane %v5548, %v5561
    %v5563 = vcombine.high %v5539, 0.0
    %v5564 = vcombine.high %v5546, 0.0
    %v5565 = vcombine.high %v5555, 0.0
    %v5566 = vcombine.high %v5562, 0.0
    %5568 = vrot.lane.b32.xlu0 %v5495, 16
    %v5569 = vpop.permute.xlu0 %5568
    %5572 = vrot.lane.b32.xlu0 %v5478, 32
    %v5573 = vpop.permute.xlu0 %5572
    %5576 = vrot.lane.b32.xlu0 %v5496, 48
    %v5577 = vpop.permute.xlu0 %5576
    %5580 = vrot.lane.b32.xlu0 %v5487, 64
    %v5581 = vpop.permute.xlu0 %5580
    %5584 = vrot.lane.b32.xlu0 %v5497, 80
    %v5585 = vpop.permute.xlu0 %5584
    %5588 = vrot.lane.b32.xlu0 %v5494, 96
    %v5589 = vpop.permute.xlu0 %5588
    %5592 = vrot.lane.b32.xlu0 %v5498, 112
    %v5593 = vpop.permute.xlu0 %5592
    %5596 = vrot.lane.b32.xlu0 %v5563, 16
    %v5597 = vpop.permute.xlu0 %5596
    %5600 = vrot.lane.b32.xlu0 %v5546, 32
    %v5601 = vpop.permute.xlu0 %5600
    %5604 = vrot.lane.b32.xlu0 %v5564, 48
    %v5605 = vpop.permute.xlu0 %5604
    %5608 = vrot.lane.b32.xlu0 %v5555, 64
    %v5609 = vpop.permute.xlu0 %5608
    %5612 = vrot.lane.b32.xlu0 %v5565, 80
    %v5613 = vpop.permute.xlu0 %5612
    %5616 = vrot.lane.b32.xlu0 %v5562, 96
    %v5617 = vpop.permute.xlu0 %5616
    %5620 = vrot.lane.b32.xlu0 %v5566, 112
    %v5621 = vpop.permute.xlu0 %5620
    %v5623 = vsel %vm364, %v5471, %v5569
    %v5624 = vsel %vm366, %v5623, %v5573
    %v5625 = vsel %vm368, %v5624, %v5577
    %v5626 = vsel %vm370, %v5625, %v5581
    %v5627 = vsel %vm372, %v5626, %v5585
    %v5628 = vsel %vm374, %v5627, %v5589
    %v5629 = vsel %vm376, %v5628, %v5593
    %v5630 = vsel %vm364, %v5539, %v5597
    %v5631 = vsel %vm366, %v5630, %v5601
    %v5632 = vsel %vm368, %v5631, %v5605
    %v5633 = vsel %vm370, %v5632, %v5609
    %v5634 = vsel %vm372, %v5633, %v5613
    %v5635 = vsel %vm374, %v5634, %v5617
    %v5636 = vsel %vm376, %v5635, %v5621
    %v5639 = vrot.slane %v5629, 4
    %v5640 = vrot.slane %v5636, 4
    %5643 = vst [vmem:[#allocation3] sm:$0xf0] %v5639
    %5644 = vst [vmem:[#allocation3 + $0x8] sm:$0xf0] %v5640
    %v5645 = vld [vmem:[#allocation2] sm:$0xff]
    %v5646 = vld [vmem:[#allocation2 + $0x8] sm:$0xff]
    %v5647 = vld [vmem:[#allocation2 + $0x18] sm:$0xff]
    %v5648 = vld [vmem:[#allocation2 + $0x20] sm:$0xff]
    %v5649 = vld [vmem:[#allocation2 + $0x30] sm:$0xff]
    %v5650 = vld [vmem:[#allocation2 + $0x38] sm:$0xff]
    %v5651 = vld [vmem:[#allocation2 + $0x48] sm:$0xff]
    %v5652 = vld [vmem:[#allocation2 + $0x50] sm:$0xff]
    %5661 = vrot.lane.b32.xlu0 %v5645, 126
    %v5662 = vpop.permute.xlu0 %5661
    %5663 = vrot.lane.b32.xlu0 %v5646, 126
    %v5664 = vpop.permute.xlu0 %5663
    %5665 = vrot.lane.b32.xlu0 %v5647, 126
    %v5666 = vpop.permute.xlu0 %5665
    %5667 = vrot.lane.b32.xlu0 %v5648, 126
    %v5668 = vpop.permute.xlu0 %5667
    %5669 = vrot.lane.b32.xlu0 %v5649, 126
    %v5670 = vpop.permute.xlu0 %5669
    %5671 = vrot.lane.b32.xlu0 %v5650, 126
    %v5672 = vpop.permute.xlu0 %5671
    %5673 = vrot.lane.b32.xlu0 %v5651, 126
    %v5674 = vpop.permute.xlu0 %5673
    %5675 = vrot.lane.b32.xlu0 %v5652, 126
    %v5676 = vpop.permute.xlu0 %5675
    %v5685 = vcombine.low %v5662, %v5670
    %v5686 = vcombine.high %v5662, %v5670
    %v5688 = vunpack.c.l.s4 1983009808
    %v5689 = vunpack.c.0.s8 %v5688
    %v5690 = vlaneseq
    %v5691 = vshrl.u32 %v5690, 7
    %v5692 = vsub.s32 %v5689, %v5691
    %v5693 = vrot.slane %v5685, %v5692
    %v5695 = vunpack.c.l.s4 1983009808
    %v5696 = vunpack.c.0.s8 %v5695
    %v5697 = vlaneseq
    %v5698 = vshrl.u32 %v5697, 7
    %v5699 = vsub.s32 %v5696, %v5698
    %v5700 = vrot.slane %v5686, %v5699
    %v5701 = vcombine.low %v5666, %v5674
    %v5702 = vcombine.high %v5666, %v5674
    %v5704 = vunpack.c.l.s4 1983009808
    %v5705 = vunpack.c.0.s8 %v5704
    %v5706 = vlaneseq
    %v5707 = vshrl.u32 %v5706, 7
    %v5708 = vsub.s32 %v5705, %v5707
    %v5709 = vrot.slane %v5701, %v5708
    %v5711 = vunpack.c.l.s4 1983009808
    %v5712 = vunpack.c.0.s8 %v5711
    %v5713 = vlaneseq
    %v5714 = vshrl.u32 %v5713, 7
    %v5715 = vsub.s32 %v5712, %v5714
    %v5716 = vrot.slane %v5702, %v5715
    %v5717 = vcombine.low %v5693, %v5709
    %v5718 = vcombine.high %v5693, %v5709
    %v5720 = vunpack.c.l.s4 1934713408
    %v5721 = vunpack.c.0.s8 %v5720
    %v5722 = vlaneseq
    %v5723 = vshrl.u32 %v5722, 7
    %v5724 = vsub.s32 %v5721, %v5723
    %v5725 = vrot.slane %v5717, %v5724
    %v5727 = vunpack.c.l.s4 1934713408
    %v5728 = vunpack.c.0.s8 %v5727
    %v5729 = vlaneseq
    %v5730 = vshrl.u32 %v5729, 7
    %v5731 = vsub.s32 %v5728, %v5730
    %v5732 = vrot.slane %v5718, %v5731
    %v5733 = vcombine.low %v5700, %v5716
    %v5734 = vcombine.high %v5700, %v5716
    %v5736 = vunpack.c.l.s4 1934713408
    %v5737 = vunpack.c.0.s8 %v5736
    %v5738 = vlaneseq
    %v5739 = vshrl.u32 %v5738, 7
    %v5740 = vsub.s32 %v5737, %v5739
    %v5741 = vrot.slane %v5733, %v5740
    %v5743 = vunpack.c.l.s4 1934713408
    %v5744 = vunpack.c.0.s8 %v5743
    %v5745 = vlaneseq
    %v5746 = vshrl.u32 %v5745, 7
    %v5747 = vsub.s32 %v5744, %v5746
    %v5748 = vrot.slane %v5734, %v5747
    %v5749 = vcombine.high %v5725, 0.0
    %v5750 = vcombine.high %v5732, 0.0
    %v5751 = vcombine.high %v5741, 0.0
    %v5752 = vcombine.high %v5748, 0.0
    %v5753 = vcombine.low %v5664, %v5672
    %v5754 = vcombine.high %v5664, %v5672
    %v5756 = vunpack.c.l.s4 1983009808
    %v5757 = vunpack.c.0.s8 %v5756
    %v5758 = vlaneseq
    %v5759 = vshrl.u32 %v5758, 7
    %v5760 = vsub.s32 %v5757, %v5759
    %v5761 = vrot.slane %v5753, %v5760
    %v5763 = vunpack.c.l.s4 1983009808
    %v5764 = vunpack.c.0.s8 %v5763
    %v5765 = vlaneseq
    %v5766 = vshrl.u32 %v5765, 7
    %v5767 = vsub.s32 %v5764, %v5766
    %v5768 = vrot.slane %v5754, %v5767
    %v5769 = vcombine.low %v5668, %v5676
    %v5770 = vcombine.high %v5668, %v5676
    %v5772 = vunpack.c.l.s4 1983009808
    %v5773 = vunpack.c.0.s8 %v5772
    %v5774 = vlaneseq
    %v5775 = vshrl.u32 %v5774, 7
    %v5776 = vsub.s32 %v5773, %v5775
    %v5777 = vrot.slane %v5769, %v5776
    %v5779 = vunpack.c.l.s4 1983009808
    %v5780 = vunpack.c.0.s8 %v5779
    %v5781 = vlaneseq
    %v5782 = vshrl.u32 %v5781, 7
    %v5783 = vsub.s32 %v5780, %v5782
    %v5784 = vrot.slane %v5770, %v5783
    %v5785 = vcombine.low %v5761, %v5777
    %v5786 = vcombine.high %v5761, %v5777
    %v5788 = vunpack.c.l.s4 1934713408
    %v5789 = vunpack.c.0.s8 %v5788
    %v5790 = vlaneseq
    %v5791 = vshrl.u32 %v5790, 7
    %v5792 = vsub.s32 %v5789, %v5791
    %v5793 = vrot.slane %v5785, %v5792
    %v5795 = vunpack.c.l.s4 1934713408
    %v5796 = vunpack.c.0.s8 %v5795
    %v5797 = vlaneseq
    %v5798 = vshrl.u32 %v5797, 7
    %v5799 = vsub.s32 %v5796, %v5798
    %v5800 = vrot.slane %v5786, %v5799
    %v5801 = vcombine.low %v5768, %v5784
    %v5802 = vcombine.high %v5768, %v5784
    %v5804 = vunpack.c.l.s4 1934713408
    %v5805 = vunpack.c.0.s8 %v5804
    %v5806 = vlaneseq
    %v5807 = vshrl.u32 %v5806, 7
    %v5808 = vsub.s32 %v5805, %v5807
    %v5809 = vrot.slane %v5801, %v5808
    %v5811 = vunpack.c.l.s4 1934713408
    %v5812 = vunpack.c.0.s8 %v5811
    %v5813 = vlaneseq
    %v5814 = vshrl.u32 %v5813, 7
    %v5815 = vsub.s32 %v5812, %v5814
    %v5816 = vrot.slane %v5802, %v5815
    %v5817 = vcombine.high %v5793, 0.0
    %v5818 = vcombine.high %v5800, 0.0
    %v5819 = vcombine.high %v5809, 0.0
    %v5820 = vcombine.high %v5816, 0.0
    %5822 = vrot.lane.b32.xlu0 %v5749, 16
    %v5823 = vpop.permute.xlu0 %5822
    %5826 = vrot.lane.b32.xlu0 %v5732, 32
    %v5827 = vpop.permute.xlu0 %5826
    %5830 = vrot.lane.b32.xlu0 %v5750, 48
    %v5831 = vpop.permute.xlu0 %5830
    %5834 = vrot.lane.b32.xlu0 %v5741, 64
    %v5835 = vpop.permute.xlu0 %5834
    %5838 = vrot.lane.b32.xlu0 %v5751, 80
    %v5839 = vpop.permute.xlu0 %5838
    %5842 = vrot.lane.b32.xlu0 %v5748, 96
    %v5843 = vpop.permute.xlu0 %5842
    %5846 = vrot.lane.b32.xlu0 %v5752, 112
    %v5847 = vpop.permute.xlu0 %5846
    %5850 = vrot.lane.b32.xlu0 %v5817, 16
    %v5851 = vpop.permute.xlu0 %5850
    %5854 = vrot.lane.b32.xlu0 %v5800, 32
    %v5855 = vpop.permute.xlu0 %5854
    %5858 = vrot.lane.b32.xlu0 %v5818, 48
    %v5859 = vpop.permute.xlu0 %5858
    %5862 = vrot.lane.b32.xlu0 %v5809, 64
    %v5863 = vpop.permute.xlu0 %5862
    %5866 = vrot.lane.b32.xlu0 %v5819, 80
    %v5867 = vpop.permute.xlu0 %5866
    %5870 = vrot.lane.b32.xlu0 %v5816, 96
    %v5871 = vpop.permute.xlu0 %5870
    %5874 = vrot.lane.b32.xlu0 %v5820, 112
    %v5875 = vpop.permute.xlu0 %5874
    %v5877 = vsel %vm364, %v5725, %v5823
    %v5878 = vsel %vm366, %v5877, %v5827
    %v5879 = vsel %vm368, %v5878, %v5831
    %v5880 = vsel %vm370, %v5879, %v5835
    %v5881 = vsel %vm372, %v5880, %v5839
    %v5882 = vsel %vm374, %v5881, %v5843
    %v5883 = vsel %vm376, %v5882, %v5847
    %v5884 = vsel %vm364, %v5793, %v5851
    %v5885 = vsel %vm366, %v5884, %v5855
    %v5886 = vsel %vm368, %v5885, %v5859
    %v5887 = vsel %vm370, %v5886, %v5863
    %v5888 = vsel %vm372, %v5887, %v5867
    %v5889 = vsel %vm374, %v5888, %v5871
    %v5890 = vsel %vm376, %v5889, %v5875
    %5891 = vst [vmem:[#allocation3 + $0x20] sm:$0xf] %v5883
    %5892 = vst [vmem:[#allocation3 + $0x28] sm:$0xf] %v5890
    %v5893 = vld [vmem:[#allocation2 + $0x1] sm:$0xff]
    %v5894 = vld [vmem:[#allocation2 + $0x9] sm:$0xff]
    %v5895 = vld [vmem:[#allocation2 + $0x19] sm:$0xff]
    %v5896 = vld [vmem:[#allocation2 + $0x21] sm:$0xff]
    %v5897 = vld [vmem:[#allocation2 + $0x31] sm:$0xff]
    %v5898 = vld [vmem:[#allocation2 + $0x39] sm:$0xff]
    %v5899 = vld [vmem:[#allocation2 + $0x49] sm:$0xff]
    %v5900 = vld [vmem:[#allocation2 + $0x51] sm:$0xff]
    %v5901 = vcombine.low %v5893, %v5897
    %v5902 = vcombine.high %v5893, %v5897
    %v5904 = vunpack.c.l.s4 1983009808
    %v5905 = vunpack.c.0.s8 %v5904
    %v5906 = vlaneseq
    %v5907 = vshrl.u32 %v5906, 7
    %v5908 = vsub.s32 %v5905, %v5907
    %v5909 = vrot.slane %v5901, %v5908
    %v5911 = vunpack.c.l.s4 1983009808
    %v5912 = vunpack.c.0.s8 %v5911
    %v5913 = vlaneseq
    %v5914 = vshrl.u32 %v5913, 7
    %v5915 = vsub.s32 %v5912, %v5914
    %v5916 = vrot.slane %v5902, %v5915
    %v5917 = vcombine.low %v5895, %v5899
    %v5918 = vcombine.high %v5895, %v5899
    %v5920 = vunpack.c.l.s4 1983009808
    %v5921 = vunpack.c.0.s8 %v5920
    %v5922 = vlaneseq
    %v5923 = vshrl.u32 %v5922, 7
    %v5924 = vsub.s32 %v5921, %v5923
    %v5925 = vrot.slane %v5917, %v5924
    %v5927 = vunpack.c.l.s4 1983009808
    %v5928 = vunpack.c.0.s8 %v5927
    %v5929 = vlaneseq
    %v5930 = vshrl.u32 %v5929, 7
    %v5931 = vsub.s32 %v5928, %v5930
    %v5932 = vrot.slane %v5918, %v5931
    %v5933 = vcombine.low %v5909, %v5925
    %v5934 = vcombine.high %v5909, %v5925
    %v5936 = vunpack.c.l.s4 1934713408
    %v5937 = vunpack.c.0.s8 %v5936
    %v5938 = vlaneseq
    %v5939 = vshrl.u32 %v5938, 7
    %v5940 = vsub.s32 %v5937, %v5939
    %v5941 = vrot.slane %v5933, %v5940
    %v5943 = vunpack.c.l.s4 1934713408
    %v5944 = vunpack.c.0.s8 %v5943
    %v5945 = vlaneseq
    %v5946 = vshrl.u32 %v5945, 7
    %v5947 = vsub.s32 %v5944, %v5946
    %v5948 = vrot.slane %v5934, %v5947
    %v5949 = vcombine.low %v5916, %v5932
    %v5950 = vcombine.high %v5916, %v5932
    %v5952 = vunpack.c.l.s4 1934713408
    %v5953 = vunpack.c.0.s8 %v5952
    %v5954 = vlaneseq
    %v5955 = vshrl.u32 %v5954, 7
    %v5956 = vsub.s32 %v5953, %v5955
    %v5957 = vrot.slane %v5949, %v5956
    %v5959 = vunpack.c.l.s4 1934713408
    %v5960 = vunpack.c.0.s8 %v5959
    %v5961 = vlaneseq
    %v5962 = vshrl.u32 %v5961, 7
    %v5963 = vsub.s32 %v5960, %v5962
    %v5964 = vrot.slane %v5950, %v5963
    %v5965 = vcombine.high %v5941, 0.0
    %v5966 = vcombine.high %v5948, 0.0
    %v5967 = vcombine.high %v5957, 0.0
    %v5968 = vcombine.high %v5964, 0.0
    %v5969 = vcombine.low %v5894, %v5898
    %v5970 = vcombine.high %v5894, %v5898
    %v5972 = vunpack.c.l.s4 1983009808
    %v5973 = vunpack.c.0.s8 %v5972
    %v5974 = vlaneseq
    %v5975 = vshrl.u32 %v5974, 7
    %v5976 = vsub.s32 %v5973, %v5975
    %v5977 = vrot.slane %v5969, %v5976
    %v5979 = vunpack.c.l.s4 1983009808
    %v5980 = vunpack.c.0.s8 %v5979
    %v5981 = vlaneseq
    %v5982 = vshrl.u32 %v5981, 7
    %v5983 = vsub.s32 %v5980, %v5982
    %v5984 = vrot.slane %v5970, %v5983
    %v5985 = vcombine.low %v5896, %v5900
    %v5986 = vcombine.high %v5896, %v5900
    %v5988 = vunpack.c.l.s4 1983009808
    %v5989 = vunpack.c.0.s8 %v5988
    %v5990 = vlaneseq
    %v5991 = vshrl.u32 %v5990, 7
    %v5992 = vsub.s32 %v5989, %v5991
    %v5993 = vrot.slane %v5985, %v5992
    %v5995 = vunpack.c.l.s4 1983009808
    %v5996 = vunpack.c.0.s8 %v5995
    %v5997 = vlaneseq
    %v5998 = vshrl.u32 %v5997, 7
    %v5999 = vsub.s32 %v5996, %v5998
    %v6000 = vrot.slane %v5986, %v5999
    %v6001 = vcombine.low %v5977, %v5993
    %v6002 = vcombine.high %v5977, %v5993
    %v6004 = vunpack.c.l.s4 1934713408
    %v6005 = vunpack.c.0.s8 %v6004
    %v6006 = vlaneseq
    %v6007 = vshrl.u32 %v6006, 7
    %v6008 = vsub.s32 %v6005, %v6007
    %v6009 = vrot.slane %v6001, %v6008
    %v6011 = vunpack.c.l.s4 1934713408
    %v6012 = vunpack.c.0.s8 %v6011
    %v6013 = vlaneseq
    %v6014 = vshrl.u32 %v6013, 7
    %v6015 = vsub.s32 %v6012, %v6014
    %v6016 = vrot.slane %v6002, %v6015
    %v6017 = vcombine.low %v5984, %v6000
    %v6018 = vcombine.high %v5984, %v6000
    %v6020 = vunpack.c.l.s4 1934713408
    %v6021 = vunpack.c.0.s8 %v6020
    %v6022 = vlaneseq
    %v6023 = vshrl.u32 %v6022, 7
    %v6024 = vsub.s32 %v6021, %v6023
    %v6025 = vrot.slane %v6017, %v6024
    %v6027 = vunpack.c.l.s4 1934713408
    %v6028 = vunpack.c.0.s8 %v6027
    %v6029 = vlaneseq
    %v6030 = vshrl.u32 %v6029, 7
    %v6031 = vsub.s32 %v6028, %v6030
    %v6032 = vrot.slane %v6018, %v6031
    %v6033 = vcombine.high %v6009, 0.0
    %v6034 = vcombine.high %v6016, 0.0
    %v6035 = vcombine.high %v6025, 0.0
    %v6036 = vcombine.high %v6032, 0.0
    %6038 = vrot.lane.b32.xlu0 %v5965, 16
    %v6039 = vpop.permute.xlu0 %6038
    %6042 = vrot.lane.b32.xlu0 %v5948, 32
    %v6043 = vpop.permute.xlu0 %6042
    %6046 = vrot.lane.b32.xlu0 %v5966, 48
    %v6047 = vpop.permute.xlu0 %6046
    %6050 = vrot.lane.b32.xlu0 %v5957, 64
    %v6051 = vpop.permute.xlu0 %6050
    %6054 = vrot.lane.b32.xlu0 %v5967, 80
    %v6055 = vpop.permute.xlu0 %6054
    %6058 = vrot.lane.b32.xlu0 %v5964, 96
    %v6059 = vpop.permute.xlu0 %6058
    %6062 = vrot.lane.b32.xlu0 %v5968, 112
    %v6063 = vpop.permute.xlu0 %6062
    %6066 = vrot.lane.b32.xlu0 %v6033, 16
    %v6067 = vpop.permute.xlu0 %6066
    %6070 = vrot.lane.b32.xlu0 %v6016, 32
    %v6071 = vpop.permute.xlu0 %6070
    %6074 = vrot.lane.b32.xlu0 %v6034, 48
    %v6075 = vpop.permute.xlu0 %6074
    %6078 = vrot.lane.b32.xlu0 %v6025, 64
    %v6079 = vpop.permute.xlu0 %6078
    %6082 = vrot.lane.b32.xlu0 %v6035, 80
    %v6083 = vpop.permute.xlu0 %6082
    %6086 = vrot.lane.b32.xlu0 %v6032, 96
    %v6087 = vpop.permute.xlu0 %6086
    %6090 = vrot.lane.b32.xlu0 %v6036, 112
    %v6091 = vpop.permute.xlu0 %6090
    %v6093 = vsel %vm364, %v5941, %v6039
    %v6094 = vsel %vm366, %v6093, %v6043
    %v6095 = vsel %vm368, %v6094, %v6047
    %v6096 = vsel %vm370, %v6095, %v6051
    %v6097 = vsel %vm372, %v6096, %v6055
    %v6098 = vsel %vm374, %v6097, %v6059
    %v6099 = vsel %vm376, %v6098, %v6063
    %v6100 = vsel %vm364, %v6009, %v6067
    %v6101 = vsel %vm366, %v6100, %v6071
    %v6102 = vsel %vm368, %v6101, %v6075
    %v6103 = vsel %vm370, %v6102, %v6079
    %v6104 = vsel %vm372, %v6103, %v6083
    %v6105 = vsel %vm374, %v6104, %v6087
    %v6106 = vsel %vm376, %v6105, %v6091
    %v6109 = vrot.slane %v6099, 4
    %v6110 = vrot.slane %v6106, 4
    %6113 = vst [vmem:[#allocation3 + $0x20] sm:$0xf0] %v6109
    %6114 = vst [vmem:[#allocation3 + $0x28] sm:$0xf0] %v6110
    %v6115 = vld [vmem:[#allocation2 + $0x1] sm:$0xff]
    %v6116 = vld [vmem:[#allocation2 + $0x9] sm:$0xff]
    %v6117 = vld [vmem:[#allocation2 + $0x19] sm:$0xff]
    %v6118 = vld [vmem:[#allocation2 + $0x21] sm:$0xff]
    %v6119 = vld [vmem:[#allocation2 + $0x31] sm:$0xff]
    %v6120 = vld [vmem:[#allocation2 + $0x39] sm:$0xff]
    %v6121 = vld [vmem:[#allocation2 + $0x49] sm:$0xff]
    %v6122 = vld [vmem:[#allocation2 + $0x51] sm:$0xff]
    %6131 = vrot.lane.b32.xlu0 %v6115, 127
    %v6132 = vpop.permute.xlu0 %6131
    %6133 = vrot.lane.b32.xlu0 %v6116, 127
    %v6134 = vpop.permute.xlu0 %6133
    %6135 = vrot.lane.b32.xlu0 %v6117, 127
    %v6136 = vpop.permute.xlu0 %6135
    %6137 = vrot.lane.b32.xlu0 %v6118, 127
    %v6138 = vpop.permute.xlu0 %6137
    %6139 = vrot.lane.b32.xlu0 %v6119, 127
    %v6140 = vpop.permute.xlu0 %6139
    %6141 = vrot.lane.b32.xlu0 %v6120, 127
    %v6142 = vpop.permute.xlu0 %6141
    %6143 = vrot.lane.b32.xlu0 %v6121, 127
    %v6144 = vpop.permute.xlu0 %6143
    %6145 = vrot.lane.b32.xlu0 %v6122, 127
    %v6146 = vpop.permute.xlu0 %6145
    %v6155 = vcombine.low %v6132, %v6140
    %v6156 = vcombine.high %v6132, %v6140
    %v6158 = vunpack.c.l.s4 1983009808
    %v6159 = vunpack.c.0.s8 %v6158
    %v6160 = vlaneseq
    %v6161 = vshrl.u32 %v6160, 7
    %v6162 = vsub.s32 %v6159, %v6161
    %v6163 = vrot.slane %v6155, %v6162
    %v6165 = vunpack.c.l.s4 1983009808
    %v6166 = vunpack.c.0.s8 %v6165
    %v6167 = vlaneseq
    %v6168 = vshrl.u32 %v6167, 7
    %v6169 = vsub.s32 %v6166, %v6168
    %v6170 = vrot.slane %v6156, %v6169
    %v6171 = vcombine.low %v6136, %v6144
    %v6172 = vcombine.high %v6136, %v6144
    %v6174 = vunpack.c.l.s4 1983009808
    %v6175 = vunpack.c.0.s8 %v6174
    %v6176 = vlaneseq
    %v6177 = vshrl.u32 %v6176, 7
    %v6178 = vsub.s32 %v6175, %v6177
    %v6179 = vrot.slane %v6171, %v6178
    %v6181 = vunpack.c.l.s4 1983009808
    %v6182 = vunpack.c.0.s8 %v6181
    %v6183 = vlaneseq
    %v6184 = vshrl.u32 %v6183, 7
    %v6185 = vsub.s32 %v6182, %v6184
    %v6186 = vrot.slane %v6172, %v6185
    %v6187 = vcombine.low %v6163, %v6179
    %v6188 = vcombine.high %v6163, %v6179
    %v6190 = vunpack.c.l.s4 1934713408
    %v6191 = vunpack.c.0.s8 %v6190
    %v6192 = vlaneseq
    %v6193 = vshrl.u32 %v6192, 7
    %v6194 = vsub.s32 %v6191, %v6193
    %v6195 = vrot.slane %v6187, %v6194
    %v6197 = vunpack.c.l.s4 1934713408
    %v6198 = vunpack.c.0.s8 %v6197
    %v6199 = vlaneseq
    %v6200 = vshrl.u32 %v6199, 7
    %v6201 = vsub.s32 %v6198, %v6200
    %v6202 = vrot.slane %v6188, %v6201
    %v6203 = vcombine.low %v6170, %v6186
    %v6204 = vcombine.high %v6170, %v6186
    %v6206 = vunpack.c.l.s4 1934713408
    %v6207 = vunpack.c.0.s8 %v6206
    %v6208 = vlaneseq
    %v6209 = vshrl.u32 %v6208, 7
    %v6210 = vsub.s32 %v6207, %v6209
    %v6211 = vrot.slane %v6203, %v6210
    %v6213 = vunpack.c.l.s4 1934713408
    %v6214 = vunpack.c.0.s8 %v6213
    %v6215 = vlaneseq
    %v6216 = vshrl.u32 %v6215, 7
    %v6217 = vsub.s32 %v6214, %v6216
    %v6218 = vrot.slane %v6204, %v6217
    %v6219 = vcombine.high %v6195, 0.0
    %v6220 = vcombine.high %v6202, 0.0
    %v6221 = vcombine.high %v6211, 0.0
    %v6222 = vcombine.high %v6218, 0.0
    %v6223 = vcombine.low %v6134, %v6142
    %v6224 = vcombine.high %v6134, %v6142
    %v6226 = vunpack.c.l.s4 1983009808
    %v6227 = vunpack.c.0.s8 %v6226
    %v6228 = vlaneseq
    %v6229 = vshrl.u32 %v6228, 7
    %v6230 = vsub.s32 %v6227, %v6229
    %v6231 = vrot.slane %v6223, %v6230
    %v6233 = vunpack.c.l.s4 1983009808
    %v6234 = vunpack.c.0.s8 %v6233
    %v6235 = vlaneseq
    %v6236 = vshrl.u32 %v6235, 7
    %v6237 = vsub.s32 %v6234, %v6236
    %v6238 = vrot.slane %v6224, %v6237
    %v6239 = vcombine.low %v6138, %v6146
    %v6240 = vcombine.high %v6138, %v6146
    %v6242 = vunpack.c.l.s4 1983009808
    %v6243 = vunpack.c.0.s8 %v6242
    %v6244 = vlaneseq
    %v6245 = vshrl.u32 %v6244, 7
    %v6246 = vsub.s32 %v6243, %v6245
    %v6247 = vrot.slane %v6239, %v6246
    %v6249 = vunpack.c.l.s4 1983009808
    %v6250 = vunpack.c.0.s8 %v6249
    %v6251 = vlaneseq
    %v6252 = vshrl.u32 %v6251, 7
    %v6253 = vsub.s32 %v6250, %v6252
    %v6254 = vrot.slane %v6240, %v6253
    %v6255 = vcombine.low %v6231, %v6247
    %v6256 = vcombine.high %v6231, %v6247
    %v6258 = vunpack.c.l.s4 1934713408
    %v6259 = vunpack.c.0.s8 %v6258
    %v6260 = vlaneseq
    %v6261 = vshrl.u32 %v6260, 7
    %v6262 = vsub.s32 %v6259, %v6261
    %v6263 = vrot.slane %v6255, %v6262
    %v6265 = vunpack.c.l.s4 1934713408
    %v6266 = vunpack.c.0.s8 %v6265
    %v6267 = vlaneseq
    %v6268 = vshrl.u32 %v6267, 7
    %v6269 = vsub.s32 %v6266, %v6268
    %v6270 = vrot.slane %v6256, %v6269
    %v6271 = vcombine.low %v6238, %v6254
    %v6272 = vcombine.high %v6238, %v6254
    %v6274 = vunpack.c.l.s4 1934713408
    %v6275 = vunpack.c.0.s8 %v6274
    %v6276 = vlaneseq
    %v6277 = vshrl.u32 %v6276, 7
    %v6278 = vsub.s32 %v6275, %v6277
    %v6279 = vrot.slane %v6271, %v6278
    %v6281 = vunpack.c.l.s4 1934713408
    %v6282 = vunpack.c.0.s8 %v6281
    %v6283 = vlaneseq
    %v6284 = vshrl.u32 %v6283, 7
    %v6285 = vsub.s32 %v6282, %v6284
    %v6286 = vrot.slane %v6272, %v6285
    %v6287 = vcombine.high %v6263, 0.0
    %v6288 = vcombine.high %v6270, 0.0
    %v6289 = vcombine.high %v6279, 0.0
    %v6290 = vcombine.high %v6286, 0.0
    %6292 = vrot.lane.b32.xlu0 %v6219, 16
    %v6293 = vpop.permute.xlu0 %6292
    %6296 = vrot.lane.b32.xlu0 %v6202, 32
    %v6297 = vpop.permute.xlu0 %6296
    %6300 = vrot.lane.b32.xlu0 %v6220, 48
    %v6301 = vpop.permute.xlu0 %6300
    %6304 = vrot.lane.b32.xlu0 %v6211, 64
    %v6305 = vpop.permute.xlu0 %6304
    %6308 = vrot.lane.b32.xlu0 %v6221, 80
    %v6309 = vpop.permute.xlu0 %6308
    %6312 = vrot.lane.b32.xlu0 %v6218, 96
    %v6313 = vpop.permute.xlu0 %6312
    %6316 = vrot.lane.b32.xlu0 %v6222, 112
    %v6317 = vpop.permute.xlu0 %6316
    %6320 = vrot.lane.b32.xlu0 %v6287, 16
    %v6321 = vpop.permute.xlu0 %6320
    %6324 = vrot.lane.b32.xlu0 %v6270, 32
    %v6325 = vpop.permute.xlu0 %6324
    %6328 = vrot.lane.b32.xlu0 %v6288, 48
    %v6329 = vpop.permute.xlu0 %6328
    %6332 = vrot.lane.b32.xlu0 %v6279, 64
    %v6333 = vpop.permute.xlu0 %6332
    %6336 = vrot.lane.b32.xlu0 %v6289, 80
    %v6337 = vpop.permute.xlu0 %6336
    %6340 = vrot.lane.b32.xlu0 %v6286, 96
    %v6341 = vpop.permute.xlu0 %6340
    %6344 = vrot.lane.b32.xlu0 %v6290, 112
    %v6345 = vpop.permute.xlu0 %6344
    %v6347 = vsel %vm364, %v6195, %v6293
    %v6348 = vsel %vm366, %v6347, %v6297
    %v6349 = vsel %vm368, %v6348, %v6301
    %v6350 = vsel %vm370, %v6349, %v6305
    %v6351 = vsel %vm372, %v6350, %v6309
    %v6352 = vsel %vm374, %v6351, %v6313
    %v6353 = vsel %vm376, %v6352, %v6317
    %v6354 = vsel %vm364, %v6263, %v6321
    %v6355 = vsel %vm366, %v6354, %v6325
    %v6356 = vsel %vm368, %v6355, %v6329
    %v6357 = vsel %vm370, %v6356, %v6333
    %v6358 = vsel %vm372, %v6357, %v6337
    %v6359 = vsel %vm374, %v6358, %v6341
    %v6360 = vsel %vm376, %v6359, %v6345
    %6361 = vst [vmem:[#allocation3 + $0x40] sm:$0xf] %v6353
    %6362 = vst [vmem:[#allocation3 + $0x48] sm:$0xf] %v6360
    %v6363 = vld [vmem:[#allocation2 + $0x1] sm:$0xff]
    %v6364 = vld [vmem:[#allocation2 + $0x9] sm:$0xff]
    %v6365 = vld [vmem:[#allocation2 + $0x19] sm:$0xff]
    %v6366 = vld [vmem:[#allocation2 + $0x21] sm:$0xff]
    %v6367 = vld [vmem:[#allocation2 + $0x31] sm:$0xff]
    %v6368 = vld [vmem:[#allocation2 + $0x39] sm:$0xff]
    %v6369 = vld [vmem:[#allocation2 + $0x49] sm:$0xff]
    %v6370 = vld [vmem:[#allocation2 + $0x51] sm:$0xff]
    %6379 = vrot.lane.b32.xlu0 %v6363, 126
    %v6380 = vpop.permute.xlu0 %6379
    %6381 = vrot.lane.b32.xlu0 %v6364, 126
    %v6382 = vpop.permute.xlu0 %6381
    %6383 = vrot.lane.b32.xlu0 %v6365, 126
    %v6384 = vpop.permute.xlu0 %6383
    %6385 = vrot.lane.b32.xlu0 %v6366, 126
    %v6386 = vpop.permute.xlu0 %6385
    %6387 = vrot.lane.b32.xlu0 %v6367, 126
    %v6388 = vpop.permute.xlu0 %6387
    %6389 = vrot.lane.b32.xlu0 %v6368, 126
    %v6390 = vpop.permute.xlu0 %6389
    %6391 = vrot.lane.b32.xlu0 %v6369, 126
    %v6392 = vpop.permute.xlu0 %6391
    %6393 = vrot.lane.b32.xlu0 %v6370, 126
    %v6394 = vpop.permute.xlu0 %6393
    %v6403 = vcombine.low %v6380, %v6388
    %v6404 = vcombine.high %v6380, %v6388
    %v6406 = vunpack.c.l.s4 1983009808
    %v6407 = vunpack.c.0.s8 %v6406
    %v6408 = vlaneseq
    %v6409 = vshrl.u32 %v6408, 7
    %v6410 = vsub.s32 %v6407, %v6409
    %v6411 = vrot.slane %v6403, %v6410
    %v6413 = vunpack.c.l.s4 1983009808
    %v6414 = vunpack.c.0.s8 %v6413
    %v6415 = vlaneseq
    %v6416 = vshrl.u32 %v6415, 7
    %v6417 = vsub.s32 %v6414, %v6416
    %v6418 = vrot.slane %v6404, %v6417
    %v6419 = vcombine.low %v6384, %v6392
    %v6420 = vcombine.high %v6384, %v6392
    %v6422 = vunpack.c.l.s4 1983009808
    %v6423 = vunpack.c.0.s8 %v6422
    %v6424 = vlaneseq
    %v6425 = vshrl.u32 %v6424, 7
    %v6426 = vsub.s32 %v6423, %v6425
    %v6427 = vrot.slane %v6419, %v6426
    %v6429 = vunpack.c.l.s4 1983009808
    %v6430 = vunpack.c.0.s8 %v6429
    %v6431 = vlaneseq
    %v6432 = vshrl.u32 %v6431, 7
    %v6433 = vsub.s32 %v6430, %v6432
    %v6434 = vrot.slane %v6420, %v6433
    %v6435 = vcombine.low %v6411, %v6427
    %v6436 = vcombine.high %v6411, %v6427
    %v6438 = vunpack.c.l.s4 1934713408
    %v6439 = vunpack.c.0.s8 %v6438
    %v6440 = vlaneseq
    %v6441 = vshrl.u32 %v6440, 7
    %v6442 = vsub.s32 %v6439, %v6441
    %v6443 = vrot.slane %v6435, %v6442
    %v6445 = vunpack.c.l.s4 1934713408
    %v6446 = vunpack.c.0.s8 %v6445
    %v6447 = vlaneseq
    %v6448 = vshrl.u32 %v6447, 7
    %v6449 = vsub.s32 %v6446, %v6448
    %v6450 = vrot.slane %v6436, %v6449
    %v6451 = vcombine.low %v6418, %v6434
    %v6452 = vcombine.high %v6418, %v6434
    %v6454 = vunpack.c.l.s4 1934713408
    %v6455 = vunpack.c.0.s8 %v6454
    %v6456 = vlaneseq
    %v6457 = vshrl.u32 %v6456, 7
    %v6458 = vsub.s32 %v6455, %v6457
    %v6459 = vrot.slane %v6451, %v6458
    %v6461 = vunpack.c.l.s4 1934713408
    %v6462 = vunpack.c.0.s8 %v6461
    %v6463 = vlaneseq
    %v6464 = vshrl.u32 %v6463, 7
    %v6465 = vsub.s32 %v6462, %v6464
    %v6466 = vrot.slane %v6452, %v6465
    %v6467 = vcombine.high %v6443, 0.0
    %v6468 = vcombine.high %v6450, 0.0
    %v6469 = vcombine.high %v6459, 0.0
    %v6470 = vcombine.high %v6466, 0.0
    %v6471 = vcombine.low %v6382, %v6390
    %v6472 = vcombine.high %v6382, %v6390
    %v6474 = vunpack.c.l.s4 1983009808
    %v6475 = vunpack.c.0.s8 %v6474
    %v6476 = vlaneseq
    %v6477 = vshrl.u32 %v6476, 7
    %v6478 = vsub.s32 %v6475, %v6477
    %v6479 = vrot.slane %v6471, %v6478
    %v6481 = vunpack.c.l.s4 1983009808
    %v6482 = vunpack.c.0.s8 %v6481
    %v6483 = vlaneseq
    %v6484 = vshrl.u32 %v6483, 7
    %v6485 = vsub.s32 %v6482, %v6484
    %v6486 = vrot.slane %v6472, %v6485
    %v6487 = vcombine.low %v6386, %v6394
    %v6488 = vcombine.high %v6386, %v6394
    %v6490 = vunpack.c.l.s4 1983009808
    %v6491 = vunpack.c.0.s8 %v6490
    %v6492 = vlaneseq
    %v6493 = vshrl.u32 %v6492, 7
    %v6494 = vsub.s32 %v6491, %v6493
    %v6495 = vrot.slane %v6487, %v6494
    %v6497 = vunpack.c.l.s4 1983009808
    %v6498 = vunpack.c.0.s8 %v6497
    %v6499 = vlaneseq
    %v6500 = vshrl.u32 %v6499, 7
    %v6501 = vsub.s32 %v6498, %v6500
    %v6502 = vrot.slane %v6488, %v6501
    %v6503 = vcombine.low %v6479, %v6495
    %v6504 = vcombine.high %v6479, %v6495
    %v6506 = vunpack.c.l.s4 1934713408
    %v6507 = vunpack.c.0.s8 %v6506
    %v6508 = vlaneseq
    %v6509 = vshrl.u32 %v6508, 7
    %v6510 = vsub.s32 %v6507, %v6509
    %v6511 = vrot.slane %v6503, %v6510
    %v6513 = vunpack.c.l.s4 1934713408
    %v6514 = vunpack.c.0.s8 %v6513
    %v6515 = vlaneseq
    %v6516 = vshrl.u32 %v6515, 7
    %v6517 = vsub.s32 %v6514, %v6516
    %v6518 = vrot.slane %v6504, %v6517
    %v6519 = vcombine.low %v6486, %v6502
    %v6520 = vcombine.high %v6486, %v6502
    %v6522 = vunpack.c.l.s4 1934713408
    %v6523 = vunpack.c.0.s8 %v6522
    %v6524 = vlaneseq
    %v6525 = vshrl.u32 %v6524, 7
    %v6526 = vsub.s32 %v6523, %v6525
    %v6527 = vrot.slane %v6519, %v6526
    %v6529 = vunpack.c.l.s4 1934713408
    %v6530 = vunpack.c.0.s8 %v6529
    %v6531 = vlaneseq
    %v6532 = vshrl.u32 %v6531, 7
    %v6533 = vsub.s32 %v6530, %v6532
    %v6534 = vrot.slane %v6520, %v6533
    %v6535 = vcombine.high %v6511, 0.0
    %v6536 = vcombine.high %v6518, 0.0
    %v6537 = vcombine.high %v6527, 0.0
    %v6538 = vcombine.high %v6534, 0.0
    %6540 = vrot.lane.b32.xlu0 %v6467, 16
    %v6541 = vpop.permute.xlu0 %6540
    %6544 = vrot.lane.b32.xlu0 %v6450, 32
    %v6545 = vpop.permute.xlu0 %6544
    %6548 = vrot.lane.b32.xlu0 %v6468, 48
    %v6549 = vpop.permute.xlu0 %6548
    %6552 = vrot.lane.b32.xlu0 %v6459, 64
    %v6553 = vpop.permute.xlu0 %6552
    %6556 = vrot.lane.b32.xlu0 %v6469, 80
    %v6557 = vpop.permute.xlu0 %6556
    %6560 = vrot.lane.b32.xlu0 %v6466, 96
    %v6561 = vpop.permute.xlu0 %6560
    %6564 = vrot.lane.b32.xlu0 %v6470, 112
    %v6565 = vpop.permute.xlu0 %6564
    %6568 = vrot.lane.b32.xlu0 %v6535, 16
    %v6569 = vpop.permute.xlu0 %6568
    %6572 = vrot.lane.b32.xlu0 %v6518, 32
    %v6573 = vpop.permute.xlu0 %6572
    %6576 = vrot.lane.b32.xlu0 %v6536, 48
    %v6577 = vpop.permute.xlu0 %6576
    %6580 = vrot.lane.b32.xlu0 %v6527, 64
    %v6581 = vpop.permute.xlu0 %6580
    %6584 = vrot.lane.b32.xlu0 %v6537, 80
    %v6585 = vpop.permute.xlu0 %6584
    %6588 = vrot.lane.b32.xlu0 %v6534, 96
    %v6589 = vpop.permute.xlu0 %6588
    %6592 = vrot.lane.b32.xlu0 %v6538, 112
    %v6593 = vpop.permute.xlu0 %6592
    %v6595 = vsel %vm364, %v6443, %v6541
    %v6596 = vsel %vm366, %v6595, %v6545
    %v6597 = vsel %vm368, %v6596, %v6549
    %v6598 = vsel %vm370, %v6597, %v6553
    %v6599 = vsel %vm372, %v6598, %v6557
    %v6600 = vsel %vm374, %v6599, %v6561
    %v6601 = vsel %vm376, %v6600, %v6565
    %v6602 = vsel %vm364, %v6511, %v6569
    %v6603 = vsel %vm366, %v6602, %v6573
    %v6604 = vsel %vm368, %v6603, %v6577
    %v6605 = vsel %vm370, %v6604, %v6581
    %v6606 = vsel %vm372, %v6605, %v6585
    %v6607 = vsel %vm374, %v6606, %v6589
    %v6608 = vsel %vm376, %v6607, %v6593
    %v6611 = vrot.slane %v6601, 4
    %v6612 = vrot.slane %v6608, 4
    %6615 = vst [vmem:[#allocation3 + $0x40] sm:$0xf0] %v6611
    %6616 = vst [vmem:[#allocation3 + $0x48] sm:$0xf0] %v6612
    %v6617 = vld [vmem:[#allocation2 + $0x2] sm:$0xff]
    %v6618 = vld [vmem:[#allocation2 + $0xa] sm:$0xff]
    %v6619 = vld [vmem:[#allocation2 + $0x1a] sm:$0xff]
    %v6620 = vld [vmem:[#allocation2 + $0x22] sm:$0xff]
    %v6621 = vld [vmem:[#allocation2 + $0x32] sm:$0xff]
    %v6622 = vld [vmem:[#allocation2 + $0x3a] sm:$0xff]
    %v6623 = vld [vmem:[#allocation2 + $0x4a] sm:$0xff]
    %v6624 = vld [vmem:[#allocation2 + $0x52] sm:$0xff]
    %v6625 = vcombine.low %v6617, %v6621
    %v6626 = vcombine.high %v6617, %v6621
    %v6628 = vunpack.c.l.s4 1983009808
    %v6629 = vunpack.c.0.s8 %v6628
    %v6630 = vlaneseq
    %v6631 = vshrl.u32 %v6630, 7
    %v6632 = vsub.s32 %v6629, %v6631
    %v6633 = vrot.slane %v6625, %v6632
    %v6635 = vunpack.c.l.s4 1983009808
    %v6636 = vunpack.c.0.s8 %v6635
    %v6637 = vlaneseq
    %v6638 = vshrl.u32 %v6637, 7
    %v6639 = vsub.s32 %v6636, %v6638
    %v6640 = vrot.slane %v6626, %v6639
    %v6641 = vcombine.low %v6619, %v6623
    %v6642 = vcombine.high %v6619, %v6623
    %v6644 = vunpack.c.l.s4 1983009808
    %v6645 = vunpack.c.0.s8 %v6644
    %v6646 = vlaneseq
    %v6647 = vshrl.u32 %v6646, 7
    %v6648 = vsub.s32 %v6645, %v6647
    %v6649 = vrot.slane %v6641, %v6648
    %v6651 = vunpack.c.l.s4 1983009808
    %v6652 = vunpack.c.0.s8 %v6651
    %v6653 = vlaneseq
    %v6654 = vshrl.u32 %v6653, 7
    %v6655 = vsub.s32 %v6652, %v6654
    %v6656 = vrot.slane %v6642, %v6655
    %v6657 = vcombine.low %v6633, %v6649
    %v6658 = vcombine.high %v6633, %v6649
    %v6660 = vunpack.c.l.s4 1934713408
    %v6661 = vunpack.c.0.s8 %v6660
    %v6662 = vlaneseq
    %v6663 = vshrl.u32 %v6662, 7
    %v6664 = vsub.s32 %v6661, %v6663
    %v6665 = vrot.slane %v6657, %v6664
    %v6667 = vunpack.c.l.s4 1934713408
    %v6668 = vunpack.c.0.s8 %v6667
    %v6669 = vlaneseq
    %v6670 = vshrl.u32 %v6669, 7
    %v6671 = vsub.s32 %v6668, %v6670
    %v6672 = vrot.slane %v6658, %v6671
    %v6673 = vcombine.low %v6640, %v6656
    %v6674 = vcombine.high %v6640, %v6656
    %v6676 = vunpack.c.l.s4 1934713408
    %v6677 = vunpack.c.0.s8 %v6676
    %v6678 = vlaneseq
    %v6679 = vshrl.u32 %v6678, 7
    %v6680 = vsub.s32 %v6677, %v6679
    %v6681 = vrot.slane %v6673, %v6680
    %v6683 = vunpack.c.l.s4 1934713408
    %v6684 = vunpack.c.0.s8 %v6683
    %v6685 = vlaneseq
    %v6686 = vshrl.u32 %v6685, 7
    %v6687 = vsub.s32 %v6684, %v6686
    %v6688 = vrot.slane %v6674, %v6687
    %v6689 = vcombine.high %v6665, 0.0
    %v6690 = vcombine.high %v6672, 0.0
    %v6691 = vcombine.high %v6681, 0.0
    %v6692 = vcombine.high %v6688, 0.0
    %v6693 = vcombine.low %v6618, %v6622
    %v6694 = vcombine.high %v6618, %v6622
    %v6696 = vunpack.c.l.s4 1983009808
    %v6697 = vunpack.c.0.s8 %v6696
    %v6698 = vlaneseq
    %v6699 = vshrl.u32 %v6698, 7
    %v6700 = vsub.s32 %v6697, %v6699
    %v6701 = vrot.slane %v6693, %v6700
    %v6703 = vunpack.c.l.s4 1983009808
    %v6704 = vunpack.c.0.s8 %v6703
    %v6705 = vlaneseq
    %v6706 = vshrl.u32 %v6705, 7
    %v6707 = vsub.s32 %v6704, %v6706
    %v6708 = vrot.slane %v6694, %v6707
    %v6709 = vcombine.low %v6620, %v6624
    %v6710 = vcombine.high %v6620, %v6624
    %v6712 = vunpack.c.l.s4 1983009808
    %v6713 = vunpack.c.0.s8 %v6712
    %v6714 = vlaneseq
    %v6715 = vshrl.u32 %v6714, 7
    %v6716 = vsub.s32 %v6713, %v6715
    %v6717 = vrot.slane %v6709, %v6716
    %v6719 = vunpack.c.l.s4 1983009808
    %v6720 = vunpack.c.0.s8 %v6719
    %v6721 = vlaneseq
    %v6722 = vshrl.u32 %v6721, 7
    %v6723 = vsub.s32 %v6720, %v6722
    %v6724 = vrot.slane %v6710, %v6723
    %v6725 = vcombine.low %v6701, %v6717
    %v6726 = vcombine.high %v6701, %v6717
    %v6728 = vunpack.c.l.s4 1934713408
    %v6729 = vunpack.c.0.s8 %v6728
    %v6730 = vlaneseq
    %v6731 = vshrl.u32 %v6730, 7
    %v6732 = vsub.s32 %v6729, %v6731
    %v6733 = vrot.slane %v6725, %v6732
    %v6735 = vunpack.c.l.s4 1934713408
    %v6736 = vunpack.c.0.s8 %v6735
    %v6737 = vlaneseq
    %v6738 = vshrl.u32 %v6737, 7
    %v6739 = vsub.s32 %v6736, %v6738
    %v6740 = vrot.slane %v6726, %v6739
    %v6741 = vcombine.low %v6708, %v6724
    %v6742 = vcombine.high %v6708, %v6724
    %v6744 = vunpack.c.l.s4 1934713408
    %v6745 = vunpack.c.0.s8 %v6744
    %v6746 = vlaneseq
    %v6747 = vshrl.u32 %v6746, 7
    %v6748 = vsub.s32 %v6745, %v6747
    %v6749 = vrot.slane %v6741, %v6748
    %v6751 = vunpack.c.l.s4 1934713408
    %v6752 = vunpack.c.0.s8 %v6751
    %v6753 = vlaneseq
    %v6754 = vshrl.u32 %v6753, 7
    %v6755 = vsub.s32 %v6752, %v6754
    %v6756 = vrot.slane %v6742, %v6755
    %v6757 = vcombine.high %v6733, 0.0
    %v6758 = vcombine.high %v6740, 0.0
    %v6759 = vcombine.high %v6749, 0.0
    %v6760 = vcombine.high %v6756, 0.0
    %6762 = vrot.lane.b32.xlu0 %v6689, 16
    %v6763 = vpop.permute.xlu0 %6762
    %6766 = vrot.lane.b32.xlu0 %v6672, 32
    %v6767 = vpop.permute.xlu0 %6766
    %6770 = vrot.lane.b32.xlu0 %v6690, 48
    %v6771 = vpop.permute.xlu0 %6770
    %6774 = vrot.lane.b32.xlu0 %v6681, 64
    %v6775 = vpop.permute.xlu0 %6774
    %6778 = vrot.lane.b32.xlu0 %v6691, 80
    %v6779 = vpop.permute.xlu0 %6778
    %6782 = vrot.lane.b32.xlu0 %v6688, 96
    %v6783 = vpop.permute.xlu0 %6782
    %6786 = vrot.lane.b32.xlu0 %v6692, 112
    %v6787 = vpop.permute.xlu0 %6786
    %6790 = vrot.lane.b32.xlu0 %v6757, 16
    %v6791 = vpop.permute.xlu0 %6790
    %6794 = vrot.lane.b32.xlu0 %v6740, 32
    %v6795 = vpop.permute.xlu0 %6794
    %6798 = vrot.lane.b32.xlu0 %v6758, 48
    %v6799 = vpop.permute.xlu0 %6798
    %6802 = vrot.lane.b32.xlu0 %v6749, 64
    %v6803 = vpop.permute.xlu0 %6802
    %6806 = vrot.lane.b32.xlu0 %v6759, 80
    %v6807 = vpop.permute.xlu0 %6806
    %6810 = vrot.lane.b32.xlu0 %v6756, 96
    %v6811 = vpop.permute.xlu0 %6810
    %6814 = vrot.lane.b32.xlu0 %v6760, 112
    %v6815 = vpop.permute.xlu0 %6814
    %v6817 = vsel %vm364, %v6665, %v6763
    %v6818 = vsel %vm366, %v6817, %v6767
    %v6819 = vsel %vm368, %v6818, %v6771
    %v6820 = vsel %vm370, %v6819, %v6775
    %v6821 = vsel %vm372, %v6820, %v6779
    %v6822 = vsel %vm374, %v6821, %v6783
    %v6823 = vsel %vm376, %v6822, %v6787
    %v6824 = vsel %vm364, %v6733, %v6791
    %v6825 = vsel %vm366, %v6824, %v6795
    %v6826 = vsel %vm368, %v6825, %v6799
    %v6827 = vsel %vm370, %v6826, %v6803
    %v6828 = vsel %vm372, %v6827, %v6807
    %v6829 = vsel %vm374, %v6828, %v6811
    %v6830 = vsel %vm376, %v6829, %v6815
    %6831 = vst [vmem:[#allocation3 + $0x60] sm:$0xf] %v6823
    %6832 = vst [vmem:[#allocation3 + $0x68] sm:$0xf] %v6830
    %v6833 = vld [vmem:[#allocation2 + $0x2] sm:$0xff]
    %v6834 = vld [vmem:[#allocation2 + $0xa] sm:$0xff]
    %v6835 = vld [vmem:[#allocation2 + $0x1a] sm:$0xff]
    %v6836 = vld [vmem:[#allocation2 + $0x22] sm:$0xff]
    %v6837 = vld [vmem:[#allocation2 + $0x32] sm:$0xff]
    %v6838 = vld [vmem:[#allocation2 + $0x3a] sm:$0xff]
    %v6839 = vld [vmem:[#allocation2 + $0x4a] sm:$0xff]
    %v6840 = vld [vmem:[#allocation2 + $0x52] sm:$0xff]
    %6849 = vrot.lane.b32.xlu0 %v6833, 127
    %v6850 = vpop.permute.xlu0 %6849
    %6851 = vrot.lane.b32.xlu0 %v6834, 127
    %v6852 = vpop.permute.xlu0 %6851
    %6853 = vrot.lane.b32.xlu0 %v6835, 127
    %v6854 = vpop.permute.xlu0 %6853
    %6855 = vrot.lane.b32.xlu0 %v6836, 127
    %v6856 = vpop.permute.xlu0 %6855
    %6857 = vrot.lane.b32.xlu0 %v6837, 127
    %v6858 = vpop.permute.xlu0 %6857
    %6859 = vrot.lane.b32.xlu0 %v6838, 127
    %v6860 = vpop.permute.xlu0 %6859
    %6861 = vrot.lane.b32.xlu0 %v6839, 127
    %v6862 = vpop.permute.xlu0 %6861
    %6863 = vrot.lane.b32.xlu0 %v6840, 127
    %v6864 = vpop.permute.xlu0 %6863
    %v6873 = vcombine.low %v6850, %v6858
    %v6874 = vcombine.high %v6850, %v6858
    %v6876 = vunpack.c.l.s4 1983009808
    %v6877 = vunpack.c.0.s8 %v6876
    %v6878 = vlaneseq
    %v6879 = vshrl.u32 %v6878, 7
    %v6880 = vsub.s32 %v6877, %v6879
    %v6881 = vrot.slane %v6873, %v6880
    %v6883 = vunpack.c.l.s4 1983009808
    %v6884 = vunpack.c.0.s8 %v6883
    %v6885 = vlaneseq
    %v6886 = vshrl.u32 %v6885, 7
    %v6887 = vsub.s32 %v6884, %v6886
    %v6888 = vrot.slane %v6874, %v6887
    %v6889 = vcombine.low %v6854, %v6862
    %v6890 = vcombine.high %v6854, %v6862
    %v6892 = vunpack.c.l.s4 1983009808
    %v6893 = vunpack.c.0.s8 %v6892
    %v6894 = vlaneseq
    %v6895 = vshrl.u32 %v6894, 7
    %v6896 = vsub.s32 %v6893, %v6895
    %v6897 = vrot.slane %v6889, %v6896
    %v6899 = vunpack.c.l.s4 1983009808
    %v6900 = vunpack.c.0.s8 %v6899
    %v6901 = vlaneseq
    %v6902 = vshrl.u32 %v6901, 7
    %v6903 = vsub.s32 %v6900, %v6902
    %v6904 = vrot.slane %v6890, %v6903
    %v6905 = vcombine.low %v6881, %v6897
    %v6906 = vcombine.high %v6881, %v6897
    %v6908 = vunpack.c.l.s4 1934713408
    %v6909 = vunpack.c.0.s8 %v6908
    %v6910 = vlaneseq
    %v6911 = vshrl.u32 %v6910, 7
    %v6912 = vsub.s32 %v6909, %v6911
    %v6913 = vrot.slane %v6905, %v6912
    %v6915 = vunpack.c.l.s4 1934713408
    %v6916 = vunpack.c.0.s8 %v6915
    %v6917 = vlaneseq
    %v6918 = vshrl.u32 %v6917, 7
    %v6919 = vsub.s32 %v6916, %v6918
    %v6920 = vrot.slane %v6906, %v6919
    %v6921 = vcombine.low %v6888, %v6904
    %v6922 = vcombine.high %v6888, %v6904
    %v6924 = vunpack.c.l.s4 1934713408
    %v6925 = vunpack.c.0.s8 %v6924
    %v6926 = vlaneseq
    %v6927 = vshrl.u32 %v6926, 7
    %v6928 = vsub.s32 %v6925, %v6927
    %v6929 = vrot.slane %v6921, %v6928
    %v6931 = vunpack.c.l.s4 1934713408
    %v6932 = vunpack.c.0.s8 %v6931
    %v6933 = vlaneseq
    %v6934 = vshrl.u32 %v6933, 7
    %v6935 = vsub.s32 %v6932, %v6934
    %v6936 = vrot.slane %v6922, %v6935
    %v6937 = vcombine.high %v6913, 0.0
    %v6938 = vcombine.high %v6920, 0.0
    %v6939 = vcombine.high %v6929, 0.0
    %v6940 = vcombine.high %v6936, 0.0
    %v6941 = vcombine.low %v6852, %v6860
    %v6942 = vcombine.high %v6852, %v6860
    %v6944 = vunpack.c.l.s4 1983009808
    %v6945 = vunpack.c.0.s8 %v6944
    %v6946 = vlaneseq
    %v6947 = vshrl.u32 %v6946, 7
    %v6948 = vsub.s32 %v6945, %v6947
    %v6949 = vrot.slane %v6941, %v6948
    %v6951 = vunpack.c.l.s4 1983009808
    %v6952 = vunpack.c.0.s8 %v6951
    %v6953 = vlaneseq
    %v6954 = vshrl.u32 %v6953, 7
    %v6955 = vsub.s32 %v6952, %v6954
    %v6956 = vrot.slane %v6942, %v6955
    %v6957 = vcombine.low %v6856, %v6864
    %v6958 = vcombine.high %v6856, %v6864
    %v6960 = vunpack.c.l.s4 1983009808
    %v6961 = vunpack.c.0.s8 %v6960
    %v6962 = vlaneseq
    %v6963 = vshrl.u32 %v6962, 7
    %v6964 = vsub.s32 %v6961, %v6963
    %v6965 = vrot.slane %v6957, %v6964
    %v6967 = vunpack.c.l.s4 1983009808
    %v6968 = vunpack.c.0.s8 %v6967
    %v6969 = vlaneseq
    %v6970 = vshrl.u32 %v6969, 7
    %v6971 = vsub.s32 %v6968, %v6970
    %v6972 = vrot.slane %v6958, %v6971
    %v6973 = vcombine.low %v6949, %v6965
    %v6974 = vcombine.high %v6949, %v6965
    %v6976 = vunpack.c.l.s4 1934713408
    %v6977 = vunpack.c.0.s8 %v6976
    %v6978 = vlaneseq
    %v6979 = vshrl.u32 %v6978, 7
    %v6980 = vsub.s32 %v6977, %v6979
    %v6981 = vrot.slane %v6973, %v6980
    %v6983 = vunpack.c.l.s4 1934713408
    %v6984 = vunpack.c.0.s8 %v6983
    %v6985 = vlaneseq
    %v6986 = vshrl.u32 %v6985, 7
    %v6987 = vsub.s32 %v6984, %v6986
    %v6988 = vrot.slane %v6974, %v6987
    %v6989 = vcombine.low %v6956, %v6972
    %v6990 = vcombine.high %v6956, %v6972
    %v6992 = vunpack.c.l.s4 1934713408
    %v6993 = vunpack.c.0.s8 %v6992
    %v6994 = vlaneseq
    %v6995 = vshrl.u32 %v6994, 7
    %v6996 = vsub.s32 %v6993, %v6995
    %v6997 = vrot.slane %v6989, %v6996
    %v6999 = vunpack.c.l.s4 1934713408
    %v7000 = vunpack.c.0.s8 %v6999
    %v7001 = vlaneseq
    %v7002 = vshrl.u32 %v7001, 7
    %v7003 = vsub.s32 %v7000, %v7002
    %v7004 = vrot.slane %v6990, %v7003
    %v7005 = vcombine.high %v6981, 0.0
    %v7006 = vcombine.high %v6988, 0.0
    %v7007 = vcombine.high %v6997, 0.0
    %v7008 = vcombine.high %v7004, 0.0
    %7010 = vrot.lane.b32.xlu0 %v6937, 16
    %v7011 = vpop.permute.xlu0 %7010
    %7014 = vrot.lane.b32.xlu0 %v6920, 32
    %v7015 = vpop.permute.xlu0 %7014
    %7018 = vrot.lane.b32.xlu0 %v6938, 48
    %v7019 = vpop.permute.xlu0 %7018
    %7022 = vrot.lane.b32.xlu0 %v6929, 64
    %v7023 = vpop.permute.xlu0 %7022
    %7026 = vrot.lane.b32.xlu0 %v6939, 80
    %v7027 = vpop.permute.xlu0 %7026
    %7030 = vrot.lane.b32.xlu0 %v6936, 96
    %v7031 = vpop.permute.xlu0 %7030
    %7034 = vrot.lane.b32.xlu0 %v6940, 112
    %v7035 = vpop.permute.xlu0 %7034
    %7038 = vrot.lane.b32.xlu0 %v7005, 16
    %v7039 = vpop.permute.xlu0 %7038
    %7042 = vrot.lane.b32.xlu0 %v6988, 32
    %v7043 = vpop.permute.xlu0 %7042
    %7046 = vrot.lane.b32.xlu0 %v7006, 48
    %v7047 = vpop.permute.xlu0 %7046
    %7050 = vrot.lane.b32.xlu0 %v6997, 64
    %v7051 = vpop.permute.xlu0 %7050
    %7054 = vrot.lane.b32.xlu0 %v7007, 80
    %v7055 = vpop.permute.xlu0 %7054
    %7058 = vrot.lane.b32.xlu0 %v7004, 96
    %v7059 = vpop.permute.xlu0 %7058
    %7062 = vrot.lane.b32.xlu0 %v7008, 112
    %v7063 = vpop.permute.xlu0 %7062
    %v7065 = vsel %vm364, %v6913, %v7011
    %v7066 = vsel %vm366, %v7065, %v7015
    %v7067 = vsel %vm368, %v7066, %v7019
    %v7068 = vsel %vm370, %v7067, %v7023
    %v7069 = vsel %vm372, %v7068, %v7027
    %v7070 = vsel %vm374, %v7069, %v7031
    %v7071 = vsel %vm376, %v7070, %v7035
    %v7072 = vsel %vm364, %v6981, %v7039
    %v7073 = vsel %vm366, %v7072, %v7043
    %v7074 = vsel %vm368, %v7073, %v7047
    %v7075 = vsel %vm370, %v7074, %v7051
    %v7076 = vsel %vm372, %v7075, %v7055
    %v7077 = vsel %vm374, %v7076, %v7059
    %v7078 = vsel %vm376, %v7077, %v7063
    %v7081 = vrot.slane %v7071, 4
    %v7082 = vrot.slane %v7078, 4
    %7085 = vst [vmem:[#allocation3 + $0x60] sm:$0xf0] %v7081
    %7086 = vst [vmem:[#allocation3 + $0x68] sm:$0xf0] %v7082
    %v7087 = vld [vmem:[#allocation2 + $0x2] sm:$0xff]
    %v7088 = vld [vmem:[#allocation2 + $0xa] sm:$0xff]
    %v7089 = vld [vmem:[#allocation2 + $0x1a] sm:$0xff]
    %v7090 = vld [vmem:[#allocation2 + $0x22] sm:$0xff]
    %v7091 = vld [vmem:[#allocation2 + $0x32] sm:$0xff]
    %v7092 = vld [vmem:[#allocation2 + $0x3a] sm:$0xff]
    %v7093 = vld [vmem:[#allocation2 + $0x4a] sm:$0xff]
    %v7094 = vld [vmem:[#allocation2 + $0x52] sm:$0xff]
    %7103 = vrot.lane.b32.xlu0 %v7087, 126
    %v7104 = vpop.permute.xlu0 %7103
    %7105 = vrot.lane.b32.xlu0 %v7088, 126
    %v7106 = vpop.permute.xlu0 %7105
    %7107 = vrot.lane.b32.xlu0 %v7089, 126
    %v7108 = vpop.permute.xlu0 %7107
    %7109 = vrot.lane.b32.xlu0 %v7090, 126
    %v7110 = vpop.permute.xlu0 %7109
    %7111 = vrot.lane.b32.xlu0 %v7091, 126
    %v7112 = vpop.permute.xlu0 %7111
    %7113 = vrot.lane.b32.xlu0 %v7092, 126
    %v7114 = vpop.permute.xlu0 %7113
    %7115 = vrot.lane.b32.xlu0 %v7093, 126
    %v7116 = vpop.permute.xlu0 %7115
    %7117 = vrot.lane.b32.xlu0 %v7094, 126
    %v7118 = vpop.permute.xlu0 %7117
    %v7127 = vcombine.low %v7104, %v7112
    %v7128 = vcombine.high %v7104, %v7112
    %v7130 = vunpack.c.l.s4 1983009808
    %v7131 = vunpack.c.0.s8 %v7130
    %v7132 = vlaneseq
    %v7133 = vshrl.u32 %v7132, 7
    %v7134 = vsub.s32 %v7131, %v7133
    %v7135 = vrot.slane %v7127, %v7134
    %v7137 = vunpack.c.l.s4 1983009808
    %v7138 = vunpack.c.0.s8 %v7137
    %v7139 = vlaneseq
    %v7140 = vshrl.u32 %v7139, 7
    %v7141 = vsub.s32 %v7138, %v7140
    %v7142 = vrot.slane %v7128, %v7141
    %v7143 = vcombine.low %v7108, %v7116
    %v7144 = vcombine.high %v7108, %v7116
    %v7146 = vunpack.c.l.s4 1983009808
    %v7147 = vunpack.c.0.s8 %v7146
    %v7148 = vlaneseq
    %v7149 = vshrl.u32 %v7148, 7
    %v7150 = vsub.s32 %v7147, %v7149
    %v7151 = vrot.slane %v7143, %v7150
    %v7153 = vunpack.c.l.s4 1983009808
    %v7154 = vunpack.c.0.s8 %v7153
    %v7155 = vlaneseq
    %v7156 = vshrl.u32 %v7155, 7
    %v7157 = vsub.s32 %v7154, %v7156
    %v7158 = vrot.slane %v7144, %v7157
    %v7159 = vcombine.low %v7135, %v7151
    %v7160 = vcombine.high %v7135, %v7151
    %v7162 = vunpack.c.l.s4 1934713408
    %v7163 = vunpack.c.0.s8 %v7162
    %v7164 = vlaneseq
    %v7165 = vshrl.u32 %v7164, 7
    %v7166 = vsub.s32 %v7163, %v7165
    %v7167 = vrot.slane %v7159, %v7166
    %v7169 = vunpack.c.l.s4 1934713408
    %v7170 = vunpack.c.0.s8 %v7169
    %v7171 = vlaneseq
    %v7172 = vshrl.u32 %v7171, 7
    %v7173 = vsub.s32 %v7170, %v7172
    %v7174 = vrot.slane %v7160, %v7173
    %v7175 = vcombine.low %v7142, %v7158
    %v7176 = vcombine.high %v7142, %v7158
    %v7178 = vunpack.c.l.s4 1934713408
    %v7179 = vunpack.c.0.s8 %v7178
    %v7180 = vlaneseq
    %v7181 = vshrl.u32 %v7180, 7
    %v7182 = vsub.s32 %v7179, %v7181
    %v7183 = vrot.slane %v7175, %v7182
    %v7185 = vunpack.c.l.s4 1934713408
    %v7186 = vunpack.c.0.s8 %v7185
    %v7187 = vlaneseq
    %v7188 = vshrl.u32 %v7187, 7
    %v7189 = vsub.s32 %v7186, %v7188
    %v7190 = vrot.slane %v7176, %v7189
    %v7191 = vcombine.high %v7167, 0.0
    %v7192 = vcombine.high %v7174, 0.0
    %v7193 = vcombine.high %v7183, 0.0
    %v7194 = vcombine.high %v7190, 0.0
    %v7195 = vcombine.low %v7106, %v7114
    %v7196 = vcombine.high %v7106, %v7114
    %v7198 = vunpack.c.l.s4 1983009808
    %v7199 = vunpack.c.0.s8 %v7198
    %v7200 = vlaneseq
    %v7201 = vshrl.u32 %v7200, 7
    %v7202 = vsub.s32 %v7199, %v7201
    %v7203 = vrot.slane %v7195, %v7202
    %v7205 = vunpack.c.l.s4 1983009808
    %v7206 = vunpack.c.0.s8 %v7205
    %v7207 = vlaneseq
    %v7208 = vshrl.u32 %v7207, 7
    %v7209 = vsub.s32 %v7206, %v7208
    %v7210 = vrot.slane %v7196, %v7209
    %v7211 = vcombine.low %v7110, %v7118
    %v7212 = vcombine.high %v7110, %v7118
    %v7214 = vunpack.c.l.s4 1983009808
    %v7215 = vunpack.c.0.s8 %v7214
    %v7216 = vlaneseq
    %v7217 = vshrl.u32 %v7216, 7
    %v7218 = vsub.s32 %v7215, %v7217
    %v7219 = vrot.slane %v7211, %v7218
    %v7221 = vunpack.c.l.s4 1983009808
    %v7222 = vunpack.c.0.s8 %v7221
    %v7223 = vlaneseq
    %v7224 = vshrl.u32 %v7223, 7
    %v7225 = vsub.s32 %v7222, %v7224
    %v7226 = vrot.slane %v7212, %v7225
    %v7227 = vcombine.low %v7203, %v7219
    %v7228 = vcombine.high %v7203, %v7219
    %v7230 = vunpack.c.l.s4 1934713408
    %v7231 = vunpack.c.0.s8 %v7230
    %v7232 = vlaneseq
    %v7233 = vshrl.u32 %v7232, 7
    %v7234 = vsub.s32 %v7231, %v7233
    %v7235 = vrot.slane %v7227, %v7234
    %v7237 = vunpack.c.l.s4 1934713408
    %v7238 = vunpack.c.0.s8 %v7237
    %v7239 = vlaneseq
    %v7240 = vshrl.u32 %v7239, 7
    %v7241 = vsub.s32 %v7238, %v7240
    %v7242 = vrot.slane %v7228, %v7241
    %v7243 = vcombine.low %v7210, %v7226
    %v7244 = vcombine.high %v7210, %v7226
    %v7246 = vunpack.c.l.s4 1934713408
    %v7247 = vunpack.c.0.s8 %v7246
    %v7248 = vlaneseq
    %v7249 = vshrl.u32 %v7248, 7
    %v7250 = vsub.s32 %v7247, %v7249
    %v7251 = vrot.slane %v7243, %v7250
    %v7253 = vunpack.c.l.s4 1934713408
    %v7254 = vunpack.c.0.s8 %v7253
    %v7255 = vlaneseq
    %v7256 = vshrl.u32 %v7255, 7
    %v7257 = vsub.s32 %v7254, %v7256
    %v7258 = vrot.slane %v7244, %v7257
    %v7259 = vcombine.high %v7235, 0.0
    %v7260 = vcombine.high %v7242, 0.0
    %v7261 = vcombine.high %v7251, 0.0
    %v7262 = vcombine.high %v7258, 0.0
    %7264 = vrot.lane.b32.xlu0 %v7191, 16
    %v7265 = vpop.permute.xlu0 %7264
    %7268 = vrot.lane.b32.xlu0 %v7174, 32
    %v7269 = vpop.permute.xlu0 %7268
    %7272 = vrot.lane.b32.xlu0 %v7192, 48
    %v7273 = vpop.permute.xlu0 %7272
    %7276 = vrot.lane.b32.xlu0 %v7183, 64
    %v7277 = vpop.permute.xlu0 %7276
    %7280 = vrot.lane.b32.xlu0 %v7193, 80
    %v7281 = vpop.permute.xlu0 %7280
    %7284 = vrot.lane.b32.xlu0 %v7190, 96
    %v7285 = vpop.permute.xlu0 %7284
    %7288 = vrot.lane.b32.xlu0 %v7194, 112
    %v7289 = vpop.permute.xlu0 %7288
    %7292 = vrot.lane.b32.xlu0 %v7259, 16
    %v7293 = vpop.permute.xlu0 %7292
    %7296 = vrot.lane.b32.xlu0 %v7242, 32
    %v7297 = vpop.permute.xlu0 %7296
    %7300 = vrot.lane.b32.xlu0 %v7260, 48
    %v7301 = vpop.permute.xlu0 %7300
    %7304 = vrot.lane.b32.xlu0 %v7251, 64
    %v7305 = vpop.permute.xlu0 %7304
    %7308 = vrot.lane.b32.xlu0 %v7261, 80
    %v7309 = vpop.permute.xlu0 %7308
    %7312 = vrot.lane.b32.xlu0 %v7258, 96
    %v7313 = vpop.permute.xlu0 %7312
    %7316 = vrot.lane.b32.xlu0 %v7262, 112
    %v7317 = vpop.permute.xlu0 %7316
    %v7319 = vsel %vm364, %v7167, %v7265
    %v7320 = vsel %vm366, %v7319, %v7269
    %v7321 = vsel %vm368, %v7320, %v7273
    %v7322 = vsel %vm370, %v7321, %v7277
    %v7323 = vsel %vm372, %v7322, %v7281
    %v7324 = vsel %vm374, %v7323, %v7285
    %v7325 = vsel %vm376, %v7324, %v7289
    %v7326 = vsel %vm364, %v7235, %v7293
    %v7327 = vsel %vm366, %v7326, %v7297
    %v7328 = vsel %vm368, %v7327, %v7301
    %v7329 = vsel %vm370, %v7328, %v7305
    %v7330 = vsel %vm372, %v7329, %v7309
    %v7331 = vsel %vm374, %v7330, %v7313
    %v7332 = vsel %vm376, %v7331, %v7317
    %7333 = vst [vmem:[#allocation3 + $0x80] sm:$0xf] %v7325
    %7334 = vst [vmem:[#allocation3 + $0x88] sm:$0xf] %v7332
    %v7335 = vld [vmem:[%s2331] sm:$0xff]
    %v7336 = vld [vmem:[%s2331 + $0x8] sm:$0xff]
    %v7337 = vld [vmem:[%s2331 + $0x18] sm:$0xff]
    %v7338 = vld [vmem:[%s2331 + $0x20] sm:$0xff]
    %v7339 = vld [vmem:[%s2331 + $0x30] sm:$0xff]
    %v7340 = vld [vmem:[%s2331 + $0x38] sm:$0xff]
    %v7341 = vld [vmem:[%s2331 + $0x48] sm:$0xff]
    %v7342 = vld [vmem:[%s2331 + $0x50] sm:$0xff]
    %v7343 = vcombine.low %v7335, %v7339
    %v7344 = vcombine.high %v7335, %v7339
    %v7346 = vunpack.c.l.s4 1983009808
    %v7347 = vunpack.c.0.s8 %v7346
    %v7348 = vlaneseq
    %v7349 = vshrl.u32 %v7348, 7
    %v7350 = vsub.s32 %v7347, %v7349
    %v7351 = vrot.slane %v7343, %v7350
    %v7353 = vunpack.c.l.s4 1983009808
    %v7354 = vunpack.c.0.s8 %v7353
    %v7355 = vlaneseq
    %v7356 = vshrl.u32 %v7355, 7
    %v7357 = vsub.s32 %v7354, %v7356
    %v7358 = vrot.slane %v7344, %v7357
    %v7359 = vcombine.low %v7337, %v7341
    %v7360 = vcombine.high %v7337, %v7341
    %v7362 = vunpack.c.l.s4 1983009808
    %v7363 = vunpack.c.0.s8 %v7362
    %v7364 = vlaneseq
    %v7365 = vshrl.u32 %v7364, 7
    %v7366 = vsub.s32 %v7363, %v7365
    %v7367 = vrot.slane %v7359, %v7366
    %v7369 = vunpack.c.l.s4 1983009808
    %v7370 = vunpack.c.0.s8 %v7369
    %v7371 = vlaneseq
    %v7372 = vshrl.u32 %v7371, 7
    %v7373 = vsub.s32 %v7370, %v7372
    %v7374 = vrot.slane %v7360, %v7373
    %v7375 = vcombine.low %v7351, %v7367
    %v7376 = vcombine.high %v7351, %v7367
    %v7378 = vunpack.c.l.s4 1934713408
    %v7379 = vunpack.c.0.s8 %v7378
    %v7380 = vlaneseq
    %v7381 = vshrl.u32 %v7380, 7
    %v7382 = vsub.s32 %v7379, %v7381
    %v7383 = vrot.slane %v7375, %v7382
    %v7385 = vunpack.c.l.s4 1934713408
    %v7386 = vunpack.c.0.s8 %v7385
    %v7387 = vlaneseq
    %v7388 = vshrl.u32 %v7387, 7
    %v7389 = vsub.s32 %v7386, %v7388
    %v7390 = vrot.slane %v7376, %v7389
    %v7391 = vcombine.low %v7358, %v7374
    %v7392 = vcombine.high %v7358, %v7374
    %v7394 = vunpack.c.l.s4 1934713408
    %v7395 = vunpack.c.0.s8 %v7394
    %v7396 = vlaneseq
    %v7397 = vshrl.u32 %v7396, 7
    %v7398 = vsub.s32 %v7395, %v7397
    %v7399 = vrot.slane %v7391, %v7398
    %v7401 = vunpack.c.l.s4 1934713408
    %v7402 = vunpack.c.0.s8 %v7401
    %v7403 = vlaneseq
    %v7404 = vshrl.u32 %v7403, 7
    %v7405 = vsub.s32 %v7402, %v7404
    %v7406 = vrot.slane %v7392, %v7405
    %v7407 = vcombine.high %v7383, 0.0
    %v7408 = vcombine.high %v7390, 0.0
    %v7409 = vcombine.high %v7399, 0.0
    %v7410 = vcombine.high %v7406, 0.0
    %v7411 = vcombine.low %v7336, %v7340
    %v7412 = vcombine.high %v7336, %v7340
    %v7414 = vunpack.c.l.s4 1983009808
    %v7415 = vunpack.c.0.s8 %v7414
    %v7416 = vlaneseq
    %v7417 = vshrl.u32 %v7416, 7
    %v7418 = vsub.s32 %v7415, %v7417
    %v7419 = vrot.slane %v7411, %v7418
    %v7421 = vunpack.c.l.s4 1983009808
    %v7422 = vunpack.c.0.s8 %v7421
    %v7423 = vlaneseq
    %v7424 = vshrl.u32 %v7423, 7
    %v7425 = vsub.s32 %v7422, %v7424
    %v7426 = vrot.slane %v7412, %v7425
    %v7427 = vcombine.low %v7338, %v7342
    %v7428 = vcombine.high %v7338, %v7342
    %v7430 = vunpack.c.l.s4 1983009808
    %v7431 = vunpack.c.0.s8 %v7430
    %v7432 = vlaneseq
    %v7433 = vshrl.u32 %v7432, 7
    %v7434 = vsub.s32 %v7431, %v7433
    %v7435 = vrot.slane %v7427, %v7434
    %v7437 = vunpack.c.l.s4 1983009808
    %v7438 = vunpack.c.0.s8 %v7437
    %v7439 = vlaneseq
    %v7440 = vshrl.u32 %v7439, 7
    %v7441 = vsub.s32 %v7438, %v7440
    %v7442 = vrot.slane %v7428, %v7441
    %v7443 = vcombine.low %v7419, %v7435
    %v7444 = vcombine.high %v7419, %v7435
    %v7446 = vunpack.c.l.s4 1934713408
    %v7447 = vunpack.c.0.s8 %v7446
    %v7448 = vlaneseq
    %v7449 = vshrl.u32 %v7448, 7
    %v7450 = vsub.s32 %v7447, %v7449
    %v7451 = vrot.slane %v7443, %v7450
    %v7453 = vunpack.c.l.s4 1934713408
    %v7454 = vunpack.c.0.s8 %v7453
    %v7455 = vlaneseq
    %v7456 = vshrl.u32 %v7455, 7
    %v7457 = vsub.s32 %v7454, %v7456
    %v7458 = vrot.slane %v7444, %v7457
    %v7459 = vcombine.low %v7426, %v7442
    %v7460 = vcombine.high %v7426, %v7442
    %v7462 = vunpack.c.l.s4 1934713408
    %v7463 = vunpack.c.0.s8 %v7462
    %v7464 = vlaneseq
    %v7465 = vshrl.u32 %v7464, 7
    %v7466 = vsub.s32 %v7463, %v7465
    %v7467 = vrot.slane %v7459, %v7466
    %v7469 = vunpack.c.l.s4 1934713408
    %v7470 = vunpack.c.0.s8 %v7469
    %v7471 = vlaneseq
    %v7472 = vshrl.u32 %v7471, 7
    %v7473 = vsub.s32 %v7470, %v7472
    %v7474 = vrot.slane %v7460, %v7473
    %v7475 = vcombine.high %v7451, 0.0
    %v7476 = vcombine.high %v7458, 0.0
    %v7477 = vcombine.high %v7467, 0.0
    %v7478 = vcombine.high %v7474, 0.0
    %7480 = vrot.lane.b32.xlu0 %v7407, 16
    %v7481 = vpop.permute.xlu0 %7480
    %7484 = vrot.lane.b32.xlu0 %v7390, 32
    %v7485 = vpop.permute.xlu0 %7484
    %7488 = vrot.lane.b32.xlu0 %v7408, 48
    %v7489 = vpop.permute.xlu0 %7488
    %7492 = vrot.lane.b32.xlu0 %v7399, 64
    %v7493 = vpop.permute.xlu0 %7492
    %7496 = vrot.lane.b32.xlu0 %v7409, 80
    %v7497 = vpop.permute.xlu0 %7496
    %7500 = vrot.lane.b32.xlu0 %v7406, 96
    %v7501 = vpop.permute.xlu0 %7500
    %7504 = vrot.lane.b32.xlu0 %v7410, 112
    %v7505 = vpop.permute.xlu0 %7504
    %7508 = vrot.lane.b32.xlu0 %v7475, 16
    %v7509 = vpop.permute.xlu0 %7508
    %7512 = vrot.lane.b32.xlu0 %v7458, 32
    %v7513 = vpop.permute.xlu0 %7512
    %7516 = vrot.lane.b32.xlu0 %v7476, 48
    %v7517 = vpop.permute.xlu0 %7516
    %7520 = vrot.lane.b32.xlu0 %v7467, 64
    %v7521 = vpop.permute.xlu0 %7520
    %7524 = vrot.lane.b32.xlu0 %v7477, 80
    %v7525 = vpop.permute.xlu0 %7524
    %7528 = vrot.lane.b32.xlu0 %v7474, 96
    %v7529 = vpop.permute.xlu0 %7528
    %7532 = vrot.lane.b32.xlu0 %v7478, 112
    %v7533 = vpop.permute.xlu0 %7532
    %v7535 = vsel %vm364, %v7383, %v7481
    %v7536 = vsel %vm366, %v7535, %v7485
    %v7537 = vsel %vm368, %v7536, %v7489
    %v7538 = vsel %vm370, %v7537, %v7493
    %v7539 = vsel %vm372, %v7538, %v7497
    %v7540 = vsel %vm374, %v7539, %v7501
    %v7541 = vsel %vm376, %v7540, %v7505
    %v7542 = vsel %vm364, %v7451, %v7509
    %v7543 = vsel %vm366, %v7542, %v7513
    %v7544 = vsel %vm368, %v7543, %v7517
    %v7545 = vsel %vm370, %v7544, %v7521
    %v7546 = vsel %vm372, %v7545, %v7525
    %v7547 = vsel %vm374, %v7546, %v7529
    %v7548 = vsel %vm376, %v7547, %v7533
    %7549 = vst [vmem:[#allocation3 + $0x10] sm:$0xf] %v7541
    %7550 = vst [vmem:[#allocation3 + $0x18] sm:$0xf] %v7548
    %v7551 = vld [vmem:[%s2331] sm:$0xff]
    %v7552 = vld [vmem:[%s2331 + $0x8] sm:$0xff]
    %v7553 = vld [vmem:[%s2331 + $0x18] sm:$0xff]
    %v7554 = vld [vmem:[%s2331 + $0x20] sm:$0xff]
    %v7555 = vld [vmem:[%s2331 + $0x30] sm:$0xff]
    %v7556 = vld [vmem:[%s2331 + $0x38] sm:$0xff]
    %v7557 = vld [vmem:[%s2331 + $0x48] sm:$0xff]
    %v7558 = vld [vmem:[%s2331 + $0x50] sm:$0xff]
    %7567 = vrot.lane.b32.xlu0 %v7551, 127
    %v7568 = vpop.permute.xlu0 %7567
    %7569 = vrot.lane.b32.xlu0 %v7552, 127
    %v7570 = vpop.permute.xlu0 %7569
    %7571 = vrot.lane.b32.xlu0 %v7553, 127
    %v7572 = vpop.permute.xlu0 %7571
    %7573 = vrot.lane.b32.xlu0 %v7554, 127
    %v7574 = vpop.permute.xlu0 %7573
    %7575 = vrot.lane.b32.xlu0 %v7555, 127
    %v7576 = vpop.permute.xlu0 %7575
    %7577 = vrot.lane.b32.xlu0 %v7556, 127
    %v7578 = vpop.permute.xlu0 %7577
    %7579 = vrot.lane.b32.xlu0 %v7557, 127
    %v7580 = vpop.permute.xlu0 %7579
    %7581 = vrot.lane.b32.xlu0 %v7558, 127
    %v7582 = vpop.permute.xlu0 %7581
    %v7591 = vcombine.low %v7568, %v7576
    %v7592 = vcombine.high %v7568, %v7576
    %v7594 = vunpack.c.l.s4 1983009808
    %v7595 = vunpack.c.0.s8 %v7594
    %v7596 = vlaneseq
    %v7597 = vshrl.u32 %v7596, 7
    %v7598 = vsub.s32 %v7595, %v7597
    %v7599 = vrot.slane %v7591, %v7598
    %v7601 = vunpack.c.l.s4 1983009808
    %v7602 = vunpack.c.0.s8 %v7601
    %v7603 = vlaneseq
    %v7604 = vshrl.u32 %v7603, 7
    %v7605 = vsub.s32 %v7602, %v7604
    %v7606 = vrot.slane %v7592, %v7605
    %v7607 = vcombine.low %v7572, %v7580
    %v7608 = vcombine.high %v7572, %v7580
    %v7610 = vunpack.c.l.s4 1983009808
    %v7611 = vunpack.c.0.s8 %v7610
    %v7612 = vlaneseq
    %v7613 = vshrl.u32 %v7612, 7
    %v7614 = vsub.s32 %v7611, %v7613
    %v7615 = vrot.slane %v7607, %v7614
    %v7617 = vunpack.c.l.s4 1983009808
    %v7618 = vunpack.c.0.s8 %v7617
    %v7619 = vlaneseq
    %v7620 = vshrl.u32 %v7619, 7
    %v7621 = vsub.s32 %v7618, %v7620
    %v7622 = vrot.slane %v7608, %v7621
    %v7623 = vcombine.low %v7599, %v7615
    %v7624 = vcombine.high %v7599, %v7615
    %v7626 = vunpack.c.l.s4 1934713408
    %v7627 = vunpack.c.0.s8 %v7626
    %v7628 = vlaneseq
    %v7629 = vshrl.u32 %v7628, 7
    %v7630 = vsub.s32 %v7627, %v7629
    %v7631 = vrot.slane %v7623, %v7630
    %v7633 = vunpack.c.l.s4 1934713408
    %v7634 = vunpack.c.0.s8 %v7633
    %v7635 = vlaneseq
    %v7636 = vshrl.u32 %v7635, 7
    %v7637 = vsub.s32 %v7634, %v7636
    %v7638 = vrot.slane %v7624, %v7637
    %v7639 = vcombine.low %v7606, %v7622
    %v7640 = vcombine.high %v7606, %v7622
    %v7642 = vunpack.c.l.s4 1934713408
    %v7643 = vunpack.c.0.s8 %v7642
    %v7644 = vlaneseq
    %v7645 = vshrl.u32 %v7644, 7
    %v7646 = vsub.s32 %v7643, %v7645
    %v7647 = vrot.slane %v7639, %v7646
    %v7649 = vunpack.c.l.s4 1934713408
    %v7650 = vunpack.c.0.s8 %v7649
    %v7651 = vlaneseq
    %v7652 = vshrl.u32 %v7651, 7
    %v7653 = vsub.s32 %v7650, %v7652
    %v7654 = vrot.slane %v7640, %v7653
    %v7655 = vcombine.high %v7631, 0.0
    %v7656 = vcombine.high %v7638, 0.0
    %v7657 = vcombine.high %v7647, 0.0
    %v7658 = vcombine.high %v7654, 0.0
    %v7659 = vcombine.low %v7570, %v7578
    %v7660 = vcombine.high %v7570, %v7578
    %v7662 = vunpack.c.l.s4 1983009808
    %v7663 = vunpack.c.0.s8 %v7662
    %v7664 = vlaneseq
    %v7665 = vshrl.u32 %v7664, 7
    %v7666 = vsub.s32 %v7663, %v7665
    %v7667 = vrot.slane %v7659, %v7666
    %v7669 = vunpack.c.l.s4 1983009808
    %v7670 = vunpack.c.0.s8 %v7669
    %v7671 = vlaneseq
    %v7672 = vshrl.u32 %v7671, 7
    %v7673 = vsub.s32 %v7670, %v7672
    %v7674 = vrot.slane %v7660, %v7673
    %v7675 = vcombine.low %v7574, %v7582
    %v7676 = vcombine.high %v7574, %v7582
    %v7678 = vunpack.c.l.s4 1983009808
    %v7679 = vunpack.c.0.s8 %v7678
    %v7680 = vlaneseq
    %v7681 = vshrl.u32 %v7680, 7
    %v7682 = vsub.s32 %v7679, %v7681
    %v7683 = vrot.slane %v7675, %v7682
    %v7685 = vunpack.c.l.s4 1983009808
    %v7686 = vunpack.c.0.s8 %v7685
    %v7687 = vlaneseq
    %v7688 = vshrl.u32 %v7687, 7
    %v7689 = vsub.s32 %v7686, %v7688
    %v7690 = vrot.slane %v7676, %v7689
    %v7691 = vcombine.low %v7667, %v7683
    %v7692 = vcombine.high %v7667, %v7683
    %v7694 = vunpack.c.l.s4 1934713408
    %v7695 = vunpack.c.0.s8 %v7694
    %v7696 = vlaneseq
    %v7697 = vshrl.u32 %v7696, 7
    %v7698 = vsub.s32 %v7695, %v7697
    %v7699 = vrot.slane %v7691, %v7698
    %v7701 = vunpack.c.l.s4 1934713408
    %v7702 = vunpack.c.0.s8 %v7701
    %v7703 = vlaneseq
    %v7704 = vshrl.u32 %v7703, 7
    %v7705 = vsub.s32 %v7702, %v7704
    %v7706 = vrot.slane %v7692, %v7705
    %v7707 = vcombine.low %v7674, %v7690
    %v7708 = vcombine.high %v7674, %v7690
    %v7710 = vunpack.c.l.s4 1934713408
    %v7711 = vunpack.c.0.s8 %v7710
    %v7712 = vlaneseq
    %v7713 = vshrl.u32 %v7712, 7
    %v7714 = vsub.s32 %v7711, %v7713
    %v7715 = vrot.slane %v7707, %v7714
    %v7717 = vunpack.c.l.s4 1934713408
    %v7718 = vunpack.c.0.s8 %v7717
    %v7719 = vlaneseq
    %v7720 = vshrl.u32 %v7719, 7
    %v7721 = vsub.s32 %v7718, %v7720
    %v7722 = vrot.slane %v7708, %v7721
    %v7723 = vcombine.high %v7699, 0.0
    %v7724 = vcombine.high %v7706, 0.0
    %v7725 = vcombine.high %v7715, 0.0
    %v7726 = vcombine.high %v7722, 0.0
    %7728 = vrot.lane.b32.xlu0 %v7655, 16
    %v7729 = vpop.permute.xlu0 %7728
    %7732 = vrot.lane.b32.xlu0 %v7638, 32
    %v7733 = vpop.permute.xlu0 %7732
    %7736 = vrot.lane.b32.xlu0 %v7656, 48
    %v7737 = vpop.permute.xlu0 %7736
    %7740 = vrot.lane.b32.xlu0 %v7647, 64
    %v7741 = vpop.permute.xlu0 %7740
    %7744 = vrot.lane.b32.xlu0 %v7657, 80
    %v7745 = vpop.permute.xlu0 %7744
    %7748 = vrot.lane.b32.xlu0 %v7654, 96
    %v7749 = vpop.permute.xlu0 %7748
    %7752 = vrot.lane.b32.xlu0 %v7658, 112
    %v7753 = vpop.permute.xlu0 %7752
    %7756 = vrot.lane.b32.xlu0 %v7723, 16
    %v7757 = vpop.permute.xlu0 %7756
    %7760 = vrot.lane.b32.xlu0 %v7706, 32
    %v7761 = vpop.permute.xlu0 %7760
    %7764 = vrot.lane.b32.xlu0 %v7724, 48
    %v7765 = vpop.permute.xlu0 %7764
    %7768 = vrot.lane.b32.xlu0 %v7715, 64
    %v7769 = vpop.permute.xlu0 %7768
    %7772 = vrot.lane.b32.xlu0 %v7725, 80
    %v7773 = vpop.permute.xlu0 %7772
    %7776 = vrot.lane.b32.xlu0 %v7722, 96
    %v7777 = vpop.permute.xlu0 %7776
    %7780 = vrot.lane.b32.xlu0 %v7726, 112
    %v7781 = vpop.permute.xlu0 %7780
    %v7783 = vsel %vm364, %v7631, %v7729
    %v7784 = vsel %vm366, %v7783, %v7733
    %v7785 = vsel %vm368, %v7784, %v7737
    %v7786 = vsel %vm370, %v7785, %v7741
    %v7787 = vsel %vm372, %v7786, %v7745
    %v7788 = vsel %vm374, %v7787, %v7749
    %v7789 = vsel %vm376, %v7788, %v7753
    %v7790 = vsel %vm364, %v7699, %v7757
    %v7791 = vsel %vm366, %v7790, %v7761
    %v7792 = vsel %vm368, %v7791, %v7765
    %v7793 = vsel %vm370, %v7792, %v7769
    %v7794 = vsel %vm372, %v7793, %v7773
    %v7795 = vsel %vm374, %v7794, %v7777
    %v7796 = vsel %vm376, %v7795, %v7781
    %v7799 = vrot.slane %v7789, 4
    %v7800 = vrot.slane %v7796, 4
    %7803 = vst [vmem:[#allocation3 + $0x10] sm:$0xf0] %v7799
    %7804 = vst [vmem:[#allocation3 + $0x18] sm:$0xf0] %v7800
    %v7805 = vld [vmem:[%s2331] sm:$0xff]
    %v7806 = vld [vmem:[%s2331 + $0x8] sm:$0xff]
    %v7807 = vld [vmem:[%s2331 + $0x18] sm:$0xff]
    %v7808 = vld [vmem:[%s2331 + $0x20] sm:$0xff]
    %v7809 = vld [vmem:[%s2331 + $0x30] sm:$0xff]
    %v7810 = vld [vmem:[%s2331 + $0x38] sm:$0xff]
    %v7811 = vld [vmem:[%s2331 + $0x48] sm:$0xff]
    %v7812 = vld [vmem:[%s2331 + $0x50] sm:$0xff]
    %7821 = vrot.lane.b32.xlu0 %v7805, 126
    %v7822 = vpop.permute.xlu0 %7821
    %7823 = vrot.lane.b32.xlu0 %v7806, 126
    %v7824 = vpop.permute.xlu0 %7823
    %7825 = vrot.lane.b32.xlu0 %v7807, 126
    %v7826 = vpop.permute.xlu0 %7825
    %7827 = vrot.lane.b32.xlu0 %v7808, 126
    %v7828 = vpop.permute.xlu0 %7827
    %7829 = vrot.lane.b32.xlu0 %v7809, 126
    %v7830 = vpop.permute.xlu0 %7829
    %7831 = vrot.lane.b32.xlu0 %v7810, 126
    %v7832 = vpop.permute.xlu0 %7831
    %7833 = vrot.lane.b32.xlu0 %v7811, 126
    %v7834 = vpop.permute.xlu0 %7833
    %7835 = vrot.lane.b32.xlu0 %v7812, 126
    %v7836 = vpop.permute.xlu0 %7835
    %v7845 = vcombine.low %v7822, %v7830
    %v7846 = vcombine.high %v7822, %v7830
    %v7848 = vunpack.c.l.s4 1983009808
    %v7849 = vunpack.c.0.s8 %v7848
    %v7850 = vlaneseq
    %v7851 = vshrl.u32 %v7850, 7
    %v7852 = vsub.s32 %v7849, %v7851
    %v7853 = vrot.slane %v7845, %v7852
    %v7855 = vunpack.c.l.s4 1983009808
    %v7856 = vunpack.c.0.s8 %v7855
    %v7857 = vlaneseq
    %v7858 = vshrl.u32 %v7857, 7
    %v7859 = vsub.s32 %v7856, %v7858
    %v7860 = vrot.slane %v7846, %v7859
    %v7861 = vcombine.low %v7826, %v7834
    %v7862 = vcombine.high %v7826, %v7834
    %v7864 = vunpack.c.l.s4 1983009808
    %v7865 = vunpack.c.0.s8 %v7864
    %v7866 = vlaneseq
    %v7867 = vshrl.u32 %v7866, 7
    %v7868 = vsub.s32 %v7865, %v7867
    %v7869 = vrot.slane %v7861, %v7868
    %v7871 = vunpack.c.l.s4 1983009808
    %v7872 = vunpack.c.0.s8 %v7871
    %v7873 = vlaneseq
    %v7874 = vshrl.u32 %v7873, 7
    %v7875 = vsub.s32 %v7872, %v7874
    %v7876 = vrot.slane %v7862, %v7875
    %v7877 = vcombine.low %v7853, %v7869
    %v7878 = vcombine.high %v7853, %v7869
    %v7880 = vunpack.c.l.s4 1934713408
    %v7881 = vunpack.c.0.s8 %v7880
    %v7882 = vlaneseq
    %v7883 = vshrl.u32 %v7882, 7
    %v7884 = vsub.s32 %v7881, %v7883
    %v7885 = vrot.slane %v7877, %v7884
    %v7887 = vunpack.c.l.s4 1934713408
    %v7888 = vunpack.c.0.s8 %v7887
    %v7889 = vlaneseq
    %v7890 = vshrl.u32 %v7889, 7
    %v7891 = vsub.s32 %v7888, %v7890
    %v7892 = vrot.slane %v7878, %v7891
    %v7893 = vcombine.low %v7860, %v7876
    %v7894 = vcombine.high %v7860, %v7876
    %v7896 = vunpack.c.l.s4 1934713408
    %v7897 = vunpack.c.0.s8 %v7896
    %v7898 = vlaneseq
    %v7899 = vshrl.u32 %v7898, 7
    %v7900 = vsub.s32 %v7897, %v7899
    %v7901 = vrot.slane %v7893, %v7900
    %v7903 = vunpack.c.l.s4 1934713408
    %v7904 = vunpack.c.0.s8 %v7903
    %v7905 = vlaneseq
    %v7906 = vshrl.u32 %v7905, 7
    %v7907 = vsub.s32 %v7904, %v7906
    %v7908 = vrot.slane %v7894, %v7907
    %v7909 = vcombine.high %v7885, 0.0
    %v7910 = vcombine.high %v7892, 0.0
    %v7911 = vcombine.high %v7901, 0.0
    %v7912 = vcombine.high %v7908, 0.0
    %v7913 = vcombine.low %v7824, %v7832
    %v7914 = vcombine.high %v7824, %v7832
    %v7916 = vunpack.c.l.s4 1983009808
    %v7917 = vunpack.c.0.s8 %v7916
    %v7918 = vlaneseq
    %v7919 = vshrl.u32 %v7918, 7
    %v7920 = vsub.s32 %v7917, %v7919
    %v7921 = vrot.slane %v7913, %v7920
    %v7923 = vunpack.c.l.s4 1983009808
    %v7924 = vunpack.c.0.s8 %v7923
    %v7925 = vlaneseq
    %v7926 = vshrl.u32 %v7925, 7
    %v7927 = vsub.s32 %v7924, %v7926
    %v7928 = vrot.slane %v7914, %v7927
    %v7929 = vcombine.low %v7828, %v7836
    %v7930 = vcombine.high %v7828, %v7836
    %v7932 = vunpack.c.l.s4 1983009808
    %v7933 = vunpack.c.0.s8 %v7932
    %v7934 = vlaneseq
    %v7935 = vshrl.u32 %v7934, 7
    %v7936 = vsub.s32 %v7933, %v7935
    %v7937 = vrot.slane %v7929, %v7936
    %v7939 = vunpack.c.l.s4 1983009808
    %v7940 = vunpack.c.0.s8 %v7939
    %v7941 = vlaneseq
    %v7942 = vshrl.u32 %v7941, 7
    %v7943 = vsub.s32 %v7940, %v7942
    %v7944 = vrot.slane %v7930, %v7943
    %v7945 = vcombine.low %v7921, %v7937
    %v7946 = vcombine.high %v7921, %v7937
    %v7948 = vunpack.c.l.s4 1934713408
    %v7949 = vunpack.c.0.s8 %v7948
    %v7950 = vlaneseq
    %v7951 = vshrl.u32 %v7950, 7
    %v7952 = vsub.s32 %v7949, %v7951
    %v7953 = vrot.slane %v7945, %v7952
    %v7955 = vunpack.c.l.s4 1934713408
    %v7956 = vunpack.c.0.s8 %v7955
    %v7957 = vlaneseq
    %v7958 = vshrl.u32 %v7957, 7
    %v7959 = vsub.s32 %v7956, %v7958
    %v7960 = vrot.slane %v7946, %v7959
    %v7961 = vcombine.low %v7928, %v7944
    %v7962 = vcombine.high %v7928, %v7944
    %v7964 = vunpack.c.l.s4 1934713408
    %v7965 = vunpack.c.0.s8 %v7964
    %v7966 = vlaneseq
    %v7967 = vshrl.u32 %v7966, 7
    %v7968 = vsub.s32 %v7965, %v7967
    %v7969 = vrot.slane %v7961, %v7968
    %v7971 = vunpack.c.l.s4 1934713408
    %v7972 = vunpack.c.0.s8 %v7971
    %v7973 = vlaneseq
    %v7974 = vshrl.u32 %v7973, 7
    %v7975 = vsub.s32 %v7972, %v7974
    %v7976 = vrot.slane %v7962, %v7975
    %v7977 = vcombine.high %v7953, 0.0
    %v7978 = vcombine.high %v7960, 0.0
    %v7979 = vcombine.high %v7969, 0.0
    %v7980 = vcombine.high %v7976, 0.0
    %7982 = vrot.lane.b32.xlu0 %v7909, 16
    %v7983 = vpop.permute.xlu0 %7982
    %7986 = vrot.lane.b32.xlu0 %v7892, 32
    %v7987 = vpop.permute.xlu0 %7986
    %7990 = vrot.lane.b32.xlu0 %v7910, 48
    %v7991 = vpop.permute.xlu0 %7990
    %7994 = vrot.lane.b32.xlu0 %v7901, 64
    %v7995 = vpop.permute.xlu0 %7994
    %7998 = vrot.lane.b32.xlu0 %v7911, 80
    %v7999 = vpop.permute.xlu0 %7998
    %8002 = vrot.lane.b32.xlu0 %v7908, 96
    %v8003 = vpop.permute.xlu0 %8002
    %8006 = vrot.lane.b32.xlu0 %v7912, 112
    %v8007 = vpop.permute.xlu0 %8006
    %8010 = vrot.lane.b32.xlu0 %v7977, 16
    %v8011 = vpop.permute.xlu0 %8010
    %8014 = vrot.lane.b32.xlu0 %v7960, 32
    %v8015 = vpop.permute.xlu0 %8014
    %8018 = vrot.lane.b32.xlu0 %v7978, 48
    %v8019 = vpop.permute.xlu0 %8018
    %8022 = vrot.lane.b32.xlu0 %v7969, 64
    %v8023 = vpop.permute.xlu0 %8022
    %8026 = vrot.lane.b32.xlu0 %v7979, 80
    %v8027 = vpop.permute.xlu0 %8026
    %8030 = vrot.lane.b32.xlu0 %v7976, 96
    %v8031 = vpop.permute.xlu0 %8030
    %8034 = vrot.lane.b32.xlu0 %v7980, 112
    %v8035 = vpop.permute.xlu0 %8034
    %v8037 = vsel %vm364, %v7885, %v7983
    %v8038 = vsel %vm366, %v8037, %v7987
    %v8039 = vsel %vm368, %v8038, %v7991
    %v8040 = vsel %vm370, %v8039, %v7995
    %v8041 = vsel %vm372, %v8040, %v7999
    %v8042 = vsel %vm374, %v8041, %v8003
    %v8043 = vsel %vm376, %v8042, %v8007
    %v8044 = vsel %vm364, %v7953, %v8011
    %v8045 = vsel %vm366, %v8044, %v8015
    %v8046 = vsel %vm368, %v8045, %v8019
    %v8047 = vsel %vm370, %v8046, %v8023
    %v8048 = vsel %vm372, %v8047, %v8027
    %v8049 = vsel %vm374, %v8048, %v8031
    %v8050 = vsel %vm376, %v8049, %v8035
    %8051 = vst [vmem:[#allocation3 + $0x30] sm:$0xf] %v8043
    %8052 = vst [vmem:[#allocation3 + $0x38] sm:$0xf] %v8050
    %v8053 = vld [vmem:[%s2331 + $0x1] sm:$0xff]
    %v8054 = vld [vmem:[%s2331 + $0x9] sm:$0xff]
    %v8055 = vld [vmem:[%s2331 + $0x19] sm:$0xff]
    %v8056 = vld [vmem:[%s2331 + $0x21] sm:$0xff]
    %v8057 = vld [vmem:[%s2331 + $0x31] sm:$0xff]
    %v8058 = vld [vmem:[%s2331 + $0x39] sm:$0xff]
    %v8059 = vld [vmem:[%s2331 + $0x49] sm:$0xff]
    %v8060 = vld [vmem:[%s2331 + $0x51] sm:$0xff]
    %v8061 = vcombine.low %v8053, %v8057
    %v8062 = vcombine.high %v8053, %v8057
    %v8064 = vunpack.c.l.s4 1983009808
    %v8065 = vunpack.c.0.s8 %v8064
    %v8066 = vlaneseq
    %v8067 = vshrl.u32 %v8066, 7
    %v8068 = vsub.s32 %v8065, %v8067
    %v8069 = vrot.slane %v8061, %v8068
    %v8071 = vunpack.c.l.s4 1983009808
    %v8072 = vunpack.c.0.s8 %v8071
    %v8073 = vlaneseq
    %v8074 = vshrl.u32 %v8073, 7
    %v8075 = vsub.s32 %v8072, %v8074
    %v8076 = vrot.slane %v8062, %v8075
    %v8077 = vcombine.low %v8055, %v8059
    %v8078 = vcombine.high %v8055, %v8059
    %v8080 = vunpack.c.l.s4 1983009808
    %v8081 = vunpack.c.0.s8 %v8080
    %v8082 = vlaneseq
    %v8083 = vshrl.u32 %v8082, 7
    %v8084 = vsub.s32 %v8081, %v8083
    %v8085 = vrot.slane %v8077, %v8084
    %v8087 = vunpack.c.l.s4 1983009808
    %v8088 = vunpack.c.0.s8 %v8087
    %v8089 = vlaneseq
    %v8090 = vshrl.u32 %v8089, 7
    %v8091 = vsub.s32 %v8088, %v8090
    %v8092 = vrot.slane %v8078, %v8091
    %v8093 = vcombine.low %v8069, %v8085
    %v8094 = vcombine.high %v8069, %v8085
    %v8096 = vunpack.c.l.s4 1934713408
    %v8097 = vunpack.c.0.s8 %v8096
    %v8098 = vlaneseq
    %v8099 = vshrl.u32 %v8098, 7
    %v8100 = vsub.s32 %v8097, %v8099
    %v8101 = vrot.slane %v8093, %v8100
    %v8103 = vunpack.c.l.s4 1934713408
    %v8104 = vunpack.c.0.s8 %v8103
    %v8105 = vlaneseq
    %v8106 = vshrl.u32 %v8105, 7
    %v8107 = vsub.s32 %v8104, %v8106
    %v8108 = vrot.slane %v8094, %v8107
    %v8109 = vcombine.low %v8076, %v8092
    %v8110 = vcombine.high %v8076, %v8092
    %v8112 = vunpack.c.l.s4 1934713408
    %v8113 = vunpack.c.0.s8 %v8112
    %v8114 = vlaneseq
    %v8115 = vshrl.u32 %v8114, 7
    %v8116 = vsub.s32 %v8113, %v8115
    %v8117 = vrot.slane %v8109, %v8116
    %v8119 = vunpack.c.l.s4 1934713408
    %v8120 = vunpack.c.0.s8 %v8119
    %v8121 = vlaneseq
    %v8122 = vshrl.u32 %v8121, 7
    %v8123 = vsub.s32 %v8120, %v8122
    %v8124 = vrot.slane %v8110, %v8123
    %v8125 = vcombine.high %v8101, 0.0
    %v8126 = vcombine.high %v8108, 0.0
    %v8127 = vcombine.high %v8117, 0.0
    %v8128 = vcombine.high %v8124, 0.0
    %v8129 = vcombine.low %v8054, %v8058
    %v8130 = vcombine.high %v8054, %v8058
    %v8132 = vunpack.c.l.s4 1983009808
    %v8133 = vunpack.c.0.s8 %v8132
    %v8134 = vlaneseq
    %v8135 = vshrl.u32 %v8134, 7
    %v8136 = vsub.s32 %v8133, %v8135
    %v8137 = vrot.slane %v8129, %v8136
    %v8139 = vunpack.c.l.s4 1983009808
    %v8140 = vunpack.c.0.s8 %v8139
    %v8141 = vlaneseq
    %v8142 = vshrl.u32 %v8141, 7
    %v8143 = vsub.s32 %v8140, %v8142
    %v8144 = vrot.slane %v8130, %v8143
    %v8145 = vcombine.low %v8056, %v8060
    %v8146 = vcombine.high %v8056, %v8060
    %v8148 = vunpack.c.l.s4 1983009808
    %v8149 = vunpack.c.0.s8 %v8148
    %v8150 = vlaneseq
    %v8151 = vshrl.u32 %v8150, 7
    %v8152 = vsub.s32 %v8149, %v8151
    %v8153 = vrot.slane %v8145, %v8152
    %v8155 = vunpack.c.l.s4 1983009808
    %v8156 = vunpack.c.0.s8 %v8155
    %v8157 = vlaneseq
    %v8158 = vshrl.u32 %v8157, 7
    %v8159 = vsub.s32 %v8156, %v8158
    %v8160 = vrot.slane %v8146, %v8159
    %v8161 = vcombine.low %v8137, %v8153
    %v8162 = vcombine.high %v8137, %v8153
    %v8164 = vunpack.c.l.s4 1934713408
    %v8165 = vunpack.c.0.s8 %v8164
    %v8166 = vlaneseq
    %v8167 = vshrl.u32 %v8166, 7
    %v8168 = vsub.s32 %v8165, %v8167
    %v8169 = vrot.slane %v8161, %v8168
    %v8171 = vunpack.c.l.s4 1934713408
    %v8172 = vunpack.c.0.s8 %v8171
    %v8173 = vlaneseq
    %v8174 = vshrl.u32 %v8173, 7
    %v8175 = vsub.s32 %v8172, %v8174
    %v8176 = vrot.slane %v8162, %v8175
    %v8177 = vcombine.low %v8144, %v8160
    %v8178 = vcombine.high %v8144, %v8160
    %v8180 = vunpack.c.l.s4 1934713408
    %v8181 = vunpack.c.0.s8 %v8180
    %v8182 = vlaneseq
    %v8183 = vshrl.u32 %v8182, 7
    %v8184 = vsub.s32 %v8181, %v8183
    %v8185 = vrot.slane %v8177, %v8184
    %v8187 = vunpack.c.l.s4 1934713408
    %v8188 = vunpack.c.0.s8 %v8187
    %v8189 = vlaneseq
    %v8190 = vshrl.u32 %v8189, 7
    %v8191 = vsub.s32 %v8188, %v8190
    %v8192 = vrot.slane %v8178, %v8191
    %v8193 = vcombine.high %v8169, 0.0
    %v8194 = vcombine.high %v8176, 0.0
    %v8195 = vcombine.high %v8185, 0.0
    %v8196 = vcombine.high %v8192, 0.0
    %8198 = vrot.lane.b32.xlu0 %v8125, 16
    %v8199 = vpop.permute.xlu0 %8198
    %8202 = vrot.lane.b32.xlu0 %v8108, 32
    %v8203 = vpop.permute.xlu0 %8202
    %8206 = vrot.lane.b32.xlu0 %v8126, 48
    %v8207 = vpop.permute.xlu0 %8206
    %8210 = vrot.lane.b32.xlu0 %v8117, 64
    %v8211 = vpop.permute.xlu0 %8210
    %8214 = vrot.lane.b32.xlu0 %v8127, 80
    %v8215 = vpop.permute.xlu0 %8214
    %8218 = vrot.lane.b32.xlu0 %v8124, 96
    %v8219 = vpop.permute.xlu0 %8218
    %8222 = vrot.lane.b32.xlu0 %v8128, 112
    %v8223 = vpop.permute.xlu0 %8222
    %8226 = vrot.lane.b32.xlu0 %v8193, 16
    %v8227 = vpop.permute.xlu0 %8226
    %8230 = vrot.lane.b32.xlu0 %v8176, 32
    %v8231 = vpop.permute.xlu0 %8230
    %8234 = vrot.lane.b32.xlu0 %v8194, 48
    %v8235 = vpop.permute.xlu0 %8234
    %8238 = vrot.lane.b32.xlu0 %v8185, 64
    %v8239 = vpop.permute.xlu0 %8238
    %8242 = vrot.lane.b32.xlu0 %v8195, 80
    %v8243 = vpop.permute.xlu0 %8242
    %8246 = vrot.lane.b32.xlu0 %v8192, 96
    %v8247 = vpop.permute.xlu0 %8246
    %8250 = vrot.lane.b32.xlu0 %v8196, 112
    %v8251 = vpop.permute.xlu0 %8250
    %v8253 = vsel %vm364, %v8101, %v8199
    %v8254 = vsel %vm366, %v8253, %v8203
    %v8255 = vsel %vm368, %v8254, %v8207
    %v8256 = vsel %vm370, %v8255, %v8211
    %v8257 = vsel %vm372, %v8256, %v8215
    %v8258 = vsel %vm374, %v8257, %v8219
    %v8259 = vsel %vm376, %v8258, %v8223
    %v8260 = vsel %vm364, %v8169, %v8227
    %v8261 = vsel %vm366, %v8260, %v8231
    %v8262 = vsel %vm368, %v8261, %v8235
    %v8263 = vsel %vm370, %v8262, %v8239
    %v8264 = vsel %vm372, %v8263, %v8243
    %v8265 = vsel %vm374, %v8264, %v8247
    %v8266 = vsel %vm376, %v8265, %v8251
    %v8269 = vrot.slane %v8259, 4
    %v8270 = vrot.slane %v8266, 4
    %8273 = vst [vmem:[#allocation3 + $0x30] sm:$0xf0] %v8269
    %8274 = vst [vmem:[#allocation3 + $0x38] sm:$0xf0] %v8270
    %v8275 = vld [vmem:[%s2331 + $0x1] sm:$0xff]
    %v8276 = vld [vmem:[%s2331 + $0x9] sm:$0xff]
    %v8277 = vld [vmem:[%s2331 + $0x19] sm:$0xff]
    %v8278 = vld [vmem:[%s2331 + $0x21] sm:$0xff]
    %v8279 = vld [vmem:[%s2331 + $0x31] sm:$0xff]
    %v8280 = vld [vmem:[%s2331 + $0x39] sm:$0xff]
    %v8281 = vld [vmem:[%s2331 + $0x49] sm:$0xff]
    %v8282 = vld [vmem:[%s2331 + $0x51] sm:$0xff]
    %8291 = vrot.lane.b32.xlu0 %v8275, 127
    %v8292 = vpop.permute.xlu0 %8291
    %8293 = vrot.lane.b32.xlu0 %v8276, 127
    %v8294 = vpop.permute.xlu0 %8293
    %8295 = vrot.lane.b32.xlu0 %v8277, 127
    %v8296 = vpop.permute.xlu0 %8295
    %8297 = vrot.lane.b32.xlu0 %v8278, 127
    %v8298 = vpop.permute.xlu0 %8297
    %8299 = vrot.lane.b32.xlu0 %v8279, 127
    %v8300 = vpop.permute.xlu0 %8299
    %8301 = vrot.lane.b32.xlu0 %v8280, 127
    %v8302 = vpop.permute.xlu0 %8301
    %8303 = vrot.lane.b32.xlu0 %v8281, 127
    %v8304 = vpop.permute.xlu0 %8303
    %8305 = vrot.lane.b32.xlu0 %v8282, 127
    %v8306 = vpop.permute.xlu0 %8305
    %v8315 = vcombine.low %v8292, %v8300
    %v8316 = vcombine.high %v8292, %v8300
    %v8318 = vunpack.c.l.s4 1983009808
    %v8319 = vunpack.c.0.s8 %v8318
    %v8320 = vlaneseq
    %v8321 = vshrl.u32 %v8320, 7
    %v8322 = vsub.s32 %v8319, %v8321
    %v8323 = vrot.slane %v8315, %v8322
    %v8325 = vunpack.c.l.s4 1983009808
    %v8326 = vunpack.c.0.s8 %v8325
    %v8327 = vlaneseq
    %v8328 = vshrl.u32 %v8327, 7
    %v8329 = vsub.s32 %v8326, %v8328
    %v8330 = vrot.slane %v8316, %v8329
    %v8331 = vcombine.low %v8296, %v8304
    %v8332 = vcombine.high %v8296, %v8304
    %v8334 = vunpack.c.l.s4 1983009808
    %v8335 = vunpack.c.0.s8 %v8334
    %v8336 = vlaneseq
    %v8337 = vshrl.u32 %v8336, 7
    %v8338 = vsub.s32 %v8335, %v8337
    %v8339 = vrot.slane %v8331, %v8338
    %v8341 = vunpack.c.l.s4 1983009808
    %v8342 = vunpack.c.0.s8 %v8341
    %v8343 = vlaneseq
    %v8344 = vshrl.u32 %v8343, 7
    %v8345 = vsub.s32 %v8342, %v8344
    %v8346 = vrot.slane %v8332, %v8345
    %v8347 = vcombine.low %v8323, %v8339
    %v8348 = vcombine.high %v8323, %v8339
    %v8350 = vunpack.c.l.s4 1934713408
    %v8351 = vunpack.c.0.s8 %v8350
    %v8352 = vlaneseq
    %v8353 = vshrl.u32 %v8352, 7
    %v8354 = vsub.s32 %v8351, %v8353
    %v8355 = vrot.slane %v8347, %v8354
    %v8357 = vunpack.c.l.s4 1934713408
    %v8358 = vunpack.c.0.s8 %v8357
    %v8359 = vlaneseq
    %v8360 = vshrl.u32 %v8359, 7
    %v8361 = vsub.s32 %v8358, %v8360
    %v8362 = vrot.slane %v8348, %v8361
    %v8363 = vcombine.low %v8330, %v8346
    %v8364 = vcombine.high %v8330, %v8346
    %v8366 = vunpack.c.l.s4 1934713408
    %v8367 = vunpack.c.0.s8 %v8366
    %v8368 = vlaneseq
    %v8369 = vshrl.u32 %v8368, 7
    %v8370 = vsub.s32 %v8367, %v8369
    %v8371 = vrot.slane %v8363, %v8370
    %v8373 = vunpack.c.l.s4 1934713408
    %v8374 = vunpack.c.0.s8 %v8373
    %v8375 = vlaneseq
    %v8376 = vshrl.u32 %v8375, 7
    %v8377 = vsub.s32 %v8374, %v8376
    %v8378 = vrot.slane %v8364, %v8377
    %v8379 = vcombine.high %v8355, 0.0
    %v8380 = vcombine.high %v8362, 0.0
    %v8381 = vcombine.high %v8371, 0.0
    %v8382 = vcombine.high %v8378, 0.0
    %v8383 = vcombine.low %v8294, %v8302
    %v8384 = vcombine.high %v8294, %v8302
    %v8386 = vunpack.c.l.s4 1983009808
    %v8387 = vunpack.c.0.s8 %v8386
    %v8388 = vlaneseq
    %v8389 = vshrl.u32 %v8388, 7
    %v8390 = vsub.s32 %v8387, %v8389
    %v8391 = vrot.slane %v8383, %v8390
    %v8393 = vunpack.c.l.s4 1983009808
    %v8394 = vunpack.c.0.s8 %v8393
    %v8395 = vlaneseq
    %v8396 = vshrl.u32 %v8395, 7
    %v8397 = vsub.s32 %v8394, %v8396
    %v8398 = vrot.slane %v8384, %v8397
    %v8399 = vcombine.low %v8298, %v8306
    %v8400 = vcombine.high %v8298, %v8306
    %v8402 = vunpack.c.l.s4 1983009808
    %v8403 = vunpack.c.0.s8 %v8402
    %v8404 = vlaneseq
    %v8405 = vshrl.u32 %v8404, 7
    %v8406 = vsub.s32 %v8403, %v8405
    %v8407 = vrot.slane %v8399, %v8406
    %v8409 = vunpack.c.l.s4 1983009808
    %v8410 = vunpack.c.0.s8 %v8409
    %v8411 = vlaneseq
    %v8412 = vshrl.u32 %v8411, 7
    %v8413 = vsub.s32 %v8410, %v8412
    %v8414 = vrot.slane %v8400, %v8413
    %v8415 = vcombine.low %v8391, %v8407
    %v8416 = vcombine.high %v8391, %v8407
    %v8418 = vunpack.c.l.s4 1934713408
    %v8419 = vunpack.c.0.s8 %v8418
    %v8420 = vlaneseq
    %v8421 = vshrl.u32 %v8420, 7
    %v8422 = vsub.s32 %v8419, %v8421
    %v8423 = vrot.slane %v8415, %v8422
    %v8425 = vunpack.c.l.s4 1934713408
    %v8426 = vunpack.c.0.s8 %v8425
    %v8427 = vlaneseq
    %v8428 = vshrl.u32 %v8427, 7
    %v8429 = vsub.s32 %v8426, %v8428
    %v8430 = vrot.slane %v8416, %v8429
    %v8431 = vcombine.low %v8398, %v8414
    %v8432 = vcombine.high %v8398, %v8414
    %v8434 = vunpack.c.l.s4 1934713408
    %v8435 = vunpack.c.0.s8 %v8434
    %v8436 = vlaneseq
    %v8437 = vshrl.u32 %v8436, 7
    %v8438 = vsub.s32 %v8435, %v8437
    %v8439 = vrot.slane %v8431, %v8438
    %v8441 = vunpack.c.l.s4 1934713408
    %v8442 = vunpack.c.0.s8 %v8441
    %v8443 = vlaneseq
    %v8444 = vshrl.u32 %v8443, 7
    %v8445 = vsub.s32 %v8442, %v8444
    %v8446 = vrot.slane %v8432, %v8445
    %v8447 = vcombine.high %v8423, 0.0
    %v8448 = vcombine.high %v8430, 0.0
    %v8449 = vcombine.high %v8439, 0.0
    %v8450 = vcombine.high %v8446, 0.0
    %8452 = vrot.lane.b32.xlu0 %v8379, 16
    %v8453 = vpop.permute.xlu0 %8452
    %8456 = vrot.lane.b32.xlu0 %v8362, 32
    %v8457 = vpop.permute.xlu0 %8456
    %8460 = vrot.lane.b32.xlu0 %v8380, 48
    %v8461 = vpop.permute.xlu0 %8460
    %8464 = vrot.lane.b32.xlu0 %v8371, 64
    %v8465 = vpop.permute.xlu0 %8464
    %8468 = vrot.lane.b32.xlu0 %v8381, 80
    %v8469 = vpop.permute.xlu0 %8468
    %8472 = vrot.lane.b32.xlu0 %v8378, 96
    %v8473 = vpop.permute.xlu0 %8472
    %8476 = vrot.lane.b32.xlu0 %v8382, 112
    %v8477 = vpop.permute.xlu0 %8476
    %8480 = vrot.lane.b32.xlu0 %v8447, 16
    %v8481 = vpop.permute.xlu0 %8480
    %8484 = vrot.lane.b32.xlu0 %v8430, 32
    %v8485 = vpop.permute.xlu0 %8484
    %8488 = vrot.lane.b32.xlu0 %v8448, 48
    %v8489 = vpop.permute.xlu0 %8488
    %8492 = vrot.lane.b32.xlu0 %v8439, 64
    %v8493 = vpop.permute.xlu0 %8492
    %8496 = vrot.lane.b32.xlu0 %v8449, 80
    %v8497 = vpop.permute.xlu0 %8496
    %8500 = vrot.lane.b32.xlu0 %v8446, 96
    %v8501 = vpop.permute.xlu0 %8500
    %8504 = vrot.lane.b32.xlu0 %v8450, 112
    %v8505 = vpop.permute.xlu0 %8504
    %v8507 = vsel %vm364, %v8355, %v8453
    %v8508 = vsel %vm366, %v8507, %v8457
    %v8509 = vsel %vm368, %v8508, %v8461
    %v8510 = vsel %vm370, %v8509, %v8465
    %v8511 = vsel %vm372, %v8510, %v8469
    %v8512 = vsel %vm374, %v8511, %v8473
    %v8513 = vsel %vm376, %v8512, %v8477
    %v8514 = vsel %vm364, %v8423, %v8481
    %v8515 = vsel %vm366, %v8514, %v8485
    %v8516 = vsel %vm368, %v8515, %v8489
    %v8517 = vsel %vm370, %v8516, %v8493
    %v8518 = vsel %vm372, %v8517, %v8497
    %v8519 = vsel %vm374, %v8518, %v8501
    %v8520 = vsel %vm376, %v8519, %v8505
    %8521 = vst [vmem:[#allocation3 + $0x50] sm:$0xf] %v8513
    %8522 = vst [vmem:[#allocation3 + $0x58] sm:$0xf] %v8520
    %v8523 = vld [vmem:[%s2331 + $0x1] sm:$0xff]
    %v8524 = vld [vmem:[%s2331 + $0x9] sm:$0xff]
    %v8525 = vld [vmem:[%s2331 + $0x19] sm:$0xff]
    %v8526 = vld [vmem:[%s2331 + $0x21] sm:$0xff]
    %v8527 = vld [vmem:[%s2331 + $0x31] sm:$0xff]
    %v8528 = vld [vmem:[%s2331 + $0x39] sm:$0xff]
    %v8529 = vld [vmem:[%s2331 + $0x49] sm:$0xff]
    %v8530 = vld [vmem:[%s2331 + $0x51] sm:$0xff]
    %8539 = vrot.lane.b32.xlu0 %v8523, 126
    %v8540 = vpop.permute.xlu0 %8539
    %8541 = vrot.lane.b32.xlu0 %v8524, 126
    %v8542 = vpop.permute.xlu0 %8541
    %8543 = vrot.lane.b32.xlu0 %v8525, 126
    %v8544 = vpop.permute.xlu0 %8543
    %8545 = vrot.lane.b32.xlu0 %v8526, 126
    %v8546 = vpop.permute.xlu0 %8545
    %8547 = vrot.lane.b32.xlu0 %v8527, 126
    %v8548 = vpop.permute.xlu0 %8547
    %8549 = vrot.lane.b32.xlu0 %v8528, 126
    %v8550 = vpop.permute.xlu0 %8549
    %8551 = vrot.lane.b32.xlu0 %v8529, 126
    %v8552 = vpop.permute.xlu0 %8551
    %8553 = vrot.lane.b32.xlu0 %v8530, 126
    %v8554 = vpop.permute.xlu0 %8553
    %v8563 = vcombine.low %v8540, %v8548
    %v8564 = vcombine.high %v8540, %v8548
    %v8566 = vunpack.c.l.s4 1983009808
    %v8567 = vunpack.c.0.s8 %v8566
    %v8568 = vlaneseq
    %v8569 = vshrl.u32 %v8568, 7
    %v8570 = vsub.s32 %v8567, %v8569
    %v8571 = vrot.slane %v8563, %v8570
    %v8573 = vunpack.c.l.s4 1983009808
    %v8574 = vunpack.c.0.s8 %v8573
    %v8575 = vlaneseq
    %v8576 = vshrl.u32 %v8575, 7
    %v8577 = vsub.s32 %v8574, %v8576
    %v8578 = vrot.slane %v8564, %v8577
    %v8579 = vcombine.low %v8544, %v8552
    %v8580 = vcombine.high %v8544, %v8552
    %v8582 = vunpack.c.l.s4 1983009808
    %v8583 = vunpack.c.0.s8 %v8582
    %v8584 = vlaneseq
    %v8585 = vshrl.u32 %v8584, 7
    %v8586 = vsub.s32 %v8583, %v8585
    %v8587 = vrot.slane %v8579, %v8586
    %v8589 = vunpack.c.l.s4 1983009808
    %v8590 = vunpack.c.0.s8 %v8589
    %v8591 = vlaneseq
    %v8592 = vshrl.u32 %v8591, 7
    %v8593 = vsub.s32 %v8590, %v8592
    %v8594 = vrot.slane %v8580, %v8593
    %v8595 = vcombine.low %v8571, %v8587
    %v8596 = vcombine.high %v8571, %v8587
    %v8598 = vunpack.c.l.s4 1934713408
    %v8599 = vunpack.c.0.s8 %v8598
    %v8600 = vlaneseq
    %v8601 = vshrl.u32 %v8600, 7
    %v8602 = vsub.s32 %v8599, %v8601
    %v8603 = vrot.slane %v8595, %v8602
    %v8605 = vunpack.c.l.s4 1934713408
    %v8606 = vunpack.c.0.s8 %v8605
    %v8607 = vlaneseq
    %v8608 = vshrl.u32 %v8607, 7
    %v8609 = vsub.s32 %v8606, %v8608
    %v8610 = vrot.slane %v8596, %v8609
    %v8611 = vcombine.low %v8578, %v8594
    %v8612 = vcombine.high %v8578, %v8594
    %v8614 = vunpack.c.l.s4 1934713408
    %v8615 = vunpack.c.0.s8 %v8614
    %v8616 = vlaneseq
    %v8617 = vshrl.u32 %v8616, 7
    %v8618 = vsub.s32 %v8615, %v8617
    %v8619 = vrot.slane %v8611, %v8618
    %v8621 = vunpack.c.l.s4 1934713408
    %v8622 = vunpack.c.0.s8 %v8621
    %v8623 = vlaneseq
    %v8624 = vshrl.u32 %v8623, 7
    %v8625 = vsub.s32 %v8622, %v8624
    %v8626 = vrot.slane %v8612, %v8625
    %v8627 = vcombine.high %v8603, 0.0
    %v8628 = vcombine.high %v8610, 0.0
    %v8629 = vcombine.high %v8619, 0.0
    %v8630 = vcombine.high %v8626, 0.0
    %v8631 = vcombine.low %v8542, %v8550
    %v8632 = vcombine.high %v8542, %v8550
    %v8634 = vunpack.c.l.s4 1983009808
    %v8635 = vunpack.c.0.s8 %v8634
    %v8636 = vlaneseq
    %v8637 = vshrl.u32 %v8636, 7
    %v8638 = vsub.s32 %v8635, %v8637
    %v8639 = vrot.slane %v8631, %v8638
    %v8641 = vunpack.c.l.s4 1983009808
    %v8642 = vunpack.c.0.s8 %v8641
    %v8643 = vlaneseq
    %v8644 = vshrl.u32 %v8643, 7
    %v8645 = vsub.s32 %v8642, %v8644
    %v8646 = vrot.slane %v8632, %v8645
    %v8647 = vcombine.low %v8546, %v8554
    %v8648 = vcombine.high %v8546, %v8554
    %v8650 = vunpack.c.l.s4 1983009808
    %v8651 = vunpack.c.0.s8 %v8650
    %v8652 = vlaneseq
    %v8653 = vshrl.u32 %v8652, 7
    %v8654 = vsub.s32 %v8651, %v8653
    %v8655 = vrot.slane %v8647, %v8654
    %v8657 = vunpack.c.l.s4 1983009808
    %v8658 = vunpack.c.0.s8 %v8657
    %v8659 = vlaneseq
    %v8660 = vshrl.u32 %v8659, 7
    %v8661 = vsub.s32 %v8658, %v8660
    %v8662 = vrot.slane %v8648, %v8661
    %v8663 = vcombine.low %v8639, %v8655
    %v8664 = vcombine.high %v8639, %v8655
    %v8666 = vunpack.c.l.s4 1934713408
    %v8667 = vunpack.c.0.s8 %v8666
    %v8668 = vlaneseq
    %v8669 = vshrl.u32 %v8668, 7
    %v8670 = vsub.s32 %v8667, %v8669
    %v8671 = vrot.slane %v8663, %v8670
    %v8673 = vunpack.c.l.s4 1934713408
    %v8674 = vunpack.c.0.s8 %v8673
    %v8675 = vlaneseq
    %v8676 = vshrl.u32 %v8675, 7
    %v8677 = vsub.s32 %v8674, %v8676
    %v8678 = vrot.slane %v8664, %v8677
    %v8679 = vcombine.low %v8646, %v8662
    %v8680 = vcombine.high %v8646, %v8662
    %v8682 = vunpack.c.l.s4 1934713408
    %v8683 = vunpack.c.0.s8 %v8682
    %v8684 = vlaneseq
    %v8685 = vshrl.u32 %v8684, 7
    %v8686 = vsub.s32 %v8683, %v8685
    %v8687 = vrot.slane %v8679, %v8686
    %v8689 = vunpack.c.l.s4 1934713408
    %v8690 = vunpack.c.0.s8 %v8689
    %v8691 = vlaneseq
    %v8692 = vshrl.u32 %v8691, 7
    %v8693 = vsub.s32 %v8690, %v8692
    %v8694 = vrot.slane %v8680, %v8693
    %v8695 = vcombine.high %v8671, 0.0
    %v8696 = vcombine.high %v8678, 0.0
    %v8697 = vcombine.high %v8687, 0.0
    %v8698 = vcombine.high %v8694, 0.0
    %8700 = vrot.lane.b32.xlu0 %v8627, 16
    %v8701 = vpop.permute.xlu0 %8700
    %8704 = vrot.lane.b32.xlu0 %v8610, 32
    %v8705 = vpop.permute.xlu0 %8704
    %8708 = vrot.lane.b32.xlu0 %v8628, 48
    %v8709 = vpop.permute.xlu0 %8708
    %8712 = vrot.lane.b32.xlu0 %v8619, 64
    %v8713 = vpop.permute.xlu0 %8712
    %8716 = vrot.lane.b32.xlu0 %v8629, 80
    %v8717 = vpop.permute.xlu0 %8716
    %8720 = vrot.lane.b32.xlu0 %v8626, 96
    %v8721 = vpop.permute.xlu0 %8720
    %8724 = vrot.lane.b32.xlu0 %v8630, 112
    %v8725 = vpop.permute.xlu0 %8724
    %8728 = vrot.lane.b32.xlu0 %v8695, 16
    %v8729 = vpop.permute.xlu0 %8728
    %8732 = vrot.lane.b32.xlu0 %v8678, 32
    %v8733 = vpop.permute.xlu0 %8732
    %8736 = vrot.lane.b32.xlu0 %v8696, 48
    %v8737 = vpop.permute.xlu0 %8736
    %8740 = vrot.lane.b32.xlu0 %v8687, 64
    %v8741 = vpop.permute.xlu0 %8740
    %8744 = vrot.lane.b32.xlu0 %v8697, 80
    %v8745 = vpop.permute.xlu0 %8744
    %8748 = vrot.lane.b32.xlu0 %v8694, 96
    %v8749 = vpop.permute.xlu0 %8748
    %8752 = vrot.lane.b32.xlu0 %v8698, 112
    %v8753 = vpop.permute.xlu0 %8752
    %v8755 = vsel %vm364, %v8603, %v8701
    %v8756 = vsel %vm366, %v8755, %v8705
    %v8757 = vsel %vm368, %v8756, %v8709
    %v8758 = vsel %vm370, %v8757, %v8713
    %v8759 = vsel %vm372, %v8758, %v8717
    %v8760 = vsel %vm374, %v8759, %v8721
    %v8761 = vsel %vm376, %v8760, %v8725
    %v8762 = vsel %vm364, %v8671, %v8729
    %v8763 = vsel %vm366, %v8762, %v8733
    %v8764 = vsel %vm368, %v8763, %v8737
    %v8765 = vsel %vm370, %v8764, %v8741
    %v8766 = vsel %vm372, %v8765, %v8745
    %v8767 = vsel %vm374, %v8766, %v8749
    %v8768 = vsel %vm376, %v8767, %v8753
    %v8771 = vrot.slane %v8761, 4
    %v8772 = vrot.slane %v8768, 4
    %8775 = vst [vmem:[#allocation3 + $0x50] sm:$0xf0] %v8771
    %8776 = vst [vmem:[#allocation3 + $0x58] sm:$0xf0] %v8772
    %v8777 = vld [vmem:[%s2331 + $0x2] sm:$0xff]
    %v8778 = vld [vmem:[%s2331 + $0xa] sm:$0xff]
    %v8779 = vld [vmem:[%s2331 + $0x1a] sm:$0xff]
    %v8780 = vld [vmem:[%s2331 + $0x22] sm:$0xff]
    %v8781 = vld [vmem:[%s2331 + $0x32] sm:$0xff]
    %v8782 = vld [vmem:[%s2331 + $0x3a] sm:$0xff]
    %v8783 = vld [vmem:[%s2331 + $0x4a] sm:$0xff]
    %v8784 = vld [vmem:[%s2331 + $0x52] sm:$0xff]
    %v8785 = vcombine.low %v8777, %v8781
    %v8786 = vcombine.high %v8777, %v8781
    %v8788 = vunpack.c.l.s4 1983009808
    %v8789 = vunpack.c.0.s8 %v8788
    %v8790 = vlaneseq
    %v8791 = vshrl.u32 %v8790, 7
    %v8792 = vsub.s32 %v8789, %v8791
    %v8793 = vrot.slane %v8785, %v8792
    %v8795 = vunpack.c.l.s4 1983009808
    %v8796 = vunpack.c.0.s8 %v8795
    %v8797 = vlaneseq
    %v8798 = vshrl.u32 %v8797, 7
    %v8799 = vsub.s32 %v8796, %v8798
    %v8800 = vrot.slane %v8786, %v8799
    %v8801 = vcombine.low %v8779, %v8783
    %v8802 = vcombine.high %v8779, %v8783
    %v8804 = vunpack.c.l.s4 1983009808
    %v8805 = vunpack.c.0.s8 %v8804
    %v8806 = vlaneseq
    %v8807 = vshrl.u32 %v8806, 7
    %v8808 = vsub.s32 %v8805, %v8807
    %v8809 = vrot.slane %v8801, %v8808
    %v8811 = vunpack.c.l.s4 1983009808
    %v8812 = vunpack.c.0.s8 %v8811
    %v8813 = vlaneseq
    %v8814 = vshrl.u32 %v8813, 7
    %v8815 = vsub.s32 %v8812, %v8814
    %v8816 = vrot.slane %v8802, %v8815
    %v8817 = vcombine.low %v8793, %v8809
    %v8818 = vcombine.high %v8793, %v8809
    %v8820 = vunpack.c.l.s4 1934713408
    %v8821 = vunpack.c.0.s8 %v8820
    %v8822 = vlaneseq
    %v8823 = vshrl.u32 %v8822, 7
    %v8824 = vsub.s32 %v8821, %v8823
    %v8825 = vrot.slane %v8817, %v8824
    %v8827 = vunpack.c.l.s4 1934713408
    %v8828 = vunpack.c.0.s8 %v8827
    %v8829 = vlaneseq
    %v8830 = vshrl.u32 %v8829, 7
    %v8831 = vsub.s32 %v8828, %v8830
    %v8832 = vrot.slane %v8818, %v8831
    %v8833 = vcombine.low %v8800, %v8816
    %v8834 = vcombine.high %v8800, %v8816
    %v8836 = vunpack.c.l.s4 1934713408
    %v8837 = vunpack.c.0.s8 %v8836
    %v8838 = vlaneseq
    %v8839 = vshrl.u32 %v8838, 7
    %v8840 = vsub.s32 %v8837, %v8839
    %v8841 = vrot.slane %v8833, %v8840
    %v8843 = vunpack.c.l.s4 1934713408
    %v8844 = vunpack.c.0.s8 %v8843
    %v8845 = vlaneseq
    %v8846 = vshrl.u32 %v8845, 7
    %v8847 = vsub.s32 %v8844, %v8846
    %v8848 = vrot.slane %v8834, %v8847
    %v8849 = vcombine.high %v8825, 0.0
    %v8850 = vcombine.high %v8832, 0.0
    %v8851 = vcombine.high %v8841, 0.0
    %v8852 = vcombine.high %v8848, 0.0
    %v8853 = vcombine.low %v8778, %v8782
    %v8854 = vcombine.high %v8778, %v8782
    %v8856 = vunpack.c.l.s4 1983009808
    %v8857 = vunpack.c.0.s8 %v8856
    %v8858 = vlaneseq
    %v8859 = vshrl.u32 %v8858, 7
    %v8860 = vsub.s32 %v8857, %v8859
    %v8861 = vrot.slane %v8853, %v8860
    %v8863 = vunpack.c.l.s4 1983009808
    %v8864 = vunpack.c.0.s8 %v8863
    %v8865 = vlaneseq
    %v8866 = vshrl.u32 %v8865, 7
    %v8867 = vsub.s32 %v8864, %v8866
    %v8868 = vrot.slane %v8854, %v8867
    %v8869 = vcombine.low %v8780, %v8784
    %v8870 = vcombine.high %v8780, %v8784
    %v8872 = vunpack.c.l.s4 1983009808
    %v8873 = vunpack.c.0.s8 %v8872
    %v8874 = vlaneseq
    %v8875 = vshrl.u32 %v8874, 7
    %v8876 = vsub.s32 %v8873, %v8875
    %v8877 = vrot.slane %v8869, %v8876
    %v8879 = vunpack.c.l.s4 1983009808
    %v8880 = vunpack.c.0.s8 %v8879
    %v8881 = vlaneseq
    %v8882 = vshrl.u32 %v8881, 7
    %v8883 = vsub.s32 %v8880, %v8882
    %v8884 = vrot.slane %v8870, %v8883
    %v8885 = vcombine.low %v8861, %v8877
    %v8886 = vcombine.high %v8861, %v8877
    %v8888 = vunpack.c.l.s4 1934713408
    %v8889 = vunpack.c.0.s8 %v8888
    %v8890 = vlaneseq
    %v8891 = vshrl.u32 %v8890, 7
    %v8892 = vsub.s32 %v8889, %v8891
    %v8893 = vrot.slane %v8885, %v8892
    %v8895 = vunpack.c.l.s4 1934713408
    %v8896 = vunpack.c.0.s8 %v8895
    %v8897 = vlaneseq
    %v8898 = vshrl.u32 %v8897, 7
    %v8899 = vsub.s32 %v8896, %v8898
    %v8900 = vrot.slane %v8886, %v8899
    %v8901 = vcombine.low %v8868, %v8884
    %v8902 = vcombine.high %v8868, %v8884
    %v8904 = vunpack.c.l.s4 1934713408
    %v8905 = vunpack.c.0.s8 %v8904
    %v8906 = vlaneseq
    %v8907 = vshrl.u32 %v8906, 7
    %v8908 = vsub.s32 %v8905, %v8907
    %v8909 = vrot.slane %v8901, %v8908
    %v8911 = vunpack.c.l.s4 1934713408
    %v8912 = vunpack.c.0.s8 %v8911
    %v8913 = vlaneseq
    %v8914 = vshrl.u32 %v8913, 7
    %v8915 = vsub.s32 %v8912, %v8914
    %v8916 = vrot.slane %v8902, %v8915
    %v8917 = vcombine.high %v8893, 0.0
    %v8918 = vcombine.high %v8900, 0.0
    %v8919 = vcombine.high %v8909, 0.0
    %v8920 = vcombine.high %v8916, 0.0
    %8922 = vrot.lane.b32.xlu0 %v8849, 16
    %v8923 = vpop.permute.xlu0 %8922
    %8926 = vrot.lane.b32.xlu0 %v8832, 32
    %v8927 = vpop.permute.xlu0 %8926
    %8930 = vrot.lane.b32.xlu0 %v8850, 48
    %v8931 = vpop.permute.xlu0 %8930
    %8934 = vrot.lane.b32.xlu0 %v8841, 64
    %v8935 = vpop.permute.xlu0 %8934
    %8938 = vrot.lane.b32.xlu0 %v8851, 80
    %v8939 = vpop.permute.xlu0 %8938
    %8942 = vrot.lane.b32.xlu0 %v8848, 96
    %v8943 = vpop.permute.xlu0 %8942
    %8946 = vrot.lane.b32.xlu0 %v8852, 112
    %v8947 = vpop.permute.xlu0 %8946
    %8950 = vrot.lane.b32.xlu0 %v8917, 16
    %v8951 = vpop.permute.xlu0 %8950
    %8954 = vrot.lane.b32.xlu0 %v8900, 32
    %v8955 = vpop.permute.xlu0 %8954
    %8958 = vrot.lane.b32.xlu0 %v8918, 48
    %v8959 = vpop.permute.xlu0 %8958
    %8962 = vrot.lane.b32.xlu0 %v8909, 64
    %v8963 = vpop.permute.xlu0 %8962
    %8966 = vrot.lane.b32.xlu0 %v8919, 80
    %v8967 = vpop.permute.xlu0 %8966
    %8970 = vrot.lane.b32.xlu0 %v8916, 96
    %v8971 = vpop.permute.xlu0 %8970
    %8974 = vrot.lane.b32.xlu0 %v8920, 112
    %v8975 = vpop.permute.xlu0 %8974
    %v8977 = vsel %vm364, %v8825, %v8923
    %v8978 = vsel %vm366, %v8977, %v8927
    %v8979 = vsel %vm368, %v8978, %v8931
    %v8980 = vsel %vm370, %v8979, %v8935
    %v8981 = vsel %vm372, %v8980, %v8939
    %v8982 = vsel %vm374, %v8981, %v8943
    %v8983 = vsel %vm376, %v8982, %v8947
    %v8984 = vsel %vm364, %v8893, %v8951
    %v8985 = vsel %vm366, %v8984, %v8955
    %v8986 = vsel %vm368, %v8985, %v8959
    %v8987 = vsel %vm370, %v8986, %v8963
    %v8988 = vsel %vm372, %v8987, %v8967
    %v8989 = vsel %vm374, %v8988, %v8971
    %v8990 = vsel %vm376, %v8989, %v8975
    %8991 = vst [vmem:[#allocation3 + $0x70] sm:$0xf] %v8983
    %8992 = vst [vmem:[#allocation3 + $0x78] sm:$0xf] %v8990
    %v8993 = vld [vmem:[%s2331 + $0x2] sm:$0xff]
    %v8994 = vld [vmem:[%s2331 + $0xa] sm:$0xff]
    %v8995 = vld [vmem:[%s2331 + $0x1a] sm:$0xff]
    %v8996 = vld [vmem:[%s2331 + $0x22] sm:$0xff]
    %v8997 = vld [vmem:[%s2331 + $0x32] sm:$0xff]
    %v8998 = vld [vmem:[%s2331 + $0x3a] sm:$0xff]
    %v8999 = vld [vmem:[%s2331 + $0x4a] sm:$0xff]
    %v9000 = vld [vmem:[%s2331 + $0x52] sm:$0xff]
    %9009 = vrot.lane.b32.xlu0 %v8993, 127
    %v9010 = vpop.permute.xlu0 %9009
    %9011 = vrot.lane.b32.xlu0 %v8994, 127
    %v9012 = vpop.permute.xlu0 %9011
    %9013 = vrot.lane.b32.xlu0 %v8995, 127
    %v9014 = vpop.permute.xlu0 %9013
    %9015 = vrot.lane.b32.xlu0 %v8996, 127
    %v9016 = vpop.permute.xlu0 %9015
    %9017 = vrot.lane.b32.xlu0 %v8997, 127
    %v9018 = vpop.permute.xlu0 %9017
    %9019 = vrot.lane.b32.xlu0 %v8998, 127
    %v9020 = vpop.permute.xlu0 %9019
    %9021 = vrot.lane.b32.xlu0 %v8999, 127
    %v9022 = vpop.permute.xlu0 %9021
    %9023 = vrot.lane.b32.xlu0 %v9000, 127
    %v9024 = vpop.permute.xlu0 %9023
    %v9033 = vcombine.low %v9010, %v9018
    %v9034 = vcombine.high %v9010, %v9018
    %v9036 = vunpack.c.l.s4 1983009808
    %v9037 = vunpack.c.0.s8 %v9036
    %v9038 = vlaneseq
    %v9039 = vshrl.u32 %v9038, 7
    %v9040 = vsub.s32 %v9037, %v9039
    %v9041 = vrot.slane %v9033, %v9040
    %v9043 = vunpack.c.l.s4 1983009808
    %v9044 = vunpack.c.0.s8 %v9043
    %v9045 = vlaneseq
    %v9046 = vshrl.u32 %v9045, 7
    %v9047 = vsub.s32 %v9044, %v9046
    %v9048 = vrot.slane %v9034, %v9047
    %v9049 = vcombine.low %v9014, %v9022
    %v9050 = vcombine.high %v9014, %v9022
    %v9052 = vunpack.c.l.s4 1983009808
    %v9053 = vunpack.c.0.s8 %v9052
    %v9054 = vlaneseq
    %v9055 = vshrl.u32 %v9054, 7
    %v9056 = vsub.s32 %v9053, %v9055
    %v9057 = vrot.slane %v9049, %v9056
    %v9059 = vunpack.c.l.s4 1983009808
    %v9060 = vunpack.c.0.s8 %v9059
    %v9061 = vlaneseq
    %v9062 = vshrl.u32 %v9061, 7
    %v9063 = vsub.s32 %v9060, %v9062
    %v9064 = vrot.slane %v9050, %v9063
    %v9065 = vcombine.low %v9041, %v9057
    %v9066 = vcombine.high %v9041, %v9057
    %v9068 = vunpack.c.l.s4 1934713408
    %v9069 = vunpack.c.0.s8 %v9068
    %v9070 = vlaneseq
    %v9071 = vshrl.u32 %v9070, 7
    %v9072 = vsub.s32 %v9069, %v9071
    %v9073 = vrot.slane %v9065, %v9072
    %v9075 = vunpack.c.l.s4 1934713408
    %v9076 = vunpack.c.0.s8 %v9075
    %v9077 = vlaneseq
    %v9078 = vshrl.u32 %v9077, 7
    %v9079 = vsub.s32 %v9076, %v9078
    %v9080 = vrot.slane %v9066, %v9079
    %v9081 = vcombine.low %v9048, %v9064
    %v9082 = vcombine.high %v9048, %v9064
    %v9084 = vunpack.c.l.s4 1934713408
    %v9085 = vunpack.c.0.s8 %v9084
    %v9086 = vlaneseq
    %v9087 = vshrl.u32 %v9086, 7
    %v9088 = vsub.s32 %v9085, %v9087
    %v9089 = vrot.slane %v9081, %v9088
    %v9091 = vunpack.c.l.s4 1934713408
    %v9092 = vunpack.c.0.s8 %v9091
    %v9093 = vlaneseq
    %v9094 = vshrl.u32 %v9093, 7
    %v9095 = vsub.s32 %v9092, %v9094
    %v9096 = vrot.slane %v9082, %v9095
    %v9097 = vcombine.high %v9073, 0.0
    %v9098 = vcombine.high %v9080, 0.0
    %v9099 = vcombine.high %v9089, 0.0
    %v9100 = vcombine.high %v9096, 0.0
    %v9101 = vcombine.low %v9012, %v9020
    %v9102 = vcombine.high %v9012, %v9020
    %v9104 = vunpack.c.l.s4 1983009808
    %v9105 = vunpack.c.0.s8 %v9104
    %v9106 = vlaneseq
    %v9107 = vshrl.u32 %v9106, 7
    %v9108 = vsub.s32 %v9105, %v9107
    %v9109 = vrot.slane %v9101, %v9108
    %v9111 = vunpack.c.l.s4 1983009808
    %v9112 = vunpack.c.0.s8 %v9111
    %v9113 = vlaneseq
    %v9114 = vshrl.u32 %v9113, 7
    %v9115 = vsub.s32 %v9112, %v9114
    %v9116 = vrot.slane %v9102, %v9115
    %v9117 = vcombine.low %v9016, %v9024
    %v9118 = vcombine.high %v9016, %v9024
    %v9120 = vunpack.c.l.s4 1983009808
    %v9121 = vunpack.c.0.s8 %v9120
    %v9122 = vlaneseq
    %v9123 = vshrl.u32 %v9122, 7
    %v9124 = vsub.s32 %v9121, %v9123
    %v9125 = vrot.slane %v9117, %v9124
    %v9127 = vunpack.c.l.s4 1983009808
    %v9128 = vunpack.c.0.s8 %v9127
    %v9129 = vlaneseq
    %v9130 = vshrl.u32 %v9129, 7
    %v9131 = vsub.s32 %v9128, %v9130
    %v9132 = vrot.slane %v9118, %v9131
    %v9133 = vcombine.low %v9109, %v9125
    %v9134 = vcombine.high %v9109, %v9125
    %v9136 = vunpack.c.l.s4 1934713408
    %v9137 = vunpack.c.0.s8 %v9136
    %v9138 = vlaneseq
    %v9139 = vshrl.u32 %v9138, 7
    %v9140 = vsub.s32 %v9137, %v9139
    %v9141 = vrot.slane %v9133, %v9140
    %v9143 = vunpack.c.l.s4 1934713408
    %v9144 = vunpack.c.0.s8 %v9143
    %v9145 = vlaneseq
    %v9146 = vshrl.u32 %v9145, 7
    %v9147 = vsub.s32 %v9144, %v9146
    %v9148 = vrot.slane %v9134, %v9147
    %v9149 = vcombine.low %v9116, %v9132
    %v9150 = vcombine.high %v9116, %v9132
    %v9152 = vunpack.c.l.s4 1934713408
    %v9153 = vunpack.c.0.s8 %v9152
    %v9154 = vlaneseq
    %v9155 = vshrl.u32 %v9154, 7
    %v9156 = vsub.s32 %v9153, %v9155
    %v9157 = vrot.slane %v9149, %v9156
    %v9159 = vunpack.c.l.s4 1934713408
    %v9160 = vunpack.c.0.s8 %v9159
    %v9161 = vlaneseq
    %v9162 = vshrl.u32 %v9161, 7
    %v9163 = vsub.s32 %v9160, %v9162
    %v9164 = vrot.slane %v9150, %v9163
    %v9165 = vcombine.high %v9141, 0.0
    %v9166 = vcombine.high %v9148, 0.0
    %v9167 = vcombine.high %v9157, 0.0
    %v9168 = vcombine.high %v9164, 0.0
    %9170 = vrot.lane.b32.xlu0 %v9097, 16
    %v9171 = vpop.permute.xlu0 %9170
    %9174 = vrot.lane.b32.xlu0 %v9080, 32
    %v9175 = vpop.permute.xlu0 %9174
    %9178 = vrot.lane.b32.xlu0 %v9098, 48
    %v9179 = vpop.permute.xlu0 %9178
    %9182 = vrot.lane.b32.xlu0 %v9089, 64
    %v9183 = vpop.permute.xlu0 %9182
    %9186 = vrot.lane.b32.xlu0 %v9099, 80
    %v9187 = vpop.permute.xlu0 %9186
    %9190 = vrot.lane.b32.xlu0 %v9096, 96
    %v9191 = vpop.permute.xlu0 %9190
    %9194 = vrot.lane.b32.xlu0 %v9100, 112
    %v9195 = vpop.permute.xlu0 %9194
    %9198 = vrot.lane.b32.xlu0 %v9165, 16
    %v9199 = vpop.permute.xlu0 %9198
    %9202 = vrot.lane.b32.xlu0 %v9148, 32
    %v9203 = vpop.permute.xlu0 %9202
    %9206 = vrot.lane.b32.xlu0 %v9166, 48
    %v9207 = vpop.permute.xlu0 %9206
    %9210 = vrot.lane.b32.xlu0 %v9157, 64
    %v9211 = vpop.permute.xlu0 %9210
    %9214 = vrot.lane.b32.xlu0 %v9167, 80
    %v9215 = vpop.permute.xlu0 %9214
    %9218 = vrot.lane.b32.xlu0 %v9164, 96
    %v9219 = vpop.permute.xlu0 %9218
    %9222 = vrot.lane.b32.xlu0 %v9168, 112
    %v9223 = vpop.permute.xlu0 %9222
    %v9225 = vsel %vm364, %v9073, %v9171
    %v9226 = vsel %vm366, %v9225, %v9175
    %v9227 = vsel %vm368, %v9226, %v9179
    %v9228 = vsel %vm370, %v9227, %v9183
    %v9229 = vsel %vm372, %v9228, %v9187
    %v9230 = vsel %vm374, %v9229, %v9191
    %v9231 = vsel %vm376, %v9230, %v9195
    %v9232 = vsel %vm364, %v9141, %v9199
    %v9233 = vsel %vm366, %v9232, %v9203
    %v9234 = vsel %vm368, %v9233, %v9207
    %v9235 = vsel %vm370, %v9234, %v9211
    %v9236 = vsel %vm372, %v9235, %v9215
    %v9237 = vsel %vm374, %v9236, %v9219
    %v9238 = vsel %vm376, %v9237, %v9223
    %v9241 = vrot.slane %v9231, 4
    %v9242 = vrot.slane %v9238, 4
    %9245 = vst [vmem:[#allocation3 + $0x70] sm:$0xf0] %v9241
    %9246 = vst [vmem:[#allocation3 + $0x78] sm:$0xf0] %v9242
    %v9247 = vld [vmem:[%s2331 + $0x2] sm:$0xff]
    %v9248 = vld [vmem:[%s2331 + $0xa] sm:$0xff]
    %v9249 = vld [vmem:[%s2331 + $0x1a] sm:$0xff]
    %v9250 = vld [vmem:[%s2331 + $0x22] sm:$0xff]
    %v9251 = vld [vmem:[%s2331 + $0x32] sm:$0xff]
    %v9252 = vld [vmem:[%s2331 + $0x3a] sm:$0xff]
    %v9253 = vld [vmem:[%s2331 + $0x4a] sm:$0xff]
    %v9254 = vld [vmem:[%s2331 + $0x52] sm:$0xff]
    %9263 = vrot.lane.b32.xlu0 %v9247, 126
    %v9264 = vpop.permute.xlu0 %9263
    %9265 = vrot.lane.b32.xlu0 %v9248, 126
    %v9266 = vpop.permute.xlu0 %9265
    %9267 = vrot.lane.b32.xlu0 %v9249, 126
    %v9268 = vpop.permute.xlu0 %9267
    %9269 = vrot.lane.b32.xlu0 %v9250, 126
    %v9270 = vpop.permute.xlu0 %9269
    %9271 = vrot.lane.b32.xlu0 %v9251, 126
    %v9272 = vpop.permute.xlu0 %9271
    %9273 = vrot.lane.b32.xlu0 %v9252, 126
    %v9274 = vpop.permute.xlu0 %9273
    %9275 = vrot.lane.b32.xlu0 %v9253, 126
    %v9276 = vpop.permute.xlu0 %9275
    %9277 = vrot.lane.b32.xlu0 %v9254, 126
    %v9278 = vpop.permute.xlu0 %9277
    %v9287 = vcombine.low %v9264, %v9272
    %v9288 = vcombine.high %v9264, %v9272
    %v9290 = vunpack.c.l.s4 1983009808
    %v9291 = vunpack.c.0.s8 %v9290
    %v9292 = vlaneseq
    %v9293 = vshrl.u32 %v9292, 7
    %v9294 = vsub.s32 %v9291, %v9293
    %v9295 = vrot.slane %v9287, %v9294
    %v9297 = vunpack.c.l.s4 1983009808
    %v9298 = vunpack.c.0.s8 %v9297
    %v9299 = vlaneseq
    %v9300 = vshrl.u32 %v9299, 7
    %v9301 = vsub.s32 %v9298, %v9300
    %v9302 = vrot.slane %v9288, %v9301
    %v9303 = vcombine.low %v9268, %v9276
    %v9304 = vcombine.high %v9268, %v9276
    %v9306 = vunpack.c.l.s4 1983009808
    %v9307 = vunpack.c.0.s8 %v9306
    %v9308 = vlaneseq
    %v9309 = vshrl.u32 %v9308, 7
    %v9310 = vsub.s32 %v9307, %v9309
    %v9311 = vrot.slane %v9303, %v9310
    %v9313 = vunpack.c.l.s4 1983009808
    %v9314 = vunpack.c.0.s8 %v9313
    %v9315 = vlaneseq
    %v9316 = vshrl.u32 %v9315, 7
    %v9317 = vsub.s32 %v9314, %v9316
    %v9318 = vrot.slane %v9304, %v9317
    %v9319 = vcombine.low %v9295, %v9311
    %v9320 = vcombine.high %v9295, %v9311
    %v9322 = vunpack.c.l.s4 1934713408
    %v9323 = vunpack.c.0.s8 %v9322
    %v9324 = vlaneseq
    %v9325 = vshrl.u32 %v9324, 7
    %v9326 = vsub.s32 %v9323, %v9325
    %v9327 = vrot.slane %v9319, %v9326
    %v9329 = vunpack.c.l.s4 1934713408
    %v9330 = vunpack.c.0.s8 %v9329
    %v9331 = vlaneseq
    %v9332 = vshrl.u32 %v9331, 7
    %v9333 = vsub.s32 %v9330, %v9332
    %v9334 = vrot.slane %v9320, %v9333
    %v9335 = vcombine.low %v9302, %v9318
    %v9336 = vcombine.high %v9302, %v9318
    %v9338 = vunpack.c.l.s4 1934713408
    %v9339 = vunpack.c.0.s8 %v9338
    %v9340 = vlaneseq
    %v9341 = vshrl.u32 %v9340, 7
    %v9342 = vsub.s32 %v9339, %v9341
    %v9343 = vrot.slane %v9335, %v9342
    %v9345 = vunpack.c.l.s4 1934713408
    %v9346 = vunpack.c.0.s8 %v9345
    %v9347 = vlaneseq
    %v9348 = vshrl.u32 %v9347, 7
    %v9349 = vsub.s32 %v9346, %v9348
    %v9350 = vrot.slane %v9336, %v9349
    %v9351 = vcombine.high %v9327, 0.0
    %v9352 = vcombine.high %v9334, 0.0
    %v9353 = vcombine.high %v9343, 0.0
    %v9354 = vcombine.high %v9350, 0.0
    %v9355 = vcombine.low %v9266, %v9274
    %v9356 = vcombine.high %v9266, %v9274
    %v9358 = vunpack.c.l.s4 1983009808
    %v9359 = vunpack.c.0.s8 %v9358
    %v9360 = vlaneseq
    %v9361 = vshrl.u32 %v9360, 7
    %v9362 = vsub.s32 %v9359, %v9361
    %v9363 = vrot.slane %v9355, %v9362
    %v9365 = vunpack.c.l.s4 1983009808
    %v9366 = vunpack.c.0.s8 %v9365
    %v9367 = vlaneseq
    %v9368 = vshrl.u32 %v9367, 7
    %v9369 = vsub.s32 %v9366, %v9368
    %v9370 = vrot.slane %v9356, %v9369
    %v9371 = vcombine.low %v9270, %v9278
    %v9372 = vcombine.high %v9270, %v9278
    %v9374 = vunpack.c.l.s4 1983009808
    %v9375 = vunpack.c.0.s8 %v9374
    %v9376 = vlaneseq
    %v9377 = vshrl.u32 %v9376, 7
    %v9378 = vsub.s32 %v9375, %v9377
    %v9379 = vrot.slane %v9371, %v9378
    %v9381 = vunpack.c.l.s4 1983009808
    %v9382 = vunpack.c.0.s8 %v9381
    %v9383 = vlaneseq
    %v9384 = vshrl.u32 %v9383, 7
    %v9385 = vsub.s32 %v9382, %v9384
    %v9386 = vrot.slane %v9372, %v9385
    %v9387 = vcombine.low %v9363, %v9379
    %v9388 = vcombine.high %v9363, %v9379
    %v9390 = vunpack.c.l.s4 1934713408
    %v9391 = vunpack.c.0.s8 %v9390
    %v9392 = vlaneseq
    %v9393 = vshrl.u32 %v9392, 7
    %v9394 = vsub.s32 %v9391, %v9393
    %v9395 = vrot.slane %v9387, %v9394
    %v9397 = vunpack.c.l.s4 1934713408
    %v9398 = vunpack.c.0.s8 %v9397
    %v9399 = vlaneseq
    %v9400 = vshrl.u32 %v9399, 7
    %v9401 = vsub.s32 %v9398, %v9400
    %v9402 = vrot.slane %v9388, %v9401
    %v9403 = vcombine.low %v9370, %v9386
    %v9404 = vcombine.high %v9370, %v9386
    %v9406 = vunpack.c.l.s4 1934713408
    %v9407 = vunpack.c.0.s8 %v9406
    %v9408 = vlaneseq
    %v9409 = vshrl.u32 %v9408, 7
    %v9410 = vsub.s32 %v9407, %v9409
    %v9411 = vrot.slane %v9403, %v9410
    %v9413 = vunpack.c.l.s4 1934713408
    %v9414 = vunpack.c.0.s8 %v9413
    %v9415 = vlaneseq
    %v9416 = vshrl.u32 %v9415, 7
    %v9417 = vsub.s32 %v9414, %v9416
    %v9418 = vrot.slane %v9404, %v9417
    %v9419 = vcombine.high %v9395, 0.0
    %v9420 = vcombine.high %v9402, 0.0
    %v9421 = vcombine.high %v9411, 0.0
    %v9422 = vcombine.high %v9418, 0.0
    %9424 = vrot.lane.b32.xlu0 %v9351, 16
    %v9425 = vpop.permute.xlu0 %9424
    %9428 = vrot.lane.b32.xlu0 %v9334, 32
    %v9429 = vpop.permute.xlu0 %9428
    %9432 = vrot.lane.b32.xlu0 %v9352, 48
    %v9433 = vpop.permute.xlu0 %9432
    %9436 = vrot.lane.b32.xlu0 %v9343, 64
    %v9437 = vpop.permute.xlu0 %9436
    %9440 = vrot.lane.b32.xlu0 %v9353, 80
    %v9441 = vpop.permute.xlu0 %9440
    %9444 = vrot.lane.b32.xlu0 %v9350, 96
    %v9445 = vpop.permute.xlu0 %9444
    %9448 = vrot.lane.b32.xlu0 %v9354, 112
    %v9449 = vpop.permute.xlu0 %9448
    %9452 = vrot.lane.b32.xlu0 %v9419, 16
    %v9453 = vpop.permute.xlu0 %9452
    %9456 = vrot.lane.b32.xlu0 %v9402, 32
    %v9457 = vpop.permute.xlu0 %9456
    %9460 = vrot.lane.b32.xlu0 %v9420, 48
    %v9461 = vpop.permute.xlu0 %9460
    %9464 = vrot.lane.b32.xlu0 %v9411, 64
    %v9465 = vpop.permute.xlu0 %9464
    %9468 = vrot.lane.b32.xlu0 %v9421, 80
    %v9469 = vpop.permute.xlu0 %9468
    %9472 = vrot.lane.b32.xlu0 %v9418, 96
    %v9473 = vpop.permute.xlu0 %9472
    %9476 = vrot.lane.b32.xlu0 %v9422, 112
    %v9477 = vpop.permute.xlu0 %9476
    %v9479 = vsel %vm364, %v9327, %v9425
    %v9480 = vsel %vm366, %v9479, %v9429
    %v9481 = vsel %vm368, %v9480, %v9433
    %v9482 = vsel %vm370, %v9481, %v9437
    %v9483 = vsel %vm372, %v9482, %v9441
    %v9484 = vsel %vm374, %v9483, %v9445
    %v9485 = vsel %vm376, %v9484, %v9449
    %v9486 = vsel %vm364, %v9395, %v9453
    %v9487 = vsel %vm366, %v9486, %v9457
    %v9488 = vsel %vm368, %v9487, %v9461
    %v9489 = vsel %vm370, %v9488, %v9465
    %v9490 = vsel %vm372, %v9489, %v9469
    %v9491 = vsel %vm374, %v9490, %v9473
    %v9492 = vsel %vm376, %v9491, %v9477
    %9493 = vst [vmem:[#allocation3 + $0x90] sm:$0xf] %v9485
    %9494 = vst [vmem:[#allocation3 + $0x98] sm:$0xf] %v9492
    %v9495 = vld [vmem:[%s5] sm:$0xf]
    %v9496 = vld [vmem:[#allocation3] sm:$0xff]
    %v9497 = vld [vmem:[#allocation3 + $0x8] sm:$0xff]
    %v9498 = vld [vmem:[#allocation3 + $0x10] sm:$0xff]
    %v9499 = vld [vmem:[#allocation3 + $0x18] sm:$0xff]
    %v9500 = vld [vmem:[#allocation3 + $0x20] sm:$0xff]
    %v9501 = vld [vmem:[#allocation3 + $0x28] sm:$0xff]
    %v9502 = vld [vmem:[#allocation3 + $0x30] sm:$0xff]
    %v9503 = vld [vmem:[#allocation3 + $0x38] sm:$0xff]
    %v9504 = vld [vmem:[#allocation3 + $0x40] sm:$0xff]
    %v9505 = vld [vmem:[#allocation3 + $0x48] sm:$0xff]
    %v9506 = vld [vmem:[#allocation3 + $0x50] sm:$0xff]
    %v9507 = vld [vmem:[#allocation3 + $0x58] sm:$0xff]
    %v9508 = vld [vmem:[#allocation3 + $0x60] sm:$0xff]
    %v9509 = vld [vmem:[#allocation3 + $0x68] sm:$0xff]
    %v9510 = vld [vmem:[#allocation3 + $0x70] sm:$0xff]
    %v9511 = vld [vmem:[#allocation3 + $0x78] sm:$0xff]
    %v9512 = vld [vmem:[#allocation3 + $0x80] sm:$0xf]
    %v9513 = vld [vmem:[#allocation3 + $0x88] sm:$0xf]
    %v9514 = vld [vmem:[#allocation3 + $0x90] sm:$0xf]
    %v9515 = vld [vmem:[#allocation3 + $0x98] sm:$0xf]
    %v9516 = vld [vmem:[%s6] sm:$0xf]
    %9518 = vset.pattern.permute.xlu0 0
    %9519 = vperm.xlu0 %9518, %v9516
    %v9520 = vpop.permute.xlu0 %9519
    %v9523 = vsel %vm4519, %v9495, 0
    %v9526 = vsel %vm4523, %v9512, 0
    %v9529 = vsel %vm4523, %v9513, 0
    %v9532 = vsel %vm4523, %v9514, 0
    %v9535 = vsel %vm4523, %v9515, 0
    %9537 = vmatprep.subr.mxu0 %v9497
    %9538 = vmatpush1.msra.mxu0 %v9496
    %9539 = vmatprep.subr.mxu0 %v9501
    %9540 = vmatpush1.msra.mxu0 %v9500
    %9541 = vmatprep.subr.mxu0 %v9505
    %9542 = vmatpush1.msra.mxu0 %v9504
    %9543 = vmatprep.subr.mxu0 %v9509
    %9544 = vmatpush1.msra.mxu0 %v9508
    %9545 = vmatprep.subr.mxu0 %v9529
    %9546 = vmatpush1.msra.mxu0 %v9526
    %9547 = vmatprep.subr.mxu0 0.0
    %9548 = vmatpush1.msra.mxu0 0.0
    %9549 = vmatprep.subr.mxu0 0.0
    %9550 = vmatpush1.msra.mxu0 0.0
    %9551 = vmatprep.subr.mxu0 0.0
    %9552 = vmatpush1.msra.mxu0 0.0
    %9553 = vmatprep.subr.mxu0 0.0
    %9554 = vmatpush1.msra.mxu0 0.0
    %9555 = vmatprep.subr.mxu0 0.0
    %9556 = vmatpush1.msra.mxu0 0.0
    %9557 = vmatprep.subr.mxu0 0.0
    %9558 = vmatpush1.msra.mxu0 0.0
    %9559 = vmatprep.subr.mxu0 0.0
    %9560 = vmatpush1.msra.mxu0 0.0
    %9561 = vmatprep.subr.mxu0 0.0
    %9562 = vmatpush1.msra.mxu0 0.0
    %9563 = vmatprep.subr.mxu0 0.0
    %9564 = vmatpush1.msra.mxu0 0.0
    %9565 = vmatprep.subr.mxu0 0.0
    %9566 = vmatpush1.msra.mxu0 0.0
    %9567 = vmatprep.subr.mxu0 0.0
    %9568 = vmatpush1.msra.mxu0 0.0
    %9569 = vmatprep.subr.mxu0 0.0
    %9570 = vmatpush1.msra.mxu0 0.0
    %9571 = vmatprep.subr.mxu0 0.0
    %9572 = vmatpush1.msra.mxu0 0.0
    %9573 = vmatprep.subr.mxu0 0.0
    %9574 = vmatpush1.msra.mxu0 0.0
    %9575 = vmatprep.subr.mxu0 0.0
    %9576 = vmatpush1.msra.mxu0 0.0
    %9577 = vmatprep.subr.mxu0 0.0
    %9578 = vmatpush1.msra.mxu0 0.0
    %9579 = vmatprep.subr.mxu0 0.0
    %9580 = vmatpush1.msra.mxu0 0.0
    %9581 = vmatprep.subr.mxu0 0.0
    %9582 = vmatpush1.msra.mxu0 0.0
    %9583 = vmatprep.subr.mxu0 0.0
    %9584 = vmatpush1.msra.mxu0 0.0
    %9585 = vmatprep.subr.mxu0 0.0
    %9586 = vmatpush1.msra.mxu0 0.0
    %9587 = vmatprep.subr.mxu0 0.0
    %9588 = vmatpush1.msra.mxu0 0.0
    %9589 = vmatprep.subr.mxu0 0.0
    %9590 = vmatpush1.msra.mxu0 0.0
    %9591 = vmatprep.subr.mxu0 0.0
    %9592 = vmatpush1.msra.mxu0 0.0
    %9593 = vmatprep.subr.mxu0 0.0
    %9594 = vmatpush1.msra.mxu0 0.0
    %9595 = vmatprep.subr.mxu0 0.0
    %9596 = vmatpush1.msra.mxu0 0.0
    %9597 = vmatprep.subr.mxu0 0.0
    %9598 = vmatpush1.msra.mxu0 0.0
    %9599 = vmatprep.subr.mxu0 0.0
    %9600 = vmatpush1.msra.mxu0 0.0
    %9601 = vmatprep.mubr.f32.mxu0 0.0
    %9602 = vmatmul.mubr.f32.gmra.mrb[0].mxu0 %v9523
    %v9603 = vpop.f32.mrb[0].mxu0
    %v9604 = vadd.f32 %v9520, %v9603
    %v9605 = vpop.f32.mrb[0].mxu0
    %v9606 = vadd.f32 %v9520, %v9605
    %9607 = vdwg.mxu0
    %9608 = vmatprep.subr.mxu0 %v9499
    %9609 = vmatpush1.msra.mxu0 %v9498
    %9610 = vmatprep.subr.mxu0 %v9503
    %9611 = vmatpush1.msra.mxu0 %v9502
    %9612 = vmatprep.subr.mxu0 %v9507
    %9613 = vmatpush1.msra.mxu0 %v9506
    %9614 = vmatprep.subr.mxu0 %v9511
    %9615 = vmatpush1.msra.mxu0 %v9510
    %9616 = vmatprep.subr.mxu0 %v9535
    %9617 = vmatpush1.msra.mxu0 %v9532
    %9618 = vmatprep.subr.mxu0 0.0
    %9619 = vmatpush1.msra.mxu0 0.0
    %9620 = vmatprep.subr.mxu0 0.0
    %9621 = vmatpush1.msra.mxu0 0.0
    %9622 = vmatprep.subr.mxu0 0.0
    %9623 = vmatpush1.msra.mxu0 0.0
    %9624 = vmatprep.subr.mxu0 0.0
    %9625 = vmatpush1.msra.mxu0 0.0
    %9626 = vmatprep.subr.mxu0 0.0
    %9627 = vmatpush1.msra.mxu0 0.0
    %9628 = vmatprep.subr.mxu0 0.0
    %9629 = vmatpush1.msra.mxu0 0.0
    %9630 = vmatprep.subr.mxu0 0.0
    %9631 = vmatpush1.msra.mxu0 0.0
    %9632 = vmatprep.subr.mxu0 0.0
    %9633 = vmatpush1.msra.mxu0 0.0
    %9634 = vmatprep.subr.mxu0 0.0
    %9635 = vmatpush1.msra.mxu0 0.0
    %9636 = vmatprep.subr.mxu0 0.0
    %9637 = vmatpush1.msra.mxu0 0.0
    %9638 = vmatprep.subr.mxu0 0.0
    %9639 = vmatpush1.msra.mxu0 0.0
    %9640 = vmatprep.subr.mxu0 0.0
    %9641 = vmatpush1.msra.mxu0 0.0
    %9642 = vmatprep.subr.mxu0 0.0
    %9643 = vmatpush1.msra.mxu0 0.0
    %9644 = vmatprep.subr.mxu0 0.0
    %9645 = vmatpush1.msra.mxu0 0.0
    %9646 = vmatprep.subr.mxu0 0.0
    %9647 = vmatpush1.msra.mxu0 0.0
    %9648 = vmatprep.subr.mxu0 0.0
    %9649 = vmatpush1.msra.mxu0 0.0
    %9650 = vmatprep.subr.mxu0 0.0
    %9651 = vmatpush1.msra.mxu0 0.0
    %9652 = vmatprep.subr.mxu0 0.0
    %9653 = vmatpush1.msra.mxu0 0.0
    %9654 = vmatprep.subr.mxu0 0.0
    %9655 = vmatpush1.msra.mxu0 0.0
    %9656 = vmatprep.subr.mxu0 0.0
    %9657 = vmatpush1.msra.mxu0 0.0
    %9658 = vmatprep.subr.mxu0 0.0
    %9659 = vmatpush1.msra.mxu0 0.0
    %9660 = vmatprep.subr.mxu0 0.0
    %9661 = vmatpush1.msra.mxu0 0.0
    %9662 = vmatprep.subr.mxu0 0.0
    %9663 = vmatpush1.msra.mxu0 0.0
    %9664 = vmatprep.subr.mxu0 0.0
    %9665 = vmatpush1.msra.mxu0 0.0
    %9666 = vmatprep.subr.mxu0 0.0
    %9667 = vmatpush1.msra.mxu0 0.0
    %9668 = vmatprep.subr.mxu0 0.0
    %9669 = vmatpush1.msra.mxu0 0.0
    %9670 = vmatprep.subr.mxu0 0.0
    %9671 = vmatpush1.msra.mxu0 0.0
    %9672 = vmatprep.mubr.f32.mxu0 0.0
    %9673 = vmatmul.mubr.f32.gmra.mrb[0].mxu0 %v9523
    %v9674 = vpop.f32.mrb[0].mxu0
    %v9675 = vadd.f32 %v9520, %v9674
    %v9676 = vpop.f32.mrb[0].mxu0
    %v9677 = vadd.f32 %v9520, %v9676
    %9678 = vdwg.mxu0
    %v9679 = vsel %vm4523, %v9604, 0.0
    %v9680 = vsel %vm4523, %v9606, 0.0
    %v9681 = vadd.f32 %v9679, %v9680
    %v9682 = vsel %vm4523, %v9675, 0.0
    %v9683 = vadd.f32 %v9681, %v9682
    %v9684 = vsel %vm4523, %v9677, 0.0
    %v9685 = vadd.f32 %v9683, %v9684
    %9686 = vadd.xlane.f32.xlu0 %v9685
    %v9687 = vpop.xlane.xlu0 %9686
    %v9688 = vmul.f32 %v9604, %v9604
    %v9689 = vmul.f32 %v9606, %v9606
    %v9690 = vmul.f32 %v9675, %v9675
    %v9691 = vmul.f32 %v9677, %v9677
    %v9692 = vsel %vm4523, %v9688, 0.0
    %v9693 = vsel %vm4523, %v9689, 0.0
    %v9694 = vadd.f32 %v9692, %v9693
    %v9695 = vsel %vm4523, %v9690, 0.0
    %v9696 = vadd.f32 %v9694, %v9695
    %v9697 = vsel %vm4523, %v9691, 0.0
    %v9698 = vadd.f32 %v9696, %v9697
    %9699 = vadd.xlane.f32.xlu0 %v9698
    %v9700 = vpop.xlane.xlu0 %9699
    %v9701 = vmul.f32 %v9687, 0.001953125
    %v9702 = vmul.f32 %v9700, 0.001953125
    %v9703 = vmul.f32 %v9701, %v9701
    %v9704 = vsub.f32 %v9702, %v9703
    %v9705 = vadd.f32 %v9704, 1e-05
    %v9706 = vrsqrt.pop %v9705
    %v9707 = vld [vmem:[%s3] sm:$0xf]
    %v9708 = vmul.f32 %v9706, %v9707
    %v9709 = vsub.f32 %v9604, %v9701
    %v9710 = vsub.f32 %v9606, %v9701
    %v9711 = vsub.f32 %v9675, %v9701
    %v9712 = vsub.f32 %v9677, %v9701
    %9714 = vset.pattern.permute.xlu0 0
    %9715 = vperm.xlu0 %9714, %v9708
    %v9716 = vpop.permute.xlu0 %9715
    %v9718 = vmul.f32 %v9709, %v9716
    %v9719 = vmul.f32 %v9710, %v9716
    %v9720 = vmul.f32 %v9711, %v9716
    %v9721 = vmul.f32 %v9712, %v9716
    %v9722 = vld [vmem:[%s4] sm:$0xf]
    %9724 = vset.pattern.permute.xlu0 0
    %9725 = vperm.xlu0 %9724, %v9722
    %v9726 = vpop.permute.xlu0 %9725
    %v9728 = vadd.f32 %v9718, %v9726
    %v9729 = vadd.f32 %v9719, %v9726
    %v9730 = vadd.f32 %v9720, %v9726
    %v9731 = vadd.f32 %v9721, %v9726
    %v9734 = vcombine.low %v9728, %v9729
    %9736 = vst [vmem:[#allocation7] sm:$0xff] %v9734
    %v9739 = vcombine.low %v9730, %v9731
    %s9741 = scalar_lea.vmem [#allocation7], 8
    %9742 = vst [vmem:[%s9741] sm:$0xff] %v9739
    // Predicated region
    $region34: #{tpu_custom_call.1} parent=1 // pred_check
      _
    $region35: #{tpu_custom_call.1} parent=1 // pred_check_branch
      %9744 = sbr.rel (0) target = $region37
    $region36: #{tpu_custom_call.1} parent=1 // pred_region
      %s9746 = ssub.s32 256, 256
      %9747 = vsyncadd [#allocation6], %s9746
      %s9748 = sshll.u32 [#allocation7], 4
      %s9749 = int_to_ptr.vmem [resolvable:$true] %s9748
      %9754 = dma.vmem_to_hbm [thread:$0]  %s9749, 256, %s7, [#allocation6], 128, 128, 8
    $region37: #{tpu_custom_call.1} parent=1 // pred_fallthru
      _
    // Predicated region
    $region38: #{tpu_custom_call.1} parent=1 // pred_check
      _
    $region39: #{tpu_custom_call.1} parent=1 // pred_check_branch
      %9756 = sbr.rel (0) target = $region41
    $region40: #{tpu_custom_call.1} parent=1 // pred_region
      %9757 = dma.done [#allocation6], 256
    $region41: #{tpu_custom_call.1} parent=1 // pred_fallthru
      _
    %9758 = vsyncpa [#allocation5], 1
    %9759 = vsyncpa [#allocation6], 1

</llo_original>
